<compile_context>
chip_gen: v5e
topology: v5e:2x2
jax: 0.10.0
libtpu: 0.0.40
codegen_flags: <defaults>
</compile_context>

<pallas_src>
import math

import numpy as np
import jax
import jax.numpy as jnp
from jax import lax
from jax.experimental import pallas as pl
from jax.experimental.pallas import tpu as pltpu

# ---- model hyper-parameters (from the reference script) ----
D_MODEL = 5
D_FF = 2048
BATCH = 2
SEQ = 3            # max_word_length
ENC_VOCAB = 5
DEC_VOCAB = 5
N_ENC_LAYERS = 6

BS = BATCH * SEQ
INV_SQRT_D = 1.0 / math.sqrt(D_MODEL)


# ----------------------------------------------------------------------------
# Pallas kernel: the whole 6-layer encoder stack in one invocation.
# All weights are full resident VMEM blocks; the activation is carried as a
# value through a static Python unroll over layers.
# ----------------------------------------------------------------------------
def encoder_stack_kernel(x_ref, bias_ref,
                         wqkv_ref, bqkv_ref, wo_ref, bo_ref,
                         w1_ref, b1_ref, w2t_ref, b2_ref,
                         o_ref):
    x = x_ref[...]                 # (BS, D) fused-batch activation
    attn_bias = bias_ref[...]      # (BS, BS, D): 0 within a batch, -1e30 across batches

    for l in range(N_ENC_LAYERS):                       # static unroll (6)
        wqkv = wqkv_ref[l]; bqkv = bqkv_ref[l]          # (D, 3D), (1, 3D)
        wo = wo_ref[l];     bo = bo_ref[l]              # (D, D),  (1, D)
        w1 = w1_ref[l];     b1 = b1_ref[l]              # (D, D_FF), (1, D_FF)
        w2t = w2t_ref[l];   b2 = b2_ref[l]              # (D, D_FF) transposed, (1, D)

        # ---- fused Q|K|V projection: one MXU pass per layer ----
        qkv = jnp.dot(x, wqkv, preferred_element_type=jnp.float32) + bqkv   # (BS, 3D)
        q = qkv[:, 0:D_MODEL]
        k = qkv[:, D_MODEL:2 * D_MODEL]
        v = qkv[:, 2 * D_MODEL:3 * D_MODEL]

        # ---- per-feature-head attention, batch fused via block-diag bias ----
        # scores[s, t, h] = q[s, h] * k[t, h] / sqrt(d_model)  (+ -1e30 cross-batch)
        scores = q[:, None, :] * k[None, :, :] * INV_SQRT_D + attn_bias     # (BS, BS, D)
        m = jnp.max(scores, axis=1, keepdims=True)                          # softmax over t
        e = jnp.exp(scores - m)
        sm = e / jnp.sum(e, axis=1, keepdims=True)
        attn = jnp.sum(sm * v[None, :, :], axis=1)                          # (BS, D)

        mha = jnp.dot(attn, wo, preferred_element_type=jnp.float32) + bo
        x = x + mha                                     # add_norm == residual add only

        # ---- position-wise feed forward (w2 stored transposed, lane-dense) ----
        h = jnp.dot(x, w1, preferred_element_type=jnp.float32) + b1         # (BS, D_FF)
        h = jnp.maximum(h, 0.0)                                             # ReLU
        ff = lax.dot_general(h, w2t, (((1,), (1,)), ((), ())),              # h @ w2t.T
                             preferred_element_type=jnp.float32) + b2       # (BS, D)
        x = x + ff                                      # add_norm

    o_ref[...] = x


def _attention_batch_bias():
    """Block-diagonal additive bias so fused-batch softmax == per-batch softmax."""
    bid = np.repeat(np.arange(BATCH), SEQ)                    # (BS,)
    same = bid[:, None] == bid[None, :]                       # (BS, BS)
    bias = np.where(same, 0.0, -1e30).astype(np.float32)      # (BS, BS)
    bias = np.broadcast_to(bias[:, :, None], (BS, BS, D_MODEL))
    return jnp.asarray(np.ascontiguousarray(bias))


def run_encoder_stack(x, p):
    """x: (B, S, D) f32.  p: dict of stacked per-layer weights (see init_params)."""
    x2d = x.reshape(BS, D_MODEL).astype(jnp.float32)
    attn_bias = _attention_batch_bias()
    vmem = pl.BlockSpec(memory_space=pltpu.MemorySpace.VMEM)

    out = pl.pallas_call(
        encoder_stack_kernel,
        out_shape=jax.ShapeDtypeStruct((BS, D_MODEL), jnp.float32),
        in_specs=[vmem] * 10,
        out_specs=vmem,
    )(x2d, attn_bias,
      p["wqkv"], p["bqkv"], p["wo"], p["bo"],
      p["w1"], p["b1"], p["w2t"], p["b2"])

    return out.reshape(BATCH, SEQ, D_MODEL)


# ----------------------------------------------------------------------------
# Plain-JAX glue: embeddings, positional encoding, parameter init, reference.
# ----------------------------------------------------------------------------
def positional_encoding(x):
    """Exact reproduction of the reference positional_encoding (f64 table,
    sin on even feature indices, cos on odd, added in f32)."""
    b, s, d = x.shape
    pos = np.arange(s, dtype=np.float64)[:, None]
    i = np.arange(d, dtype=np.float64)[None, :]
    pe = pos / np.power(10000.0, 2.0 * i)
    out = np.empty_like(pe)
    out[:, 0::2] = np.sin(pe[:, 0::2])
    out[:, 1::2] = np.cos(pe[:, 1::2])
    out = np.broadcast_to(out[None], (b, s, d))
    return jnp.asarray(out, dtype=jnp.float32) + x


def init_params(key):
    ks = jax.random.split(key, 10)
    L = N_ENC_LAYERS

    def nrm(k, shape, scale=0.1):
        return (scale * jax.random.normal(k, shape)).astype(jnp.float32)

    return {
        "enc_embed": nrm(ks[0], (ENC_VOCAB, D_MODEL), 1.0),
        "dec_embed": nrm(ks[1], (DEC_VOCAB, D_MODEL), 1.0),
        # fused Q|K|V projection weights / biases (concatenated on the out dim)
        "wqkv": nrm(ks[2], (L, D_MODEL, 3 * D_MODEL)),
        "bqkv": nrm(ks[3], (L, 1, 3 * D_MODEL)),
        "wo":   nrm(ks[4], (L, D_MODEL, D_MODEL)),
        "bo":   nrm(ks[5], (L, 1, D_MODEL)),
        "w1":   nrm(ks[6], (L, D_MODEL, D_FF)),
        "b1":   nrm(ks[7], (L, 1, D_FF)),
        # w2 stored TRANSPOSED (lane-dense (5, 2048) rows): y = h @ w2t.T + b2
        "w2t":  nrm(ks[8], (L, D_MODEL, D_FF)),
        "b2":   nrm(ks[9], (L, 1, D_MODEL)),
    }


def encoder_stack_ref(x, p):
    """Pure-JAX reference of the encoder stack (locks in the per-feature-head
    attention and add-only add_norm semantics)."""
    for l in range(N_ENC_LAYERS):
        wq = p["wqkv"][l, :, 0:D_MODEL]
        wk = p["wqkv"][l, :, D_MODEL:2 * D_MODEL]
        wv = p["wqkv"][l, :, 2 * D_MODEL:3 * D_MODEL]
        bq = p["bqkv"][l, 0, 0:D_MODEL]
        bk = p["bqkv"][l, 0, D_MODEL:2 * D_MODEL]
        bv = p["bqkv"][l, 0, 2 * D_MODEL:3 * D_MODEL]

        q = x @ wq + bq
        k = x @ wk + bk
        v = x @ wv + bv
        scores = q[:, :, None, :] * k[:, None, :, :] * INV_SQRT_D     # (B,S,S,D)
        sm = jax.nn.softmax(scores, axis=2)
        attn = jnp.sum(sm * v[:, None, :, :], axis=2)                 # (B,S,D)
        x = x + (attn @ p["wo"][l] + p["bo"][l, 0])

        h = jax.nn.relu(x @ p["w1"][l] + p["b1"][l, 0])
        ff = jnp.einsum("bsf,df->bsd", h, p["w2t"][l]) + p["b2"][l, 0]
        x = x + ff
    return x


def transformer_forward(params, inputs_idx, outputs_idx):
    """Mirrors transformer.forward.  Returns (module_output, encoder_output):
    the PyTorch module returns only `module_output`; the encoder stack result
    is computed but discarded by the reference forward — we expose it so the
    Pallas kernel's work is observable."""
    x = jnp.take(params["enc_embed"], inputs_idx, axis=0)   # (B, S, D)
    x = positional_encoding(x)
    enc_out = run_encoder_stack(x, params)                  # Pallas kernel (6 layers)

    y = jnp.take(params["dec_embed"], outputs_idx, axis=0)  # (B, S, D)
    y = positional_encoding(y)                              # == module's return value
    return y, enc_out


if __name__ == "__main__":
    key = jax.random.PRNGKey(0)
    k_par, k_in, k_out = jax.random.split(key, 3)

    params = init_params(k_par)
    inputs_idx = jax.random.randint(k_in, (BATCH, SEQ), 0, ENC_VOCAB, dtype=jnp.int32)
    outputs_idx = jax.random.randint(k_out, (BATCH, SEQ), 0, DEC_VOCAB, dtype=jnp.int32)

    fwd = jax.jit(transformer_forward)
    module_out, enc_out = fwd(params, inputs_idx, outputs_idx)
    jax.block_until_ready((module_out, enc_out))

    # Semantics check against the pure-JAX reference (generous tolerance to
    # absorb MXU precision-mode differences).
    x0 = positional_encoding(jnp.take(params["enc_embed"], inputs_idx, axis=0))
    enc_ref = encoder_stack_ref(x0, params)
    np.testing.assert_allclose(np.asarray(enc_out), np.asarray(enc_ref),
                               rtol=5e-2, atol=5e-2)

    assert module_out.shape == (BATCH, SEQ, D_MODEL)
    assert enc_out.shape == (BATCH, SEQ, D_MODEL)
    print("KERNEL_OK")
</pallas_src>

<mosaic_0001>
module attributes {stable_mosaic.version = 11 : i64} {
  func.func @encoder_stack_kernel(%arg0: memref<6x5xf32, #tpu.memory_space<vmem>>, %arg1: memref<6x6x5xf32, #tpu.memory_space<vmem>>, %arg2: memref<6x5x15xf32, #tpu.memory_space<vmem>>, %arg3: memref<6x1x15xf32, #tpu.memory_space<vmem>>, %arg4: memref<6x5x5xf32, #tpu.memory_space<vmem>>, %arg5: memref<6x1x5xf32, #tpu.memory_space<vmem>>, %arg6: memref<6x5x2048xf32, #tpu.memory_space<vmem>>, %arg7: memref<6x1x2048xf32, #tpu.memory_space<vmem>>, %arg8: memref<6x5x2048xf32, #tpu.memory_space<vmem>>, %arg9: memref<6x1x5xf32, #tpu.memory_space<vmem>>, %arg10: memref<6x5xf32, #tpu.memory_space<vmem>>) attributes {dimension_semantics = [], scalar_prefetch = 0 : i64, scratch_operands = 0 : i64, tpu.core_type = #tpu.core_type<tc>} {
    %c0 = arith.constant 0 : index
    %c0_0 = arith.constant 0 : index
    %0 = vector.load %arg0[%c0, %c0_0] : memref<6x5xf32, #tpu.memory_space<vmem>>, vector<6x5xf32>
    %c0_1 = arith.constant 0 : index
    %c0_2 = arith.constant 0 : index
    %c0_3 = arith.constant 0 : index
    %1 = vector.load %arg1[%c0_1, %c0_2, %c0_3] : memref<6x6x5xf32, #tpu.memory_space<vmem>>, vector<6x6x5xf32>
    %c0_4 = arith.constant 0 : index
    %c0_5 = arith.constant 0 : index
    %c0_6 = arith.constant 0 : index
    %2 = vector.load %arg2[%c0_4, %c0_5, %c0_6] : memref<6x5x15xf32, #tpu.memory_space<vmem>>, vector<1x5x15xf32>
    %3 = vector.shape_cast %2 : vector<1x5x15xf32> to vector<5x15xf32>
    %c0_7 = arith.constant 0 : index
    %c0_8 = arith.constant 0 : index
    %c0_9 = arith.constant 0 : index
    %4 = vector.load %arg3[%c0_7, %c0_8, %c0_9] : memref<6x1x15xf32, #tpu.memory_space<vmem>>, vector<1x1x15xf32>
    %5 = vector.shape_cast %4 : vector<1x1x15xf32> to vector<1x15xf32>
    %c0_10 = arith.constant 0 : index
    %c0_11 = arith.constant 0 : index
    %c0_12 = arith.constant 0 : index
    %6 = vector.load %arg4[%c0_10, %c0_11, %c0_12] : memref<6x5x5xf32, #tpu.memory_space<vmem>>, vector<1x5x5xf32>
    %7 = vector.shape_cast %6 : vector<1x5x5xf32> to vector<5x5xf32>
    %c0_13 = arith.constant 0 : index
    %c0_14 = arith.constant 0 : index
    %c0_15 = arith.constant 0 : index
    %8 = vector.load %arg5[%c0_13, %c0_14, %c0_15] : memref<6x1x5xf32, #tpu.memory_space<vmem>>, vector<1x1x5xf32>
    %9 = vector.shape_cast %8 : vector<1x1x5xf32> to vector<1x5xf32>
    %c0_16 = arith.constant 0 : index
    %c0_17 = arith.constant 0 : index
    %c0_18 = arith.constant 0 : index
    %10 = vector.load %arg6[%c0_16, %c0_17, %c0_18] : memref<6x5x2048xf32, #tpu.memory_space<vmem>>, vector<1x5x2048xf32>
    %11 = vector.shape_cast %10 : vector<1x5x2048xf32> to vector<5x2048xf32>
    %c0_19 = arith.constant 0 : index
    %c0_20 = arith.constant 0 : index
    %c0_21 = arith.constant 0 : index
    %12 = vector.load %arg7[%c0_19, %c0_20, %c0_21] : memref<6x1x2048xf32, #tpu.memory_space<vmem>>, vector<1x1x2048xf32>
    %13 = vector.shape_cast %12 : vector<1x1x2048xf32> to vector<1x2048xf32>
    %c0_22 = arith.constant 0 : index
    %c0_23 = arith.constant 0 : index
    %c0_24 = arith.constant 0 : index
    %14 = vector.load %arg8[%c0_22, %c0_23, %c0_24] : memref<6x5x2048xf32, #tpu.memory_space<vmem>>, vector<1x5x2048xf32>
    %15 = vector.shape_cast %14 : vector<1x5x2048xf32> to vector<5x2048xf32>
    %c0_25 = arith.constant 0 : index
    %c0_26 = arith.constant 0 : index
    %c0_27 = arith.constant 0 : index
    %16 = vector.load %arg9[%c0_25, %c0_26, %c0_27] : memref<6x1x5xf32, #tpu.memory_space<vmem>>, vector<1x1x5xf32>
    %17 = vector.shape_cast %16 : vector<1x1x5xf32> to vector<1x5xf32>
    %cst = arith.constant dense<0.000000e+00> : vector<6x15xf32>
    %18 = tpu.matmul %0, %3, %cst {dimension_numbers = #tpu.dot_dimension_numbers<[1], [0], [0], [1], [0, 0, 1, 1], [], []>} : vector<6x5xf32>, vector<5x15xf32>, vector<6x15xf32> -> vector<6x15xf32>
    %19 = vector.broadcast %5 : vector<1x15xf32> to vector<6x15xf32>
    %20 = arith.addf %18, %19 : vector<6x15xf32>
    %21 = vector.extract_strided_slice %20 {offsets = [0, 0], sizes = [6, 5], strides = [1, 1]} : vector<6x15xf32> to vector<6x5xf32>
    %22 = vector.extract_strided_slice %20 {offsets = [0, 5], sizes = [6, 5], strides = [1, 1]} : vector<6x15xf32> to vector<6x5xf32>
    %23 = vector.extract_strided_slice %20 {offsets = [0, 10], sizes = [6, 5], strides = [1, 1]} : vector<6x15xf32> to vector<6x5xf32>
    %24 = vector.shape_cast %21 : vector<6x5xf32> to vector<6x1x5xf32>
    %25 = vector.shape_cast %22 : vector<6x5xf32> to vector<1x6x5xf32>
    %26 = vector.broadcast %24 : vector<6x1x5xf32> to vector<6x6x5xf32>
    %27 = vector.broadcast %25 : vector<1x6x5xf32> to vector<6x6x5xf32>
    %28 = arith.mulf %26, %27 : vector<6x6x5xf32>
    %cst_28 = arith.constant 0.44721359 : f32
    %29 = vector.broadcast %cst_28 : f32 to vector<6x6x5xf32>
    %30 = arith.mulf %28, %29 : vector<6x6x5xf32>
    %31 = arith.addf %30, %1 : vector<6x6x5xf32>
    %cst_29 = arith.constant dense<0xFF800000> : vector<6x5xf32>
    %32 = vector.multi_reduction <maximumf>, %31, %cst_29 [1] : vector<6x6x5xf32> to vector<6x5xf32>
    %33 = vector.shape_cast %32 : vector<6x5xf32> to vector<6x1x5xf32>
    %34 = vector.broadcast %33 : vector<6x1x5xf32> to vector<6x6x5xf32>
    %35 = arith.subf %31, %34 : vector<6x6x5xf32>
    %36 = math.exp %35 : vector<6x6x5xf32>
    %cst_30 = arith.constant dense<0.000000e+00> : vector<6x5xf32>
    %37 = vector.multi_reduction <add>, %36, %cst_30 [1] : vector<6x6x5xf32> to vector<6x5xf32>
    %38 = vector.shape_cast %37 : vector<6x5xf32> to vector<6x1x5xf32>
    %39 = vector.broadcast %38 : vector<6x1x5xf32> to vector<6x6x5xf32>
    %40 = arith.divf %36, %39 : vector<6x6x5xf32>
    %41 = vector.shape_cast %23 : vector<6x5xf32> to vector<1x6x5xf32>
    %42 = vector.broadcast %41 : vector<1x6x5xf32> to vector<6x6x5xf32>
    %43 = arith.mulf %40, %42 : vector<6x6x5xf32>
    %cst_31 = arith.constant dense<0.000000e+00> : vector<6x5xf32>
    %44 = vector.multi_reduction <add>, %43, %cst_31 [1] : vector<6x6x5xf32> to vector<6x5xf32>
    %cst_32 = arith.constant dense<0.000000e+00> : vector<6x5xf32>
    %45 = tpu.matmul %44, %7, %cst_32 {dimension_numbers = #tpu.dot_dimension_numbers<[1], [0], [0], [1], [0, 0, 1, 1], [], []>} : vector<6x5xf32>, vector<5x5xf32>, vector<6x5xf32> -> vector<6x5xf32>
    %46 = vector.broadcast %9 : vector<1x5xf32> to vector<6x5xf32>
    %47 = arith.addf %45, %46 : vector<6x5xf32>
    %48 = arith.addf %0, %47 : vector<6x5xf32>
    %cst_33 = arith.constant dense<0.000000e+00> : vector<6x2048xf32>
    %49 = tpu.matmul %48, %11, %cst_33 {dimension_numbers = #tpu.dot_dimension_numbers<[1], [0], [0], [1], [0, 0, 1, 1], [], []>} : vector<6x5xf32>, vector<5x2048xf32>, vector<6x2048xf32> -> vector<6x2048xf32>
    %50 = vector.broadcast %13 : vector<1x2048xf32> to vector<6x2048xf32>
    %51 = arith.addf %49, %50 : vector<6x2048xf32>
    %cst_34 = arith.constant 0.000000e+00 : f32
    %52 = vector.broadcast %cst_34 : f32 to vector<6x2048xf32>
    %53 = arith.maximumf %51, %52 : vector<6x2048xf32>
    %cst_35 = arith.constant dense<0.000000e+00> : vector<6x5xf32>
    %54 = tpu.matmul %53, %15, %cst_35 {dimension_numbers = #tpu.dot_dimension_numbers<[1], [1], [0], [0], [0, 0, 1, 0], [], []>} : vector<6x2048xf32>, vector<5x2048xf32>, vector<6x5xf32> -> vector<6x5xf32>
    %55 = vector.broadcast %17 : vector<1x5xf32> to vector<6x5xf32>
    %56 = arith.addf %54, %55 : vector<6x5xf32>
    %57 = arith.addf %48, %56 : vector<6x5xf32>
    %c1 = arith.constant 1 : index
    %c0_36 = arith.constant 0 : index
    %c0_37 = arith.constant 0 : index
    %58 = vector.load %arg2[%c1, %c0_36, %c0_37] : memref<6x5x15xf32, #tpu.memory_space<vmem>>, vector<1x5x15xf32>
    %59 = vector.shape_cast %58 : vector<1x5x15xf32> to vector<5x15xf32>
    %c1_38 = arith.constant 1 : index
    %c0_39 = arith.constant 0 : index
    %c0_40 = arith.constant 0 : index
    %60 = vector.load %arg3[%c1_38, %c0_39, %c0_40] : memref<6x1x15xf32, #tpu.memory_space<vmem>>, vector<1x1x15xf32>
    %61 = vector.shape_cast %60 : vector<1x1x15xf32> to vector<1x15xf32>
    %c1_41 = arith.constant 1 : index
    %c0_42 = arith.constant 0 : index
    %c0_43 = arith.constant 0 : index
    %62 = vector.load %arg4[%c1_41, %c0_42, %c0_43] : memref<6x5x5xf32, #tpu.memory_space<vmem>>, vector<1x5x5xf32>
    %63 = vector.shape_cast %62 : vector<1x5x5xf32> to vector<5x5xf32>
    %c1_44 = arith.constant 1 : index
    %c0_45 = arith.constant 0 : index
    %c0_46 = arith.constant 0 : index
    %64 = vector.load %arg5[%c1_44, %c0_45, %c0_46] : memref<6x1x5xf32, #tpu.memory_space<vmem>>, vector<1x1x5xf32>
    %65 = vector.shape_cast %64 : vector<1x1x5xf32> to vector<1x5xf32>
    %c1_47 = arith.constant 1 : index
    %c0_48 = arith.constant 0 : index
    %c0_49 = arith.constant 0 : index
    %66 = vector.load %arg6[%c1_47, %c0_48, %c0_49] : memref<6x5x2048xf32, #tpu.memory_space<vmem>>, vector<1x5x2048xf32>
    %67 = vector.shape_cast %66 : vector<1x5x2048xf32> to vector<5x2048xf32>
    %c1_50 = arith.constant 1 : index
    %c0_51 = arith.constant 0 : index
    %c0_52 = arith.constant 0 : index
    %68 = vector.load %arg7[%c1_50, %c0_51, %c0_52] : memref<6x1x2048xf32, #tpu.memory_space<vmem>>, vector<1x1x2048xf32>
    %69 = vector.shape_cast %68 : vector<1x1x2048xf32> to vector<1x2048xf32>
    %c1_53 = arith.constant 1 : index
    %c0_54 = arith.constant 0 : index
    %c0_55 = arith.constant 0 : index
    %70 = vector.load %arg8[%c1_53, %c0_54, %c0_55] : memref<6x5x2048xf32, #tpu.memory_space<vmem>>, vector<1x5x2048xf32>
    %71 = vector.shape_cast %70 : vector<1x5x2048xf32> to vector<5x2048xf32>
    %c1_56 = arith.constant 1 : index
    %c0_57 = arith.constant 0 : index
    %c0_58 = arith.constant 0 : index
    %72 = vector.load %arg9[%c1_56, %c0_57, %c0_58] : memref<6x1x5xf32, #tpu.memory_space<vmem>>, vector<1x1x5xf32>
    %73 = vector.shape_cast %72 : vector<1x1x5xf32> to vector<1x5xf32>
    %cst_59 = arith.constant dense<0.000000e+00> : vector<6x15xf32>
    %74 = tpu.matmul %57, %59, %cst_59 {dimension_numbers = #tpu.dot_dimension_numbers<[1], [0], [0], [1], [0, 0, 1, 1], [], []>} : vector<6x5xf32>, vector<5x15xf32>, vector<6x15xf32> -> vector<6x15xf32>
    %75 = vector.broadcast %61 : vector<1x15xf32> to vector<6x15xf32>
    %76 = arith.addf %74, %75 : vector<6x15xf32>
    %77 = vector.extract_strided_slice %76 {offsets = [0, 0], sizes = [6, 5], strides = [1, 1]} : vector<6x15xf32> to vector<6x5xf32>
    %78 = vector.extract_strided_slice %76 {offsets = [0, 5], sizes = [6, 5], strides = [1, 1]} : vector<6x15xf32> to vector<6x5xf32>
    %79 = vector.extract_strided_slice %76 {offsets = [0, 10], sizes = [6, 5], strides = [1, 1]} : vector<6x15xf32> to vector<6x5xf32>
    %80 = vector.shape_cast %77 : vector<6x5xf32> to vector<6x1x5xf32>
    %81 = vector.shape_cast %78 : vector<6x5xf32> to vector<1x6x5xf32>
    %82 = vector.broadcast %80 : vector<6x1x5xf32> to vector<6x6x5xf32>
    %83 = vector.broadcast %81 : vector<1x6x5xf32> to vector<6x6x5xf32>
    %84 = arith.mulf %82, %83 : vector<6x6x5xf32>
    %cst_60 = arith.constant 0.44721359 : f32
    %85 = vector.broadcast %cst_60 : f32 to vector<6x6x5xf32>
    %86 = arith.mulf %84, %85 : vector<6x6x5xf32>
    %87 = arith.addf %86, %1 : vector<6x6x5xf32>
    %cst_61 = arith.constant dense<0xFF800000> : vector<6x5xf32>
    %88 = vector.multi_reduction <maximumf>, %87, %cst_61 [1] : vector<6x6x5xf32> to vector<6x5xf32>
    %89 = vector.shape_cast %88 : vector<6x5xf32> to vector<6x1x5xf32>
    %90 = vector.broadcast %89 : vector<6x1x5xf32> to vector<6x6x5xf32>
    %91 = arith.subf %87, %90 : vector<6x6x5xf32>
    %92 = math.exp %91 : vector<6x6x5xf32>
    %cst_62 = arith.constant dense<0.000000e+00> : vector<6x5xf32>
    %93 = vector.multi_reduction <add>, %92, %cst_62 [1] : vector<6x6x5xf32> to vector<6x5xf32>
    %94 = vector.shape_cast %93 : vector<6x5xf32> to vector<6x1x5xf32>
    %95 = vector.broadcast %94 : vector<6x1x5xf32> to vector<6x6x5xf32>
    %96 = arith.divf %92, %95 : vector<6x6x5xf32>
    %97 = vector.shape_cast %79 : vector<6x5xf32> to vector<1x6x5xf32>
    %98 = vector.broadcast %97 : vector<1x6x5xf32> to vector<6x6x5xf32>
    %99 = arith.mulf %96, %98 : vector<6x6x5xf32>
    %cst_63 = arith.constant dense<0.000000e+00> : vector<6x5xf32>
    %100 = vector.multi_reduction <add>, %99, %cst_63 [1] : vector<6x6x5xf32> to vector<6x5xf32>
    %cst_64 = arith.constant dense<0.000000e+00> : vector<6x5xf32>
    %101 = tpu.matmul %100, %63, %cst_64 {dimension_numbers = #tpu.dot_dimension_numbers<[1], [0], [0], [1], [0, 0, 1, 1], [], []>} : vector<6x5xf32>, vector<5x5xf32>, vector<6x5xf32> -> vector<6x5xf32>
    %102 = vector.broadcast %65 : vector<1x5xf32> to vector<6x5xf32>
    %103 = arith.addf %101, %102 : vector<6x5xf32>
    %104 = arith.addf %57, %103 : vector<6x5xf32>
    %cst_65 = arith.constant dense<0.000000e+00> : vector<6x2048xf32>
    %105 = tpu.matmul %104, %67, %cst_65 {dimension_numbers = #tpu.dot_dimension_numbers<[1], [0], [0], [1], [0, 0, 1, 1], [], []>} : vector<6x5xf32>, vector<5x2048xf32>, vector<6x2048xf32> -> vector<6x2048xf32>
    %106 = vector.broadcast %69 : vector<1x2048xf32> to vector<6x2048xf32>
    %107 = arith.addf %105, %106 : vector<6x2048xf32>
    %cst_66 = arith.constant 0.000000e+00 : f32
    %108 = vector.broadcast %cst_66 : f32 to vector<6x2048xf32>
    %109 = arith.maximumf %107, %108 : vector<6x2048xf32>
    %cst_67 = arith.constant dense<0.000000e+00> : vector<6x5xf32>
    %110 = tpu.matmul %109, %71, %cst_67 {dimension_numbers = #tpu.dot_dimension_numbers<[1], [1], [0], [0], [0, 0, 1, 0], [], []>} : vector<6x2048xf32>, vector<5x2048xf32>, vector<6x5xf32> -> vector<6x5xf32>
    %111 = vector.broadcast %73 : vector<1x5xf32> to vector<6x5xf32>
    %112 = arith.addf %110, %111 : vector<6x5xf32>
    %113 = arith.addf %104, %112 : vector<6x5xf32>
    %c2 = arith.constant 2 : index
    %c0_68 = arith.constant 0 : index
    %c0_69 = arith.constant 0 : index
    %114 = vector.load %arg2[%c2, %c0_68, %c0_69] : memref<6x5x15xf32, #tpu.memory_space<vmem>>, vector<1x5x15xf32>
    %115 = vector.shape_cast %114 : vector<1x5x15xf32> to vector<5x15xf32>
    %c2_70 = arith.constant 2 : index
    %c0_71 = arith.constant 0 : index
    %c0_72 = arith.constant 0 : index
    %116 = vector.load %arg3[%c2_70, %c0_71, %c0_72] : memref<6x1x15xf32, #tpu.memory_space<vmem>>, vector<1x1x15xf32>
    %117 = vector.shape_cast %116 : vector<1x1x15xf32> to vector<1x15xf32>
    %c2_73 = arith.constant 2 : index
    %c0_74 = arith.constant 0 : index
    %c0_75 = arith.constant 0 : index
    %118 = vector.load %arg4[%c2_73, %c0_74, %c0_75] : memref<6x5x5xf32, #tpu.memory_space<vmem>>, vector<1x5x5xf32>
    %119 = vector.shape_cast %118 : vector<1x5x5xf32> to vector<5x5xf32>
    %c2_76 = arith.constant 2 : index
    %c0_77 = arith.constant 0 : index
    %c0_78 = arith.constant 0 : index
    %120 = vector.load %arg5[%c2_76, %c0_77, %c0_78] : memref<6x1x5xf32, #tpu.memory_space<vmem>>, vector<1x1x5xf32>
    %121 = vector.shape_cast %120 : vector<1x1x5xf32> to vector<1x5xf32>
    %c2_79 = arith.constant 2 : index
    %c0_80 = arith.constant 0 : index
    %c0_81 = arith.constant 0 : index
    %122 = vector.load %arg6[%c2_79, %c0_80, %c0_81] : memref<6x5x2048xf32, #tpu.memory_space<vmem>>, vector<1x5x2048xf32>
    %123 = vector.shape_cast %122 : vector<1x5x2048xf32> to vector<5x2048xf32>
    %c2_82 = arith.constant 2 : index
    %c0_83 = arith.constant 0 : index
    %c0_84 = arith.constant 0 : index
    %124 = vector.load %arg7[%c2_82, %c0_83, %c0_84] : memref<6x1x2048xf32, #tpu.memory_space<vmem>>, vector<1x1x2048xf32>
    %125 = vector.shape_cast %124 : vector<1x1x2048xf32> to vector<1x2048xf32>
    %c2_85 = arith.constant 2 : index
    %c0_86 = arith.constant 0 : index
    %c0_87 = arith.constant 0 : index
    %126 = vector.load %arg8[%c2_85, %c0_86, %c0_87] : memref<6x5x2048xf32, #tpu.memory_space<vmem>>, vector<1x5x2048xf32>
    %127 = vector.shape_cast %126 : vector<1x5x2048xf32> to vector<5x2048xf32>
    %c2_88 = arith.constant 2 : index
    %c0_89 = arith.constant 0 : index
    %c0_90 = arith.constant 0 : index
    %128 = vector.load %arg9[%c2_88, %c0_89, %c0_90] : memref<6x1x5xf32, #tpu.memory_space<vmem>>, vector<1x1x5xf32>
    %129 = vector.shape_cast %128 : vector<1x1x5xf32> to vector<1x5xf32>
    %cst_91 = arith.constant dense<0.000000e+00> : vector<6x15xf32>
    %130 = tpu.matmul %113, %115, %cst_91 {dimension_numbers = #tpu.dot_dimension_numbers<[1], [0], [0], [1], [0, 0, 1, 1], [], []>} : vector<6x5xf32>, vector<5x15xf32>, vector<6x15xf32> -> vector<6x15xf32>
    %131 = vector.broadcast %117 : vector<1x15xf32> to vector<6x15xf32>
    %132 = arith.addf %130, %131 : vector<6x15xf32>
    %133 = vector.extract_strided_slice %132 {offsets = [0, 0], sizes = [6, 5], strides = [1, 1]} : vector<6x15xf32> to vector<6x5xf32>
    %134 = vector.extract_strided_slice %132 {offsets = [0, 5], sizes = [6, 5], strides = [1, 1]} : vector<6x15xf32> to vector<6x5xf32>
    %135 = vector.extract_strided_slice %132 {offsets = [0, 10], sizes = [6, 5], strides = [1, 1]} : vector<6x15xf32> to vector<6x5xf32>
    %136 = vector.shape_cast %133 : vector<6x5xf32> to vector<6x1x5xf32>
    %137 = vector.shape_cast %134 : vector<6x5xf32> to vector<1x6x5xf32>
    %138 = vector.broadcast %136 : vector<6x1x5xf32> to vector<6x6x5xf32>
    %139 = vector.broadcast %137 : vector<1x6x5xf32> to vector<6x6x5xf32>
    %140 = arith.mulf %138, %139 : vector<6x6x5xf32>
    %cst_92 = arith.constant 0.44721359 : f32
    %141 = vector.broadcast %cst_92 : f32 to vector<6x6x5xf32>
    %142 = arith.mulf %140, %141 : vector<6x6x5xf32>
    %143 = arith.addf %142, %1 : vector<6x6x5xf32>
    %cst_93 = arith.constant dense<0xFF800000> : vector<6x5xf32>
    %144 = vector.multi_reduction <maximumf>, %143, %cst_93 [1] : vector<6x6x5xf32> to vector<6x5xf32>
    %145 = vector.shape_cast %144 : vector<6x5xf32> to vector<6x1x5xf32>
    %146 = vector.broadcast %145 : vector<6x1x5xf32> to vector<6x6x5xf32>
    %147 = arith.subf %143, %146 : vector<6x6x5xf32>
    %148 = math.exp %147 : vector<6x6x5xf32>
    %cst_94 = arith.constant dense<0.000000e+00> : vector<6x5xf32>
    %149 = vector.multi_reduction <add>, %148, %cst_94 [1] : vector<6x6x5xf32> to vector<6x5xf32>
    %150 = vector.shape_cast %149 : vector<6x5xf32> to vector<6x1x5xf32>
    %151 = vector.broadcast %150 : vector<6x1x5xf32> to vector<6x6x5xf32>
    %152 = arith.divf %148, %151 : vector<6x6x5xf32>
    %153 = vector.shape_cast %135 : vector<6x5xf32> to vector<1x6x5xf32>
    %154 = vector.broadcast %153 : vector<1x6x5xf32> to vector<6x6x5xf32>
    %155 = arith.mulf %152, %154 : vector<6x6x5xf32>
    %cst_95 = arith.constant dense<0.000000e+00> : vector<6x5xf32>
    %156 = vector.multi_reduction <add>, %155, %cst_95 [1] : vector<6x6x5xf32> to vector<6x5xf32>
    %cst_96 = arith.constant dense<0.000000e+00> : vector<6x5xf32>
    %157 = tpu.matmul %156, %119, %cst_96 {dimension_numbers = #tpu.dot_dimension_numbers<[1], [0], [0], [1], [0, 0, 1, 1], [], []>} : vector<6x5xf32>, vector<5x5xf32>, vector<6x5xf32> -> vector<6x5xf32>
    %158 = vector.broadcast %121 : vector<1x5xf32> to vector<6x5xf32>
    %159 = arith.addf %157, %158 : vector<6x5xf32>
    %160 = arith.addf %113, %159 : vector<6x5xf32>
    %cst_97 = arith.constant dense<0.000000e+00> : vector<6x2048xf32>
    %161 = tpu.matmul %160, %123, %cst_97 {dimension_numbers = #tpu.dot_dimension_numbers<[1], [0], [0], [1], [0, 0, 1, 1], [], []>} : vector<6x5xf32>, vector<5x2048xf32>, vector<6x2048xf32> -> vector<6x2048xf32>
    %162 = vector.broadcast %125 : vector<1x2048xf32> to vector<6x2048xf32>
    %163 = arith.addf %161, %162 : vector<6x2048xf32>
    %cst_98 = arith.constant 0.000000e+00 : f32
    %164 = vector.broadcast %cst_98 : f32 to vector<6x2048xf32>
    %165 = arith.maximumf %163, %164 : vector<6x2048xf32>
    %cst_99 = arith.constant dense<0.000000e+00> : vector<6x5xf32>
    %166 = tpu.matmul %165, %127, %cst_99 {dimension_numbers = #tpu.dot_dimension_numbers<[1], [1], [0], [0], [0, 0, 1, 0], [], []>} : vector<6x2048xf32>, vector<5x2048xf32>, vector<6x5xf32> -> vector<6x5xf32>
    %167 = vector.broadcast %129 : vector<1x5xf32> to vector<6x5xf32>
    %168 = arith.addf %166, %167 : vector<6x5xf32>
    %169 = arith.addf %160, %168 : vector<6x5xf32>
    %c3 = arith.constant 3 : index
    %c0_100 = arith.constant 0 : index
    %c0_101 = arith.constant 0 : index
    %170 = vector.load %arg2[%c3, %c0_100, %c0_101] : memref<6x5x15xf32, #tpu.memory_space<vmem>>, vector<1x5x15xf32>
    %171 = vector.shape_cast %170 : vector<1x5x15xf32> to vector<5x15xf32>
    %c3_102 = arith.constant 3 : index
    %c0_103 = arith.constant 0 : index
    %c0_104 = arith.constant 0 : index
    %172 = vector.load %arg3[%c3_102, %c0_103, %c0_104] : memref<6x1x15xf32, #tpu.memory_space<vmem>>, vector<1x1x15xf32>
    %173 = vector.shape_cast %172 : vector<1x1x15xf32> to vector<1x15xf32>
    %c3_105 = arith.constant 3 : index
    %c0_106 = arith.constant 0 : index
    %c0_107 = arith.constant 0 : index
    %174 = vector.load %arg4[%c3_105, %c0_106, %c0_107] : memref<6x5x5xf32, #tpu.memory_space<vmem>>, vector<1x5x5xf32>
    %175 = vector.shape_cast %174 : vector<1x5x5xf32> to vector<5x5xf32>
    %c3_108 = arith.constant 3 : index
    %c0_109 = arith.constant 0 : index
    %c0_110 = arith.constant 0 : index
    %176 = vector.load %arg5[%c3_108, %c0_109, %c0_110] : memref<6x1x5xf32, #tpu.memory_space<vmem>>, vector<1x1x5xf32>
    %177 = vector.shape_cast %176 : vector<1x1x5xf32> to vector<1x5xf32>
    %c3_111 = arith.constant 3 : index
    %c0_112 = arith.constant 0 : index
    %c0_113 = arith.constant 0 : index
    %178 = vector.load %arg6[%c3_111, %c0_112, %c0_113] : memref<6x5x2048xf32, #tpu.memory_space<vmem>>, vector<1x5x2048xf32>
    %179 = vector.shape_cast %178 : vector<1x5x2048xf32> to vector<5x2048xf32>
    %c3_114 = arith.constant 3 : index
    %c0_115 = arith.constant 0 : index
    %c0_116 = arith.constant 0 : index
    %180 = vector.load %arg7[%c3_114, %c0_115, %c0_116] : memref<6x1x2048xf32, #tpu.memory_space<vmem>>, vector<1x1x2048xf32>
    %181 = vector.shape_cast %180 : vector<1x1x2048xf32> to vector<1x2048xf32>
    %c3_117 = arith.constant 3 : index
    %c0_118 = arith.constant 0 : index
    %c0_119 = arith.constant 0 : index
    %182 = vector.load %arg8[%c3_117, %c0_118, %c0_119] : memref<6x5x2048xf32, #tpu.memory_space<vmem>>, vector<1x5x2048xf32>
    %183 = vector.shape_cast %182 : vector<1x5x2048xf32> to vector<5x2048xf32>
    %c3_120 = arith.constant 3 : index
    %c0_121 = arith.constant 0 : index
    %c0_122 = arith.constant 0 : index
    %184 = vector.load %arg9[%c3_120, %c0_121, %c0_122] : memref<6x1x5xf32, #tpu.memory_space<vmem>>, vector<1x1x5xf32>
    %185 = vector.shape_cast %184 : vector<1x1x5xf32> to vector<1x5xf32>
    %cst_123 = arith.constant dense<0.000000e+00> : vector<6x15xf32>
    %186 = tpu.matmul %169, %171, %cst_123 {dimension_numbers = #tpu.dot_dimension_numbers<[1], [0], [0], [1], [0, 0, 1, 1], [], []>} : vector<6x5xf32>, vector<5x15xf32>, vector<6x15xf32> -> vector<6x15xf32>
    %187 = vector.broadcast %173 : vector<1x15xf32> to vector<6x15xf32>
    %188 = arith.addf %186, %187 : vector<6x15xf32>
    %189 = vector.extract_strided_slice %188 {offsets = [0, 0], sizes = [6, 5], strides = [1, 1]} : vector<6x15xf32> to vector<6x5xf32>
    %190 = vector.extract_strided_slice %188 {offsets = [0, 5], sizes = [6, 5], strides = [1, 1]} : vector<6x15xf32> to vector<6x5xf32>
    %191 = vector.extract_strided_slice %188 {offsets = [0, 10], sizes = [6, 5], strides = [1, 1]} : vector<6x15xf32> to vector<6x5xf32>
    %192 = vector.shape_cast %189 : vector<6x5xf32> to vector<6x1x5xf32>
    %193 = vector.shape_cast %190 : vector<6x5xf32> to vector<1x6x5xf32>
    %194 = vector.broadcast %192 : vector<6x1x5xf32> to vector<6x6x5xf32>
    %195 = vector.broadcast %193 : vector<1x6x5xf32> to vector<6x6x5xf32>
    %196 = arith.mulf %194, %195 : vector<6x6x5xf32>
    %cst_124 = arith.constant 0.44721359 : f32
    %197 = vector.broadcast %cst_124 : f32 to vector<6x6x5xf32>
    %198 = arith.mulf %196, %197 : vector<6x6x5xf32>
    %199 = arith.addf %198, %1 : vector<6x6x5xf32>
    %cst_125 = arith.constant dense<0xFF800000> : vector<6x5xf32>
    %200 = vector.multi_reduction <maximumf>, %199, %cst_125 [1] : vector<6x6x5xf32> to vector<6x5xf32>
    %201 = vector.shape_cast %200 : vector<6x5xf32> to vector<6x1x5xf32>
    %202 = vector.broadcast %201 : vector<6x1x5xf32> to vector<6x6x5xf32>
    %203 = arith.subf %199, %202 : vector<6x6x5xf32>
    %204 = math.exp %203 : vector<6x6x5xf32>
    %cst_126 = arith.constant dense<0.000000e+00> : vector<6x5xf32>
    %205 = vector.multi_reduction <add>, %204, %cst_126 [1] : vector<6x6x5xf32> to vector<6x5xf32>
    %206 = vector.shape_cast %205 : vector<6x5xf32> to vector<6x1x5xf32>
    %207 = vector.broadcast %206 : vector<6x1x5xf32> to vector<6x6x5xf32>
    %208 = arith.divf %204, %207 : vector<6x6x5xf32>
    %209 = vector.shape_cast %191 : vector<6x5xf32> to vector<1x6x5xf32>
    %210 = vector.broadcast %209 : vector<1x6x5xf32> to vector<6x6x5xf32>
    %211 = arith.mulf %208, %210 : vector<6x6x5xf32>
    %cst_127 = arith.constant dense<0.000000e+00> : vector<6x5xf32>
    %212 = vector.multi_reduction <add>, %211, %cst_127 [1] : vector<6x6x5xf32> to vector<6x5xf32>
    %cst_128 = arith.constant dense<0.000000e+00> : vector<6x5xf32>
    %213 = tpu.matmul %212, %175, %cst_128 {dimension_numbers = #tpu.dot_dimension_numbers<[1], [0], [0], [1], [0, 0, 1, 1], [], []>} : vector<6x5xf32>, vector<5x5xf32>, vector<6x5xf32> -> vector<6x5xf32>
    %214 = vector.broadcast %177 : vector<1x5xf32> to vector<6x5xf32>
    %215 = arith.addf %213, %214 : vector<6x5xf32>
    %216 = arith.addf %169, %215 : vector<6x5xf32>
    %cst_129 = arith.constant dense<0.000000e+00> : vector<6x2048xf32>
    %217 = tpu.matmul %216, %179, %cst_129 {dimension_numbers = #tpu.dot_dimension_numbers<[1], [0], [0], [1], [0, 0, 1, 1], [], []>} : vector<6x5xf32>, vector<5x2048xf32>, vector<6x2048xf32> -> vector<6x2048xf32>
    %218 = vector.broadcast %181 : vector<1x2048xf32> to vector<6x2048xf32>
    %219 = arith.addf %217, %218 : vector<6x2048xf32>
    %cst_130 = arith.constant 0.000000e+00 : f32
    %220 = vector.broadcast %cst_130 : f32 to vector<6x2048xf32>
    %221 = arith.maximumf %219, %220 : vector<6x2048xf32>
    %cst_131 = arith.constant dense<0.000000e+00> : vector<6x5xf32>
    %222 = tpu.matmul %221, %183, %cst_131 {dimension_numbers = #tpu.dot_dimension_numbers<[1], [1], [0], [0], [0, 0, 1, 0], [], []>} : vector<6x2048xf32>, vector<5x2048xf32>, vector<6x5xf32> -> vector<6x5xf32>
    %223 = vector.broadcast %185 : vector<1x5xf32> to vector<6x5xf32>
    %224 = arith.addf %222, %223 : vector<6x5xf32>
    %225 = arith.addf %216, %224 : vector<6x5xf32>
    %c4 = arith.constant 4 : index
    %c0_132 = arith.constant 0 : index
    %c0_133 = arith.constant 0 : index
    %226 = vector.load %arg2[%c4, %c0_132, %c0_133] : memref<6x5x15xf32, #tpu.memory_space<vmem>>, vector<1x5x15xf32>
    %227 = vector.shape_cast %226 : vector<1x5x15xf32> to vector<5x15xf32>
    %c4_134 = arith.constant 4 : index
    %c0_135 = arith.constant 0 : index
    %c0_136 = arith.constant 0 : index
    %228 = vector.load %arg3[%c4_134, %c0_135, %c0_136] : memref<6x1x15xf32, #tpu.memory_space<vmem>>, vector<1x1x15xf32>
    %229 = vector.shape_cast %228 : vector<1x1x15xf32> to vector<1x15xf32>
    %c4_137 = arith.constant 4 : index
    %c0_138 = arith.constant 0 : index
    %c0_139 = arith.constant 0 : index
    %230 = vector.load %arg4[%c4_137, %c0_138, %c0_139] : memref<6x5x5xf32, #tpu.memory_space<vmem>>, vector<1x5x5xf32>
    %231 = vector.shape_cast %230 : vector<1x5x5xf32> to vector<5x5xf32>
    %c4_140 = arith.constant 4 : index
    %c0_141 = arith.constant 0 : index
    %c0_142 = arith.constant 0 : index
    %232 = vector.load %arg5[%c4_140, %c0_141, %c0_142] : memref<6x1x5xf32, #tpu.memory_space<vmem>>, vector<1x1x5xf32>
    %233 = vector.shape_cast %232 : vector<1x1x5xf32> to vector<1x5xf32>
    %c4_143 = arith.constant 4 : index
    %c0_144 = arith.constant 0 : index
    %c0_145 = arith.constant 0 : index
    %234 = vector.load %arg6[%c4_143, %c0_144, %c0_145] : memref<6x5x2048xf32, #tpu.memory_space<vmem>>, vector<1x5x2048xf32>
    %235 = vector.shape_cast %234 : vector<1x5x2048xf32> to vector<5x2048xf32>
    %c4_146 = arith.constant 4 : index
    %c0_147 = arith.constant 0 : index
    %c0_148 = arith.constant 0 : index
    %236 = vector.load %arg7[%c4_146, %c0_147, %c0_148] : memref<6x1x2048xf32, #tpu.memory_space<vmem>>, vector<1x1x2048xf32>
    %237 = vector.shape_cast %236 : vector<1x1x2048xf32> to vector<1x2048xf32>
    %c4_149 = arith.constant 4 : index
    %c0_150 = arith.constant 0 : index
    %c0_151 = arith.constant 0 : index
    %238 = vector.load %arg8[%c4_149, %c0_150, %c0_151] : memref<6x5x2048xf32, #tpu.memory_space<vmem>>, vector<1x5x2048xf32>
    %239 = vector.shape_cast %238 : vector<1x5x2048xf32> to vector<5x2048xf32>
    %c4_152 = arith.constant 4 : index
    %c0_153 = arith.constant 0 : index
    %c0_154 = arith.constant 0 : index
    %240 = vector.load %arg9[%c4_152, %c0_153, %c0_154] : memref<6x1x5xf32, #tpu.memory_space<vmem>>, vector<1x1x5xf32>
    %241 = vector.shape_cast %240 : vector<1x1x5xf32> to vector<1x5xf32>
    %cst_155 = arith.constant dense<0.000000e+00> : vector<6x15xf32>
    %242 = tpu.matmul %225, %227, %cst_155 {dimension_numbers = #tpu.dot_dimension_numbers<[1], [0], [0], [1], [0, 0, 1, 1], [], []>} : vector<6x5xf32>, vector<5x15xf32>, vector<6x15xf32> -> vector<6x15xf32>
    %243 = vector.broadcast %229 : vector<1x15xf32> to vector<6x15xf32>
    %244 = arith.addf %242, %243 : vector<6x15xf32>
    %245 = vector.extract_strided_slice %244 {offsets = [0, 0], sizes = [6, 5], strides = [1, 1]} : vector<6x15xf32> to vector<6x5xf32>
    %246 = vector.extract_strided_slice %244 {offsets = [0, 5], sizes = [6, 5], strides = [1, 1]} : vector<6x15xf32> to vector<6x5xf32>
    %247 = vector.extract_strided_slice %244 {offsets = [0, 10], sizes = [6, 5], strides = [1, 1]} : vector<6x15xf32> to vector<6x5xf32>
    %248 = vector.shape_cast %245 : vector<6x5xf32> to vector<6x1x5xf32>
    %249 = vector.shape_cast %246 : vector<6x5xf32> to vector<1x6x5xf32>
    %250 = vector.broadcast %248 : vector<6x1x5xf32> to vector<6x6x5xf32>
    %251 = vector.broadcast %249 : vector<1x6x5xf32> to vector<6x6x5xf32>
    %252 = arith.mulf %250, %251 : vector<6x6x5xf32>
    %cst_156 = arith.constant 0.44721359 : f32
    %253 = vector.broadcast %cst_156 : f32 to vector<6x6x5xf32>
    %254 = arith.mulf %252, %253 : vector<6x6x5xf32>
    %255 = arith.addf %254, %1 : vector<6x6x5xf32>
    %cst_157 = arith.constant dense<0xFF800000> : vector<6x5xf32>
    %256 = vector.multi_reduction <maximumf>, %255, %cst_157 [1] : vector<6x6x5xf32> to vector<6x5xf32>
    %257 = vector.shape_cast %256 : vector<6x5xf32> to vector<6x1x5xf32>
    %258 = vector.broadcast %257 : vector<6x1x5xf32> to vector<6x6x5xf32>
    %259 = arith.subf %255, %258 : vector<6x6x5xf32>
    %260 = math.exp %259 : vector<6x6x5xf32>
    %cst_158 = arith.constant dense<0.000000e+00> : vector<6x5xf32>
    %261 = vector.multi_reduction <add>, %260, %cst_158 [1] : vector<6x6x5xf32> to vector<6x5xf32>
    %262 = vector.shape_cast %261 : vector<6x5xf32> to vector<6x1x5xf32>
    %263 = vector.broadcast %262 : vector<6x1x5xf32> to vector<6x6x5xf32>
    %264 = arith.divf %260, %263 : vector<6x6x5xf32>
    %265 = vector.shape_cast %247 : vector<6x5xf32> to vector<1x6x5xf32>
    %266 = vector.broadcast %265 : vector<1x6x5xf32> to vector<6x6x5xf32>
    %267 = arith.mulf %264, %266 : vector<6x6x5xf32>
    %cst_159 = arith.constant dense<0.000000e+00> : vector<6x5xf32>
    %268 = vector.multi_reduction <add>, %267, %cst_159 [1] : vector<6x6x5xf32> to vector<6x5xf32>
    %cst_160 = arith.constant dense<0.000000e+00> : vector<6x5xf32>
    %269 = tpu.matmul %268, %231, %cst_160 {dimension_numbers = #tpu.dot_dimension_numbers<[1], [0], [0], [1], [0, 0, 1, 1], [], []>} : vector<6x5xf32>, vector<5x5xf32>, vector<6x5xf32> -> vector<6x5xf32>
    %270 = vector.broadcast %233 : vector<1x5xf32> to vector<6x5xf32>
    %271 = arith.addf %269, %270 : vector<6x5xf32>
    %272 = arith.addf %225, %271 : vector<6x5xf32>
    %cst_161 = arith.constant dense<0.000000e+00> : vector<6x2048xf32>
    %273 = tpu.matmul %272, %235, %cst_161 {dimension_numbers = #tpu.dot_dimension_numbers<[1], [0], [0], [1], [0, 0, 1, 1], [], []>} : vector<6x5xf32>, vector<5x2048xf32>, vector<6x2048xf32> -> vector<6x2048xf32>
    %274 = vector.broadcast %237 : vector<1x2048xf32> to vector<6x2048xf32>
    %275 = arith.addf %273, %274 : vector<6x2048xf32>
    %cst_162 = arith.constant 0.000000e+00 : f32
    %276 = vector.broadcast %cst_162 : f32 to vector<6x2048xf32>
    %277 = arith.maximumf %275, %276 : vector<6x2048xf32>
    %cst_163 = arith.constant dense<0.000000e+00> : vector<6x5xf32>
    %278 = tpu.matmul %277, %239, %cst_163 {dimension_numbers = #tpu.dot_dimension_numbers<[1], [1], [0], [0], [0, 0, 1, 0], [], []>} : vector<6x2048xf32>, vector<5x2048xf32>, vector<6x5xf32> -> vector<6x5xf32>
    %279 = vector.broadcast %241 : vector<1x5xf32> to vector<6x5xf32>
    %280 = arith.addf %278, %279 : vector<6x5xf32>
    %281 = arith.addf %272, %280 : vector<6x5xf32>
    %c5 = arith.constant 5 : index
    %c0_164 = arith.constant 0 : index
    %c0_165 = arith.constant 0 : index
    %282 = vector.load %arg2[%c5, %c0_164, %c0_165] : memref<6x5x15xf32, #tpu.memory_space<vmem>>, vector<1x5x15xf32>
    %283 = vector.shape_cast %282 : vector<1x5x15xf32> to vector<5x15xf32>
    %c5_166 = arith.constant 5 : index
    %c0_167 = arith.constant 0 : index
    %c0_168 = arith.constant 0 : index
    %284 = vector.load %arg3[%c5_166, %c0_167, %c0_168] : memref<6x1x15xf32, #tpu.memory_space<vmem>>, vector<1x1x15xf32>
    %285 = vector.shape_cast %284 : vector<1x1x15xf32> to vector<1x15xf32>
    %c5_169 = arith.constant 5 : index
    %c0_170 = arith.constant 0 : index
    %c0_171 = arith.constant 0 : index
    %286 = vector.load %arg4[%c5_169, %c0_170, %c0_171] : memref<6x5x5xf32, #tpu.memory_space<vmem>>, vector<1x5x5xf32>
    %287 = vector.shape_cast %286 : vector<1x5x5xf32> to vector<5x5xf32>
    %c5_172 = arith.constant 5 : index
    %c0_173 = arith.constant 0 : index
    %c0_174 = arith.constant 0 : index
    %288 = vector.load %arg5[%c5_172, %c0_173, %c0_174] : memref<6x1x5xf32, #tpu.memory_space<vmem>>, vector<1x1x5xf32>
    %289 = vector.shape_cast %288 : vector<1x1x5xf32> to vector<1x5xf32>
    %c5_175 = arith.constant 5 : index
    %c0_176 = arith.constant 0 : index
    %c0_177 = arith.constant 0 : index
    %290 = vector.load %arg6[%c5_175, %c0_176, %c0_177] : memref<6x5x2048xf32, #tpu.memory_space<vmem>>, vector<1x5x2048xf32>
    %291 = vector.shape_cast %290 : vector<1x5x2048xf32> to vector<5x2048xf32>
    %c5_178 = arith.constant 5 : index
    %c0_179 = arith.constant 0 : index
    %c0_180 = arith.constant 0 : index
    %292 = vector.load %arg7[%c5_178, %c0_179, %c0_180] : memref<6x1x2048xf32, #tpu.memory_space<vmem>>, vector<1x1x2048xf32>
    %293 = vector.shape_cast %292 : vector<1x1x2048xf32> to vector<1x2048xf32>
    %c5_181 = arith.constant 5 : index
    %c0_182 = arith.constant 0 : index
    %c0_183 = arith.constant 0 : index
    %294 = vector.load %arg8[%c5_181, %c0_182, %c0_183] : memref<6x5x2048xf32, #tpu.memory_space<vmem>>, vector<1x5x2048xf32>
    %295 = vector.shape_cast %294 : vector<1x5x2048xf32> to vector<5x2048xf32>
    %c5_184 = arith.constant 5 : index
    %c0_185 = arith.constant 0 : index
    %c0_186 = arith.constant 0 : index
    %296 = vector.load %arg9[%c5_184, %c0_185, %c0_186] : memref<6x1x5xf32, #tpu.memory_space<vmem>>, vector<1x1x5xf32>
    %297 = vector.shape_cast %296 : vector<1x1x5xf32> to vector<1x5xf32>
    %cst_187 = arith.constant dense<0.000000e+00> : vector<6x15xf32>
    %298 = tpu.matmul %281, %283, %cst_187 {dimension_numbers = #tpu.dot_dimension_numbers<[1], [0], [0], [1], [0, 0, 1, 1], [], []>} : vector<6x5xf32>, vector<5x15xf32>, vector<6x15xf32> -> vector<6x15xf32>
    %299 = vector.broadcast %285 : vector<1x15xf32> to vector<6x15xf32>
    %300 = arith.addf %298, %299 : vector<6x15xf32>
    %301 = vector.extract_strided_slice %300 {offsets = [0, 0], sizes = [6, 5], strides = [1, 1]} : vector<6x15xf32> to vector<6x5xf32>
    %302 = vector.extract_strided_slice %300 {offsets = [0, 5], sizes = [6, 5], strides = [1, 1]} : vector<6x15xf32> to vector<6x5xf32>
    %303 = vector.extract_strided_slice %300 {offsets = [0, 10], sizes = [6, 5], strides = [1, 1]} : vector<6x15xf32> to vector<6x5xf32>
    %304 = vector.shape_cast %301 : vector<6x5xf32> to vector<6x1x5xf32>
    %305 = vector.shape_cast %302 : vector<6x5xf32> to vector<1x6x5xf32>
    %306 = vector.broadcast %304 : vector<6x1x5xf32> to vector<6x6x5xf32>
    %307 = vector.broadcast %305 : vector<1x6x5xf32> to vector<6x6x5xf32>
    %308 = arith.mulf %306, %307 : vector<6x6x5xf32>
    %cst_188 = arith.constant 0.44721359 : f32
    %309 = vector.broadcast %cst_188 : f32 to vector<6x6x5xf32>
    %310 = arith.mulf %308, %309 : vector<6x6x5xf32>
    %311 = arith.addf %310, %1 : vector<6x6x5xf32>
    %cst_189 = arith.constant dense<0xFF800000> : vector<6x5xf32>
    %312 = vector.multi_reduction <maximumf>, %311, %cst_189 [1] : vector<6x6x5xf32> to vector<6x5xf32>
    %313 = vector.shape_cast %312 : vector<6x5xf32> to vector<6x1x5xf32>
    %314 = vector.broadcast %313 : vector<6x1x5xf32> to vector<6x6x5xf32>
    %315 = arith.subf %311, %314 : vector<6x6x5xf32>
    %316 = math.exp %315 : vector<6x6x5xf32>
    %cst_190 = arith.constant dense<0.000000e+00> : vector<6x5xf32>
    %317 = vector.multi_reduction <add>, %316, %cst_190 [1] : vector<6x6x5xf32> to vector<6x5xf32>
    %318 = vector.shape_cast %317 : vector<6x5xf32> to vector<6x1x5xf32>
    %319 = vector.broadcast %318 : vector<6x1x5xf32> to vector<6x6x5xf32>
    %320 = arith.divf %316, %319 : vector<6x6x5xf32>
    %321 = vector.shape_cast %303 : vector<6x5xf32> to vector<1x6x5xf32>
    %322 = vector.broadcast %321 : vector<1x6x5xf32> to vector<6x6x5xf32>
    %323 = arith.mulf %320, %322 : vector<6x6x5xf32>
    %cst_191 = arith.constant dense<0.000000e+00> : vector<6x5xf32>
    %324 = vector.multi_reduction <add>, %323, %cst_191 [1] : vector<6x6x5xf32> to vector<6x5xf32>
    %cst_192 = arith.constant dense<0.000000e+00> : vector<6x5xf32>
    %325 = tpu.matmul %324, %287, %cst_192 {dimension_numbers = #tpu.dot_dimension_numbers<[1], [0], [0], [1], [0, 0, 1, 1], [], []>} : vector<6x5xf32>, vector<5x5xf32>, vector<6x5xf32> -> vector<6x5xf32>
    %326 = vector.broadcast %289 : vector<1x5xf32> to vector<6x5xf32>
    %327 = arith.addf %325, %326 : vector<6x5xf32>
    %328 = arith.addf %281, %327 : vector<6x5xf32>
    %cst_193 = arith.constant dense<0.000000e+00> : vector<6x2048xf32>
    %329 = tpu.matmul %328, %291, %cst_193 {dimension_numbers = #tpu.dot_dimension_numbers<[1], [0], [0], [1], [0, 0, 1, 1], [], []>} : vector<6x5xf32>, vector<5x2048xf32>, vector<6x2048xf32> -> vector<6x2048xf32>
    %330 = vector.broadcast %293 : vector<1x2048xf32> to vector<6x2048xf32>
    %331 = arith.addf %329, %330 : vector<6x2048xf32>
    %cst_194 = arith.constant 0.000000e+00 : f32
    %332 = vector.broadcast %cst_194 : f32 to vector<6x2048xf32>
    %333 = arith.maximumf %331, %332 : vector<6x2048xf32>
    %cst_195 = arith.constant dense<0.000000e+00> : vector<6x5xf32>
    %334 = tpu.matmul %333, %295, %cst_195 {dimension_numbers = #tpu.dot_dimension_numbers<[1], [1], [0], [0], [0, 0, 1, 0], [], []>} : vector<6x2048xf32>, vector<5x2048xf32>, vector<6x5xf32> -> vector<6x5xf32>
    %335 = vector.broadcast %297 : vector<1x5xf32> to vector<6x5xf32>
    %336 = arith.addf %334, %335 : vector<6x5xf32>
    %337 = arith.addf %328, %336 : vector<6x5xf32>
    %c0_196 = arith.constant 0 : index
    %c0_197 = arith.constant 0 : index
    %338 = vector.load %arg10[%c0_196, %c0_197] : memref<6x5xf32, #tpu.memory_space<vmem>>, vector<6x5xf32>
    tpu.vector_store %arg10[%c0_196, %c0_197], %337 {strides = array<i32>} : memref<6x5xf32, #tpu.memory_space<vmem>>, vector<6x5xf32>,
    return
  }
}

</mosaic_0001>

<llo_original>
// kernel: transformer_forward.1
$region0: #{transformer_forward.1}
  #allocation0 [shape = 'u32[]', space=smem, size = 0x4, offset = 0x4, fixed_abs, tag = 'smem constant byte address 0x4 - core index']
  #allocation1 [shape = 'u32[72,128]{1,0:T(1,128)}', space=vmem, size = 0x9000, scoped, tag = 'internal scratch']
  %s0 = inlined_call_operand.vmem [shape: f32[6,5], index: 0, kind: input, shape index: {}]
  %s1 = inlined_call_operand.vmem [shape: f32[6,6,5], index: 1, kind: input, shape index: {}]
  %s2 = inlined_call_operand.vmem [shape: f32[6,5,15], index: 2, kind: input, shape index: {}]
  %s3 = inlined_call_operand.vmem [shape: f32[6,1,15], index: 3, kind: input, shape index: {}]
  %s4 = inlined_call_operand.vmem [shape: f32[6,5,5], index: 4, kind: input, shape index: {}]
  %s5 = inlined_call_operand.vmem [shape: f32[6,1,5], index: 5, kind: input, shape index: {}]
  %s6 = inlined_call_operand.vmem [shape: f32[6,5,2048], index: 6, kind: input, shape index: {}]
  %s7 = inlined_call_operand.vmem [shape: f32[6,1,2048], index: 7, kind: input, shape index: {}]
  %s8 = inlined_call_operand.vmem [shape: f32[6,5,2048], index: 8, kind: input, shape index: {}]
  %s9 = inlined_call_operand.vmem [shape: f32[6,1,5], index: 9, kind: input, shape index: {}]
  %s10 = inlined_call_operand.vmem [shape: f32[6,5], index: 10, kind: output, shape index: {}]
  %s11 = sld [smem:[#allocation0]]
  $region50: #{transformer_forward.1} parent=0
    _
  %s13 = ssub.s32 1, %s11
  %s14 = scalar_select 0, %s13, %s11
  // Predicated region
  $region2: #{transformer_forward.1} parent=0 // pred_check
    _
  $region3: #{transformer_forward.1} parent=0 // pred_check_branch
    %16 = sbr.rel (0) target = $region5
  $region4: #{transformer_forward.1} parent=0 // pred_region
    _
  $region5: #{transformer_forward.1} parent=0 // pred_fallthru
    _
  // Predicated region
  $region6: #{transformer_forward.1} parent=0 // pred_check
    _
  $region7: #{transformer_forward.1} parent=0 // pred_check_branch
    %18 = sbr.rel (0) target = $region9
  $region8: #{transformer_forward.1} parent=0 // pred_region
    _
  $region9: #{transformer_forward.1} parent=0 // pred_fallthru
    _
  // Predicated region
  $region10: #{transformer_forward.1} parent=0 // pred_check
    _
  $region11: #{transformer_forward.1} parent=0 // pred_check_branch
    %20 = sbr.rel (0) target = $region13
  $region12: #{transformer_forward.1} parent=0 // pred_region
    _
  $region13: #{transformer_forward.1} parent=0 // pred_fallthru
    _
  // Predicated region
  $region14: #{transformer_forward.1} parent=0 // pred_check
    _
  $region15: #{transformer_forward.1} parent=0 // pred_check_branch
    %22 = sbr.rel (0) target = $region17
  $region16: #{transformer_forward.1} parent=0 // pred_region
    _
  $region17: #{transformer_forward.1} parent=0 // pred_fallthru
    _
  // Predicated region
  $region18: #{transformer_forward.1} parent=0 // pred_check
    _
  $region19: #{transformer_forward.1} parent=0 // pred_check_branch
    %24 = sbr.rel (0) target = $region21
  $region20: #{transformer_forward.1} parent=0 // pred_region
    _
  $region21: #{transformer_forward.1} parent=0 // pred_fallthru
    _
  // Predicated region
  $region22: #{transformer_forward.1} parent=0 // pred_check
    _
  $region23: #{transformer_forward.1} parent=0 // pred_check_branch
    %26 = sbr.rel (0) target = $region25
  $region24: #{transformer_forward.1} parent=0 // pred_region
    _
  $region25: #{transformer_forward.1} parent=0 // pred_fallthru
    _
  // Predicated region
  $region26: #{transformer_forward.1} parent=0 // pred_check
    _
  $region27: #{transformer_forward.1} parent=0 // pred_check_branch
    %28 = sbr.rel (0) target = $region29
  $region28: #{transformer_forward.1} parent=0 // pred_region
    _
  $region29: #{transformer_forward.1} parent=0 // pred_fallthru
    _
  // Predicated region
  $region30: #{transformer_forward.1} parent=0 // pred_check
    _
  $region31: #{transformer_forward.1} parent=0 // pred_check_branch
    %30 = sbr.rel (0) target = $region33
  $region32: #{transformer_forward.1} parent=0 // pred_region
    _
  $region33: #{transformer_forward.1} parent=0 // pred_fallthru
    _
  // Predicated region
  $region34: #{transformer_forward.1} parent=0 // pred_check
    _
  $region35: #{transformer_forward.1} parent=0 // pred_check_branch
    %32 = sbr.rel (0) target = $region37
  $region36: #{transformer_forward.1} parent=0 // pred_region
    _
  $region37: #{transformer_forward.1} parent=0 // pred_fallthru
    _
  // Predicated region
  $region38: #{transformer_forward.1} parent=0 // pred_check
    _
  $region39: #{transformer_forward.1} parent=0 // pred_check_branch
    %34 = sbr.rel (0) target = $region41
  $region40: #{transformer_forward.1} parent=0 // pred_region
    _
  $region41: #{transformer_forward.1} parent=0 // pred_fallthru
    _
  %v35 = vld [vmem:[%s0] sm:$0x3f]
  %v36 = vld [vmem:[%s1] sm:$0x3f]
  %v37 = vld [vmem:[%s1 + $0x8] sm:$0x3f]
  %v38 = vld [vmem:[%s1 + $0x10] sm:$0x3f]
  %v39 = vld [vmem:[%s1 + $0x18] sm:$0x3f]
  %v40 = vld [vmem:[%s1 + $0x20] sm:$0x3f]
  %v41 = vld [vmem:[%s1 + $0x28] sm:$0x3f]
  %v42 = vld [vmem:[%s2] sm:$0x1f]
  %v43 = vld [vmem:[%s3] sm:$0x1]
  %v44 = vld [vmem:[%s4] sm:$0x1f]
  %v45 = vld [vmem:[%s5] sm:$0x1]
  %v46 = vld [vmem:[%s6] sm:$0x1f]
  %v47 = vld [vmem:[%s6 + $0x8] sm:$0x1f]
  %v48 = vld [vmem:[%s6 + $0x10] sm:$0x1f]
  %v49 = vld [vmem:[%s6 + $0x18] sm:$0x1f]
  %v50 = vld [vmem:[%s6 + $0x20] sm:$0x1f]
  %v51 = vld [vmem:[%s6 + $0x28] sm:$0x1f]
  %v52 = vld [vmem:[%s6 + $0x30] sm:$0x1f]
  %v53 = vld [vmem:[%s6 + $0x38] sm:$0x1f]
  %v54 = vld [vmem:[%s6 + $0x40] sm:$0x1f]
  %v55 = vld [vmem:[%s6 + $0x48] sm:$0x1f]
  %v56 = vld [vmem:[%s6 + $0x50] sm:$0x1f]
  %v57 = vld [vmem:[%s6 + $0x58] sm:$0x1f]
  %v58 = vld [vmem:[%s6 + $0x60] sm:$0x1f]
  %v59 = vld [vmem:[%s6 + $0x68] sm:$0x1f]
  %v60 = vld [vmem:[%s6 + $0x70] sm:$0x1f]
  %v61 = vld [vmem:[%s6 + $0x78] sm:$0x1f]
  %v62 = vld [vmem:[%s7] sm:$0xff]
  %v63 = vld [vmem:[%s7 + $0x8] sm:$0xff]
  %v64 = vld [vmem:[%s8] sm:$0x1f]
  %v65 = vld [vmem:[%s8 + $0x8] sm:$0x1f]
  %v66 = vld [vmem:[%s8 + $0x10] sm:$0x1f]
  %v67 = vld [vmem:[%s8 + $0x18] sm:$0x1f]
  %v68 = vld [vmem:[%s8 + $0x20] sm:$0x1f]
  %v69 = vld [vmem:[%s8 + $0x28] sm:$0x1f]
  %v70 = vld [vmem:[%s8 + $0x30] sm:$0x1f]
  %v71 = vld [vmem:[%s8 + $0x38] sm:$0x1f]
  %v72 = vld [vmem:[%s8 + $0x40] sm:$0x1f]
  %v73 = vld [vmem:[%s8 + $0x48] sm:$0x1f]
  %v74 = vld [vmem:[%s8 + $0x50] sm:$0x1f]
  %v75 = vld [vmem:[%s8 + $0x58] sm:$0x1f]
  %v76 = vld [vmem:[%s8 + $0x60] sm:$0x1f]
  %v77 = vld [vmem:[%s8 + $0x68] sm:$0x1f]
  %v78 = vld [vmem:[%s8 + $0x70] sm:$0x1f]
  %v79 = vld [vmem:[%s8 + $0x78] sm:$0x1f]
  %v80 = vld [vmem:[%s9] sm:$0x1]
  %v82 = vperm.slane %v43, 0
  %vm84 = vcmask 39936
  %v86 = vsel %vm84, %v35, 0
  %vm88 = vcmask 1044480
  %v90 = vsel %vm88, %v42, 0
  %92 = vmatpush.msra.mxu0 0.0
  %93 = vmatpush.msra.mxu0 0.0
  %94 = vmatpush.msra.mxu0 0.0
  %95 = vmatpush.msra.mxu0 0.0
  %96 = vmatpush.msra.mxu0 0.0
  %97 = vmatpush.msra.mxu0 0.0
  %98 = vmatpush.msra.mxu0 0.0
  %99 = vmatpush.msra.mxu0 0.0
  %100 = vmatpush.msra.mxu0 0.0
  %101 = vmatpush.msra.mxu0 0.0
  %102 = vmatpush.msra.mxu0 0.0
  %103 = vmatpush.msra.mxu0 0.0
  %104 = vmatpush.msra.mxu0 0.0
  %105 = vmatpush.msra.mxu0 0.0
  %106 = vmatpush.msra.mxu0 0.0
  %107 = vmatpush.msra.mxu0 %v90
  %108 = vmatmul.f32.gmra.mxu0 %v86
  %v109 = vpop.f32.mrf.mxu0
  %v110 = vadd.f32 %v82, %v109
  %111 = vdwg.mxu0
  %v113 = vrot.slane %v110, 1
  %v114 = vrot.slane %v110, 2
  %v115 = vrot.slane %v110, 3
  %v116 = vrot.slane %v110, 4
  %v117 = vrot.slane %v110, 5
  %v118 = vperm.slane %v110, 0
  %v119 = vperm.slane %v113, 0
  %v120 = vperm.slane %v114, 0
  %v121 = vperm.slane %v115, 0
  %v122 = vperm.slane %v116, 0
  %v123 = vperm.slane %v117, 0
  %130 = vrot.lane.b32.xlu0 %v110, 123
  %v131 = vpop.permute.xlu0 %130
  %v133 = vmul.f32 %v118, %v131
  %v134 = vmul.f32 %v119, %v131
  %v135 = vmul.f32 %v120, %v131
  %v136 = vmul.f32 %v121, %v131
  %v137 = vmul.f32 %v122, %v131
  %v138 = vmul.f32 %v123, %v131
  %v139 = vmul.f32 %v133, 0.4472136
  %v140 = vmul.f32 %v134, 0.4472136
  %v141 = vmul.f32 %v135, 0.4472136
  %v142 = vmul.f32 %v136, 0.4472136
  %v143 = vmul.f32 %v137, 0.4472136
  %v144 = vmul.f32 %v138, 0.4472136
  %v145 = vadd.f32 %v139, %v36
  %v146 = vadd.f32 %v140, %v37
  %v147 = vadd.f32 %v141, %v38
  %v148 = vadd.f32 %v142, %v39
  %v149 = vadd.f32 %v143, %v40
  %v150 = vadd.f32 %v144, %v41
  %vm151 = vcmask 37888
  %v152 = vsel %vm151, %v145, -inf
  %v153 = vrot.slane %v152, 4
  %v154 = vmax.f32 %v152, %v153
  %v155 = vrot.slane %v154, 2
  %v156 = vmax.f32 %v154, %v155
  %v157 = vrot.slane %v156, 1
  %v158 = vmax.f32 %v156, %v157
  %v159 = vsel %vm151, %v146, -inf
  %v160 = vrot.slane %v159, 4
  %v161 = vmax.f32 %v159, %v160
  %v162 = vrot.slane %v161, 2
  %v163 = vmax.f32 %v161, %v162
  %v164 = vrot.slane %v163, 1
  %v165 = vmax.f32 %v163, %v164
  %v166 = vsel %vm151, %v147, -inf
  %v167 = vrot.slane %v166, 4
  %v168 = vmax.f32 %v166, %v167
  %v169 = vrot.slane %v168, 2
  %v170 = vmax.f32 %v168, %v169
  %v171 = vrot.slane %v170, 1
  %v172 = vmax.f32 %v170, %v171
  %v173 = vsel %vm151, %v148, -inf
  %v174 = vrot.slane %v173, 4
  %v175 = vmax.f32 %v173, %v174
  %v176 = vrot.slane %v175, 2
  %v177 = vmax.f32 %v175, %v176
  %v178 = vrot.slane %v177, 1
  %v179 = vmax.f32 %v177, %v178
  %v180 = vsel %vm151, %v149, -inf
  %v181 = vrot.slane %v180, 4
  %v182 = vmax.f32 %v180, %v181
  %v183 = vrot.slane %v182, 2
  %v184 = vmax.f32 %v182, %v183
  %v185 = vrot.slane %v184, 1
  %v186 = vmax.f32 %v184, %v185
  %v187 = vsel %vm151, %v150, -inf
  %v188 = vrot.slane %v187, 4
  %v189 = vmax.f32 %v187, %v188
  %v190 = vrot.slane %v189, 2
  %v191 = vmax.f32 %v189, %v190
  %v192 = vrot.slane %v191, 1
  %v193 = vmax.f32 %v191, %v192
  %v194 = vsub.f32 %v145, %v158
  %v195 = vsub.f32 %v146, %v165
  %v196 = vsub.f32 %v147, %v172
  %v197 = vsub.f32 %v148, %v179
  %v198 = vsub.f32 %v149, %v186
  %v199 = vsub.f32 %v150, %v193
  %v200 = vmul.f32 %v194, 1.442695
  %v201 = vpow.pop %v200
  %v202 = vmul.f32 %v195, 1.442695
  %v203 = vpow.pop %v202
  %v204 = vmul.f32 %v196, 1.442695
  %v205 = vpow.pop %v204
  %v206 = vmul.f32 %v197, 1.442695
  %v207 = vpow.pop %v206
  %v208 = vmul.f32 %v198, 1.442695
  %v209 = vpow.pop %v208
  %v210 = vmul.f32 %v199, 1.442695
  %v211 = vpow.pop %v210
  %v212 = vsel %vm151, %v201, 0.0
  %v213 = vrot.slane %v212, 4
  %v214 = vadd.f32 %v212, %v213
  %v215 = vrot.slane %v214, 2
  %v216 = vadd.f32 %v214, %v215
  %v217 = vrot.slane %v216, 1
  %v218 = vadd.f32 %v216, %v217
  %v219 = vsel %vm151, %v203, 0.0
  %v220 = vrot.slane %v219, 4
  %v221 = vadd.f32 %v219, %v220
  %v222 = vrot.slane %v221, 2
  %v223 = vadd.f32 %v221, %v222
  %v224 = vrot.slane %v223, 1
  %v225 = vadd.f32 %v223, %v224
  %v226 = vsel %vm151, %v205, 0.0
  %v227 = vrot.slane %v226, 4
  %v228 = vadd.f32 %v226, %v227
  %v229 = vrot.slane %v228, 2
  %v230 = vadd.f32 %v228, %v229
  %v231 = vrot.slane %v230, 1
  %v232 = vadd.f32 %v230, %v231
  %v233 = vsel %vm151, %v207, 0.0
  %v234 = vrot.slane %v233, 4
  %v235 = vadd.f32 %v233, %v234
  %v236 = vrot.slane %v235, 2
  %v237 = vadd.f32 %v235, %v236
  %v238 = vrot.slane %v237, 1
  %v239 = vadd.f32 %v237, %v238
  %v240 = vsel %vm151, %v209, 0.0
  %v241 = vrot.slane %v240, 4
  %v242 = vadd.f32 %v240, %v241
  %v243 = vrot.slane %v242, 2
  %v244 = vadd.f32 %v242, %v243
  %v245 = vrot.slane %v244, 1
  %v246 = vadd.f32 %v244, %v245
  %v247 = vsel %vm151, %v211, 0.0
  %v248 = vrot.slane %v247, 4
  %v249 = vadd.f32 %v247, %v248
  %v250 = vrot.slane %v249, 2
  %v251 = vadd.f32 %v249, %v250
  %v252 = vrot.slane %v251, 1
  %v253 = vadd.f32 %v251, %v252
  %v254 = vrcp.pop %v218
  %v255 = vmul.f32 %v218, %v254
  %v256 = vsub.f32 1.0, %v255
  %v257 = vmul.f32 %v254, %v256
  %v258 = vadd.f32 %v254, %v257
  %vm259 = vweird.f32 %v218
  %vm260 = vweird.f32 %v254
  %vm261 = vmor %vm259, %vm260
  %v262 = vsel %vm261, %v254, %v258
  %v263 = vand.u32 2147483647, %v218
  %vm264 = vcmp.eq.f32.partialorder %v263, 8.507059e+37
  %v265 = vand.u32 %v218, 2147483648
  %v266 = vor.u32 1.1754944e-38, %v265
  %v267 = vsel %vm264, %v266, %v262
  %v268 = vmul.f32 %v201, %v267
  %v269 = vrcp.pop %v225
  %v270 = vmul.f32 %v225, %v269
  %v271 = vsub.f32 1.0, %v270
  %v272 = vmul.f32 %v269, %v271
  %v273 = vadd.f32 %v269, %v272
  %vm274 = vweird.f32 %v225
  %vm275 = vweird.f32 %v269
  %vm276 = vmor %vm274, %vm275
  %v277 = vsel %vm276, %v269, %v273
  %v278 = vand.u32 2147483647, %v225
  %vm279 = vcmp.eq.f32.partialorder %v278, 8.507059e+37
  %v280 = vand.u32 %v225, 2147483648
  %v281 = vor.u32 1.1754944e-38, %v280
  %v282 = vsel %vm279, %v281, %v277
  %v283 = vmul.f32 %v203, %v282
  %v284 = vrcp.pop %v232
  %v285 = vmul.f32 %v232, %v284
  %v286 = vsub.f32 1.0, %v285
  %v287 = vmul.f32 %v284, %v286
  %v288 = vadd.f32 %v284, %v287
  %vm289 = vweird.f32 %v232
  %vm290 = vweird.f32 %v284
  %vm291 = vmor %vm289, %vm290
  %v292 = vsel %vm291, %v284, %v288
  %v293 = vand.u32 2147483647, %v232
  %vm294 = vcmp.eq.f32.partialorder %v293, 8.507059e+37
  %v295 = vand.u32 %v232, 2147483648
  %v296 = vor.u32 1.1754944e-38, %v295
  %v297 = vsel %vm294, %v296, %v292
  %v298 = vmul.f32 %v205, %v297
  %v299 = vrcp.pop %v239
  %v300 = vmul.f32 %v239, %v299
  %v301 = vsub.f32 1.0, %v300
  %v302 = vmul.f32 %v299, %v301
  %v303 = vadd.f32 %v299, %v302
  %vm304 = vweird.f32 %v239
  %vm305 = vweird.f32 %v299
  %vm306 = vmor %vm304, %vm305
  %v307 = vsel %vm306, %v299, %v303
  %v308 = vand.u32 2147483647, %v239
  %vm309 = vcmp.eq.f32.partialorder %v308, 8.507059e+37
  %v310 = vand.u32 %v239, 2147483648
  %v311 = vor.u32 1.1754944e-38, %v310
  %v312 = vsel %vm309, %v311, %v307
  %v313 = vmul.f32 %v207, %v312
  %v314 = vrcp.pop %v246
  %v315 = vmul.f32 %v246, %v314
  %v316 = vsub.f32 1.0, %v315
  %v317 = vmul.f32 %v314, %v316
  %v318 = vadd.f32 %v314, %v317
  %vm319 = vweird.f32 %v246
  %vm320 = vweird.f32 %v314
  %vm321 = vmor %vm319, %vm320
  %v322 = vsel %vm321, %v314, %v318
  %v323 = vand.u32 2147483647, %v246
  %vm324 = vcmp.eq.f32.partialorder %v323, 8.507059e+37
  %v325 = vand.u32 %v246, 2147483648
  %v326 = vor.u32 1.1754944e-38, %v325
  %v327 = vsel %vm324, %v326, %v322
  %v328 = vmul.f32 %v209, %v327
  %v329 = vrcp.pop %v253
  %v330 = vmul.f32 %v253, %v329
  %v331 = vsub.f32 1.0, %v330
  %v332 = vmul.f32 %v329, %v331
  %v333 = vadd.f32 %v329, %v332
  %vm334 = vweird.f32 %v253
  %vm335 = vweird.f32 %v329
  %vm336 = vmor %vm334, %vm335
  %v337 = vsel %vm336, %v329, %v333
  %v338 = vand.u32 2147483647, %v253
  %vm339 = vcmp.eq.f32.partialorder %v338, 8.507059e+37
  %v340 = vand.u32 %v253, 2147483648
  %v341 = vor.u32 1.1754944e-38, %v340
  %v342 = vsel %vm339, %v341, %v337
  %v343 = vmul.f32 %v211, %v342
  %344 = vrot.lane.b32.xlu0 %v110, 118
  %v345 = vpop.permute.xlu0 %344
  %v347 = vmul.f32 %v268, %v345
  %v348 = vmul.f32 %v283, %v345
  %v349 = vmul.f32 %v298, %v345
  %v350 = vmul.f32 %v313, %v345
  %v351 = vmul.f32 %v328, %v345
  %v352 = vmul.f32 %v343, %v345
  %v353 = vsel %vm151, %v347, 0.0
  %v354 = vrot.slane %v353, 4
  %v355 = vadd.f32 %v353, %v354
  %v356 = vrot.slane %v355, 2
  %v357 = vadd.f32 %v355, %v356
  %v358 = vrot.slane %v357, 1
  %v359 = vadd.f32 %v357, %v358
  %v360 = vsel %vm151, %v348, 0.0
  %v361 = vrot.slane %v360, 4
  %v362 = vadd.f32 %v360, %v361
  %v363 = vrot.slane %v362, 2
  %v364 = vadd.f32 %v362, %v363
  %v365 = vrot.slane %v364, 1
  %v366 = vadd.f32 %v364, %v365
  %v367 = vsel %vm151, %v349, 0.0
  %v368 = vrot.slane %v367, 4
  %v369 = vadd.f32 %v367, %v368
  %v370 = vrot.slane %v369, 2
  %v371 = vadd.f32 %v369, %v370
  %v372 = vrot.slane %v371, 1
  %v373 = vadd.f32 %v371, %v372
  %v374 = vsel %vm151, %v350, 0.0
  %v375 = vrot.slane %v374, 4
  %v376 = vadd.f32 %v374, %v375
  %v377 = vrot.slane %v376, 2
  %v378 = vadd.f32 %v376, %v377
  %v379 = vrot.slane %v378, 1
  %v380 = vadd.f32 %v378, %v379
  %v381 = vsel %vm151, %v351, 0.0
  %v382 = vrot.slane %v381, 4
  %v383 = vadd.f32 %v381, %v382
  %v384 = vrot.slane %v383, 2
  %v385 = vadd.f32 %v383, %v384
  %v386 = vrot.slane %v385, 1
  %v387 = vadd.f32 %v385, %v386
  %v388 = vsel %vm151, %v352, 0.0
  %v389 = vrot.slane %v388, 4
  %v390 = vadd.f32 %v388, %v389
  %v391 = vrot.slane %v390, 2
  %v392 = vadd.f32 %v390, %v391
  %v393 = vrot.slane %v392, 1
  %v394 = vadd.f32 %v392, %v393
  %v396 = vperm.slane %v45, 0
  %vm404 = vcmask 1041409
  %v405 = vsel %vm404, %v366, %v359
  %vm406 = vcmask 1042434
  %v407 = vsel %vm406, %v373, %v405
  %vm408 = vcmask 1043459
  %v409 = vsel %vm408, %v380, %v407
  %vm410 = vcmask 1044484
  %v411 = vsel %vm410, %v387, %v409
  %vm412 = vcmask 1045509
  %v413 = vsel %vm412, %v394, %v411
  %v414 = vsel %vm84, %v413, 0
  %v417 = vsel %vm88, %v44, 0
  %419 = vmatpush.msra.mxu0 0.0
  %420 = vmatpush.msra.mxu0 0.0
  %421 = vmatpush.msra.mxu0 0.0
  %422 = vmatpush.msra.mxu0 0.0
  %423 = vmatpush.msra.mxu0 0.0
  %424 = vmatpush.msra.mxu0 0.0
  %425 = vmatpush.msra.mxu0 0.0
  %426 = vmatpush.msra.mxu0 0.0
  %427 = vmatpush.msra.mxu0 0.0
  %428 = vmatpush.msra.mxu0 0.0
  %429 = vmatpush.msra.mxu0 0.0
  %430 = vmatpush.msra.mxu0 0.0
  %431 = vmatpush.msra.mxu0 0.0
  %432 = vmatpush.msra.mxu0 0.0
  %433 = vmatpush.msra.mxu0 0.0
  %434 = vmatpush.msra.mxu0 %v417
  %435 = vmatmul.f32.gmra.mxu0 %v414
  %v436 = vpop.f32.mrf.mxu0
  %v437 = vadd.f32 %v396, %v436
  %438 = vdwg.mxu0
  %v439 = vadd.f32 %v35, %v437
  %v442 = vperm.slane %v62, 0
  %v443 = vperm.slane %v62, 1
  %v444 = vperm.slane %v62, 2
  %v445 = vperm.slane %v62, 3
  %v446 = vperm.slane %v62, 4
  %v447 = vperm.slane %v62, 5
  %v448 = vperm.slane %v62, 6
  %v449 = vperm.slane %v62, 7
  %v450 = vperm.slane %v63, 0
  %v451 = vperm.slane %v63, 1
  %v452 = vperm.slane %v63, 2
  %v453 = vperm.slane %v63, 3
  %v454 = vperm.slane %v63, 4
  %v455 = vperm.slane %v63, 5
  %v456 = vperm.slane %v63, 6
  %v457 = vperm.slane %v63, 7
  %v475 = vsel %vm84, %v439, 0
  %v478 = vsel %vm88, %v46, 0
  %v481 = vsel %vm88, %v47, 0
  %v484 = vsel %vm88, %v48, 0
  %v487 = vsel %vm88, %v49, 0
  %v490 = vsel %vm88, %v50, 0
  %v493 = vsel %vm88, %v51, 0
  %v496 = vsel %vm88, %v52, 0
  %v499 = vsel %vm88, %v53, 0
  %v502 = vsel %vm88, %v54, 0
  %v505 = vsel %vm88, %v55, 0
  %v508 = vsel %vm88, %v56, 0
  %v511 = vsel %vm88, %v57, 0
  %v514 = vsel %vm88, %v58, 0
  %v517 = vsel %vm88, %v59, 0
  %v520 = vsel %vm88, %v60, 0
  %v523 = vsel %vm88, %v61, 0
  %525 = vmatpush.msra.mxu0 0.0
  %526 = vmatpush.msra.mxu0 0.0
  %527 = vmatpush.msra.mxu0 0.0
  %528 = vmatpush.msra.mxu0 0.0
  %529 = vmatpush.msra.mxu0 0.0
  %530 = vmatpush.msra.mxu0 0.0
  %531 = vmatpush.msra.mxu0 0.0
  %532 = vmatpush.msra.mxu0 0.0
  %533 = vmatpush.msra.mxu0 0.0
  %534 = vmatpush.msra.mxu0 0.0
  %535 = vmatpush.msra.mxu0 0.0
  %536 = vmatpush.msra.mxu0 0.0
  %537 = vmatpush.msra.mxu0 0.0
  %538 = vmatpush.msra.mxu0 0.0
  %539 = vmatpush.msra.mxu0 0.0
  %540 = vmatpush.msra.mxu0 %v478
  %541 = vmatmul.f32.gmra.mxu0 %v475
  %v542 = vpop.f32.mrf.mxu0
  %v543 = vadd.f32 %v442, %v542
  %544 = vdwg.mxu0
  %545 = vmatpush.msra.mxu0 0.0
  %546 = vmatpush.msra.mxu0 0.0
  %547 = vmatpush.msra.mxu0 0.0
  %548 = vmatpush.msra.mxu0 0.0
  %549 = vmatpush.msra.mxu0 0.0
  %550 = vmatpush.msra.mxu0 0.0
  %551 = vmatpush.msra.mxu0 0.0
  %552 = vmatpush.msra.mxu0 0.0
  %553 = vmatpush.msra.mxu0 0.0
  %554 = vmatpush.msra.mxu0 0.0
  %555 = vmatpush.msra.mxu0 0.0
  %556 = vmatpush.msra.mxu0 0.0
  %557 = vmatpush.msra.mxu0 0.0
  %558 = vmatpush.msra.mxu0 0.0
  %559 = vmatpush.msra.mxu0 0.0
  %560 = vmatpush.msra.mxu0 %v481
  %561 = vmatmul.f32.gmra.mxu0 %v475
  %v562 = vpop.f32.mrf.mxu0
  %v563 = vadd.f32 %v443, %v562
  %564 = vdwg.mxu0
  %565 = vmatpush.msra.mxu0 0.0
  %566 = vmatpush.msra.mxu0 0.0
  %567 = vmatpush.msra.mxu0 0.0
  %568 = vmatpush.msra.mxu0 0.0
  %569 = vmatpush.msra.mxu0 0.0
  %570 = vmatpush.msra.mxu0 0.0
  %571 = vmatpush.msra.mxu0 0.0
  %572 = vmatpush.msra.mxu0 0.0
  %573 = vmatpush.msra.mxu0 0.0
  %574 = vmatpush.msra.mxu0 0.0
  %575 = vmatpush.msra.mxu0 0.0
  %576 = vmatpush.msra.mxu0 0.0
  %577 = vmatpush.msra.mxu0 0.0
  %578 = vmatpush.msra.mxu0 0.0
  %579 = vmatpush.msra.mxu0 0.0
  %580 = vmatpush.msra.mxu0 %v484
  %581 = vmatmul.f32.gmra.mxu0 %v475
  %v582 = vpop.f32.mrf.mxu0
  %v583 = vadd.f32 %v444, %v582
  %584 = vdwg.mxu0
  %585 = vmatpush.msra.mxu0 0.0
  %586 = vmatpush.msra.mxu0 0.0
  %587 = vmatpush.msra.mxu0 0.0
  %588 = vmatpush.msra.mxu0 0.0
  %589 = vmatpush.msra.mxu0 0.0
  %590 = vmatpush.msra.mxu0 0.0
  %591 = vmatpush.msra.mxu0 0.0
  %592 = vmatpush.msra.mxu0 0.0
  %593 = vmatpush.msra.mxu0 0.0
  %594 = vmatpush.msra.mxu0 0.0
  %595 = vmatpush.msra.mxu0 0.0
  %596 = vmatpush.msra.mxu0 0.0
  %597 = vmatpush.msra.mxu0 0.0
  %598 = vmatpush.msra.mxu0 0.0
  %599 = vmatpush.msra.mxu0 0.0
  %600 = vmatpush.msra.mxu0 %v487
  %601 = vmatmul.f32.gmra.mxu0 %v475
  %v602 = vpop.f32.mrf.mxu0
  %v603 = vadd.f32 %v445, %v602
  %604 = vdwg.mxu0
  %605 = vmatpush.msra.mxu0 0.0
  %606 = vmatpush.msra.mxu0 0.0
  %607 = vmatpush.msra.mxu0 0.0
  %608 = vmatpush.msra.mxu0 0.0
  %609 = vmatpush.msra.mxu0 0.0
  %610 = vmatpush.msra.mxu0 0.0
  %611 = vmatpush.msra.mxu0 0.0
  %612 = vmatpush.msra.mxu0 0.0
  %613 = vmatpush.msra.mxu0 0.0
  %614 = vmatpush.msra.mxu0 0.0
  %615 = vmatpush.msra.mxu0 0.0
  %616 = vmatpush.msra.mxu0 0.0
  %617 = vmatpush.msra.mxu0 0.0
  %618 = vmatpush.msra.mxu0 0.0
  %619 = vmatpush.msra.mxu0 0.0
  %620 = vmatpush.msra.mxu0 %v490
  %621 = vmatmul.f32.gmra.mxu0 %v475
  %v622 = vpop.f32.mrf.mxu0
  %v623 = vadd.f32 %v446, %v622
  %624 = vdwg.mxu0
  %625 = vmatpush.msra.mxu0 0.0
  %626 = vmatpush.msra.mxu0 0.0
  %627 = vmatpush.msra.mxu0 0.0
  %628 = vmatpush.msra.mxu0 0.0
  %629 = vmatpush.msra.mxu0 0.0
  %630 = vmatpush.msra.mxu0 0.0
  %631 = vmatpush.msra.mxu0 0.0
  %632 = vmatpush.msra.mxu0 0.0
  %633 = vmatpush.msra.mxu0 0.0
  %634 = vmatpush.msra.mxu0 0.0
  %635 = vmatpush.msra.mxu0 0.0
  %636 = vmatpush.msra.mxu0 0.0
  %637 = vmatpush.msra.mxu0 0.0
  %638 = vmatpush.msra.mxu0 0.0
  %639 = vmatpush.msra.mxu0 0.0
  %640 = vmatpush.msra.mxu0 %v493
  %641 = vmatmul.f32.gmra.mxu0 %v475
  %v642 = vpop.f32.mrf.mxu0
  %v643 = vadd.f32 %v447, %v642
  %644 = vdwg.mxu0
  %645 = vmatpush.msra.mxu0 0.0
  %646 = vmatpush.msra.mxu0 0.0
  %647 = vmatpush.msra.mxu0 0.0
  %648 = vmatpush.msra.mxu0 0.0
  %649 = vmatpush.msra.mxu0 0.0
  %650 = vmatpush.msra.mxu0 0.0
  %651 = vmatpush.msra.mxu0 0.0
  %652 = vmatpush.msra.mxu0 0.0
  %653 = vmatpush.msra.mxu0 0.0
  %654 = vmatpush.msra.mxu0 0.0
  %655 = vmatpush.msra.mxu0 0.0
  %656 = vmatpush.msra.mxu0 0.0
  %657 = vmatpush.msra.mxu0 0.0
  %658 = vmatpush.msra.mxu0 0.0
  %659 = vmatpush.msra.mxu0 0.0
  %660 = vmatpush.msra.mxu0 %v496
  %661 = vmatmul.f32.gmra.mxu0 %v475
  %v662 = vpop.f32.mrf.mxu0
  %v663 = vadd.f32 %v448, %v662
  %664 = vdwg.mxu0
  %665 = vmatpush.msra.mxu0 0.0
  %666 = vmatpush.msra.mxu0 0.0
  %667 = vmatpush.msra.mxu0 0.0
  %668 = vmatpush.msra.mxu0 0.0
  %669 = vmatpush.msra.mxu0 0.0
  %670 = vmatpush.msra.mxu0 0.0
  %671 = vmatpush.msra.mxu0 0.0
  %672 = vmatpush.msra.mxu0 0.0
  %673 = vmatpush.msra.mxu0 0.0
  %674 = vmatpush.msra.mxu0 0.0
  %675 = vmatpush.msra.mxu0 0.0
  %676 = vmatpush.msra.mxu0 0.0
  %677 = vmatpush.msra.mxu0 0.0
  %678 = vmatpush.msra.mxu0 0.0
  %679 = vmatpush.msra.mxu0 0.0
  %680 = vmatpush.msra.mxu0 %v499
  %681 = vmatmul.f32.gmra.mxu0 %v475
  %v682 = vpop.f32.mrf.mxu0
  %v683 = vadd.f32 %v449, %v682
  %684 = vdwg.mxu0
  %685 = vmatpush.msra.mxu0 0.0
  %686 = vmatpush.msra.mxu0 0.0
  %687 = vmatpush.msra.mxu0 0.0
  %688 = vmatpush.msra.mxu0 0.0
  %689 = vmatpush.msra.mxu0 0.0
  %690 = vmatpush.msra.mxu0 0.0
  %691 = vmatpush.msra.mxu0 0.0
  %692 = vmatpush.msra.mxu0 0.0
  %693 = vmatpush.msra.mxu0 0.0
  %694 = vmatpush.msra.mxu0 0.0
  %695 = vmatpush.msra.mxu0 0.0
  %696 = vmatpush.msra.mxu0 0.0
  %697 = vmatpush.msra.mxu0 0.0
  %698 = vmatpush.msra.mxu0 0.0
  %699 = vmatpush.msra.mxu0 0.0
  %700 = vmatpush.msra.mxu0 %v502
  %701 = vmatmul.f32.gmra.mxu0 %v475
  %v702 = vpop.f32.mrf.mxu0
  %v703 = vadd.f32 %v450, %v702
  %704 = vdwg.mxu0
  %705 = vmatpush.msra.mxu0 0.0
  %706 = vmatpush.msra.mxu0 0.0
  %707 = vmatpush.msra.mxu0 0.0
  %708 = vmatpush.msra.mxu0 0.0
  %709 = vmatpush.msra.mxu0 0.0
  %710 = vmatpush.msra.mxu0 0.0
  %711 = vmatpush.msra.mxu0 0.0
  %712 = vmatpush.msra.mxu0 0.0
  %713 = vmatpush.msra.mxu0 0.0
  %714 = vmatpush.msra.mxu0 0.0
  %715 = vmatpush.msra.mxu0 0.0
  %716 = vmatpush.msra.mxu0 0.0
  %717 = vmatpush.msra.mxu0 0.0
  %718 = vmatpush.msra.mxu0 0.0
  %719 = vmatpush.msra.mxu0 0.0
  %720 = vmatpush.msra.mxu0 %v505
  %721 = vmatmul.f32.gmra.mxu0 %v475
  %v722 = vpop.f32.mrf.mxu0
  %v723 = vadd.f32 %v451, %v722
  %724 = vdwg.mxu0
  %725 = vmatpush.msra.mxu0 0.0
  %726 = vmatpush.msra.mxu0 0.0
  %727 = vmatpush.msra.mxu0 0.0
  %728 = vmatpush.msra.mxu0 0.0
  %729 = vmatpush.msra.mxu0 0.0
  %730 = vmatpush.msra.mxu0 0.0
  %731 = vmatpush.msra.mxu0 0.0
  %732 = vmatpush.msra.mxu0 0.0
  %733 = vmatpush.msra.mxu0 0.0
  %734 = vmatpush.msra.mxu0 0.0
  %735 = vmatpush.msra.mxu0 0.0
  %736 = vmatpush.msra.mxu0 0.0
  %737 = vmatpush.msra.mxu0 0.0
  %738 = vmatpush.msra.mxu0 0.0
  %739 = vmatpush.msra.mxu0 0.0
  %740 = vmatpush.msra.mxu0 %v508
  %741 = vmatmul.f32.gmra.mxu0 %v475
  %v742 = vpop.f32.mrf.mxu0
  %v743 = vadd.f32 %v452, %v742
  %744 = vdwg.mxu0
  %745 = vmatpush.msra.mxu0 0.0
  %746 = vmatpush.msra.mxu0 0.0
  %747 = vmatpush.msra.mxu0 0.0
  %748 = vmatpush.msra.mxu0 0.0
  %749 = vmatpush.msra.mxu0 0.0
  %750 = vmatpush.msra.mxu0 0.0
  %751 = vmatpush.msra.mxu0 0.0
  %752 = vmatpush.msra.mxu0 0.0
  %753 = vmatpush.msra.mxu0 0.0
  %754 = vmatpush.msra.mxu0 0.0
  %755 = vmatpush.msra.mxu0 0.0
  %756 = vmatpush.msra.mxu0 0.0
  %757 = vmatpush.msra.mxu0 0.0
  %758 = vmatpush.msra.mxu0 0.0
  %759 = vmatpush.msra.mxu0 0.0
  %760 = vmatpush.msra.mxu0 %v511
  %761 = vmatmul.f32.gmra.mxu0 %v475
  %v762 = vpop.f32.mrf.mxu0
  %v763 = vadd.f32 %v453, %v762
  %764 = vdwg.mxu0
  %765 = vmatpush.msra.mxu0 0.0
  %766 = vmatpush.msra.mxu0 0.0
  %767 = vmatpush.msra.mxu0 0.0
  %768 = vmatpush.msra.mxu0 0.0
  %769 = vmatpush.msra.mxu0 0.0
  %770 = vmatpush.msra.mxu0 0.0
  %771 = vmatpush.msra.mxu0 0.0
  %772 = vmatpush.msra.mxu0 0.0
  %773 = vmatpush.msra.mxu0 0.0
  %774 = vmatpush.msra.mxu0 0.0
  %775 = vmatpush.msra.mxu0 0.0
  %776 = vmatpush.msra.mxu0 0.0
  %777 = vmatpush.msra.mxu0 0.0
  %778 = vmatpush.msra.mxu0 0.0
  %779 = vmatpush.msra.mxu0 0.0
  %780 = vmatpush.msra.mxu0 %v514
  %781 = vmatmul.f32.gmra.mxu0 %v475
  %v782 = vpop.f32.mrf.mxu0
  %v783 = vadd.f32 %v454, %v782
  %784 = vdwg.mxu0
  %785 = vmatpush.msra.mxu0 0.0
  %786 = vmatpush.msra.mxu0 0.0
  %787 = vmatpush.msra.mxu0 0.0
  %788 = vmatpush.msra.mxu0 0.0
  %789 = vmatpush.msra.mxu0 0.0
  %790 = vmatpush.msra.mxu0 0.0
  %791 = vmatpush.msra.mxu0 0.0
  %792 = vmatpush.msra.mxu0 0.0
  %793 = vmatpush.msra.mxu0 0.0
  %794 = vmatpush.msra.mxu0 0.0
  %795 = vmatpush.msra.mxu0 0.0
  %796 = vmatpush.msra.mxu0 0.0
  %797 = vmatpush.msra.mxu0 0.0
  %798 = vmatpush.msra.mxu0 0.0
  %799 = vmatpush.msra.mxu0 0.0
  %800 = vmatpush.msra.mxu0 %v517
  %801 = vmatmul.f32.gmra.mxu0 %v475
  %v802 = vpop.f32.mrf.mxu0
  %v803 = vadd.f32 %v455, %v802
  %804 = vdwg.mxu0
  %805 = vmatpush.msra.mxu0 0.0
  %806 = vmatpush.msra.mxu0 0.0
  %807 = vmatpush.msra.mxu0 0.0
  %808 = vmatpush.msra.mxu0 0.0
  %809 = vmatpush.msra.mxu0 0.0
  %810 = vmatpush.msra.mxu0 0.0
  %811 = vmatpush.msra.mxu0 0.0
  %812 = vmatpush.msra.mxu0 0.0
  %813 = vmatpush.msra.mxu0 0.0
  %814 = vmatpush.msra.mxu0 0.0
  %815 = vmatpush.msra.mxu0 0.0
  %816 = vmatpush.msra.mxu0 0.0
  %817 = vmatpush.msra.mxu0 0.0
  %818 = vmatpush.msra.mxu0 0.0
  %819 = vmatpush.msra.mxu0 0.0
  %820 = vmatpush.msra.mxu0 %v520
  %821 = vmatmul.f32.gmra.mxu0 %v475
  %v822 = vpop.f32.mrf.mxu0
  %v823 = vadd.f32 %v456, %v822
  %824 = vdwg.mxu0
  %825 = vmatpush.msra.mxu0 0.0
  %826 = vmatpush.msra.mxu0 0.0
  %827 = vmatpush.msra.mxu0 0.0
  %828 = vmatpush.msra.mxu0 0.0
  %829 = vmatpush.msra.mxu0 0.0
  %830 = vmatpush.msra.mxu0 0.0
  %831 = vmatpush.msra.mxu0 0.0
  %832 = vmatpush.msra.mxu0 0.0
  %833 = vmatpush.msra.mxu0 0.0
  %834 = vmatpush.msra.mxu0 0.0
  %835 = vmatpush.msra.mxu0 0.0
  %836 = vmatpush.msra.mxu0 0.0
  %837 = vmatpush.msra.mxu0 0.0
  %838 = vmatpush.msra.mxu0 0.0
  %839 = vmatpush.msra.mxu0 0.0
  %840 = vmatpush.msra.mxu0 %v523
  %841 = vmatmul.f32.gmra.mxu0 %v475
  %v842 = vpop.f32.mrf.mxu0
  %v843 = vadd.f32 %v457, %v842
  %844 = vdwg.mxu0
  %v845 = vmax.f32 %v543, 0.0
  %v846 = vmax.f32 %v563, 0.0
  %v847 = vmax.f32 %v583, 0.0
  %v848 = vmax.f32 %v603, 0.0
  %v849 = vmax.f32 %v623, 0.0
  %v850 = vmax.f32 %v643, 0.0
  %v851 = vmax.f32 %v663, 0.0
  %v852 = vmax.f32 %v683, 0.0
  %v853 = vmax.f32 %v703, 0.0
  %v854 = vmax.f32 %v723, 0.0
  %v855 = vmax.f32 %v743, 0.0
  %v856 = vmax.f32 %v763, 0.0
  %v857 = vmax.f32 %v783, 0.0
  %v858 = vmax.f32 %v803, 0.0
  %v859 = vmax.f32 %v823, 0.0
  %v860 = vmax.f32 %v843, 0.0
  %v862 = vperm.slane %v80, 0
  %864 = vmatpush.xpose.msra.mxu0 0.0
  %865 = vmatpush.xpose.msra.mxu0 0.0
  %866 = vmatpush.xpose.msra.mxu0 0.0
  %867 = vmatpush.xpose.msra.mxu0 0.0
  %868 = vmatpush.xpose.msra.mxu0 0.0
  %869 = vmatpush.xpose.msra.mxu0 0.0
  %870 = vmatpush.xpose.msra.mxu0 0.0
  %871 = vmatpush.xpose.msra.mxu0 0.0
  %872 = vmatpush.xpose.msra.mxu0 0.0
  %873 = vmatpush.xpose.msra.mxu0 0.0
  %874 = vmatpush.xpose.msra.mxu0 0.0
  %875 = vmatpush.xpose.msra.mxu0 0.0
  %876 = vmatpush.xpose.msra.mxu0 0.0
  %877 = vmatpush.xpose.msra.mxu0 0.0
  %878 = vmatpush.xpose.msra.mxu0 0.0
  %879 = vmatpush.xpose.msra.mxu0 %v64
  %880 = vmatmul.f32.gmra.mxu0 %v845
  %v881 = vpop.f32.mrf.mxu0
  %v882 = vadd.f32 %v862, %v881
  %883 = vdwg.mxu0
  %884 = vmatpush.xpose.msra.mxu0 0.0
  %885 = vmatpush.xpose.msra.mxu0 0.0
  %886 = vmatpush.xpose.msra.mxu0 0.0
  %887 = vmatpush.xpose.msra.mxu0 0.0
  %888 = vmatpush.xpose.msra.mxu0 0.0
  %889 = vmatpush.xpose.msra.mxu0 0.0
  %890 = vmatpush.xpose.msra.mxu0 0.0
  %891 = vmatpush.xpose.msra.mxu0 0.0
  %892 = vmatpush.xpose.msra.mxu0 0.0
  %893 = vmatpush.xpose.msra.mxu0 0.0
  %894 = vmatpush.xpose.msra.mxu0 0.0
  %895 = vmatpush.xpose.msra.mxu0 0.0
  %896 = vmatpush.xpose.msra.mxu0 0.0
  %897 = vmatpush.xpose.msra.mxu0 0.0
  %898 = vmatpush.xpose.msra.mxu0 0.0
  %899 = vmatpush.xpose.msra.mxu0 %v65
  %900 = vmatmul.f32.gmra.mxu0 %v846
  %v901 = vpop.f32.mrf.mxu0
  %v902 = vadd.f32 %v882, %v901
  %903 = vdwg.mxu0
  %904 = vmatpush.xpose.msra.mxu0 0.0
  %905 = vmatpush.xpose.msra.mxu0 0.0
  %906 = vmatpush.xpose.msra.mxu0 0.0
  %907 = vmatpush.xpose.msra.mxu0 0.0
  %908 = vmatpush.xpose.msra.mxu0 0.0
  %909 = vmatpush.xpose.msra.mxu0 0.0
  %910 = vmatpush.xpose.msra.mxu0 0.0
  %911 = vmatpush.xpose.msra.mxu0 0.0
  %912 = vmatpush.xpose.msra.mxu0 0.0
  %913 = vmatpush.xpose.msra.mxu0 0.0
  %914 = vmatpush.xpose.msra.mxu0 0.0
  %915 = vmatpush.xpose.msra.mxu0 0.0
  %916 = vmatpush.xpose.msra.mxu0 0.0
  %917 = vmatpush.xpose.msra.mxu0 0.0
  %918 = vmatpush.xpose.msra.mxu0 0.0
  %919 = vmatpush.xpose.msra.mxu0 %v66
  %920 = vmatmul.f32.gmra.mxu0 %v847
  %v921 = vpop.f32.mrf.mxu0
  %v922 = vadd.f32 %v902, %v921
  %923 = vdwg.mxu0
  %924 = vmatpush.xpose.msra.mxu0 0.0
  %925 = vmatpush.xpose.msra.mxu0 0.0
  %926 = vmatpush.xpose.msra.mxu0 0.0
  %927 = vmatpush.xpose.msra.mxu0 0.0
  %928 = vmatpush.xpose.msra.mxu0 0.0
  %929 = vmatpush.xpose.msra.mxu0 0.0
  %930 = vmatpush.xpose.msra.mxu0 0.0
  %931 = vmatpush.xpose.msra.mxu0 0.0
  %932 = vmatpush.xpose.msra.mxu0 0.0
  %933 = vmatpush.xpose.msra.mxu0 0.0
  %934 = vmatpush.xpose.msra.mxu0 0.0
  %935 = vmatpush.xpose.msra.mxu0 0.0
  %936 = vmatpush.xpose.msra.mxu0 0.0
  %937 = vmatpush.xpose.msra.mxu0 0.0
  %938 = vmatpush.xpose.msra.mxu0 0.0
  %939 = vmatpush.xpose.msra.mxu0 %v67
  %940 = vmatmul.f32.gmra.mxu0 %v848
  %v941 = vpop.f32.mrf.mxu0
  %v942 = vadd.f32 %v922, %v941
  %943 = vdwg.mxu0
  %944 = vmatpush.xpose.msra.mxu0 0.0
  %945 = vmatpush.xpose.msra.mxu0 0.0
  %946 = vmatpush.xpose.msra.mxu0 0.0
  %947 = vmatpush.xpose.msra.mxu0 0.0
  %948 = vmatpush.xpose.msra.mxu0 0.0
  %949 = vmatpush.xpose.msra.mxu0 0.0
  %950 = vmatpush.xpose.msra.mxu0 0.0
  %951 = vmatpush.xpose.msra.mxu0 0.0
  %952 = vmatpush.xpose.msra.mxu0 0.0
  %953 = vmatpush.xpose.msra.mxu0 0.0
  %954 = vmatpush.xpose.msra.mxu0 0.0
  %955 = vmatpush.xpose.msra.mxu0 0.0
  %956 = vmatpush.xpose.msra.mxu0 0.0
  %957 = vmatpush.xpose.msra.mxu0 0.0
  %958 = vmatpush.xpose.msra.mxu0 0.0
  %959 = vmatpush.xpose.msra.mxu0 %v68
  %960 = vmatmul.f32.gmra.mxu0 %v849
  %v961 = vpop.f32.mrf.mxu0
  %v962 = vadd.f32 %v942, %v961
  %963 = vdwg.mxu0
  %964 = vmatpush.xpose.msra.mxu0 0.0
  %965 = vmatpush.xpose.msra.mxu0 0.0
  %966 = vmatpush.xpose.msra.mxu0 0.0
  %967 = vmatpush.xpose.msra.mxu0 0.0
  %968 = vmatpush.xpose.msra.mxu0 0.0
  %969 = vmatpush.xpose.msra.mxu0 0.0
  %970 = vmatpush.xpose.msra.mxu0 0.0
  %971 = vmatpush.xpose.msra.mxu0 0.0
  %972 = vmatpush.xpose.msra.mxu0 0.0
  %973 = vmatpush.xpose.msra.mxu0 0.0
  %974 = vmatpush.xpose.msra.mxu0 0.0
  %975 = vmatpush.xpose.msra.mxu0 0.0
  %976 = vmatpush.xpose.msra.mxu0 0.0
  %977 = vmatpush.xpose.msra.mxu0 0.0
  %978 = vmatpush.xpose.msra.mxu0 0.0
  %979 = vmatpush.xpose.msra.mxu0 %v69
  %980 = vmatmul.f32.gmra.mxu0 %v850
  %v981 = vpop.f32.mrf.mxu0
  %v982 = vadd.f32 %v962, %v981
  %983 = vdwg.mxu0
  %984 = vmatpush.xpose.msra.mxu0 0.0
  %985 = vmatpush.xpose.msra.mxu0 0.0
  %986 = vmatpush.xpose.msra.mxu0 0.0
  %987 = vmatpush.xpose.msra.mxu0 0.0
  %988 = vmatpush.xpose.msra.mxu0 0.0
  %989 = vmatpush.xpose.msra.mxu0 0.0
  %990 = vmatpush.xpose.msra.mxu0 0.0
  %991 = vmatpush.xpose.msra.mxu0 0.0
  %992 = vmatpush.xpose.msra.mxu0 0.0
  %993 = vmatpush.xpose.msra.mxu0 0.0
  %994 = vmatpush.xpose.msra.mxu0 0.0
  %995 = vmatpush.xpose.msra.mxu0 0.0
  %996 = vmatpush.xpose.msra.mxu0 0.0
  %997 = vmatpush.xpose.msra.mxu0 0.0
  %998 = vmatpush.xpose.msra.mxu0 0.0
  %999 = vmatpush.xpose.msra.mxu0 %v70
  %1000 = vmatmul.f32.gmra.mxu0 %v851
  %v1001 = vpop.f32.mrf.mxu0
  %v1002 = vadd.f32 %v982, %v1001
  %1003 = vdwg.mxu0
  %1004 = vmatpush.xpose.msra.mxu0 0.0
  %1005 = vmatpush.xpose.msra.mxu0 0.0
  %1006 = vmatpush.xpose.msra.mxu0 0.0
  %1007 = vmatpush.xpose.msra.mxu0 0.0
  %1008 = vmatpush.xpose.msra.mxu0 0.0
  %1009 = vmatpush.xpose.msra.mxu0 0.0
  %1010 = vmatpush.xpose.msra.mxu0 0.0
  %1011 = vmatpush.xpose.msra.mxu0 0.0
  %1012 = vmatpush.xpose.msra.mxu0 0.0
  %1013 = vmatpush.xpose.msra.mxu0 0.0
  %1014 = vmatpush.xpose.msra.mxu0 0.0
  %1015 = vmatpush.xpose.msra.mxu0 0.0
  %1016 = vmatpush.xpose.msra.mxu0 0.0
  %1017 = vmatpush.xpose.msra.mxu0 0.0
  %1018 = vmatpush.xpose.msra.mxu0 0.0
  %1019 = vmatpush.xpose.msra.mxu0 %v71
  %1020 = vmatmul.f32.gmra.mxu0 %v852
  %v1021 = vpop.f32.mrf.mxu0
  %v1022 = vadd.f32 %v1002, %v1021
  %1023 = vdwg.mxu0
  %1024 = vmatpush.xpose.msra.mxu0 0.0
  %1025 = vmatpush.xpose.msra.mxu0 0.0
  %1026 = vmatpush.xpose.msra.mxu0 0.0
  %1027 = vmatpush.xpose.msra.mxu0 0.0
  %1028 = vmatpush.xpose.msra.mxu0 0.0
  %1029 = vmatpush.xpose.msra.mxu0 0.0
  %1030 = vmatpush.xpose.msra.mxu0 0.0
  %1031 = vmatpush.xpose.msra.mxu0 0.0
  %1032 = vmatpush.xpose.msra.mxu0 0.0
  %1033 = vmatpush.xpose.msra.mxu0 0.0
  %1034 = vmatpush.xpose.msra.mxu0 0.0
  %1035 = vmatpush.xpose.msra.mxu0 0.0
  %1036 = vmatpush.xpose.msra.mxu0 0.0
  %1037 = vmatpush.xpose.msra.mxu0 0.0
  %1038 = vmatpush.xpose.msra.mxu0 0.0
  %1039 = vmatpush.xpose.msra.mxu0 %v72
  %1040 = vmatmul.f32.gmra.mxu0 %v853
  %v1041 = vpop.f32.mrf.mxu0
  %v1042 = vadd.f32 %v1022, %v1041
  %1043 = vdwg.mxu0
  %1044 = vmatpush.xpose.msra.mxu0 0.0
  %1045 = vmatpush.xpose.msra.mxu0 0.0
  %1046 = vmatpush.xpose.msra.mxu0 0.0
  %1047 = vmatpush.xpose.msra.mxu0 0.0
  %1048 = vmatpush.xpose.msra.mxu0 0.0
  %1049 = vmatpush.xpose.msra.mxu0 0.0
  %1050 = vmatpush.xpose.msra.mxu0 0.0
  %1051 = vmatpush.xpose.msra.mxu0 0.0
  %1052 = vmatpush.xpose.msra.mxu0 0.0
  %1053 = vmatpush.xpose.msra.mxu0 0.0
  %1054 = vmatpush.xpose.msra.mxu0 0.0
  %1055 = vmatpush.xpose.msra.mxu0 0.0
  %1056 = vmatpush.xpose.msra.mxu0 0.0
  %1057 = vmatpush.xpose.msra.mxu0 0.0
  %1058 = vmatpush.xpose.msra.mxu0 0.0
  %1059 = vmatpush.xpose.msra.mxu0 %v73
  %1060 = vmatmul.f32.gmra.mxu0 %v854
  %v1061 = vpop.f32.mrf.mxu0
  %v1062 = vadd.f32 %v1042, %v1061
  %1063 = vdwg.mxu0
  %1064 = vmatpush.xpose.msra.mxu0 0.0
  %1065 = vmatpush.xpose.msra.mxu0 0.0
  %1066 = vmatpush.xpose.msra.mxu0 0.0
  %1067 = vmatpush.xpose.msra.mxu0 0.0
  %1068 = vmatpush.xpose.msra.mxu0 0.0
  %1069 = vmatpush.xpose.msra.mxu0 0.0
  %1070 = vmatpush.xpose.msra.mxu0 0.0
  %1071 = vmatpush.xpose.msra.mxu0 0.0
  %1072 = vmatpush.xpose.msra.mxu0 0.0
  %1073 = vmatpush.xpose.msra.mxu0 0.0
  %1074 = vmatpush.xpose.msra.mxu0 0.0
  %1075 = vmatpush.xpose.msra.mxu0 0.0
  %1076 = vmatpush.xpose.msra.mxu0 0.0
  %1077 = vmatpush.xpose.msra.mxu0 0.0
  %1078 = vmatpush.xpose.msra.mxu0 0.0
  %1079 = vmatpush.xpose.msra.mxu0 %v74
  %1080 = vmatmul.f32.gmra.mxu0 %v855
  %v1081 = vpop.f32.mrf.mxu0
  %v1082 = vadd.f32 %v1062, %v1081
  %1083 = vdwg.mxu0
  %1084 = vmatpush.xpose.msra.mxu0 0.0
  %1085 = vmatpush.xpose.msra.mxu0 0.0
  %1086 = vmatpush.xpose.msra.mxu0 0.0
  %1087 = vmatpush.xpose.msra.mxu0 0.0
  %1088 = vmatpush.xpose.msra.mxu0 0.0
  %1089 = vmatpush.xpose.msra.mxu0 0.0
  %1090 = vmatpush.xpose.msra.mxu0 0.0
  %1091 = vmatpush.xpose.msra.mxu0 0.0
  %1092 = vmatpush.xpose.msra.mxu0 0.0
  %1093 = vmatpush.xpose.msra.mxu0 0.0
  %1094 = vmatpush.xpose.msra.mxu0 0.0
  %1095 = vmatpush.xpose.msra.mxu0 0.0
  %1096 = vmatpush.xpose.msra.mxu0 0.0
  %1097 = vmatpush.xpose.msra.mxu0 0.0
  %1098 = vmatpush.xpose.msra.mxu0 0.0
  %1099 = vmatpush.xpose.msra.mxu0 %v75
  %1100 = vmatmul.f32.gmra.mxu0 %v856
  %v1101 = vpop.f32.mrf.mxu0
  %v1102 = vadd.f32 %v1082, %v1101
  %1103 = vdwg.mxu0
  %1104 = vmatpush.xpose.msra.mxu0 0.0
  %1105 = vmatpush.xpose.msra.mxu0 0.0
  %1106 = vmatpush.xpose.msra.mxu0 0.0
  %1107 = vmatpush.xpose.msra.mxu0 0.0
  %1108 = vmatpush.xpose.msra.mxu0 0.0
  %1109 = vmatpush.xpose.msra.mxu0 0.0
  %1110 = vmatpush.xpose.msra.mxu0 0.0
  %1111 = vmatpush.xpose.msra.mxu0 0.0
  %1112 = vmatpush.xpose.msra.mxu0 0.0
  %1113 = vmatpush.xpose.msra.mxu0 0.0
  %1114 = vmatpush.xpose.msra.mxu0 0.0
  %1115 = vmatpush.xpose.msra.mxu0 0.0
  %1116 = vmatpush.xpose.msra.mxu0 0.0
  %1117 = vmatpush.xpose.msra.mxu0 0.0
  %1118 = vmatpush.xpose.msra.mxu0 0.0
  %1119 = vmatpush.xpose.msra.mxu0 %v76
  %1120 = vmatmul.f32.gmra.mxu0 %v857
  %v1121 = vpop.f32.mrf.mxu0
  %v1122 = vadd.f32 %v1102, %v1121
  %1123 = vdwg.mxu0
  %1124 = vmatpush.xpose.msra.mxu0 0.0
  %1125 = vmatpush.xpose.msra.mxu0 0.0
  %1126 = vmatpush.xpose.msra.mxu0 0.0
  %1127 = vmatpush.xpose.msra.mxu0 0.0
  %1128 = vmatpush.xpose.msra.mxu0 0.0
  %1129 = vmatpush.xpose.msra.mxu0 0.0
  %1130 = vmatpush.xpose.msra.mxu0 0.0
  %1131 = vmatpush.xpose.msra.mxu0 0.0
  %1132 = vmatpush.xpose.msra.mxu0 0.0
  %1133 = vmatpush.xpose.msra.mxu0 0.0
  %1134 = vmatpush.xpose.msra.mxu0 0.0
  %1135 = vmatpush.xpose.msra.mxu0 0.0
  %1136 = vmatpush.xpose.msra.mxu0 0.0
  %1137 = vmatpush.xpose.msra.mxu0 0.0
  %1138 = vmatpush.xpose.msra.mxu0 0.0
  %1139 = vmatpush.xpose.msra.mxu0 %v77
  %1140 = vmatmul.f32.gmra.mxu0 %v858
  %v1141 = vpop.f32.mrf.mxu0
  %v1142 = vadd.f32 %v1122, %v1141
  %1143 = vdwg.mxu0
  %1144 = vmatpush.xpose.msra.mxu0 0.0
  %1145 = vmatpush.xpose.msra.mxu0 0.0
  %1146 = vmatpush.xpose.msra.mxu0 0.0
  %1147 = vmatpush.xpose.msra.mxu0 0.0
  %1148 = vmatpush.xpose.msra.mxu0 0.0
  %1149 = vmatpush.xpose.msra.mxu0 0.0
  %1150 = vmatpush.xpose.msra.mxu0 0.0
  %1151 = vmatpush.xpose.msra.mxu0 0.0
  %1152 = vmatpush.xpose.msra.mxu0 0.0
  %1153 = vmatpush.xpose.msra.mxu0 0.0
  %1154 = vmatpush.xpose.msra.mxu0 0.0
  %1155 = vmatpush.xpose.msra.mxu0 0.0
  %1156 = vmatpush.xpose.msra.mxu0 0.0
  %1157 = vmatpush.xpose.msra.mxu0 0.0
  %1158 = vmatpush.xpose.msra.mxu0 0.0
  %1159 = vmatpush.xpose.msra.mxu0 %v78
  %1160 = vmatmul.f32.gmra.mxu0 %v859
  %v1161 = vpop.f32.mrf.mxu0
  %v1162 = vadd.f32 %v1142, %v1161
  %1163 = vdwg.mxu0
  %1164 = vmatpush.xpose.msra.mxu0 0.0
  %1165 = vmatpush.xpose.msra.mxu0 0.0
  %1166 = vmatpush.xpose.msra.mxu0 0.0
  %1167 = vmatpush.xpose.msra.mxu0 0.0
  %1168 = vmatpush.xpose.msra.mxu0 0.0
  %1169 = vmatpush.xpose.msra.mxu0 0.0
  %1170 = vmatpush.xpose.msra.mxu0 0.0
  %1171 = vmatpush.xpose.msra.mxu0 0.0
  %1172 = vmatpush.xpose.msra.mxu0 0.0
  %1173 = vmatpush.xpose.msra.mxu0 0.0
  %1174 = vmatpush.xpose.msra.mxu0 0.0
  %1175 = vmatpush.xpose.msra.mxu0 0.0
  %1176 = vmatpush.xpose.msra.mxu0 0.0
  %1177 = vmatpush.xpose.msra.mxu0 0.0
  %1178 = vmatpush.xpose.msra.mxu0 0.0
  %1179 = vmatpush.xpose.msra.mxu0 %v79
  %1180 = vmatmul.f32.gmra.mxu0 %v860
  %v1181 = vpop.f32.mrf.mxu0
  %v1182 = vadd.f32 %v1162, %v1181
  %1183 = vdwg.mxu0
  %v1184 = vadd.f32 %v439, %v1182
  %s1185 = scalar_lea.vmem %s2, 8
  %v1186 = vld [vmem:[%s1185] sm:$0x1f]
  %s1187 = scalar_lea.vmem %s3, 1
  %v1188 = vld [vmem:[%s1187] sm:$0x1]
  %s1189 = scalar_lea.vmem %s4, 8
  %v1190 = vld [vmem:[%s1189] sm:$0x1f]
  %s1191 = scalar_lea.vmem %s5, 1
  %v1192 = vld [vmem:[%s1191] sm:$0x1]
  %s1193 = scalar_lea.vmem %s6, 128
  %v1194 = vld [vmem:[%s1193] sm:$0x1f]
  %v1195 = vld [vmem:[%s1193 + $0x8] sm:$0x1f]
  %v1196 = vld [vmem:[%s1193 + $0x10] sm:$0x1f]
  %v1197 = vld [vmem:[%s1193 + $0x18] sm:$0x1f]
  %v1198 = vld [vmem:[%s1193 + $0x20] sm:$0x1f]
  %v1199 = vld [vmem:[%s1193 + $0x28] sm:$0x1f]
  %v1200 = vld [vmem:[%s1193 + $0x30] sm:$0x1f]
  %v1201 = vld [vmem:[%s1193 + $0x38] sm:$0x1f]
  %v1202 = vld [vmem:[%s1193 + $0x40] sm:$0x1f]
  %v1203 = vld [vmem:[%s1193 + $0x48] sm:$0x1f]
  %v1204 = vld [vmem:[%s1193 + $0x50] sm:$0x1f]
  %v1205 = vld [vmem:[%s1193 + $0x58] sm:$0x1f]
  %v1206 = vld [vmem:[%s1193 + $0x60] sm:$0x1f]
  %v1207 = vld [vmem:[%s1193 + $0x68] sm:$0x1f]
  %v1208 = vld [vmem:[%s1193 + $0x70] sm:$0x1f]
  %v1209 = vld [vmem:[%s1193 + $0x78] sm:$0x1f]
  %s1210 = scalar_lea.vmem %s7, 16
  %v1211 = vld [vmem:[%s1210] sm:$0xff]
  %v1212 = vld [vmem:[%s1210 + $0x8] sm:$0xff]
  %s1213 = scalar_lea.vmem %s8, 128
  %v1214 = vld [vmem:[%s1213] sm:$0x1f]
  %v1215 = vld [vmem:[%s1213 + $0x8] sm:$0x1f]
  %v1216 = vld [vmem:[%s1213 + $0x10] sm:$0x1f]
  %v1217 = vld [vmem:[%s1213 + $0x18] sm:$0x1f]
  %v1218 = vld [vmem:[%s1213 + $0x20] sm:$0x1f]
  %v1219 = vld [vmem:[%s1213 + $0x28] sm:$0x1f]
  %v1220 = vld [vmem:[%s1213 + $0x30] sm:$0x1f]
  %v1221 = vld [vmem:[%s1213 + $0x38] sm:$0x1f]
  %v1222 = vld [vmem:[%s1213 + $0x40] sm:$0x1f]
  %v1223 = vld [vmem:[%s1213 + $0x48] sm:$0x1f]
  %v1224 = vld [vmem:[%s1213 + $0x50] sm:$0x1f]
  %v1225 = vld [vmem:[%s1213 + $0x58] sm:$0x1f]
  %v1226 = vld [vmem:[%s1213 + $0x60] sm:$0x1f]
  %v1227 = vld [vmem:[%s1213 + $0x68] sm:$0x1f]
  %v1228 = vld [vmem:[%s1213 + $0x70] sm:$0x1f]
  %v1229 = vld [vmem:[%s1213 + $0x78] sm:$0x1f]
  %s1230 = scalar_lea.vmem %s9, 1
  %v1231 = vld [vmem:[%s1230] sm:$0x1]
  %v1233 = vperm.slane %v1188, 0
  %v1236 = vsel %vm84, %v1184, 0
  %v1239 = vsel %vm88, %v1186, 0
  %1241 = vmatpush.msra.mxu0 0.0
  %1242 = vmatpush.msra.mxu0 0.0
  %1243 = vmatpush.msra.mxu0 0.0
  %1244 = vmatpush.msra.mxu0 0.0
  %1245 = vmatpush.msra.mxu0 0.0
  %1246 = vmatpush.msra.mxu0 0.0
  %1247 = vmatpush.msra.mxu0 0.0
  %1248 = vmatpush.msra.mxu0 0.0
  %1249 = vmatpush.msra.mxu0 0.0
  %1250 = vmatpush.msra.mxu0 0.0
  %1251 = vmatpush.msra.mxu0 0.0
  %1252 = vmatpush.msra.mxu0 0.0
  %1253 = vmatpush.msra.mxu0 0.0
  %1254 = vmatpush.msra.mxu0 0.0
  %1255 = vmatpush.msra.mxu0 0.0
  %1256 = vmatpush.msra.mxu0 %v1239
  %1257 = vmatmul.f32.gmra.mxu0 %v1236
  %v1258 = vpop.f32.mrf.mxu0
  %v1259 = vadd.f32 %v1233, %v1258
  %1260 = vdwg.mxu0
  %v1262 = vrot.slane %v1259, 1
  %v1263 = vrot.slane %v1259, 2
  %v1264 = vrot.slane %v1259, 3
  %v1265 = vrot.slane %v1259, 4
  %v1266 = vrot.slane %v1259, 5
  %v1267 = vperm.slane %v1259, 0
  %v1268 = vperm.slane %v1262, 0
  %v1269 = vperm.slane %v1263, 0
  %v1270 = vperm.slane %v1264, 0
  %v1271 = vperm.slane %v1265, 0
  %v1272 = vperm.slane %v1266, 0
  %1279 = vrot.lane.b32.xlu0 %v1259, 123
  %v1280 = vpop.permute.xlu0 %1279
  %v1282 = vmul.f32 %v1267, %v1280
  %v1283 = vmul.f32 %v1268, %v1280
  %v1284 = vmul.f32 %v1269, %v1280
  %v1285 = vmul.f32 %v1270, %v1280
  %v1286 = vmul.f32 %v1271, %v1280
  %v1287 = vmul.f32 %v1272, %v1280
  %v1288 = vmul.f32 %v1282, 0.4472136
  %v1289 = vmul.f32 %v1283, 0.4472136
  %v1290 = vmul.f32 %v1284, 0.4472136
  %v1291 = vmul.f32 %v1285, 0.4472136
  %v1292 = vmul.f32 %v1286, 0.4472136
  %v1293 = vmul.f32 %v1287, 0.4472136
  %v1294 = vadd.f32 %v1288, %v36
  %v1295 = vadd.f32 %v1289, %v37
  %v1296 = vadd.f32 %v1290, %v38
  %v1297 = vadd.f32 %v1291, %v39
  %v1298 = vadd.f32 %v1292, %v40
  %v1299 = vadd.f32 %v1293, %v41
  %v1300 = vsel %vm151, %v1294, -inf
  %v1301 = vrot.slane %v1300, 4
  %v1302 = vmax.f32 %v1300, %v1301
  %v1303 = vrot.slane %v1302, 2
  %v1304 = vmax.f32 %v1302, %v1303
  %v1305 = vrot.slane %v1304, 1
  %v1306 = vmax.f32 %v1304, %v1305
  %v1307 = vsel %vm151, %v1295, -inf
  %v1308 = vrot.slane %v1307, 4
  %v1309 = vmax.f32 %v1307, %v1308
  %v1310 = vrot.slane %v1309, 2
  %v1311 = vmax.f32 %v1309, %v1310
  %v1312 = vrot.slane %v1311, 1
  %v1313 = vmax.f32 %v1311, %v1312
  %v1314 = vsel %vm151, %v1296, -inf
  %v1315 = vrot.slane %v1314, 4
  %v1316 = vmax.f32 %v1314, %v1315
  %v1317 = vrot.slane %v1316, 2
  %v1318 = vmax.f32 %v1316, %v1317
  %v1319 = vrot.slane %v1318, 1
  %v1320 = vmax.f32 %v1318, %v1319
  %v1321 = vsel %vm151, %v1297, -inf
  %v1322 = vrot.slane %v1321, 4
  %v1323 = vmax.f32 %v1321, %v1322
  %v1324 = vrot.slane %v1323, 2
  %v1325 = vmax.f32 %v1323, %v1324
  %v1326 = vrot.slane %v1325, 1
  %v1327 = vmax.f32 %v1325, %v1326
  %v1328 = vsel %vm151, %v1298, -inf
  %v1329 = vrot.slane %v1328, 4
  %v1330 = vmax.f32 %v1328, %v1329
  %v1331 = vrot.slane %v1330, 2
  %v1332 = vmax.f32 %v1330, %v1331
  %v1333 = vrot.slane %v1332, 1
  %v1334 = vmax.f32 %v1332, %v1333
  %v1335 = vsel %vm151, %v1299, -inf
  %v1336 = vrot.slane %v1335, 4
  %v1337 = vmax.f32 %v1335, %v1336
  %v1338 = vrot.slane %v1337, 2
  %v1339 = vmax.f32 %v1337, %v1338
  %v1340 = vrot.slane %v1339, 1
  %v1341 = vmax.f32 %v1339, %v1340
  %v1342 = vsub.f32 %v1294, %v1306
  %v1343 = vsub.f32 %v1295, %v1313
  %v1344 = vsub.f32 %v1296, %v1320
  %v1345 = vsub.f32 %v1297, %v1327
  %v1346 = vsub.f32 %v1298, %v1334
  %v1347 = vsub.f32 %v1299, %v1341
  %v1348 = vmul.f32 %v1342, 1.442695
  %v1349 = vpow.pop %v1348
  %v1350 = vmul.f32 %v1343, 1.442695
  %v1351 = vpow.pop %v1350
  %v1352 = vmul.f32 %v1344, 1.442695
  %v1353 = vpow.pop %v1352
  %v1354 = vmul.f32 %v1345, 1.442695
  %v1355 = vpow.pop %v1354
  %v1356 = vmul.f32 %v1346, 1.442695
  %v1357 = vpow.pop %v1356
  %v1358 = vmul.f32 %v1347, 1.442695
  %v1359 = vpow.pop %v1358
  %v1360 = vsel %vm151, %v1349, 0.0
  %v1361 = vrot.slane %v1360, 4
  %v1362 = vadd.f32 %v1360, %v1361
  %v1363 = vrot.slane %v1362, 2
  %v1364 = vadd.f32 %v1362, %v1363
  %v1365 = vrot.slane %v1364, 1
  %v1366 = vadd.f32 %v1364, %v1365
  %v1367 = vsel %vm151, %v1351, 0.0
  %v1368 = vrot.slane %v1367, 4
  %v1369 = vadd.f32 %v1367, %v1368
  %v1370 = vrot.slane %v1369, 2
  %v1371 = vadd.f32 %v1369, %v1370
  %v1372 = vrot.slane %v1371, 1
  %v1373 = vadd.f32 %v1371, %v1372
  %v1374 = vsel %vm151, %v1353, 0.0
  %v1375 = vrot.slane %v1374, 4
  %v1376 = vadd.f32 %v1374, %v1375
  %v1377 = vrot.slane %v1376, 2
  %v1378 = vadd.f32 %v1376, %v1377
  %v1379 = vrot.slane %v1378, 1
  %v1380 = vadd.f32 %v1378, %v1379
  %v1381 = vsel %vm151, %v1355, 0.0
  %v1382 = vrot.slane %v1381, 4
  %v1383 = vadd.f32 %v1381, %v1382
  %v1384 = vrot.slane %v1383, 2
  %v1385 = vadd.f32 %v1383, %v1384
  %v1386 = vrot.slane %v1385, 1
  %v1387 = vadd.f32 %v1385, %v1386
  %v1388 = vsel %vm151, %v1357, 0.0
  %v1389 = vrot.slane %v1388, 4
  %v1390 = vadd.f32 %v1388, %v1389
  %v1391 = vrot.slane %v1390, 2
  %v1392 = vadd.f32 %v1390, %v1391
  %v1393 = vrot.slane %v1392, 1
  %v1394 = vadd.f32 %v1392, %v1393
  %v1395 = vsel %vm151, %v1359, 0.0
  %v1396 = vrot.slane %v1395, 4
  %v1397 = vadd.f32 %v1395, %v1396
  %v1398 = vrot.slane %v1397, 2
  %v1399 = vadd.f32 %v1397, %v1398
  %v1400 = vrot.slane %v1399, 1
  %v1401 = vadd.f32 %v1399, %v1400
  %v1402 = vrcp.pop %v1366
  %v1403 = vmul.f32 %v1366, %v1402
  %v1404 = vsub.f32 1.0, %v1403
  %v1405 = vmul.f32 %v1402, %v1404
  %v1406 = vadd.f32 %v1402, %v1405
  %vm1407 = vweird.f32 %v1366
  %vm1408 = vweird.f32 %v1402
  %vm1409 = vmor %vm1407, %vm1408
  %v1410 = vsel %vm1409, %v1402, %v1406
  %v1411 = vand.u32 2147483647, %v1366
  %vm1412 = vcmp.eq.f32.partialorder %v1411, 8.507059e+37
  %v1413 = vand.u32 %v1366, 2147483648
  %v1414 = vor.u32 1.1754944e-38, %v1413
  %v1415 = vsel %vm1412, %v1414, %v1410
  %v1416 = vmul.f32 %v1349, %v1415
  %v1417 = vrcp.pop %v1373
  %v1418 = vmul.f32 %v1373, %v1417
  %v1419 = vsub.f32 1.0, %v1418
  %v1420 = vmul.f32 %v1417, %v1419
  %v1421 = vadd.f32 %v1417, %v1420
  %vm1422 = vweird.f32 %v1373
  %vm1423 = vweird.f32 %v1417
  %vm1424 = vmor %vm1422, %vm1423
  %v1425 = vsel %vm1424, %v1417, %v1421
  %v1426 = vand.u32 2147483647, %v1373
  %vm1427 = vcmp.eq.f32.partialorder %v1426, 8.507059e+37
  %v1428 = vand.u32 %v1373, 2147483648
  %v1429 = vor.u32 1.1754944e-38, %v1428
  %v1430 = vsel %vm1427, %v1429, %v1425
  %v1431 = vmul.f32 %v1351, %v1430
  %v1432 = vrcp.pop %v1380
  %v1433 = vmul.f32 %v1380, %v1432
  %v1434 = vsub.f32 1.0, %v1433
  %v1435 = vmul.f32 %v1432, %v1434
  %v1436 = vadd.f32 %v1432, %v1435
  %vm1437 = vweird.f32 %v1380
  %vm1438 = vweird.f32 %v1432
  %vm1439 = vmor %vm1437, %vm1438
  %v1440 = vsel %vm1439, %v1432, %v1436
  %v1441 = vand.u32 2147483647, %v1380
  %vm1442 = vcmp.eq.f32.partialorder %v1441, 8.507059e+37
  %v1443 = vand.u32 %v1380, 2147483648
  %v1444 = vor.u32 1.1754944e-38, %v1443
  %v1445 = vsel %vm1442, %v1444, %v1440
  %v1446 = vmul.f32 %v1353, %v1445
  %v1447 = vrcp.pop %v1387
  %v1448 = vmul.f32 %v1387, %v1447
  %v1449 = vsub.f32 1.0, %v1448
  %v1450 = vmul.f32 %v1447, %v1449
  %v1451 = vadd.f32 %v1447, %v1450
  %vm1452 = vweird.f32 %v1387
  %vm1453 = vweird.f32 %v1447
  %vm1454 = vmor %vm1452, %vm1453
  %v1455 = vsel %vm1454, %v1447, %v1451
  %v1456 = vand.u32 2147483647, %v1387
  %vm1457 = vcmp.eq.f32.partialorder %v1456, 8.507059e+37
  %v1458 = vand.u32 %v1387, 2147483648
  %v1459 = vor.u32 1.1754944e-38, %v1458
  %v1460 = vsel %vm1457, %v1459, %v1455
  %v1461 = vmul.f32 %v1355, %v1460
  %v1462 = vrcp.pop %v1394
  %v1463 = vmul.f32 %v1394, %v1462
  %v1464 = vsub.f32 1.0, %v1463
  %v1465 = vmul.f32 %v1462, %v1464
  %v1466 = vadd.f32 %v1462, %v1465
  %vm1467 = vweird.f32 %v1394
  %vm1468 = vweird.f32 %v1462
  %vm1469 = vmor %vm1467, %vm1468
  %v1470 = vsel %vm1469, %v1462, %v1466
  %v1471 = vand.u32 2147483647, %v1394
  %vm1472 = vcmp.eq.f32.partialorder %v1471, 8.507059e+37
  %v1473 = vand.u32 %v1394, 2147483648
  %v1474 = vor.u32 1.1754944e-38, %v1473
  %v1475 = vsel %vm1472, %v1474, %v1470
  %v1476 = vmul.f32 %v1357, %v1475
  %v1477 = vrcp.pop %v1401
  %v1478 = vmul.f32 %v1401, %v1477
  %v1479 = vsub.f32 1.0, %v1478
  %v1480 = vmul.f32 %v1477, %v1479
  %v1481 = vadd.f32 %v1477, %v1480
  %vm1482 = vweird.f32 %v1401
  %vm1483 = vweird.f32 %v1477
  %vm1484 = vmor %vm1482, %vm1483
  %v1485 = vsel %vm1484, %v1477, %v1481
  %v1486 = vand.u32 2147483647, %v1401
  %vm1487 = vcmp.eq.f32.partialorder %v1486, 8.507059e+37
  %v1488 = vand.u32 %v1401, 2147483648
  %v1489 = vor.u32 1.1754944e-38, %v1488
  %v1490 = vsel %vm1487, %v1489, %v1485
  %v1491 = vmul.f32 %v1359, %v1490
  %1492 = vrot.lane.b32.xlu0 %v1259, 118
  %v1493 = vpop.permute.xlu0 %1492
  %v1495 = vmul.f32 %v1416, %v1493
  %v1496 = vmul.f32 %v1431, %v1493
  %v1497 = vmul.f32 %v1446, %v1493
  %v1498 = vmul.f32 %v1461, %v1493
  %v1499 = vmul.f32 %v1476, %v1493
  %v1500 = vmul.f32 %v1491, %v1493
  %v1501 = vsel %vm151, %v1495, 0.0
  %v1502 = vrot.slane %v1501, 4
  %v1503 = vadd.f32 %v1501, %v1502
  %v1504 = vrot.slane %v1503, 2
  %v1505 = vadd.f32 %v1503, %v1504
  %v1506 = vrot.slane %v1505, 1
  %v1507 = vadd.f32 %v1505, %v1506
  %v1508 = vsel %vm151, %v1496, 0.0
  %v1509 = vrot.slane %v1508, 4
  %v1510 = vadd.f32 %v1508, %v1509
  %v1511 = vrot.slane %v1510, 2
  %v1512 = vadd.f32 %v1510, %v1511
  %v1513 = vrot.slane %v1512, 1
  %v1514 = vadd.f32 %v1512, %v1513
  %v1515 = vsel %vm151, %v1497, 0.0
  %v1516 = vrot.slane %v1515, 4
  %v1517 = vadd.f32 %v1515, %v1516
  %v1518 = vrot.slane %v1517, 2
  %v1519 = vadd.f32 %v1517, %v1518
  %v1520 = vrot.slane %v1519, 1
  %v1521 = vadd.f32 %v1519, %v1520
  %v1522 = vsel %vm151, %v1498, 0.0
  %v1523 = vrot.slane %v1522, 4
  %v1524 = vadd.f32 %v1522, %v1523
  %v1525 = vrot.slane %v1524, 2
  %v1526 = vadd.f32 %v1524, %v1525
  %v1527 = vrot.slane %v1526, 1
  %v1528 = vadd.f32 %v1526, %v1527
  %v1529 = vsel %vm151, %v1499, 0.0
  %v1530 = vrot.slane %v1529, 4
  %v1531 = vadd.f32 %v1529, %v1530
  %v1532 = vrot.slane %v1531, 2
  %v1533 = vadd.f32 %v1531, %v1532
  %v1534 = vrot.slane %v1533, 1
  %v1535 = vadd.f32 %v1533, %v1534
  %v1536 = vsel %vm151, %v1500, 0.0
  %v1537 = vrot.slane %v1536, 4
  %v1538 = vadd.f32 %v1536, %v1537
  %v1539 = vrot.slane %v1538, 2
  %v1540 = vadd.f32 %v1538, %v1539
  %v1541 = vrot.slane %v1540, 1
  %v1542 = vadd.f32 %v1540, %v1541
  %v1544 = vperm.slane %v1192, 0
  %v1552 = vsel %vm404, %v1514, %v1507
  %v1553 = vsel %vm406, %v1521, %v1552
  %v1554 = vsel %vm408, %v1528, %v1553
  %v1555 = vsel %vm410, %v1535, %v1554
  %v1556 = vsel %vm412, %v1542, %v1555
  %v1557 = vsel %vm84, %v1556, 0
  %v1560 = vsel %vm88, %v1190, 0
  %1562 = vmatpush.msra.mxu0 0.0
  %1563 = vmatpush.msra.mxu0 0.0
  %1564 = vmatpush.msra.mxu0 0.0
  %1565 = vmatpush.msra.mxu0 0.0
  %1566 = vmatpush.msra.mxu0 0.0
  %1567 = vmatpush.msra.mxu0 0.0
  %1568 = vmatpush.msra.mxu0 0.0
  %1569 = vmatpush.msra.mxu0 0.0
  %1570 = vmatpush.msra.mxu0 0.0
  %1571 = vmatpush.msra.mxu0 0.0
  %1572 = vmatpush.msra.mxu0 0.0
  %1573 = vmatpush.msra.mxu0 0.0
  %1574 = vmatpush.msra.mxu0 0.0
  %1575 = vmatpush.msra.mxu0 0.0
  %1576 = vmatpush.msra.mxu0 0.0
  %1577 = vmatpush.msra.mxu0 %v1560
  %1578 = vmatmul.f32.gmra.mxu0 %v1557
  %v1579 = vpop.f32.mrf.mxu0
  %v1580 = vadd.f32 %v1544, %v1579
  %1581 = vdwg.mxu0
  %v1582 = vadd.f32 %v1184, %v1580
  %v1585 = vperm.slane %v1211, 0
  %v1586 = vperm.slane %v1211, 1
  %v1587 = vperm.slane %v1211, 2
  %v1588 = vperm.slane %v1211, 3
  %v1589 = vperm.slane %v1211, 4
  %v1590 = vperm.slane %v1211, 5
  %v1591 = vperm.slane %v1211, 6
  %v1592 = vperm.slane %v1211, 7
  %v1593 = vperm.slane %v1212, 0
  %v1594 = vperm.slane %v1212, 1
  %v1595 = vperm.slane %v1212, 2
  %v1596 = vperm.slane %v1212, 3
  %v1597 = vperm.slane %v1212, 4
  %v1598 = vperm.slane %v1212, 5
  %v1599 = vperm.slane %v1212, 6
  %v1600 = vperm.slane %v1212, 7
  %v1618 = vsel %vm84, %v1582, 0
  %v1621 = vsel %vm88, %v1194, 0
  %v1624 = vsel %vm88, %v1195, 0
  %v1627 = vsel %vm88, %v1196, 0
  %v1630 = vsel %vm88, %v1197, 0
  %v1633 = vsel %vm88, %v1198, 0
  %v1636 = vsel %vm88, %v1199, 0
  %v1639 = vsel %vm88, %v1200, 0
  %v1642 = vsel %vm88, %v1201, 0
  %v1645 = vsel %vm88, %v1202, 0
  %v1648 = vsel %vm88, %v1203, 0
  %v1651 = vsel %vm88, %v1204, 0
  %v1654 = vsel %vm88, %v1205, 0
  %v1657 = vsel %vm88, %v1206, 0
  %v1660 = vsel %vm88, %v1207, 0
  %v1663 = vsel %vm88, %v1208, 0
  %v1666 = vsel %vm88, %v1209, 0
  %1668 = vmatpush.msra.mxu0 0.0
  %1669 = vmatpush.msra.mxu0 0.0
  %1670 = vmatpush.msra.mxu0 0.0
  %1671 = vmatpush.msra.mxu0 0.0
  %1672 = vmatpush.msra.mxu0 0.0
  %1673 = vmatpush.msra.mxu0 0.0
  %1674 = vmatpush.msra.mxu0 0.0
  %1675 = vmatpush.msra.mxu0 0.0
  %1676 = vmatpush.msra.mxu0 0.0
  %1677 = vmatpush.msra.mxu0 0.0
  %1678 = vmatpush.msra.mxu0 0.0
  %1679 = vmatpush.msra.mxu0 0.0
  %1680 = vmatpush.msra.mxu0 0.0
  %1681 = vmatpush.msra.mxu0 0.0
  %1682 = vmatpush.msra.mxu0 0.0
  %1683 = vmatpush.msra.mxu0 %v1621
  %1684 = vmatmul.f32.gmra.mxu0 %v1618
  %v1685 = vpop.f32.mrf.mxu0
  %v1686 = vadd.f32 %v1585, %v1685
  %1687 = vdwg.mxu0
  %1688 = vmatpush.msra.mxu0 0.0
  %1689 = vmatpush.msra.mxu0 0.0
  %1690 = vmatpush.msra.mxu0 0.0
  %1691 = vmatpush.msra.mxu0 0.0
  %1692 = vmatpush.msra.mxu0 0.0
  %1693 = vmatpush.msra.mxu0 0.0
  %1694 = vmatpush.msra.mxu0 0.0
  %1695 = vmatpush.msra.mxu0 0.0
  %1696 = vmatpush.msra.mxu0 0.0
  %1697 = vmatpush.msra.mxu0 0.0
  %1698 = vmatpush.msra.mxu0 0.0
  %1699 = vmatpush.msra.mxu0 0.0
  %1700 = vmatpush.msra.mxu0 0.0
  %1701 = vmatpush.msra.mxu0 0.0
  %1702 = vmatpush.msra.mxu0 0.0
  %1703 = vmatpush.msra.mxu0 %v1624
  %1704 = vmatmul.f32.gmra.mxu0 %v1618
  %v1705 = vpop.f32.mrf.mxu0
  %v1706 = vadd.f32 %v1586, %v1705
  %1707 = vdwg.mxu0
  %1708 = vmatpush.msra.mxu0 0.0
  %1709 = vmatpush.msra.mxu0 0.0
  %1710 = vmatpush.msra.mxu0 0.0
  %1711 = vmatpush.msra.mxu0 0.0
  %1712 = vmatpush.msra.mxu0 0.0
  %1713 = vmatpush.msra.mxu0 0.0
  %1714 = vmatpush.msra.mxu0 0.0
  %1715 = vmatpush.msra.mxu0 0.0
  %1716 = vmatpush.msra.mxu0 0.0
  %1717 = vmatpush.msra.mxu0 0.0
  %1718 = vmatpush.msra.mxu0 0.0
  %1719 = vmatpush.msra.mxu0 0.0
  %1720 = vmatpush.msra.mxu0 0.0
  %1721 = vmatpush.msra.mxu0 0.0
  %1722 = vmatpush.msra.mxu0 0.0
  %1723 = vmatpush.msra.mxu0 %v1627
  %1724 = vmatmul.f32.gmra.mxu0 %v1618
  %v1725 = vpop.f32.mrf.mxu0
  %v1726 = vadd.f32 %v1587, %v1725
  %1727 = vdwg.mxu0
  %1728 = vmatpush.msra.mxu0 0.0
  %1729 = vmatpush.msra.mxu0 0.0
  %1730 = vmatpush.msra.mxu0 0.0
  %1731 = vmatpush.msra.mxu0 0.0
  %1732 = vmatpush.msra.mxu0 0.0
  %1733 = vmatpush.msra.mxu0 0.0
  %1734 = vmatpush.msra.mxu0 0.0
  %1735 = vmatpush.msra.mxu0 0.0
  %1736 = vmatpush.msra.mxu0 0.0
  %1737 = vmatpush.msra.mxu0 0.0
  %1738 = vmatpush.msra.mxu0 0.0
  %1739 = vmatpush.msra.mxu0 0.0
  %1740 = vmatpush.msra.mxu0 0.0
  %1741 = vmatpush.msra.mxu0 0.0
  %1742 = vmatpush.msra.mxu0 0.0
  %1743 = vmatpush.msra.mxu0 %v1630
  %1744 = vmatmul.f32.gmra.mxu0 %v1618
  %v1745 = vpop.f32.mrf.mxu0
  %v1746 = vadd.f32 %v1588, %v1745
  %1747 = vdwg.mxu0
  %1748 = vmatpush.msra.mxu0 0.0
  %1749 = vmatpush.msra.mxu0 0.0
  %1750 = vmatpush.msra.mxu0 0.0
  %1751 = vmatpush.msra.mxu0 0.0
  %1752 = vmatpush.msra.mxu0 0.0
  %1753 = vmatpush.msra.mxu0 0.0
  %1754 = vmatpush.msra.mxu0 0.0
  %1755 = vmatpush.msra.mxu0 0.0
  %1756 = vmatpush.msra.mxu0 0.0
  %1757 = vmatpush.msra.mxu0 0.0
  %1758 = vmatpush.msra.mxu0 0.0
  %1759 = vmatpush.msra.mxu0 0.0
  %1760 = vmatpush.msra.mxu0 0.0
  %1761 = vmatpush.msra.mxu0 0.0
  %1762 = vmatpush.msra.mxu0 0.0
  %1763 = vmatpush.msra.mxu0 %v1633
  %1764 = vmatmul.f32.gmra.mxu0 %v1618
  %v1765 = vpop.f32.mrf.mxu0
  %v1766 = vadd.f32 %v1589, %v1765
  %1767 = vdwg.mxu0
  %1768 = vmatpush.msra.mxu0 0.0
  %1769 = vmatpush.msra.mxu0 0.0
  %1770 = vmatpush.msra.mxu0 0.0
  %1771 = vmatpush.msra.mxu0 0.0
  %1772 = vmatpush.msra.mxu0 0.0
  %1773 = vmatpush.msra.mxu0 0.0
  %1774 = vmatpush.msra.mxu0 0.0
  %1775 = vmatpush.msra.mxu0 0.0
  %1776 = vmatpush.msra.mxu0 0.0
  %1777 = vmatpush.msra.mxu0 0.0
  %1778 = vmatpush.msra.mxu0 0.0
  %1779 = vmatpush.msra.mxu0 0.0
  %1780 = vmatpush.msra.mxu0 0.0
  %1781 = vmatpush.msra.mxu0 0.0
  %1782 = vmatpush.msra.mxu0 0.0
  %1783 = vmatpush.msra.mxu0 %v1636
  %1784 = vmatmul.f32.gmra.mxu0 %v1618
  %v1785 = vpop.f32.mrf.mxu0
  %v1786 = vadd.f32 %v1590, %v1785
  %1787 = vdwg.mxu0
  %1788 = vmatpush.msra.mxu0 0.0
  %1789 = vmatpush.msra.mxu0 0.0
  %1790 = vmatpush.msra.mxu0 0.0
  %1791 = vmatpush.msra.mxu0 0.0
  %1792 = vmatpush.msra.mxu0 0.0
  %1793 = vmatpush.msra.mxu0 0.0
  %1794 = vmatpush.msra.mxu0 0.0
  %1795 = vmatpush.msra.mxu0 0.0
  %1796 = vmatpush.msra.mxu0 0.0
  %1797 = vmatpush.msra.mxu0 0.0
  %1798 = vmatpush.msra.mxu0 0.0
  %1799 = vmatpush.msra.mxu0 0.0
  %1800 = vmatpush.msra.mxu0 0.0
  %1801 = vmatpush.msra.mxu0 0.0
  %1802 = vmatpush.msra.mxu0 0.0
  %1803 = vmatpush.msra.mxu0 %v1639
  %1804 = vmatmul.f32.gmra.mxu0 %v1618
  %v1805 = vpop.f32.mrf.mxu0
  %v1806 = vadd.f32 %v1591, %v1805
  %1807 = vdwg.mxu0
  %1808 = vmatpush.msra.mxu0 0.0
  %1809 = vmatpush.msra.mxu0 0.0
  %1810 = vmatpush.msra.mxu0 0.0
  %1811 = vmatpush.msra.mxu0 0.0
  %1812 = vmatpush.msra.mxu0 0.0
  %1813 = vmatpush.msra.mxu0 0.0
  %1814 = vmatpush.msra.mxu0 0.0
  %1815 = vmatpush.msra.mxu0 0.0
  %1816 = vmatpush.msra.mxu0 0.0
  %1817 = vmatpush.msra.mxu0 0.0
  %1818 = vmatpush.msra.mxu0 0.0
  %1819 = vmatpush.msra.mxu0 0.0
  %1820 = vmatpush.msra.mxu0 0.0
  %1821 = vmatpush.msra.mxu0 0.0
  %1822 = vmatpush.msra.mxu0 0.0
  %1823 = vmatpush.msra.mxu0 %v1642
  %1824 = vmatmul.f32.gmra.mxu0 %v1618
  %v1825 = vpop.f32.mrf.mxu0
  %v1826 = vadd.f32 %v1592, %v1825
  %1827 = vdwg.mxu0
  %1828 = vmatpush.msra.mxu0 0.0
  %1829 = vmatpush.msra.mxu0 0.0
  %1830 = vmatpush.msra.mxu0 0.0
  %1831 = vmatpush.msra.mxu0 0.0
  %1832 = vmatpush.msra.mxu0 0.0
  %1833 = vmatpush.msra.mxu0 0.0
  %1834 = vmatpush.msra.mxu0 0.0
  %1835 = vmatpush.msra.mxu0 0.0
  %1836 = vmatpush.msra.mxu0 0.0
  %1837 = vmatpush.msra.mxu0 0.0
  %1838 = vmatpush.msra.mxu0 0.0
  %1839 = vmatpush.msra.mxu0 0.0
  %1840 = vmatpush.msra.mxu0 0.0
  %1841 = vmatpush.msra.mxu0 0.0
  %1842 = vmatpush.msra.mxu0 0.0
  %1843 = vmatpush.msra.mxu0 %v1645
  %1844 = vmatmul.f32.gmra.mxu0 %v1618
  %v1845 = vpop.f32.mrf.mxu0
  %v1846 = vadd.f32 %v1593, %v1845
  %1847 = vdwg.mxu0
  %1848 = vmatpush.msra.mxu0 0.0
  %1849 = vmatpush.msra.mxu0 0.0
  %1850 = vmatpush.msra.mxu0 0.0
  %1851 = vmatpush.msra.mxu0 0.0
  %1852 = vmatpush.msra.mxu0 0.0
  %1853 = vmatpush.msra.mxu0 0.0
  %1854 = vmatpush.msra.mxu0 0.0
  %1855 = vmatpush.msra.mxu0 0.0
  %1856 = vmatpush.msra.mxu0 0.0
  %1857 = vmatpush.msra.mxu0 0.0
  %1858 = vmatpush.msra.mxu0 0.0
  %1859 = vmatpush.msra.mxu0 0.0
  %1860 = vmatpush.msra.mxu0 0.0
  %1861 = vmatpush.msra.mxu0 0.0
  %1862 = vmatpush.msra.mxu0 0.0
  %1863 = vmatpush.msra.mxu0 %v1648
  %1864 = vmatmul.f32.gmra.mxu0 %v1618
  %v1865 = vpop.f32.mrf.mxu0
  %v1866 = vadd.f32 %v1594, %v1865
  %1867 = vdwg.mxu0
  %1868 = vmatpush.msra.mxu0 0.0
  %1869 = vmatpush.msra.mxu0 0.0
  %1870 = vmatpush.msra.mxu0 0.0
  %1871 = vmatpush.msra.mxu0 0.0
  %1872 = vmatpush.msra.mxu0 0.0
  %1873 = vmatpush.msra.mxu0 0.0
  %1874 = vmatpush.msra.mxu0 0.0
  %1875 = vmatpush.msra.mxu0 0.0
  %1876 = vmatpush.msra.mxu0 0.0
  %1877 = vmatpush.msra.mxu0 0.0
  %1878 = vmatpush.msra.mxu0 0.0
  %1879 = vmatpush.msra.mxu0 0.0
  %1880 = vmatpush.msra.mxu0 0.0
  %1881 = vmatpush.msra.mxu0 0.0
  %1882 = vmatpush.msra.mxu0 0.0
  %1883 = vmatpush.msra.mxu0 %v1651
  %1884 = vmatmul.f32.gmra.mxu0 %v1618
  %v1885 = vpop.f32.mrf.mxu0
  %v1886 = vadd.f32 %v1595, %v1885
  %1887 = vdwg.mxu0
  %1888 = vmatpush.msra.mxu0 0.0
  %1889 = vmatpush.msra.mxu0 0.0
  %1890 = vmatpush.msra.mxu0 0.0
  %1891 = vmatpush.msra.mxu0 0.0
  %1892 = vmatpush.msra.mxu0 0.0
  %1893 = vmatpush.msra.mxu0 0.0
  %1894 = vmatpush.msra.mxu0 0.0
  %1895 = vmatpush.msra.mxu0 0.0
  %1896 = vmatpush.msra.mxu0 0.0
  %1897 = vmatpush.msra.mxu0 0.0
  %1898 = vmatpush.msra.mxu0 0.0
  %1899 = vmatpush.msra.mxu0 0.0
  %1900 = vmatpush.msra.mxu0 0.0
  %1901 = vmatpush.msra.mxu0 0.0
  %1902 = vmatpush.msra.mxu0 0.0
  %1903 = vmatpush.msra.mxu0 %v1654
  %1904 = vmatmul.f32.gmra.mxu0 %v1618
  %v1905 = vpop.f32.mrf.mxu0
  %v1906 = vadd.f32 %v1596, %v1905
  %1907 = vdwg.mxu0
  %1908 = vmatpush.msra.mxu0 0.0
  %1909 = vmatpush.msra.mxu0 0.0
  %1910 = vmatpush.msra.mxu0 0.0
  %1911 = vmatpush.msra.mxu0 0.0
  %1912 = vmatpush.msra.mxu0 0.0
  %1913 = vmatpush.msra.mxu0 0.0
  %1914 = vmatpush.msra.mxu0 0.0
  %1915 = vmatpush.msra.mxu0 0.0
  %1916 = vmatpush.msra.mxu0 0.0
  %1917 = vmatpush.msra.mxu0 0.0
  %1918 = vmatpush.msra.mxu0 0.0
  %1919 = vmatpush.msra.mxu0 0.0
  %1920 = vmatpush.msra.mxu0 0.0
  %1921 = vmatpush.msra.mxu0 0.0
  %1922 = vmatpush.msra.mxu0 0.0
  %1923 = vmatpush.msra.mxu0 %v1657
  %1924 = vmatmul.f32.gmra.mxu0 %v1618
  %v1925 = vpop.f32.mrf.mxu0
  %v1926 = vadd.f32 %v1597, %v1925
  %1927 = vdwg.mxu0
  %1928 = vmatpush.msra.mxu0 0.0
  %1929 = vmatpush.msra.mxu0 0.0
  %1930 = vmatpush.msra.mxu0 0.0
  %1931 = vmatpush.msra.mxu0 0.0
  %1932 = vmatpush.msra.mxu0 0.0
  %1933 = vmatpush.msra.mxu0 0.0
  %1934 = vmatpush.msra.mxu0 0.0
  %1935 = vmatpush.msra.mxu0 0.0
  %1936 = vmatpush.msra.mxu0 0.0
  %1937 = vmatpush.msra.mxu0 0.0
  %1938 = vmatpush.msra.mxu0 0.0
  %1939 = vmatpush.msra.mxu0 0.0
  %1940 = vmatpush.msra.mxu0 0.0
  %1941 = vmatpush.msra.mxu0 0.0
  %1942 = vmatpush.msra.mxu0 0.0
  %1943 = vmatpush.msra.mxu0 %v1660
  %1944 = vmatmul.f32.gmra.mxu0 %v1618
  %v1945 = vpop.f32.mrf.mxu0
  %v1946 = vadd.f32 %v1598, %v1945
  %1947 = vdwg.mxu0
  %1948 = vmatpush.msra.mxu0 0.0
  %1949 = vmatpush.msra.mxu0 0.0
  %1950 = vmatpush.msra.mxu0 0.0
  %1951 = vmatpush.msra.mxu0 0.0
  %1952 = vmatpush.msra.mxu0 0.0
  %1953 = vmatpush.msra.mxu0 0.0
  %1954 = vmatpush.msra.mxu0 0.0
  %1955 = vmatpush.msra.mxu0 0.0
  %1956 = vmatpush.msra.mxu0 0.0
  %1957 = vmatpush.msra.mxu0 0.0
  %1958 = vmatpush.msra.mxu0 0.0
  %1959 = vmatpush.msra.mxu0 0.0
  %1960 = vmatpush.msra.mxu0 0.0
  %1961 = vmatpush.msra.mxu0 0.0
  %1962 = vmatpush.msra.mxu0 0.0
  %1963 = vmatpush.msra.mxu0 %v1663
  %1964 = vmatmul.f32.gmra.mxu0 %v1618
  %v1965 = vpop.f32.mrf.mxu0
  %v1966 = vadd.f32 %v1599, %v1965
  %1967 = vdwg.mxu0
  %1968 = vmatpush.msra.mxu0 0.0
  %1969 = vmatpush.msra.mxu0 0.0
  %1970 = vmatpush.msra.mxu0 0.0
  %1971 = vmatpush.msra.mxu0 0.0
  %1972 = vmatpush.msra.mxu0 0.0
  %1973 = vmatpush.msra.mxu0 0.0
  %1974 = vmatpush.msra.mxu0 0.0
  %1975 = vmatpush.msra.mxu0 0.0
  %1976 = vmatpush.msra.mxu0 0.0
  %1977 = vmatpush.msra.mxu0 0.0
  %1978 = vmatpush.msra.mxu0 0.0
  %1979 = vmatpush.msra.mxu0 0.0
  %1980 = vmatpush.msra.mxu0 0.0
  %1981 = vmatpush.msra.mxu0 0.0
  %1982 = vmatpush.msra.mxu0 0.0
  %1983 = vmatpush.msra.mxu0 %v1666
  %1984 = vmatmul.f32.gmra.mxu0 %v1618
  %v1985 = vpop.f32.mrf.mxu0
  %v1986 = vadd.f32 %v1600, %v1985
  %1987 = vdwg.mxu0
  %v1988 = vmax.f32 %v1686, 0.0
  %v1989 = vmax.f32 %v1706, 0.0
  %v1990 = vmax.f32 %v1726, 0.0
  %v1991 = vmax.f32 %v1746, 0.0
  %v1992 = vmax.f32 %v1766, 0.0
  %v1993 = vmax.f32 %v1786, 0.0
  %v1994 = vmax.f32 %v1806, 0.0
  %v1995 = vmax.f32 %v1826, 0.0
  %v1996 = vmax.f32 %v1846, 0.0
  %v1997 = vmax.f32 %v1866, 0.0
  %v1998 = vmax.f32 %v1886, 0.0
  %v1999 = vmax.f32 %v1906, 0.0
  %v2000 = vmax.f32 %v1926, 0.0
  %v2001 = vmax.f32 %v1946, 0.0
  %v2002 = vmax.f32 %v1966, 0.0
  %v2003 = vmax.f32 %v1986, 0.0
  %v2005 = vperm.slane %v1231, 0
  %2007 = vmatpush.xpose.msra.mxu0 0.0
  %2008 = vmatpush.xpose.msra.mxu0 0.0
  %2009 = vmatpush.xpose.msra.mxu0 0.0
  %2010 = vmatpush.xpose.msra.mxu0 0.0
  %2011 = vmatpush.xpose.msra.mxu0 0.0
  %2012 = vmatpush.xpose.msra.mxu0 0.0
  %2013 = vmatpush.xpose.msra.mxu0 0.0
  %2014 = vmatpush.xpose.msra.mxu0 0.0
  %2015 = vmatpush.xpose.msra.mxu0 0.0
  %2016 = vmatpush.xpose.msra.mxu0 0.0
  %2017 = vmatpush.xpose.msra.mxu0 0.0
  %2018 = vmatpush.xpose.msra.mxu0 0.0
  %2019 = vmatpush.xpose.msra.mxu0 0.0
  %2020 = vmatpush.xpose.msra.mxu0 0.0
  %2021 = vmatpush.xpose.msra.mxu0 0.0
  %2022 = vmatpush.xpose.msra.mxu0 %v1214
  %2023 = vmatmul.f32.gmra.mxu0 %v1988
  %v2024 = vpop.f32.mrf.mxu0
  %v2025 = vadd.f32 %v2005, %v2024
  %2026 = vdwg.mxu0
  %2027 = vmatpush.xpose.msra.mxu0 0.0
  %2028 = vmatpush.xpose.msra.mxu0 0.0
  %2029 = vmatpush.xpose.msra.mxu0 0.0
  %2030 = vmatpush.xpose.msra.mxu0 0.0
  %2031 = vmatpush.xpose.msra.mxu0 0.0
  %2032 = vmatpush.xpose.msra.mxu0 0.0
  %2033 = vmatpush.xpose.msra.mxu0 0.0
  %2034 = vmatpush.xpose.msra.mxu0 0.0
  %2035 = vmatpush.xpose.msra.mxu0 0.0
  %2036 = vmatpush.xpose.msra.mxu0 0.0
  %2037 = vmatpush.xpose.msra.mxu0 0.0
  %2038 = vmatpush.xpose.msra.mxu0 0.0
  %2039 = vmatpush.xpose.msra.mxu0 0.0
  %2040 = vmatpush.xpose.msra.mxu0 0.0
  %2041 = vmatpush.xpose.msra.mxu0 0.0
  %2042 = vmatpush.xpose.msra.mxu0 %v1215
  %2043 = vmatmul.f32.gmra.mxu0 %v1989
  %v2044 = vpop.f32.mrf.mxu0
  %v2045 = vadd.f32 %v2025, %v2044
  %2046 = vdwg.mxu0
  %2047 = vmatpush.xpose.msra.mxu0 0.0
  %2048 = vmatpush.xpose.msra.mxu0 0.0
  %2049 = vmatpush.xpose.msra.mxu0 0.0
  %2050 = vmatpush.xpose.msra.mxu0 0.0
  %2051 = vmatpush.xpose.msra.mxu0 0.0
  %2052 = vmatpush.xpose.msra.mxu0 0.0
  %2053 = vmatpush.xpose.msra.mxu0 0.0
  %2054 = vmatpush.xpose.msra.mxu0 0.0
  %2055 = vmatpush.xpose.msra.mxu0 0.0
  %2056 = vmatpush.xpose.msra.mxu0 0.0
  %2057 = vmatpush.xpose.msra.mxu0 0.0
  %2058 = vmatpush.xpose.msra.mxu0 0.0
  %2059 = vmatpush.xpose.msra.mxu0 0.0
  %2060 = vmatpush.xpose.msra.mxu0 0.0
  %2061 = vmatpush.xpose.msra.mxu0 0.0
  %2062 = vmatpush.xpose.msra.mxu0 %v1216
  %2063 = vmatmul.f32.gmra.mxu0 %v1990
  %v2064 = vpop.f32.mrf.mxu0
  %v2065 = vadd.f32 %v2045, %v2064
  %2066 = vdwg.mxu0
  %2067 = vmatpush.xpose.msra.mxu0 0.0
  %2068 = vmatpush.xpose.msra.mxu0 0.0
  %2069 = vmatpush.xpose.msra.mxu0 0.0
  %2070 = vmatpush.xpose.msra.mxu0 0.0
  %2071 = vmatpush.xpose.msra.mxu0 0.0
  %2072 = vmatpush.xpose.msra.mxu0 0.0
  %2073 = vmatpush.xpose.msra.mxu0 0.0
  %2074 = vmatpush.xpose.msra.mxu0 0.0
  %2075 = vmatpush.xpose.msra.mxu0 0.0
  %2076 = vmatpush.xpose.msra.mxu0 0.0
  %2077 = vmatpush.xpose.msra.mxu0 0.0
  %2078 = vmatpush.xpose.msra.mxu0 0.0
  %2079 = vmatpush.xpose.msra.mxu0 0.0
  %2080 = vmatpush.xpose.msra.mxu0 0.0
  %2081 = vmatpush.xpose.msra.mxu0 0.0
  %2082 = vmatpush.xpose.msra.mxu0 %v1217
  %2083 = vmatmul.f32.gmra.mxu0 %v1991
  %v2084 = vpop.f32.mrf.mxu0
  %v2085 = vadd.f32 %v2065, %v2084
  %2086 = vdwg.mxu0
  %2087 = vmatpush.xpose.msra.mxu0 0.0
  %2088 = vmatpush.xpose.msra.mxu0 0.0
  %2089 = vmatpush.xpose.msra.mxu0 0.0
  %2090 = vmatpush.xpose.msra.mxu0 0.0
  %2091 = vmatpush.xpose.msra.mxu0 0.0
  %2092 = vmatpush.xpose.msra.mxu0 0.0
  %2093 = vmatpush.xpose.msra.mxu0 0.0
  %2094 = vmatpush.xpose.msra.mxu0 0.0
  %2095 = vmatpush.xpose.msra.mxu0 0.0
  %2096 = vmatpush.xpose.msra.mxu0 0.0
  %2097 = vmatpush.xpose.msra.mxu0 0.0
  %2098 = vmatpush.xpose.msra.mxu0 0.0
  %2099 = vmatpush.xpose.msra.mxu0 0.0
  %2100 = vmatpush.xpose.msra.mxu0 0.0
  %2101 = vmatpush.xpose.msra.mxu0 0.0
  %2102 = vmatpush.xpose.msra.mxu0 %v1218
  %2103 = vmatmul.f32.gmra.mxu0 %v1992
  %v2104 = vpop.f32.mrf.mxu0
  %v2105 = vadd.f32 %v2085, %v2104
  %2106 = vdwg.mxu0
  %2107 = vmatpush.xpose.msra.mxu0 0.0
  %2108 = vmatpush.xpose.msra.mxu0 0.0
  %2109 = vmatpush.xpose.msra.mxu0 0.0
  %2110 = vmatpush.xpose.msra.mxu0 0.0
  %2111 = vmatpush.xpose.msra.mxu0 0.0
  %2112 = vmatpush.xpose.msra.mxu0 0.0
  %2113 = vmatpush.xpose.msra.mxu0 0.0
  %2114 = vmatpush.xpose.msra.mxu0 0.0
  %2115 = vmatpush.xpose.msra.mxu0 0.0
  %2116 = vmatpush.xpose.msra.mxu0 0.0
  %2117 = vmatpush.xpose.msra.mxu0 0.0
  %2118 = vmatpush.xpose.msra.mxu0 0.0
  %2119 = vmatpush.xpose.msra.mxu0 0.0
  %2120 = vmatpush.xpose.msra.mxu0 0.0
  %2121 = vmatpush.xpose.msra.mxu0 0.0
  %2122 = vmatpush.xpose.msra.mxu0 %v1219
  %2123 = vmatmul.f32.gmra.mxu0 %v1993
  %v2124 = vpop.f32.mrf.mxu0
  %v2125 = vadd.f32 %v2105, %v2124
  %2126 = vdwg.mxu0
  %2127 = vmatpush.xpose.msra.mxu0 0.0
  %2128 = vmatpush.xpose.msra.mxu0 0.0
  %2129 = vmatpush.xpose.msra.mxu0 0.0
  %2130 = vmatpush.xpose.msra.mxu0 0.0
  %2131 = vmatpush.xpose.msra.mxu0 0.0
  %2132 = vmatpush.xpose.msra.mxu0 0.0
  %2133 = vmatpush.xpose.msra.mxu0 0.0
  %2134 = vmatpush.xpose.msra.mxu0 0.0
  %2135 = vmatpush.xpose.msra.mxu0 0.0
  %2136 = vmatpush.xpose.msra.mxu0 0.0
  %2137 = vmatpush.xpose.msra.mxu0 0.0
  %2138 = vmatpush.xpose.msra.mxu0 0.0
  %2139 = vmatpush.xpose.msra.mxu0 0.0
  %2140 = vmatpush.xpose.msra.mxu0 0.0
  %2141 = vmatpush.xpose.msra.mxu0 0.0
  %2142 = vmatpush.xpose.msra.mxu0 %v1220
  %2143 = vmatmul.f32.gmra.mxu0 %v1994
  %v2144 = vpop.f32.mrf.mxu0
  %v2145 = vadd.f32 %v2125, %v2144
  %2146 = vdwg.mxu0
  %2147 = vmatpush.xpose.msra.mxu0 0.0
  %2148 = vmatpush.xpose.msra.mxu0 0.0
  %2149 = vmatpush.xpose.msra.mxu0 0.0
  %2150 = vmatpush.xpose.msra.mxu0 0.0
  %2151 = vmatpush.xpose.msra.mxu0 0.0
  %2152 = vmatpush.xpose.msra.mxu0 0.0
  %2153 = vmatpush.xpose.msra.mxu0 0.0
  %2154 = vmatpush.xpose.msra.mxu0 0.0
  %2155 = vmatpush.xpose.msra.mxu0 0.0
  %2156 = vmatpush.xpose.msra.mxu0 0.0
  %2157 = vmatpush.xpose.msra.mxu0 0.0
  %2158 = vmatpush.xpose.msra.mxu0 0.0
  %2159 = vmatpush.xpose.msra.mxu0 0.0
  %2160 = vmatpush.xpose.msra.mxu0 0.0
  %2161 = vmatpush.xpose.msra.mxu0 0.0
  %2162 = vmatpush.xpose.msra.mxu0 %v1221
  %2163 = vmatmul.f32.gmra.mxu0 %v1995
  %v2164 = vpop.f32.mrf.mxu0
  %v2165 = vadd.f32 %v2145, %v2164
  %2166 = vdwg.mxu0
  %2167 = vmatpush.xpose.msra.mxu0 0.0
  %2168 = vmatpush.xpose.msra.mxu0 0.0
  %2169 = vmatpush.xpose.msra.mxu0 0.0
  %2170 = vmatpush.xpose.msra.mxu0 0.0
  %2171 = vmatpush.xpose.msra.mxu0 0.0
  %2172 = vmatpush.xpose.msra.mxu0 0.0
  %2173 = vmatpush.xpose.msra.mxu0 0.0
  %2174 = vmatpush.xpose.msra.mxu0 0.0
  %2175 = vmatpush.xpose.msra.mxu0 0.0
  %2176 = vmatpush.xpose.msra.mxu0 0.0
  %2177 = vmatpush.xpose.msra.mxu0 0.0
  %2178 = vmatpush.xpose.msra.mxu0 0.0
  %2179 = vmatpush.xpose.msra.mxu0 0.0
  %2180 = vmatpush.xpose.msra.mxu0 0.0
  %2181 = vmatpush.xpose.msra.mxu0 0.0
  %2182 = vmatpush.xpose.msra.mxu0 %v1222
  %2183 = vmatmul.f32.gmra.mxu0 %v1996
  %v2184 = vpop.f32.mrf.mxu0
  %v2185 = vadd.f32 %v2165, %v2184
  %2186 = vdwg.mxu0
  %2187 = vmatpush.xpose.msra.mxu0 0.0
  %2188 = vmatpush.xpose.msra.mxu0 0.0
  %2189 = vmatpush.xpose.msra.mxu0 0.0
  %2190 = vmatpush.xpose.msra.mxu0 0.0
  %2191 = vmatpush.xpose.msra.mxu0 0.0
  %2192 = vmatpush.xpose.msra.mxu0 0.0
  %2193 = vmatpush.xpose.msra.mxu0 0.0
  %2194 = vmatpush.xpose.msra.mxu0 0.0
  %2195 = vmatpush.xpose.msra.mxu0 0.0
  %2196 = vmatpush.xpose.msra.mxu0 0.0
  %2197 = vmatpush.xpose.msra.mxu0 0.0
  %2198 = vmatpush.xpose.msra.mxu0 0.0
  %2199 = vmatpush.xpose.msra.mxu0 0.0
  %2200 = vmatpush.xpose.msra.mxu0 0.0
  %2201 = vmatpush.xpose.msra.mxu0 0.0
  %2202 = vmatpush.xpose.msra.mxu0 %v1223
  %2203 = vmatmul.f32.gmra.mxu0 %v1997
  %v2204 = vpop.f32.mrf.mxu0
  %v2205 = vadd.f32 %v2185, %v2204
  %2206 = vdwg.mxu0
  %2207 = vmatpush.xpose.msra.mxu0 0.0
  %2208 = vmatpush.xpose.msra.mxu0 0.0
  %2209 = vmatpush.xpose.msra.mxu0 0.0
  %2210 = vmatpush.xpose.msra.mxu0 0.0
  %2211 = vmatpush.xpose.msra.mxu0 0.0
  %2212 = vmatpush.xpose.msra.mxu0 0.0
  %2213 = vmatpush.xpose.msra.mxu0 0.0
  %2214 = vmatpush.xpose.msra.mxu0 0.0
  %2215 = vmatpush.xpose.msra.mxu0 0.0
  %2216 = vmatpush.xpose.msra.mxu0 0.0
  %2217 = vmatpush.xpose.msra.mxu0 0.0
  %2218 = vmatpush.xpose.msra.mxu0 0.0
  %2219 = vmatpush.xpose.msra.mxu0 0.0
  %2220 = vmatpush.xpose.msra.mxu0 0.0
  %2221 = vmatpush.xpose.msra.mxu0 0.0
  %2222 = vmatpush.xpose.msra.mxu0 %v1224
  %2223 = vmatmul.f32.gmra.mxu0 %v1998
  %v2224 = vpop.f32.mrf.mxu0
  %v2225 = vadd.f32 %v2205, %v2224
  %2226 = vdwg.mxu0
  %2227 = vmatpush.xpose.msra.mxu0 0.0
  %2228 = vmatpush.xpose.msra.mxu0 0.0
  %2229 = vmatpush.xpose.msra.mxu0 0.0
  %2230 = vmatpush.xpose.msra.mxu0 0.0
  %2231 = vmatpush.xpose.msra.mxu0 0.0
  %2232 = vmatpush.xpose.msra.mxu0 0.0
  %2233 = vmatpush.xpose.msra.mxu0 0.0
  %2234 = vmatpush.xpose.msra.mxu0 0.0
  %2235 = vmatpush.xpose.msra.mxu0 0.0
  %2236 = vmatpush.xpose.msra.mxu0 0.0
  %2237 = vmatpush.xpose.msra.mxu0 0.0
  %2238 = vmatpush.xpose.msra.mxu0 0.0
  %2239 = vmatpush.xpose.msra.mxu0 0.0
  %2240 = vmatpush.xpose.msra.mxu0 0.0
  %2241 = vmatpush.xpose.msra.mxu0 0.0
  %2242 = vmatpush.xpose.msra.mxu0 %v1225
  %2243 = vmatmul.f32.gmra.mxu0 %v1999
  %v2244 = vpop.f32.mrf.mxu0
  %v2245 = vadd.f32 %v2225, %v2244
  %2246 = vdwg.mxu0
  %2247 = vmatpush.xpose.msra.mxu0 0.0
  %2248 = vmatpush.xpose.msra.mxu0 0.0
  %2249 = vmatpush.xpose.msra.mxu0 0.0
  %2250 = vmatpush.xpose.msra.mxu0 0.0
  %2251 = vmatpush.xpose.msra.mxu0 0.0
  %2252 = vmatpush.xpose.msra.mxu0 0.0
  %2253 = vmatpush.xpose.msra.mxu0 0.0
  %2254 = vmatpush.xpose.msra.mxu0 0.0
  %2255 = vmatpush.xpose.msra.mxu0 0.0
  %2256 = vmatpush.xpose.msra.mxu0 0.0
  %2257 = vmatpush.xpose.msra.mxu0 0.0
  %2258 = vmatpush.xpose.msra.mxu0 0.0
  %2259 = vmatpush.xpose.msra.mxu0 0.0
  %2260 = vmatpush.xpose.msra.mxu0 0.0
  %2261 = vmatpush.xpose.msra.mxu0 0.0
  %2262 = vmatpush.xpose.msra.mxu0 %v1226
  %2263 = vmatmul.f32.gmra.mxu0 %v2000
  %v2264 = vpop.f32.mrf.mxu0
  %v2265 = vadd.f32 %v2245, %v2264
  %2266 = vdwg.mxu0
  %2267 = vmatpush.xpose.msra.mxu0 0.0
  %2268 = vmatpush.xpose.msra.mxu0 0.0
  %2269 = vmatpush.xpose.msra.mxu0 0.0
  %2270 = vmatpush.xpose.msra.mxu0 0.0
  %2271 = vmatpush.xpose.msra.mxu0 0.0
  %2272 = vmatpush.xpose.msra.mxu0 0.0
  %2273 = vmatpush.xpose.msra.mxu0 0.0
  %2274 = vmatpush.xpose.msra.mxu0 0.0
  %2275 = vmatpush.xpose.msra.mxu0 0.0
  %2276 = vmatpush.xpose.msra.mxu0 0.0
  %2277 = vmatpush.xpose.msra.mxu0 0.0
  %2278 = vmatpush.xpose.msra.mxu0 0.0
  %2279 = vmatpush.xpose.msra.mxu0 0.0
  %2280 = vmatpush.xpose.msra.mxu0 0.0
  %2281 = vmatpush.xpose.msra.mxu0 0.0
  %2282 = vmatpush.xpose.msra.mxu0 %v1227
  %2283 = vmatmul.f32.gmra.mxu0 %v2001
  %v2284 = vpop.f32.mrf.mxu0
  %v2285 = vadd.f32 %v2265, %v2284
  %2286 = vdwg.mxu0
  %2287 = vmatpush.xpose.msra.mxu0 0.0
  %2288 = vmatpush.xpose.msra.mxu0 0.0
  %2289 = vmatpush.xpose.msra.mxu0 0.0
  %2290 = vmatpush.xpose.msra.mxu0 0.0
  %2291 = vmatpush.xpose.msra.mxu0 0.0
  %2292 = vmatpush.xpose.msra.mxu0 0.0
  %2293 = vmatpush.xpose.msra.mxu0 0.0
  %2294 = vmatpush.xpose.msra.mxu0 0.0
  %2295 = vmatpush.xpose.msra.mxu0 0.0
  %2296 = vmatpush.xpose.msra.mxu0 0.0
  %2297 = vmatpush.xpose.msra.mxu0 0.0
  %2298 = vmatpush.xpose.msra.mxu0 0.0
  %2299 = vmatpush.xpose.msra.mxu0 0.0
  %2300 = vmatpush.xpose.msra.mxu0 0.0
  %2301 = vmatpush.xpose.msra.mxu0 0.0
  %2302 = vmatpush.xpose.msra.mxu0 %v1228
  %2303 = vmatmul.f32.gmra.mxu0 %v2002
  %v2304 = vpop.f32.mrf.mxu0
  %v2305 = vadd.f32 %v2285, %v2304
  %2306 = vdwg.mxu0
  %2307 = vmatpush.xpose.msra.mxu0 0.0
  %2308 = vmatpush.xpose.msra.mxu0 0.0
  %2309 = vmatpush.xpose.msra.mxu0 0.0
  %2310 = vmatpush.xpose.msra.mxu0 0.0
  %2311 = vmatpush.xpose.msra.mxu0 0.0
  %2312 = vmatpush.xpose.msra.mxu0 0.0
  %2313 = vmatpush.xpose.msra.mxu0 0.0
  %2314 = vmatpush.xpose.msra.mxu0 0.0
  %2315 = vmatpush.xpose.msra.mxu0 0.0
  %2316 = vmatpush.xpose.msra.mxu0 0.0
  %2317 = vmatpush.xpose.msra.mxu0 0.0
  %2318 = vmatpush.xpose.msra.mxu0 0.0
  %2319 = vmatpush.xpose.msra.mxu0 0.0
  %2320 = vmatpush.xpose.msra.mxu0 0.0
  %2321 = vmatpush.xpose.msra.mxu0 0.0
  %2322 = vmatpush.xpose.msra.mxu0 %v1229
  %2323 = vmatmul.f32.gmra.mxu0 %v2003
  %v2324 = vpop.f32.mrf.mxu0
  %v2325 = vadd.f32 %v2305, %v2324
  %2326 = vdwg.mxu0
  %v2327 = vadd.f32 %v1582, %v2325
  %s2328 = scalar_lea.vmem %s2, 16
  %v2329 = vld [vmem:[%s2328] sm:$0x1f]
  %s2330 = scalar_lea.vmem %s3, 2
  %v2331 = vld [vmem:[%s2330] sm:$0x1]
  %s2332 = scalar_lea.vmem %s4, 16
  %v2333 = vld [vmem:[%s2332] sm:$0x1f]
  %s2334 = scalar_lea.vmem %s5, 2
  %v2335 = vld [vmem:[%s2334] sm:$0x1]
  %s2336 = scalar_lea.vmem %s6, 256
  %v2337 = vld [vmem:[%s2336] sm:$0x1f]
  %v2338 = vld [vmem:[%s2336 + $0x8] sm:$0x1f]
  %v2339 = vld [vmem:[%s2336 + $0x10] sm:$0x1f]
  %v2340 = vld [vmem:[%s2336 + $0x18] sm:$0x1f]
  %v2341 = vld [vmem:[%s2336 + $0x20] sm:$0x1f]
  %v2342 = vld [vmem:[%s2336 + $0x28] sm:$0x1f]
  %v2343 = vld [vmem:[%s2336 + $0x30] sm:$0x1f]
  %v2344 = vld [vmem:[%s2336 + $0x38] sm:$0x1f]
  %v2345 = vld [vmem:[%s2336 + $0x40] sm:$0x1f]
  %v2346 = vld [vmem:[%s2336 + $0x48] sm:$0x1f]
  %v2347 = vld [vmem:[%s2336 + $0x50] sm:$0x1f]
  %v2348 = vld [vmem:[%s2336 + $0x58] sm:$0x1f]
  %v2349 = vld [vmem:[%s2336 + $0x60] sm:$0x1f]
  %v2350 = vld [vmem:[%s2336 + $0x68] sm:$0x1f]
  %v2351 = vld [vmem:[%s2336 + $0x70] sm:$0x1f]
  %v2352 = vld [vmem:[%s2336 + $0x78] sm:$0x1f]
  %s2353 = scalar_lea.vmem %s7, 32
  %v2354 = vld [vmem:[%s2353] sm:$0xff]
  %v2355 = vld [vmem:[%s2353 + $0x8] sm:$0xff]
  %s2356 = scalar_lea.vmem %s8, 256
  %v2357 = vld [vmem:[%s2356] sm:$0x1f]
  %v2358 = vld [vmem:[%s2356 + $0x8] sm:$0x1f]
  %v2359 = vld [vmem:[%s2356 + $0x10] sm:$0x1f]
  %v2360 = vld [vmem:[%s2356 + $0x18] sm:$0x1f]
  %v2361 = vld [vmem:[%s2356 + $0x20] sm:$0x1f]
  %v2362 = vld [vmem:[%s2356 + $0x28] sm:$0x1f]
  %v2363 = vld [vmem:[%s2356 + $0x30] sm:$0x1f]
  %v2364 = vld [vmem:[%s2356 + $0x38] sm:$0x1f]
  %v2365 = vld [vmem:[%s2356 + $0x40] sm:$0x1f]
  %v2366 = vld [vmem:[%s2356 + $0x48] sm:$0x1f]
  %v2367 = vld [vmem:[%s2356 + $0x50] sm:$0x1f]
  %v2368 = vld [vmem:[%s2356 + $0x58] sm:$0x1f]
  %v2369 = vld [vmem:[%s2356 + $0x60] sm:$0x1f]
  %v2370 = vld [vmem:[%s2356 + $0x68] sm:$0x1f]
  %v2371 = vld [vmem:[%s2356 + $0x70] sm:$0x1f]
  %v2372 = vld [vmem:[%s2356 + $0x78] sm:$0x1f]
  %s2373 = scalar_lea.vmem %s9, 2
  %v2374 = vld [vmem:[%s2373] sm:$0x1]
  %v2376 = vperm.slane %v2331, 0
  %v2379 = vsel %vm84, %v2327, 0
  %v2382 = vsel %vm88, %v2329, 0
  %2384 = vmatpush.msra.mxu0 0.0
  %2385 = vmatpush.msra.mxu0 0.0
  %2386 = vmatpush.msra.mxu0 0.0
  %2387 = vmatpush.msra.mxu0 0.0
  %2388 = vmatpush.msra.mxu0 0.0
  %2389 = vmatpush.msra.mxu0 0.0
  %2390 = vmatpush.msra.mxu0 0.0
  %2391 = vmatpush.msra.mxu0 0.0
  %2392 = vmatpush.msra.mxu0 0.0
  %2393 = vmatpush.msra.mxu0 0.0
  %2394 = vmatpush.msra.mxu0 0.0
  %2395 = vmatpush.msra.mxu0 0.0
  %2396 = vmatpush.msra.mxu0 0.0
  %2397 = vmatpush.msra.mxu0 0.0
  %2398 = vmatpush.msra.mxu0 0.0
  %2399 = vmatpush.msra.mxu0 %v2382
  %2400 = vmatmul.f32.gmra.mxu0 %v2379
  %v2401 = vpop.f32.mrf.mxu0
  %v2402 = vadd.f32 %v2376, %v2401
  %2403 = vdwg.mxu0
  %v2405 = vrot.slane %v2402, 1
  %v2406 = vrot.slane %v2402, 2
  %v2407 = vrot.slane %v2402, 3
  %v2408 = vrot.slane %v2402, 4
  %v2409 = vrot.slane %v2402, 5
  %v2410 = vperm.slane %v2402, 0
  %v2411 = vperm.slane %v2405, 0
  %v2412 = vperm.slane %v2406, 0
  %v2413 = vperm.slane %v2407, 0
  %v2414 = vperm.slane %v2408, 0
  %v2415 = vperm.slane %v2409, 0
  %2422 = vrot.lane.b32.xlu0 %v2402, 123
  %v2423 = vpop.permute.xlu0 %2422
  %v2425 = vmul.f32 %v2410, %v2423
  %v2426 = vmul.f32 %v2411, %v2423
  %v2427 = vmul.f32 %v2412, %v2423
  %v2428 = vmul.f32 %v2413, %v2423
  %v2429 = vmul.f32 %v2414, %v2423
  %v2430 = vmul.f32 %v2415, %v2423
  %v2431 = vmul.f32 %v2425, 0.4472136
  %v2432 = vmul.f32 %v2426, 0.4472136
  %v2433 = vmul.f32 %v2427, 0.4472136
  %v2434 = vmul.f32 %v2428, 0.4472136
  %v2435 = vmul.f32 %v2429, 0.4472136
  %v2436 = vmul.f32 %v2430, 0.4472136
  %v2437 = vadd.f32 %v2431, %v36
  %v2438 = vadd.f32 %v2432, %v37
  %v2439 = vadd.f32 %v2433, %v38
  %v2440 = vadd.f32 %v2434, %v39
  %v2441 = vadd.f32 %v2435, %v40
  %v2442 = vadd.f32 %v2436, %v41
  %v2443 = vsel %vm151, %v2437, -inf
  %v2444 = vrot.slane %v2443, 4
  %v2445 = vmax.f32 %v2443, %v2444
  %v2446 = vrot.slane %v2445, 2
  %v2447 = vmax.f32 %v2445, %v2446
  %v2448 = vrot.slane %v2447, 1
  %v2449 = vmax.f32 %v2447, %v2448
  %v2450 = vsel %vm151, %v2438, -inf
  %v2451 = vrot.slane %v2450, 4
  %v2452 = vmax.f32 %v2450, %v2451
  %v2453 = vrot.slane %v2452, 2
  %v2454 = vmax.f32 %v2452, %v2453
  %v2455 = vrot.slane %v2454, 1
  %v2456 = vmax.f32 %v2454, %v2455
  %v2457 = vsel %vm151, %v2439, -inf
  %v2458 = vrot.slane %v2457, 4
  %v2459 = vmax.f32 %v2457, %v2458
  %v2460 = vrot.slane %v2459, 2
  %v2461 = vmax.f32 %v2459, %v2460
  %v2462 = vrot.slane %v2461, 1
  %v2463 = vmax.f32 %v2461, %v2462
  %v2464 = vsel %vm151, %v2440, -inf
  %v2465 = vrot.slane %v2464, 4
  %v2466 = vmax.f32 %v2464, %v2465
  %v2467 = vrot.slane %v2466, 2
  %v2468 = vmax.f32 %v2466, %v2467
  %v2469 = vrot.slane %v2468, 1
  %v2470 = vmax.f32 %v2468, %v2469
  %v2471 = vsel %vm151, %v2441, -inf
  %v2472 = vrot.slane %v2471, 4
  %v2473 = vmax.f32 %v2471, %v2472
  %v2474 = vrot.slane %v2473, 2
  %v2475 = vmax.f32 %v2473, %v2474
  %v2476 = vrot.slane %v2475, 1
  %v2477 = vmax.f32 %v2475, %v2476
  %v2478 = vsel %vm151, %v2442, -inf
  %v2479 = vrot.slane %v2478, 4
  %v2480 = vmax.f32 %v2478, %v2479
  %v2481 = vrot.slane %v2480, 2
  %v2482 = vmax.f32 %v2480, %v2481
  %v2483 = vrot.slane %v2482, 1
  %v2484 = vmax.f32 %v2482, %v2483
  %v2485 = vsub.f32 %v2437, %v2449
  %v2486 = vsub.f32 %v2438, %v2456
  %v2487 = vsub.f32 %v2439, %v2463
  %v2488 = vsub.f32 %v2440, %v2470
  %v2489 = vsub.f32 %v2441, %v2477
  %v2490 = vsub.f32 %v2442, %v2484
  %v2491 = vmul.f32 %v2485, 1.442695
  %v2492 = vpow.pop %v2491
  %v2493 = vmul.f32 %v2486, 1.442695
  %v2494 = vpow.pop %v2493
  %v2495 = vmul.f32 %v2487, 1.442695
  %v2496 = vpow.pop %v2495
  %v2497 = vmul.f32 %v2488, 1.442695
  %v2498 = vpow.pop %v2497
  %v2499 = vmul.f32 %v2489, 1.442695
  %v2500 = vpow.pop %v2499
  %v2501 = vmul.f32 %v2490, 1.442695
  %v2502 = vpow.pop %v2501
  %v2503 = vsel %vm151, %v2492, 0.0
  %v2504 = vrot.slane %v2503, 4
  %v2505 = vadd.f32 %v2503, %v2504
  %v2506 = vrot.slane %v2505, 2
  %v2507 = vadd.f32 %v2505, %v2506
  %v2508 = vrot.slane %v2507, 1
  %v2509 = vadd.f32 %v2507, %v2508
  %v2510 = vsel %vm151, %v2494, 0.0
  %v2511 = vrot.slane %v2510, 4
  %v2512 = vadd.f32 %v2510, %v2511
  %v2513 = vrot.slane %v2512, 2
  %v2514 = vadd.f32 %v2512, %v2513
  %v2515 = vrot.slane %v2514, 1
  %v2516 = vadd.f32 %v2514, %v2515
  %v2517 = vsel %vm151, %v2496, 0.0
  %v2518 = vrot.slane %v2517, 4
  %v2519 = vadd.f32 %v2517, %v2518
  %v2520 = vrot.slane %v2519, 2
  %v2521 = vadd.f32 %v2519, %v2520
  %v2522 = vrot.slane %v2521, 1
  %v2523 = vadd.f32 %v2521, %v2522
  %v2524 = vsel %vm151, %v2498, 0.0
  %v2525 = vrot.slane %v2524, 4
  %v2526 = vadd.f32 %v2524, %v2525
  %v2527 = vrot.slane %v2526, 2
  %v2528 = vadd.f32 %v2526, %v2527
  %v2529 = vrot.slane %v2528, 1
  %v2530 = vadd.f32 %v2528, %v2529
  %v2531 = vsel %vm151, %v2500, 0.0
  %v2532 = vrot.slane %v2531, 4
  %v2533 = vadd.f32 %v2531, %v2532
  %v2534 = vrot.slane %v2533, 2
  %v2535 = vadd.f32 %v2533, %v2534
  %v2536 = vrot.slane %v2535, 1
  %v2537 = vadd.f32 %v2535, %v2536
  %v2538 = vsel %vm151, %v2502, 0.0
  %v2539 = vrot.slane %v2538, 4
  %v2540 = vadd.f32 %v2538, %v2539
  %v2541 = vrot.slane %v2540, 2
  %v2542 = vadd.f32 %v2540, %v2541
  %v2543 = vrot.slane %v2542, 1
  %v2544 = vadd.f32 %v2542, %v2543
  %v2545 = vrcp.pop %v2509
  %v2546 = vmul.f32 %v2509, %v2545
  %v2547 = vsub.f32 1.0, %v2546
  %v2548 = vmul.f32 %v2545, %v2547
  %v2549 = vadd.f32 %v2545, %v2548
  %vm2550 = vweird.f32 %v2509
  %vm2551 = vweird.f32 %v2545
  %vm2552 = vmor %vm2550, %vm2551
  %v2553 = vsel %vm2552, %v2545, %v2549
  %v2554 = vand.u32 2147483647, %v2509
  %vm2555 = vcmp.eq.f32.partialorder %v2554, 8.507059e+37
  %v2556 = vand.u32 %v2509, 2147483648
  %v2557 = vor.u32 1.1754944e-38, %v2556
  %v2558 = vsel %vm2555, %v2557, %v2553
  %v2559 = vmul.f32 %v2492, %v2558
  %v2560 = vrcp.pop %v2516
  %v2561 = vmul.f32 %v2516, %v2560
  %v2562 = vsub.f32 1.0, %v2561
  %v2563 = vmul.f32 %v2560, %v2562
  %v2564 = vadd.f32 %v2560, %v2563
  %vm2565 = vweird.f32 %v2516
  %vm2566 = vweird.f32 %v2560
  %vm2567 = vmor %vm2565, %vm2566
  %v2568 = vsel %vm2567, %v2560, %v2564
  %v2569 = vand.u32 2147483647, %v2516
  %vm2570 = vcmp.eq.f32.partialorder %v2569, 8.507059e+37
  %v2571 = vand.u32 %v2516, 2147483648
  %v2572 = vor.u32 1.1754944e-38, %v2571
  %v2573 = vsel %vm2570, %v2572, %v2568
  %v2574 = vmul.f32 %v2494, %v2573
  %v2575 = vrcp.pop %v2523
  %v2576 = vmul.f32 %v2523, %v2575
  %v2577 = vsub.f32 1.0, %v2576
  %v2578 = vmul.f32 %v2575, %v2577
  %v2579 = vadd.f32 %v2575, %v2578
  %vm2580 = vweird.f32 %v2523
  %vm2581 = vweird.f32 %v2575
  %vm2582 = vmor %vm2580, %vm2581
  %v2583 = vsel %vm2582, %v2575, %v2579
  %v2584 = vand.u32 2147483647, %v2523
  %vm2585 = vcmp.eq.f32.partialorder %v2584, 8.507059e+37
  %v2586 = vand.u32 %v2523, 2147483648
  %v2587 = vor.u32 1.1754944e-38, %v2586
  %v2588 = vsel %vm2585, %v2587, %v2583
  %v2589 = vmul.f32 %v2496, %v2588
  %v2590 = vrcp.pop %v2530
  %v2591 = vmul.f32 %v2530, %v2590
  %v2592 = vsub.f32 1.0, %v2591
  %v2593 = vmul.f32 %v2590, %v2592
  %v2594 = vadd.f32 %v2590, %v2593
  %vm2595 = vweird.f32 %v2530
  %vm2596 = vweird.f32 %v2590
  %vm2597 = vmor %vm2595, %vm2596
  %v2598 = vsel %vm2597, %v2590, %v2594
  %v2599 = vand.u32 2147483647, %v2530
  %vm2600 = vcmp.eq.f32.partialorder %v2599, 8.507059e+37
  %v2601 = vand.u32 %v2530, 2147483648
  %v2602 = vor.u32 1.1754944e-38, %v2601
  %v2603 = vsel %vm2600, %v2602, %v2598
  %v2604 = vmul.f32 %v2498, %v2603
  %v2605 = vrcp.pop %v2537
  %v2606 = vmul.f32 %v2537, %v2605
  %v2607 = vsub.f32 1.0, %v2606
  %v2608 = vmul.f32 %v2605, %v2607
  %v2609 = vadd.f32 %v2605, %v2608
  %vm2610 = vweird.f32 %v2537
  %vm2611 = vweird.f32 %v2605
  %vm2612 = vmor %vm2610, %vm2611
  %v2613 = vsel %vm2612, %v2605, %v2609
  %v2614 = vand.u32 2147483647, %v2537
  %vm2615 = vcmp.eq.f32.partialorder %v2614, 8.507059e+37
  %v2616 = vand.u32 %v2537, 2147483648
  %v2617 = vor.u32 1.1754944e-38, %v2616
  %v2618 = vsel %vm2615, %v2617, %v2613
  %v2619 = vmul.f32 %v2500, %v2618
  %v2620 = vrcp.pop %v2544
  %v2621 = vmul.f32 %v2544, %v2620
  %v2622 = vsub.f32 1.0, %v2621
  %v2623 = vmul.f32 %v2620, %v2622
  %v2624 = vadd.f32 %v2620, %v2623
  %vm2625 = vweird.f32 %v2544
  %vm2626 = vweird.f32 %v2620
  %vm2627 = vmor %vm2625, %vm2626
  %v2628 = vsel %vm2627, %v2620, %v2624
  %v2629 = vand.u32 2147483647, %v2544
  %vm2630 = vcmp.eq.f32.partialorder %v2629, 8.507059e+37
  %v2631 = vand.u32 %v2544, 2147483648
  %v2632 = vor.u32 1.1754944e-38, %v2631
  %v2633 = vsel %vm2630, %v2632, %v2628
  %v2634 = vmul.f32 %v2502, %v2633
  %2635 = vrot.lane.b32.xlu0 %v2402, 118
  %v2636 = vpop.permute.xlu0 %2635
  %v2638 = vmul.f32 %v2559, %v2636
  %v2639 = vmul.f32 %v2574, %v2636
  %v2640 = vmul.f32 %v2589, %v2636
  %v2641 = vmul.f32 %v2604, %v2636
  %v2642 = vmul.f32 %v2619, %v2636
  %v2643 = vmul.f32 %v2634, %v2636
  %v2644 = vsel %vm151, %v2638, 0.0
  %v2645 = vrot.slane %v2644, 4
  %v2646 = vadd.f32 %v2644, %v2645
  %v2647 = vrot.slane %v2646, 2
  %v2648 = vadd.f32 %v2646, %v2647
  %v2649 = vrot.slane %v2648, 1
  %v2650 = vadd.f32 %v2648, %v2649
  %v2651 = vsel %vm151, %v2639, 0.0
  %v2652 = vrot.slane %v2651, 4
  %v2653 = vadd.f32 %v2651, %v2652
  %v2654 = vrot.slane %v2653, 2
  %v2655 = vadd.f32 %v2653, %v2654
  %v2656 = vrot.slane %v2655, 1
  %v2657 = vadd.f32 %v2655, %v2656
  %v2658 = vsel %vm151, %v2640, 0.0
  %v2659 = vrot.slane %v2658, 4
  %v2660 = vadd.f32 %v2658, %v2659
  %v2661 = vrot.slane %v2660, 2
  %v2662 = vadd.f32 %v2660, %v2661
  %v2663 = vrot.slane %v2662, 1
  %v2664 = vadd.f32 %v2662, %v2663
  %v2665 = vsel %vm151, %v2641, 0.0
  %v2666 = vrot.slane %v2665, 4
  %v2667 = vadd.f32 %v2665, %v2666
  %v2668 = vrot.slane %v2667, 2
  %v2669 = vadd.f32 %v2667, %v2668
  %v2670 = vrot.slane %v2669, 1
  %v2671 = vadd.f32 %v2669, %v2670
  %v2672 = vsel %vm151, %v2642, 0.0
  %v2673 = vrot.slane %v2672, 4
  %v2674 = vadd.f32 %v2672, %v2673
  %v2675 = vrot.slane %v2674, 2
  %v2676 = vadd.f32 %v2674, %v2675
  %v2677 = vrot.slane %v2676, 1
  %v2678 = vadd.f32 %v2676, %v2677
  %v2679 = vsel %vm151, %v2643, 0.0
  %v2680 = vrot.slane %v2679, 4
  %v2681 = vadd.f32 %v2679, %v2680
  %v2682 = vrot.slane %v2681, 2
  %v2683 = vadd.f32 %v2681, %v2682
  %v2684 = vrot.slane %v2683, 1
  %v2685 = vadd.f32 %v2683, %v2684
  %v2687 = vperm.slane %v2335, 0
  %v2695 = vsel %vm404, %v2657, %v2650
  %v2696 = vsel %vm406, %v2664, %v2695
  %v2697 = vsel %vm408, %v2671, %v2696
  %v2698 = vsel %vm410, %v2678, %v2697
  %v2699 = vsel %vm412, %v2685, %v2698
  %v2700 = vsel %vm84, %v2699, 0
  %v2703 = vsel %vm88, %v2333, 0
  %2705 = vmatpush.msra.mxu0 0.0
  %2706 = vmatpush.msra.mxu0 0.0
  %2707 = vmatpush.msra.mxu0 0.0
  %2708 = vmatpush.msra.mxu0 0.0
  %2709 = vmatpush.msra.mxu0 0.0
  %2710 = vmatpush.msra.mxu0 0.0
  %2711 = vmatpush.msra.mxu0 0.0
  %2712 = vmatpush.msra.mxu0 0.0
  %2713 = vmatpush.msra.mxu0 0.0
  %2714 = vmatpush.msra.mxu0 0.0
  %2715 = vmatpush.msra.mxu0 0.0
  %2716 = vmatpush.msra.mxu0 0.0
  %2717 = vmatpush.msra.mxu0 0.0
  %2718 = vmatpush.msra.mxu0 0.0
  %2719 = vmatpush.msra.mxu0 0.0
  %2720 = vmatpush.msra.mxu0 %v2703
  %2721 = vmatmul.f32.gmra.mxu0 %v2700
  %v2722 = vpop.f32.mrf.mxu0
  %v2723 = vadd.f32 %v2687, %v2722
  %2724 = vdwg.mxu0
  %v2725 = vadd.f32 %v2327, %v2723
  %v2728 = vperm.slane %v2354, 0
  %v2729 = vperm.slane %v2354, 1
  %v2730 = vperm.slane %v2354, 2
  %v2731 = vperm.slane %v2354, 3
  %v2732 = vperm.slane %v2354, 4
  %v2733 = vperm.slane %v2354, 5
  %v2734 = vperm.slane %v2354, 6
  %v2735 = vperm.slane %v2354, 7
  %v2736 = vperm.slane %v2355, 0
  %v2737 = vperm.slane %v2355, 1
  %v2738 = vperm.slane %v2355, 2
  %v2739 = vperm.slane %v2355, 3
  %v2740 = vperm.slane %v2355, 4
  %v2741 = vperm.slane %v2355, 5
  %v2742 = vperm.slane %v2355, 6
  %v2743 = vperm.slane %v2355, 7
  %v2761 = vsel %vm84, %v2725, 0
  %v2764 = vsel %vm88, %v2337, 0
  %v2767 = vsel %vm88, %v2338, 0
  %v2770 = vsel %vm88, %v2339, 0
  %v2773 = vsel %vm88, %v2340, 0
  %v2776 = vsel %vm88, %v2341, 0
  %v2779 = vsel %vm88, %v2342, 0
  %v2782 = vsel %vm88, %v2343, 0
  %v2785 = vsel %vm88, %v2344, 0
  %v2788 = vsel %vm88, %v2345, 0
  %v2791 = vsel %vm88, %v2346, 0
  %v2794 = vsel %vm88, %v2347, 0
  %v2797 = vsel %vm88, %v2348, 0
  %v2800 = vsel %vm88, %v2349, 0
  %v2803 = vsel %vm88, %v2350, 0
  %v2806 = vsel %vm88, %v2351, 0
  %v2809 = vsel %vm88, %v2352, 0
  %2811 = vmatpush.msra.mxu0 0.0
  %2812 = vmatpush.msra.mxu0 0.0
  %2813 = vmatpush.msra.mxu0 0.0
  %2814 = vmatpush.msra.mxu0 0.0
  %2815 = vmatpush.msra.mxu0 0.0
  %2816 = vmatpush.msra.mxu0 0.0
  %2817 = vmatpush.msra.mxu0 0.0
  %2818 = vmatpush.msra.mxu0 0.0
  %2819 = vmatpush.msra.mxu0 0.0
  %2820 = vmatpush.msra.mxu0 0.0
  %2821 = vmatpush.msra.mxu0 0.0
  %2822 = vmatpush.msra.mxu0 0.0
  %2823 = vmatpush.msra.mxu0 0.0
  %2824 = vmatpush.msra.mxu0 0.0
  %2825 = vmatpush.msra.mxu0 0.0
  %2826 = vmatpush.msra.mxu0 %v2764
  %2827 = vmatmul.f32.gmra.mxu0 %v2761
  %v2828 = vpop.f32.mrf.mxu0
  %v2829 = vadd.f32 %v2728, %v2828
  %2830 = vdwg.mxu0
  %2831 = vmatpush.msra.mxu0 0.0
  %2832 = vmatpush.msra.mxu0 0.0
  %2833 = vmatpush.msra.mxu0 0.0
  %2834 = vmatpush.msra.mxu0 0.0
  %2835 = vmatpush.msra.mxu0 0.0
  %2836 = vmatpush.msra.mxu0 0.0
  %2837 = vmatpush.msra.mxu0 0.0
  %2838 = vmatpush.msra.mxu0 0.0
  %2839 = vmatpush.msra.mxu0 0.0
  %2840 = vmatpush.msra.mxu0 0.0
  %2841 = vmatpush.msra.mxu0 0.0
  %2842 = vmatpush.msra.mxu0 0.0
  %2843 = vmatpush.msra.mxu0 0.0
  %2844 = vmatpush.msra.mxu0 0.0
  %2845 = vmatpush.msra.mxu0 0.0
  %2846 = vmatpush.msra.mxu0 %v2767
  %2847 = vmatmul.f32.gmra.mxu0 %v2761
  %v2848 = vpop.f32.mrf.mxu0
  %v2849 = vadd.f32 %v2729, %v2848
  %2850 = vdwg.mxu0
  %2851 = vmatpush.msra.mxu0 0.0
  %2852 = vmatpush.msra.mxu0 0.0
  %2853 = vmatpush.msra.mxu0 0.0
  %2854 = vmatpush.msra.mxu0 0.0
  %2855 = vmatpush.msra.mxu0 0.0
  %2856 = vmatpush.msra.mxu0 0.0
  %2857 = vmatpush.msra.mxu0 0.0
  %2858 = vmatpush.msra.mxu0 0.0
  %2859 = vmatpush.msra.mxu0 0.0
  %2860 = vmatpush.msra.mxu0 0.0
  %2861 = vmatpush.msra.mxu0 0.0
  %2862 = vmatpush.msra.mxu0 0.0
  %2863 = vmatpush.msra.mxu0 0.0
  %2864 = vmatpush.msra.mxu0 0.0
  %2865 = vmatpush.msra.mxu0 0.0
  %2866 = vmatpush.msra.mxu0 %v2770
  %2867 = vmatmul.f32.gmra.mxu0 %v2761
  %v2868 = vpop.f32.mrf.mxu0
  %v2869 = vadd.f32 %v2730, %v2868
  %2870 = vdwg.mxu0
  %2871 = vmatpush.msra.mxu0 0.0
  %2872 = vmatpush.msra.mxu0 0.0
  %2873 = vmatpush.msra.mxu0 0.0
  %2874 = vmatpush.msra.mxu0 0.0
  %2875 = vmatpush.msra.mxu0 0.0
  %2876 = vmatpush.msra.mxu0 0.0
  %2877 = vmatpush.msra.mxu0 0.0
  %2878 = vmatpush.msra.mxu0 0.0
  %2879 = vmatpush.msra.mxu0 0.0
  %2880 = vmatpush.msra.mxu0 0.0
  %2881 = vmatpush.msra.mxu0 0.0
  %2882 = vmatpush.msra.mxu0 0.0
  %2883 = vmatpush.msra.mxu0 0.0
  %2884 = vmatpush.msra.mxu0 0.0
  %2885 = vmatpush.msra.mxu0 0.0
  %2886 = vmatpush.msra.mxu0 %v2773
  %2887 = vmatmul.f32.gmra.mxu0 %v2761
  %v2888 = vpop.f32.mrf.mxu0
  %v2889 = vadd.f32 %v2731, %v2888
  %2890 = vdwg.mxu0
  %2891 = vmatpush.msra.mxu0 0.0
  %2892 = vmatpush.msra.mxu0 0.0
  %2893 = vmatpush.msra.mxu0 0.0
  %2894 = vmatpush.msra.mxu0 0.0
  %2895 = vmatpush.msra.mxu0 0.0
  %2896 = vmatpush.msra.mxu0 0.0
  %2897 = vmatpush.msra.mxu0 0.0
  %2898 = vmatpush.msra.mxu0 0.0
  %2899 = vmatpush.msra.mxu0 0.0
  %2900 = vmatpush.msra.mxu0 0.0
  %2901 = vmatpush.msra.mxu0 0.0
  %2902 = vmatpush.msra.mxu0 0.0
  %2903 = vmatpush.msra.mxu0 0.0
  %2904 = vmatpush.msra.mxu0 0.0
  %2905 = vmatpush.msra.mxu0 0.0
  %2906 = vmatpush.msra.mxu0 %v2776
  %2907 = vmatmul.f32.gmra.mxu0 %v2761
  %v2908 = vpop.f32.mrf.mxu0
  %v2909 = vadd.f32 %v2732, %v2908
  %2910 = vdwg.mxu0
  %2911 = vmatpush.msra.mxu0 0.0
  %2912 = vmatpush.msra.mxu0 0.0
  %2913 = vmatpush.msra.mxu0 0.0
  %2914 = vmatpush.msra.mxu0 0.0
  %2915 = vmatpush.msra.mxu0 0.0
  %2916 = vmatpush.msra.mxu0 0.0
  %2917 = vmatpush.msra.mxu0 0.0
  %2918 = vmatpush.msra.mxu0 0.0
  %2919 = vmatpush.msra.mxu0 0.0
  %2920 = vmatpush.msra.mxu0 0.0
  %2921 = vmatpush.msra.mxu0 0.0
  %2922 = vmatpush.msra.mxu0 0.0
  %2923 = vmatpush.msra.mxu0 0.0
  %2924 = vmatpush.msra.mxu0 0.0
  %2925 = vmatpush.msra.mxu0 0.0
  %2926 = vmatpush.msra.mxu0 %v2779
  %2927 = vmatmul.f32.gmra.mxu0 %v2761
  %v2928 = vpop.f32.mrf.mxu0
  %v2929 = vadd.f32 %v2733, %v2928
  %2930 = vdwg.mxu0
  %2931 = vmatpush.msra.mxu0 0.0
  %2932 = vmatpush.msra.mxu0 0.0
  %2933 = vmatpush.msra.mxu0 0.0
  %2934 = vmatpush.msra.mxu0 0.0
  %2935 = vmatpush.msra.mxu0 0.0
  %2936 = vmatpush.msra.mxu0 0.0
  %2937 = vmatpush.msra.mxu0 0.0
  %2938 = vmatpush.msra.mxu0 0.0
  %2939 = vmatpush.msra.mxu0 0.0
  %2940 = vmatpush.msra.mxu0 0.0
  %2941 = vmatpush.msra.mxu0 0.0
  %2942 = vmatpush.msra.mxu0 0.0
  %2943 = vmatpush.msra.mxu0 0.0
  %2944 = vmatpush.msra.mxu0 0.0
  %2945 = vmatpush.msra.mxu0 0.0
  %2946 = vmatpush.msra.mxu0 %v2782
  %2947 = vmatmul.f32.gmra.mxu0 %v2761
  %v2948 = vpop.f32.mrf.mxu0
  %v2949 = vadd.f32 %v2734, %v2948
  %2950 = vdwg.mxu0
  %2951 = vmatpush.msra.mxu0 0.0
  %2952 = vmatpush.msra.mxu0 0.0
  %2953 = vmatpush.msra.mxu0 0.0
  %2954 = vmatpush.msra.mxu0 0.0
  %2955 = vmatpush.msra.mxu0 0.0
  %2956 = vmatpush.msra.mxu0 0.0
  %2957 = vmatpush.msra.mxu0 0.0
  %2958 = vmatpush.msra.mxu0 0.0
  %2959 = vmatpush.msra.mxu0 0.0
  %2960 = vmatpush.msra.mxu0 0.0
  %2961 = vmatpush.msra.mxu0 0.0
  %2962 = vmatpush.msra.mxu0 0.0
  %2963 = vmatpush.msra.mxu0 0.0
  %2964 = vmatpush.msra.mxu0 0.0
  %2965 = vmatpush.msra.mxu0 0.0
  %2966 = vmatpush.msra.mxu0 %v2785
  %2967 = vmatmul.f32.gmra.mxu0 %v2761
  %v2968 = vpop.f32.mrf.mxu0
  %v2969 = vadd.f32 %v2735, %v2968
  %2970 = vdwg.mxu0
  %2971 = vmatpush.msra.mxu0 0.0
  %2972 = vmatpush.msra.mxu0 0.0
  %2973 = vmatpush.msra.mxu0 0.0
  %2974 = vmatpush.msra.mxu0 0.0
  %2975 = vmatpush.msra.mxu0 0.0
  %2976 = vmatpush.msra.mxu0 0.0
  %2977 = vmatpush.msra.mxu0 0.0
  %2978 = vmatpush.msra.mxu0 0.0
  %2979 = vmatpush.msra.mxu0 0.0
  %2980 = vmatpush.msra.mxu0 0.0
  %2981 = vmatpush.msra.mxu0 0.0
  %2982 = vmatpush.msra.mxu0 0.0
  %2983 = vmatpush.msra.mxu0 0.0
  %2984 = vmatpush.msra.mxu0 0.0
  %2985 = vmatpush.msra.mxu0 0.0
  %2986 = vmatpush.msra.mxu0 %v2788
  %2987 = vmatmul.f32.gmra.mxu0 %v2761
  %v2988 = vpop.f32.mrf.mxu0
  %v2989 = vadd.f32 %v2736, %v2988
  %2990 = vdwg.mxu0
  %2991 = vmatpush.msra.mxu0 0.0
  %2992 = vmatpush.msra.mxu0 0.0
  %2993 = vmatpush.msra.mxu0 0.0
  %2994 = vmatpush.msra.mxu0 0.0
  %2995 = vmatpush.msra.mxu0 0.0
  %2996 = vmatpush.msra.mxu0 0.0
  %2997 = vmatpush.msra.mxu0 0.0
  %2998 = vmatpush.msra.mxu0 0.0
  %2999 = vmatpush.msra.mxu0 0.0
  %3000 = vmatpush.msra.mxu0 0.0
  %3001 = vmatpush.msra.mxu0 0.0
  %3002 = vmatpush.msra.mxu0 0.0
  %3003 = vmatpush.msra.mxu0 0.0
  %3004 = vmatpush.msra.mxu0 0.0
  %3005 = vmatpush.msra.mxu0 0.0
  %3006 = vmatpush.msra.mxu0 %v2791
  %3007 = vmatmul.f32.gmra.mxu0 %v2761
  %v3008 = vpop.f32.mrf.mxu0
  %v3009 = vadd.f32 %v2737, %v3008
  %3010 = vdwg.mxu0
  %3011 = vmatpush.msra.mxu0 0.0
  %3012 = vmatpush.msra.mxu0 0.0
  %3013 = vmatpush.msra.mxu0 0.0
  %3014 = vmatpush.msra.mxu0 0.0
  %3015 = vmatpush.msra.mxu0 0.0
  %3016 = vmatpush.msra.mxu0 0.0
  %3017 = vmatpush.msra.mxu0 0.0
  %3018 = vmatpush.msra.mxu0 0.0
  %3019 = vmatpush.msra.mxu0 0.0
  %3020 = vmatpush.msra.mxu0 0.0
  %3021 = vmatpush.msra.mxu0 0.0
  %3022 = vmatpush.msra.mxu0 0.0
  %3023 = vmatpush.msra.mxu0 0.0
  %3024 = vmatpush.msra.mxu0 0.0
  %3025 = vmatpush.msra.mxu0 0.0
  %3026 = vmatpush.msra.mxu0 %v2794
  %3027 = vmatmul.f32.gmra.mxu0 %v2761
  %v3028 = vpop.f32.mrf.mxu0
  %v3029 = vadd.f32 %v2738, %v3028
  %3030 = vdwg.mxu0
  %3031 = vmatpush.msra.mxu0 0.0
  %3032 = vmatpush.msra.mxu0 0.0
  %3033 = vmatpush.msra.mxu0 0.0
  %3034 = vmatpush.msra.mxu0 0.0
  %3035 = vmatpush.msra.mxu0 0.0
  %3036 = vmatpush.msra.mxu0 0.0
  %3037 = vmatpush.msra.mxu0 0.0
  %3038 = vmatpush.msra.mxu0 0.0
  %3039 = vmatpush.msra.mxu0 0.0
  %3040 = vmatpush.msra.mxu0 0.0
  %3041 = vmatpush.msra.mxu0 0.0
  %3042 = vmatpush.msra.mxu0 0.0
  %3043 = vmatpush.msra.mxu0 0.0
  %3044 = vmatpush.msra.mxu0 0.0
  %3045 = vmatpush.msra.mxu0 0.0
  %3046 = vmatpush.msra.mxu0 %v2797
  %3047 = vmatmul.f32.gmra.mxu0 %v2761
  %v3048 = vpop.f32.mrf.mxu0
  %v3049 = vadd.f32 %v2739, %v3048
  %3050 = vdwg.mxu0
  %3051 = vmatpush.msra.mxu0 0.0
  %3052 = vmatpush.msra.mxu0 0.0
  %3053 = vmatpush.msra.mxu0 0.0
  %3054 = vmatpush.msra.mxu0 0.0
  %3055 = vmatpush.msra.mxu0 0.0
  %3056 = vmatpush.msra.mxu0 0.0
  %3057 = vmatpush.msra.mxu0 0.0
  %3058 = vmatpush.msra.mxu0 0.0
  %3059 = vmatpush.msra.mxu0 0.0
  %3060 = vmatpush.msra.mxu0 0.0
  %3061 = vmatpush.msra.mxu0 0.0
  %3062 = vmatpush.msra.mxu0 0.0
  %3063 = vmatpush.msra.mxu0 0.0
  %3064 = vmatpush.msra.mxu0 0.0
  %3065 = vmatpush.msra.mxu0 0.0
  %3066 = vmatpush.msra.mxu0 %v2800
  %3067 = vmatmul.f32.gmra.mxu0 %v2761
  %v3068 = vpop.f32.mrf.mxu0
  %v3069 = vadd.f32 %v2740, %v3068
  %3070 = vdwg.mxu0
  %3071 = vmatpush.msra.mxu0 0.0
  %3072 = vmatpush.msra.mxu0 0.0
  %3073 = vmatpush.msra.mxu0 0.0
  %3074 = vmatpush.msra.mxu0 0.0
  %3075 = vmatpush.msra.mxu0 0.0
  %3076 = vmatpush.msra.mxu0 0.0
  %3077 = vmatpush.msra.mxu0 0.0
  %3078 = vmatpush.msra.mxu0 0.0
  %3079 = vmatpush.msra.mxu0 0.0
  %3080 = vmatpush.msra.mxu0 0.0
  %3081 = vmatpush.msra.mxu0 0.0
  %3082 = vmatpush.msra.mxu0 0.0
  %3083 = vmatpush.msra.mxu0 0.0
  %3084 = vmatpush.msra.mxu0 0.0
  %3085 = vmatpush.msra.mxu0 0.0
  %3086 = vmatpush.msra.mxu0 %v2803
  %3087 = vmatmul.f32.gmra.mxu0 %v2761
  %v3088 = vpop.f32.mrf.mxu0
  %v3089 = vadd.f32 %v2741, %v3088
  %3090 = vdwg.mxu0
  %3091 = vmatpush.msra.mxu0 0.0
  %3092 = vmatpush.msra.mxu0 0.0
  %3093 = vmatpush.msra.mxu0 0.0
  %3094 = vmatpush.msra.mxu0 0.0
  %3095 = vmatpush.msra.mxu0 0.0
  %3096 = vmatpush.msra.mxu0 0.0
  %3097 = vmatpush.msra.mxu0 0.0
  %3098 = vmatpush.msra.mxu0 0.0
  %3099 = vmatpush.msra.mxu0 0.0
  %3100 = vmatpush.msra.mxu0 0.0
  %3101 = vmatpush.msra.mxu0 0.0
  %3102 = vmatpush.msra.mxu0 0.0
  %3103 = vmatpush.msra.mxu0 0.0
  %3104 = vmatpush.msra.mxu0 0.0
  %3105 = vmatpush.msra.mxu0 0.0
  %3106 = vmatpush.msra.mxu0 %v2806
  %3107 = vmatmul.f32.gmra.mxu0 %v2761
  %v3108 = vpop.f32.mrf.mxu0
  %v3109 = vadd.f32 %v2742, %v3108
  %3110 = vdwg.mxu0
  %3111 = vmatpush.msra.mxu0 0.0
  %3112 = vmatpush.msra.mxu0 0.0
  %3113 = vmatpush.msra.mxu0 0.0
  %3114 = vmatpush.msra.mxu0 0.0
  %3115 = vmatpush.msra.mxu0 0.0
  %3116 = vmatpush.msra.mxu0 0.0
  %3117 = vmatpush.msra.mxu0 0.0
  %3118 = vmatpush.msra.mxu0 0.0
  %3119 = vmatpush.msra.mxu0 0.0
  %3120 = vmatpush.msra.mxu0 0.0
  %3121 = vmatpush.msra.mxu0 0.0
  %3122 = vmatpush.msra.mxu0 0.0
  %3123 = vmatpush.msra.mxu0 0.0
  %3124 = vmatpush.msra.mxu0 0.0
  %3125 = vmatpush.msra.mxu0 0.0
  %3126 = vmatpush.msra.mxu0 %v2809
  %3127 = vmatmul.f32.gmra.mxu0 %v2761
  %v3128 = vpop.f32.mrf.mxu0
  %v3129 = vadd.f32 %v2743, %v3128
  %3130 = vdwg.mxu0
  %v3131 = vmax.f32 %v2829, 0.0
  %v3132 = vmax.f32 %v2849, 0.0
  %v3133 = vmax.f32 %v2869, 0.0
  %v3134 = vmax.f32 %v2889, 0.0
  %v3135 = vmax.f32 %v2909, 0.0
  %v3136 = vmax.f32 %v2929, 0.0
  %v3137 = vmax.f32 %v2949, 0.0
  %v3138 = vmax.f32 %v2969, 0.0
  %v3139 = vmax.f32 %v2989, 0.0
  %v3140 = vmax.f32 %v3009, 0.0
  %v3141 = vmax.f32 %v3029, 0.0
  %v3142 = vmax.f32 %v3049, 0.0
  %v3143 = vmax.f32 %v3069, 0.0
  %v3144 = vmax.f32 %v3089, 0.0
  %v3145 = vmax.f32 %v3109, 0.0
  %v3146 = vmax.f32 %v3129, 0.0
  %v3148 = vperm.slane %v2374, 0
  %3150 = vmatpush.xpose.msra.mxu0 0.0
  %3151 = vmatpush.xpose.msra.mxu0 0.0
  %3152 = vmatpush.xpose.msra.mxu0 0.0
  %3153 = vmatpush.xpose.msra.mxu0 0.0
  %3154 = vmatpush.xpose.msra.mxu0 0.0
  %3155 = vmatpush.xpose.msra.mxu0 0.0
  %3156 = vmatpush.xpose.msra.mxu0 0.0
  %3157 = vmatpush.xpose.msra.mxu0 0.0
  %3158 = vmatpush.xpose.msra.mxu0 0.0
  %3159 = vmatpush.xpose.msra.mxu0 0.0
  %3160 = vmatpush.xpose.msra.mxu0 0.0
  %3161 = vmatpush.xpose.msra.mxu0 0.0
  %3162 = vmatpush.xpose.msra.mxu0 0.0
  %3163 = vmatpush.xpose.msra.mxu0 0.0
  %3164 = vmatpush.xpose.msra.mxu0 0.0
  %3165 = vmatpush.xpose.msra.mxu0 %v2357
  %3166 = vmatmul.f32.gmra.mxu0 %v3131
  %v3167 = vpop.f32.mrf.mxu0
  %v3168 = vadd.f32 %v3148, %v3167
  %3169 = vdwg.mxu0
  %3170 = vmatpush.xpose.msra.mxu0 0.0
  %3171 = vmatpush.xpose.msra.mxu0 0.0
  %3172 = vmatpush.xpose.msra.mxu0 0.0
  %3173 = vmatpush.xpose.msra.mxu0 0.0
  %3174 = vmatpush.xpose.msra.mxu0 0.0
  %3175 = vmatpush.xpose.msra.mxu0 0.0
  %3176 = vmatpush.xpose.msra.mxu0 0.0
  %3177 = vmatpush.xpose.msra.mxu0 0.0
  %3178 = vmatpush.xpose.msra.mxu0 0.0
  %3179 = vmatpush.xpose.msra.mxu0 0.0
  %3180 = vmatpush.xpose.msra.mxu0 0.0
  %3181 = vmatpush.xpose.msra.mxu0 0.0
  %3182 = vmatpush.xpose.msra.mxu0 0.0
  %3183 = vmatpush.xpose.msra.mxu0 0.0
  %3184 = vmatpush.xpose.msra.mxu0 0.0
  %3185 = vmatpush.xpose.msra.mxu0 %v2358
  %3186 = vmatmul.f32.gmra.mxu0 %v3132
  %v3187 = vpop.f32.mrf.mxu0
  %v3188 = vadd.f32 %v3168, %v3187
  %3189 = vdwg.mxu0
  %3190 = vmatpush.xpose.msra.mxu0 0.0
  %3191 = vmatpush.xpose.msra.mxu0 0.0
  %3192 = vmatpush.xpose.msra.mxu0 0.0
  %3193 = vmatpush.xpose.msra.mxu0 0.0
  %3194 = vmatpush.xpose.msra.mxu0 0.0
  %3195 = vmatpush.xpose.msra.mxu0 0.0
  %3196 = vmatpush.xpose.msra.mxu0 0.0
  %3197 = vmatpush.xpose.msra.mxu0 0.0
  %3198 = vmatpush.xpose.msra.mxu0 0.0
  %3199 = vmatpush.xpose.msra.mxu0 0.0
  %3200 = vmatpush.xpose.msra.mxu0 0.0
  %3201 = vmatpush.xpose.msra.mxu0 0.0
  %3202 = vmatpush.xpose.msra.mxu0 0.0
  %3203 = vmatpush.xpose.msra.mxu0 0.0
  %3204 = vmatpush.xpose.msra.mxu0 0.0
  %3205 = vmatpush.xpose.msra.mxu0 %v2359
  %3206 = vmatmul.f32.gmra.mxu0 %v3133
  %v3207 = vpop.f32.mrf.mxu0
  %v3208 = vadd.f32 %v3188, %v3207
  %3209 = vdwg.mxu0
  %3210 = vmatpush.xpose.msra.mxu0 0.0
  %3211 = vmatpush.xpose.msra.mxu0 0.0
  %3212 = vmatpush.xpose.msra.mxu0 0.0
  %3213 = vmatpush.xpose.msra.mxu0 0.0
  %3214 = vmatpush.xpose.msra.mxu0 0.0
  %3215 = vmatpush.xpose.msra.mxu0 0.0
  %3216 = vmatpush.xpose.msra.mxu0 0.0
  %3217 = vmatpush.xpose.msra.mxu0 0.0
  %3218 = vmatpush.xpose.msra.mxu0 0.0
  %3219 = vmatpush.xpose.msra.mxu0 0.0
  %3220 = vmatpush.xpose.msra.mxu0 0.0
  %3221 = vmatpush.xpose.msra.mxu0 0.0
  %3222 = vmatpush.xpose.msra.mxu0 0.0
  %3223 = vmatpush.xpose.msra.mxu0 0.0
  %3224 = vmatpush.xpose.msra.mxu0 0.0
  %3225 = vmatpush.xpose.msra.mxu0 %v2360
  %3226 = vmatmul.f32.gmra.mxu0 %v3134
  %v3227 = vpop.f32.mrf.mxu0
  %v3228 = vadd.f32 %v3208, %v3227
  %3229 = vdwg.mxu0
  %3230 = vmatpush.xpose.msra.mxu0 0.0
  %3231 = vmatpush.xpose.msra.mxu0 0.0
  %3232 = vmatpush.xpose.msra.mxu0 0.0
  %3233 = vmatpush.xpose.msra.mxu0 0.0
  %3234 = vmatpush.xpose.msra.mxu0 0.0
  %3235 = vmatpush.xpose.msra.mxu0 0.0
  %3236 = vmatpush.xpose.msra.mxu0 0.0
  %3237 = vmatpush.xpose.msra.mxu0 0.0
  %3238 = vmatpush.xpose.msra.mxu0 0.0
  %3239 = vmatpush.xpose.msra.mxu0 0.0
  %3240 = vmatpush.xpose.msra.mxu0 0.0
  %3241 = vmatpush.xpose.msra.mxu0 0.0
  %3242 = vmatpush.xpose.msra.mxu0 0.0
  %3243 = vmatpush.xpose.msra.mxu0 0.0
  %3244 = vmatpush.xpose.msra.mxu0 0.0
  %3245 = vmatpush.xpose.msra.mxu0 %v2361
  %3246 = vmatmul.f32.gmra.mxu0 %v3135
  %v3247 = vpop.f32.mrf.mxu0
  %v3248 = vadd.f32 %v3228, %v3247
  %3249 = vdwg.mxu0
  %3250 = vmatpush.xpose.msra.mxu0 0.0
  %3251 = vmatpush.xpose.msra.mxu0 0.0
  %3252 = vmatpush.xpose.msra.mxu0 0.0
  %3253 = vmatpush.xpose.msra.mxu0 0.0
  %3254 = vmatpush.xpose.msra.mxu0 0.0
  %3255 = vmatpush.xpose.msra.mxu0 0.0
  %3256 = vmatpush.xpose.msra.mxu0 0.0
  %3257 = vmatpush.xpose.msra.mxu0 0.0
  %3258 = vmatpush.xpose.msra.mxu0 0.0
  %3259 = vmatpush.xpose.msra.mxu0 0.0
  %3260 = vmatpush.xpose.msra.mxu0 0.0
  %3261 = vmatpush.xpose.msra.mxu0 0.0
  %3262 = vmatpush.xpose.msra.mxu0 0.0
  %3263 = vmatpush.xpose.msra.mxu0 0.0
  %3264 = vmatpush.xpose.msra.mxu0 0.0
  %3265 = vmatpush.xpose.msra.mxu0 %v2362
  %3266 = vmatmul.f32.gmra.mxu0 %v3136
  %v3267 = vpop.f32.mrf.mxu0
  %v3268 = vadd.f32 %v3248, %v3267
  %3269 = vdwg.mxu0
  %3270 = vmatpush.xpose.msra.mxu0 0.0
  %3271 = vmatpush.xpose.msra.mxu0 0.0
  %3272 = vmatpush.xpose.msra.mxu0 0.0
  %3273 = vmatpush.xpose.msra.mxu0 0.0
  %3274 = vmatpush.xpose.msra.mxu0 0.0
  %3275 = vmatpush.xpose.msra.mxu0 0.0
  %3276 = vmatpush.xpose.msra.mxu0 0.0
  %3277 = vmatpush.xpose.msra.mxu0 0.0
  %3278 = vmatpush.xpose.msra.mxu0 0.0
  %3279 = vmatpush.xpose.msra.mxu0 0.0
  %3280 = vmatpush.xpose.msra.mxu0 0.0
  %3281 = vmatpush.xpose.msra.mxu0 0.0
  %3282 = vmatpush.xpose.msra.mxu0 0.0
  %3283 = vmatpush.xpose.msra.mxu0 0.0
  %3284 = vmatpush.xpose.msra.mxu0 0.0
  %3285 = vmatpush.xpose.msra.mxu0 %v2363
  %3286 = vmatmul.f32.gmra.mxu0 %v3137
  %v3287 = vpop.f32.mrf.mxu0
  %v3288 = vadd.f32 %v3268, %v3287
  %3289 = vdwg.mxu0
  %3290 = vmatpush.xpose.msra.mxu0 0.0
  %3291 = vmatpush.xpose.msra.mxu0 0.0
  %3292 = vmatpush.xpose.msra.mxu0 0.0
  %3293 = vmatpush.xpose.msra.mxu0 0.0
  %3294 = vmatpush.xpose.msra.mxu0 0.0
  %3295 = vmatpush.xpose.msra.mxu0 0.0
  %3296 = vmatpush.xpose.msra.mxu0 0.0
  %3297 = vmatpush.xpose.msra.mxu0 0.0
  %3298 = vmatpush.xpose.msra.mxu0 0.0
  %3299 = vmatpush.xpose.msra.mxu0 0.0
  %3300 = vmatpush.xpose.msra.mxu0 0.0
  %3301 = vmatpush.xpose.msra.mxu0 0.0
  %3302 = vmatpush.xpose.msra.mxu0 0.0
  %3303 = vmatpush.xpose.msra.mxu0 0.0
  %3304 = vmatpush.xpose.msra.mxu0 0.0
  %3305 = vmatpush.xpose.msra.mxu0 %v2364
  %3306 = vmatmul.f32.gmra.mxu0 %v3138
  %v3307 = vpop.f32.mrf.mxu0
  %v3308 = vadd.f32 %v3288, %v3307
  %3309 = vdwg.mxu0
  %3310 = vmatpush.xpose.msra.mxu0 0.0
  %3311 = vmatpush.xpose.msra.mxu0 0.0
  %3312 = vmatpush.xpose.msra.mxu0 0.0
  %3313 = vmatpush.xpose.msra.mxu0 0.0
  %3314 = vmatpush.xpose.msra.mxu0 0.0
  %3315 = vmatpush.xpose.msra.mxu0 0.0
  %3316 = vmatpush.xpose.msra.mxu0 0.0
  %3317 = vmatpush.xpose.msra.mxu0 0.0
  %3318 = vmatpush.xpose.msra.mxu0 0.0
  %3319 = vmatpush.xpose.msra.mxu0 0.0
  %3320 = vmatpush.xpose.msra.mxu0 0.0
  %3321 = vmatpush.xpose.msra.mxu0 0.0
  %3322 = vmatpush.xpose.msra.mxu0 0.0
  %3323 = vmatpush.xpose.msra.mxu0 0.0
  %3324 = vmatpush.xpose.msra.mxu0 0.0
  %3325 = vmatpush.xpose.msra.mxu0 %v2365
  %3326 = vmatmul.f32.gmra.mxu0 %v3139
  %v3327 = vpop.f32.mrf.mxu0
  %v3328 = vadd.f32 %v3308, %v3327
  %3329 = vdwg.mxu0
  %3330 = vmatpush.xpose.msra.mxu0 0.0
  %3331 = vmatpush.xpose.msra.mxu0 0.0
  %3332 = vmatpush.xpose.msra.mxu0 0.0
  %3333 = vmatpush.xpose.msra.mxu0 0.0
  %3334 = vmatpush.xpose.msra.mxu0 0.0
  %3335 = vmatpush.xpose.msra.mxu0 0.0
  %3336 = vmatpush.xpose.msra.mxu0 0.0
  %3337 = vmatpush.xpose.msra.mxu0 0.0
  %3338 = vmatpush.xpose.msra.mxu0 0.0
  %3339 = vmatpush.xpose.msra.mxu0 0.0
  %3340 = vmatpush.xpose.msra.mxu0 0.0
  %3341 = vmatpush.xpose.msra.mxu0 0.0
  %3342 = vmatpush.xpose.msra.mxu0 0.0
  %3343 = vmatpush.xpose.msra.mxu0 0.0
  %3344 = vmatpush.xpose.msra.mxu0 0.0
  %3345 = vmatpush.xpose.msra.mxu0 %v2366
  %3346 = vmatmul.f32.gmra.mxu0 %v3140
  %v3347 = vpop.f32.mrf.mxu0
  %v3348 = vadd.f32 %v3328, %v3347
  %3349 = vdwg.mxu0
  %3350 = vmatpush.xpose.msra.mxu0 0.0
  %3351 = vmatpush.xpose.msra.mxu0 0.0
  %3352 = vmatpush.xpose.msra.mxu0 0.0
  %3353 = vmatpush.xpose.msra.mxu0 0.0
  %3354 = vmatpush.xpose.msra.mxu0 0.0
  %3355 = vmatpush.xpose.msra.mxu0 0.0
  %3356 = vmatpush.xpose.msra.mxu0 0.0
  %3357 = vmatpush.xpose.msra.mxu0 0.0
  %3358 = vmatpush.xpose.msra.mxu0 0.0
  %3359 = vmatpush.xpose.msra.mxu0 0.0
  %3360 = vmatpush.xpose.msra.mxu0 0.0
  %3361 = vmatpush.xpose.msra.mxu0 0.0
  %3362 = vmatpush.xpose.msra.mxu0 0.0
  %3363 = vmatpush.xpose.msra.mxu0 0.0
  %3364 = vmatpush.xpose.msra.mxu0 0.0
  %3365 = vmatpush.xpose.msra.mxu0 %v2367
  %3366 = vmatmul.f32.gmra.mxu0 %v3141
  %v3367 = vpop.f32.mrf.mxu0
  %v3368 = vadd.f32 %v3348, %v3367
  %3369 = vdwg.mxu0
  %3370 = vmatpush.xpose.msra.mxu0 0.0
  %3371 = vmatpush.xpose.msra.mxu0 0.0
  %3372 = vmatpush.xpose.msra.mxu0 0.0
  %3373 = vmatpush.xpose.msra.mxu0 0.0
  %3374 = vmatpush.xpose.msra.mxu0 0.0
  %3375 = vmatpush.xpose.msra.mxu0 0.0
  %3376 = vmatpush.xpose.msra.mxu0 0.0
  %3377 = vmatpush.xpose.msra.mxu0 0.0
  %3378 = vmatpush.xpose.msra.mxu0 0.0
  %3379 = vmatpush.xpose.msra.mxu0 0.0
  %3380 = vmatpush.xpose.msra.mxu0 0.0
  %3381 = vmatpush.xpose.msra.mxu0 0.0
  %3382 = vmatpush.xpose.msra.mxu0 0.0
  %3383 = vmatpush.xpose.msra.mxu0 0.0
  %3384 = vmatpush.xpose.msra.mxu0 0.0
  %3385 = vmatpush.xpose.msra.mxu0 %v2368
  %3386 = vmatmul.f32.gmra.mxu0 %v3142
  %v3387 = vpop.f32.mrf.mxu0
  %v3388 = vadd.f32 %v3368, %v3387
  %3389 = vdwg.mxu0
  %3390 = vmatpush.xpose.msra.mxu0 0.0
  %3391 = vmatpush.xpose.msra.mxu0 0.0
  %3392 = vmatpush.xpose.msra.mxu0 0.0
  %3393 = vmatpush.xpose.msra.mxu0 0.0
  %3394 = vmatpush.xpose.msra.mxu0 0.0
  %3395 = vmatpush.xpose.msra.mxu0 0.0
  %3396 = vmatpush.xpose.msra.mxu0 0.0
  %3397 = vmatpush.xpose.msra.mxu0 0.0
  %3398 = vmatpush.xpose.msra.mxu0 0.0
  %3399 = vmatpush.xpose.msra.mxu0 0.0
  %3400 = vmatpush.xpose.msra.mxu0 0.0
  %3401 = vmatpush.xpose.msra.mxu0 0.0
  %3402 = vmatpush.xpose.msra.mxu0 0.0
  %3403 = vmatpush.xpose.msra.mxu0 0.0
  %3404 = vmatpush.xpose.msra.mxu0 0.0
  %3405 = vmatpush.xpose.msra.mxu0 %v2369
  %3406 = vmatmul.f32.gmra.mxu0 %v3143
  %v3407 = vpop.f32.mrf.mxu0
  %v3408 = vadd.f32 %v3388, %v3407
  %3409 = vdwg.mxu0
  %3410 = vmatpush.xpose.msra.mxu0 0.0
  %3411 = vmatpush.xpose.msra.mxu0 0.0
  %3412 = vmatpush.xpose.msra.mxu0 0.0
  %3413 = vmatpush.xpose.msra.mxu0 0.0
  %3414 = vmatpush.xpose.msra.mxu0 0.0
  %3415 = vmatpush.xpose.msra.mxu0 0.0
  %3416 = vmatpush.xpose.msra.mxu0 0.0
  %3417 = vmatpush.xpose.msra.mxu0 0.0
  %3418 = vmatpush.xpose.msra.mxu0 0.0
  %3419 = vmatpush.xpose.msra.mxu0 0.0
  %3420 = vmatpush.xpose.msra.mxu0 0.0
  %3421 = vmatpush.xpose.msra.mxu0 0.0
  %3422 = vmatpush.xpose.msra.mxu0 0.0
  %3423 = vmatpush.xpose.msra.mxu0 0.0
  %3424 = vmatpush.xpose.msra.mxu0 0.0
  %3425 = vmatpush.xpose.msra.mxu0 %v2370
  %3426 = vmatmul.f32.gmra.mxu0 %v3144
  %v3427 = vpop.f32.mrf.mxu0
  %v3428 = vadd.f32 %v3408, %v3427
  %3429 = vdwg.mxu0
  %3430 = vmatpush.xpose.msra.mxu0 0.0
  %3431 = vmatpush.xpose.msra.mxu0 0.0
  %3432 = vmatpush.xpose.msra.mxu0 0.0
  %3433 = vmatpush.xpose.msra.mxu0 0.0
  %3434 = vmatpush.xpose.msra.mxu0 0.0
  %3435 = vmatpush.xpose.msra.mxu0 0.0
  %3436 = vmatpush.xpose.msra.mxu0 0.0
  %3437 = vmatpush.xpose.msra.mxu0 0.0
  %3438 = vmatpush.xpose.msra.mxu0 0.0
  %3439 = vmatpush.xpose.msra.mxu0 0.0
  %3440 = vmatpush.xpose.msra.mxu0 0.0
  %3441 = vmatpush.xpose.msra.mxu0 0.0
  %3442 = vmatpush.xpose.msra.mxu0 0.0
  %3443 = vmatpush.xpose.msra.mxu0 0.0
  %3444 = vmatpush.xpose.msra.mxu0 0.0
  %3445 = vmatpush.xpose.msra.mxu0 %v2371
  %3446 = vmatmul.f32.gmra.mxu0 %v3145
  %v3447 = vpop.f32.mrf.mxu0
  %v3448 = vadd.f32 %v3428, %v3447
  %3449 = vdwg.mxu0
  %3450 = vmatpush.xpose.msra.mxu0 0.0
  %3451 = vmatpush.xpose.msra.mxu0 0.0
  %3452 = vmatpush.xpose.msra.mxu0 0.0
  %3453 = vmatpush.xpose.msra.mxu0 0.0
  %3454 = vmatpush.xpose.msra.mxu0 0.0
  %3455 = vmatpush.xpose.msra.mxu0 0.0
  %3456 = vmatpush.xpose.msra.mxu0 0.0
  %3457 = vmatpush.xpose.msra.mxu0 0.0
  %3458 = vmatpush.xpose.msra.mxu0 0.0
  %3459 = vmatpush.xpose.msra.mxu0 0.0
  %3460 = vmatpush.xpose.msra.mxu0 0.0
  %3461 = vmatpush.xpose.msra.mxu0 0.0
  %3462 = vmatpush.xpose.msra.mxu0 0.0
  %3463 = vmatpush.xpose.msra.mxu0 0.0
  %3464 = vmatpush.xpose.msra.mxu0 0.0
  %3465 = vmatpush.xpose.msra.mxu0 %v2372
  %3466 = vmatmul.f32.gmra.mxu0 %v3146
  %v3467 = vpop.f32.mrf.mxu0
  %v3468 = vadd.f32 %v3448, %v3467
  %3469 = vdwg.mxu0
  %v3470 = vadd.f32 %v2725, %v3468
  %s3471 = scalar_lea.vmem %s2, 24
  %v3472 = vld [vmem:[%s3471] sm:$0x1f]
  %s3473 = scalar_lea.vmem %s3, 3
  %v3474 = vld [vmem:[%s3473] sm:$0x1]
  %s3475 = scalar_lea.vmem %s4, 24
  %v3476 = vld [vmem:[%s3475] sm:$0x1f]
  %s3477 = scalar_lea.vmem %s5, 3
  %v3478 = vld [vmem:[%s3477] sm:$0x1]
  %s3479 = scalar_lea.vmem %s6, 384
  %v3480 = vld [vmem:[%s3479] sm:$0x1f]
  %v3481 = vld [vmem:[%s3479 + $0x8] sm:$0x1f]
  %v3482 = vld [vmem:[%s3479 + $0x10] sm:$0x1f]
  %v3483 = vld [vmem:[%s3479 + $0x18] sm:$0x1f]
  %v3484 = vld [vmem:[%s3479 + $0x20] sm:$0x1f]
  %v3485 = vld [vmem:[%s3479 + $0x28] sm:$0x1f]
  %v3486 = vld [vmem:[%s3479 + $0x30] sm:$0x1f]
  %v3487 = vld [vmem:[%s3479 + $0x38] sm:$0x1f]
  %v3488 = vld [vmem:[%s3479 + $0x40] sm:$0x1f]
  %v3489 = vld [vmem:[%s3479 + $0x48] sm:$0x1f]
  %v3490 = vld [vmem:[%s3479 + $0x50] sm:$0x1f]
  %v3491 = vld [vmem:[%s3479 + $0x58] sm:$0x1f]
  %v3492 = vld [vmem:[%s3479 + $0x60] sm:$0x1f]
  %v3493 = vld [vmem:[%s3479 + $0x68] sm:$0x1f]
  %v3494 = vld [vmem:[%s3479 + $0x70] sm:$0x1f]
  %v3495 = vld [vmem:[%s3479 + $0x78] sm:$0x1f]
  %s3496 = scalar_lea.vmem %s7, 48
  %v3497 = vld [vmem:[%s3496] sm:$0xff]
  %v3498 = vld [vmem:[%s3496 + $0x8] sm:$0xff]
  %s3499 = scalar_lea.vmem %s8, 384
  %v3500 = vld [vmem:[%s3499] sm:$0x1f]
  %v3501 = vld [vmem:[%s3499 + $0x8] sm:$0x1f]
  %v3502 = vld [vmem:[%s3499 + $0x10] sm:$0x1f]
  %v3503 = vld [vmem:[%s3499 + $0x18] sm:$0x1f]
  %v3504 = vld [vmem:[%s3499 + $0x20] sm:$0x1f]
  %v3505 = vld [vmem:[%s3499 + $0x28] sm:$0x1f]
  %v3506 = vld [vmem:[%s3499 + $0x30] sm:$0x1f]
  %v3507 = vld [vmem:[%s3499 + $0x38] sm:$0x1f]
  %v3508 = vld [vmem:[%s3499 + $0x40] sm:$0x1f]
  %v3509 = vld [vmem:[%s3499 + $0x48] sm:$0x1f]
  %v3510 = vld [vmem:[%s3499 + $0x50] sm:$0x1f]
  %v3511 = vld [vmem:[%s3499 + $0x58] sm:$0x1f]
  %v3512 = vld [vmem:[%s3499 + $0x60] sm:$0x1f]
  %v3513 = vld [vmem:[%s3499 + $0x68] sm:$0x1f]
  %v3514 = vld [vmem:[%s3499 + $0x70] sm:$0x1f]
  %v3515 = vld [vmem:[%s3499 + $0x78] sm:$0x1f]
  %s3516 = scalar_lea.vmem %s9, 3
  %v3517 = vld [vmem:[%s3516] sm:$0x1]
  %v3519 = vperm.slane %v3474, 0
  %v3522 = vsel %vm84, %v3470, 0
  %v3525 = vsel %vm88, %v3472, 0
  %3527 = vmatpush.msra.mxu0 0.0
  %3528 = vmatpush.msra.mxu0 0.0
  %3529 = vmatpush.msra.mxu0 0.0
  %3530 = vmatpush.msra.mxu0 0.0
  %3531 = vmatpush.msra.mxu0 0.0
  %3532 = vmatpush.msra.mxu0 0.0
  %3533 = vmatpush.msra.mxu0 0.0
  %3534 = vmatpush.msra.mxu0 0.0
  %3535 = vmatpush.msra.mxu0 0.0
  %3536 = vmatpush.msra.mxu0 0.0
  %3537 = vmatpush.msra.mxu0 0.0
  %3538 = vmatpush.msra.mxu0 0.0
  %3539 = vmatpush.msra.mxu0 0.0
  %3540 = vmatpush.msra.mxu0 0.0
  %3541 = vmatpush.msra.mxu0 0.0
  %3542 = vmatpush.msra.mxu0 %v3525
  %3543 = vmatmul.f32.gmra.mxu0 %v3522
  %v3544 = vpop.f32.mrf.mxu0
  %v3545 = vadd.f32 %v3519, %v3544
  %3546 = vdwg.mxu0
  %v3548 = vrot.slane %v3545, 1
  %v3549 = vrot.slane %v3545, 2
  %v3550 = vrot.slane %v3545, 3
  %v3551 = vrot.slane %v3545, 4
  %v3552 = vrot.slane %v3545, 5
  %v3553 = vperm.slane %v3545, 0
  %v3554 = vperm.slane %v3548, 0
  %v3555 = vperm.slane %v3549, 0
  %v3556 = vperm.slane %v3550, 0
  %v3557 = vperm.slane %v3551, 0
  %v3558 = vperm.slane %v3552, 0
  %3565 = vrot.lane.b32.xlu0 %v3545, 123
  %v3566 = vpop.permute.xlu0 %3565
  %v3568 = vmul.f32 %v3553, %v3566
  %v3569 = vmul.f32 %v3554, %v3566
  %v3570 = vmul.f32 %v3555, %v3566
  %v3571 = vmul.f32 %v3556, %v3566
  %v3572 = vmul.f32 %v3557, %v3566
  %v3573 = vmul.f32 %v3558, %v3566
  %v3574 = vmul.f32 %v3568, 0.4472136
  %v3575 = vmul.f32 %v3569, 0.4472136
  %v3576 = vmul.f32 %v3570, 0.4472136
  %v3577 = vmul.f32 %v3571, 0.4472136
  %v3578 = vmul.f32 %v3572, 0.4472136
  %v3579 = vmul.f32 %v3573, 0.4472136
  %v3580 = vadd.f32 %v3574, %v36
  %v3581 = vadd.f32 %v3575, %v37
  %v3582 = vadd.f32 %v3576, %v38
  %v3583 = vadd.f32 %v3577, %v39
  %v3584 = vadd.f32 %v3578, %v40
  %v3585 = vadd.f32 %v3579, %v41
  %v3586 = vsel %vm151, %v3580, -inf
  %v3587 = vrot.slane %v3586, 4
  %v3588 = vmax.f32 %v3586, %v3587
  %v3589 = vrot.slane %v3588, 2
  %v3590 = vmax.f32 %v3588, %v3589
  %v3591 = vrot.slane %v3590, 1
  %v3592 = vmax.f32 %v3590, %v3591
  %v3593 = vsel %vm151, %v3581, -inf
  %v3594 = vrot.slane %v3593, 4
  %v3595 = vmax.f32 %v3593, %v3594
  %v3596 = vrot.slane %v3595, 2
  %v3597 = vmax.f32 %v3595, %v3596
  %v3598 = vrot.slane %v3597, 1
  %v3599 = vmax.f32 %v3597, %v3598
  %v3600 = vsel %vm151, %v3582, -inf
  %v3601 = vrot.slane %v3600, 4
  %v3602 = vmax.f32 %v3600, %v3601
  %v3603 = vrot.slane %v3602, 2
  %v3604 = vmax.f32 %v3602, %v3603
  %v3605 = vrot.slane %v3604, 1
  %v3606 = vmax.f32 %v3604, %v3605
  %v3607 = vsel %vm151, %v3583, -inf
  %v3608 = vrot.slane %v3607, 4
  %v3609 = vmax.f32 %v3607, %v3608
  %v3610 = vrot.slane %v3609, 2
  %v3611 = vmax.f32 %v3609, %v3610
  %v3612 = vrot.slane %v3611, 1
  %v3613 = vmax.f32 %v3611, %v3612
  %v3614 = vsel %vm151, %v3584, -inf
  %v3615 = vrot.slane %v3614, 4
  %v3616 = vmax.f32 %v3614, %v3615
  %v3617 = vrot.slane %v3616, 2
  %v3618 = vmax.f32 %v3616, %v3617
  %v3619 = vrot.slane %v3618, 1
  %v3620 = vmax.f32 %v3618, %v3619
  %v3621 = vsel %vm151, %v3585, -inf
  %v3622 = vrot.slane %v3621, 4
  %v3623 = vmax.f32 %v3621, %v3622
  %v3624 = vrot.slane %v3623, 2
  %v3625 = vmax.f32 %v3623, %v3624
  %v3626 = vrot.slane %v3625, 1
  %v3627 = vmax.f32 %v3625, %v3626
  %v3628 = vsub.f32 %v3580, %v3592
  %v3629 = vsub.f32 %v3581, %v3599
  %v3630 = vsub.f32 %v3582, %v3606
  %v3631 = vsub.f32 %v3583, %v3613
  %v3632 = vsub.f32 %v3584, %v3620
  %v3633 = vsub.f32 %v3585, %v3627
  %v3634 = vmul.f32 %v3628, 1.442695
  %v3635 = vpow.pop %v3634
  %v3636 = vmul.f32 %v3629, 1.442695
  %v3637 = vpow.pop %v3636
  %v3638 = vmul.f32 %v3630, 1.442695
  %v3639 = vpow.pop %v3638
  %v3640 = vmul.f32 %v3631, 1.442695
  %v3641 = vpow.pop %v3640
  %v3642 = vmul.f32 %v3632, 1.442695
  %v3643 = vpow.pop %v3642
  %v3644 = vmul.f32 %v3633, 1.442695
  %v3645 = vpow.pop %v3644
  %v3646 = vsel %vm151, %v3635, 0.0
  %v3647 = vrot.slane %v3646, 4
  %v3648 = vadd.f32 %v3646, %v3647
  %v3649 = vrot.slane %v3648, 2
  %v3650 = vadd.f32 %v3648, %v3649
  %v3651 = vrot.slane %v3650, 1
  %v3652 = vadd.f32 %v3650, %v3651
  %v3653 = vsel %vm151, %v3637, 0.0
  %v3654 = vrot.slane %v3653, 4
  %v3655 = vadd.f32 %v3653, %v3654
  %v3656 = vrot.slane %v3655, 2
  %v3657 = vadd.f32 %v3655, %v3656
  %v3658 = vrot.slane %v3657, 1
  %v3659 = vadd.f32 %v3657, %v3658
  %v3660 = vsel %vm151, %v3639, 0.0
  %v3661 = vrot.slane %v3660, 4
  %v3662 = vadd.f32 %v3660, %v3661
  %v3663 = vrot.slane %v3662, 2
  %v3664 = vadd.f32 %v3662, %v3663
  %v3665 = vrot.slane %v3664, 1
  %v3666 = vadd.f32 %v3664, %v3665
  %v3667 = vsel %vm151, %v3641, 0.0
  %v3668 = vrot.slane %v3667, 4
  %v3669 = vadd.f32 %v3667, %v3668
  %v3670 = vrot.slane %v3669, 2
  %v3671 = vadd.f32 %v3669, %v3670
  %v3672 = vrot.slane %v3671, 1
  %v3673 = vadd.f32 %v3671, %v3672
  %v3674 = vsel %vm151, %v3643, 0.0
  %v3675 = vrot.slane %v3674, 4
  %v3676 = vadd.f32 %v3674, %v3675
  %v3677 = vrot.slane %v3676, 2
  %v3678 = vadd.f32 %v3676, %v3677
  %v3679 = vrot.slane %v3678, 1
  %v3680 = vadd.f32 %v3678, %v3679
  %v3681 = vsel %vm151, %v3645, 0.0
  %v3682 = vrot.slane %v3681, 4
  %v3683 = vadd.f32 %v3681, %v3682
  %v3684 = vrot.slane %v3683, 2
  %v3685 = vadd.f32 %v3683, %v3684
  %v3686 = vrot.slane %v3685, 1
  %v3687 = vadd.f32 %v3685, %v3686
  %v3688 = vrcp.pop %v3652
  %v3689 = vmul.f32 %v3652, %v3688
  %v3690 = vsub.f32 1.0, %v3689
  %v3691 = vmul.f32 %v3688, %v3690
  %v3692 = vadd.f32 %v3688, %v3691
  %vm3693 = vweird.f32 %v3652
  %vm3694 = vweird.f32 %v3688
  %vm3695 = vmor %vm3693, %vm3694
  %v3696 = vsel %vm3695, %v3688, %v3692
  %v3697 = vand.u32 2147483647, %v3652
  %vm3698 = vcmp.eq.f32.partialorder %v3697, 8.507059e+37
  %v3699 = vand.u32 %v3652, 2147483648
  %v3700 = vor.u32 1.1754944e-38, %v3699
  %v3701 = vsel %vm3698, %v3700, %v3696
  %v3702 = vmul.f32 %v3635, %v3701
  %v3703 = vrcp.pop %v3659
  %v3704 = vmul.f32 %v3659, %v3703
  %v3705 = vsub.f32 1.0, %v3704
  %v3706 = vmul.f32 %v3703, %v3705
  %v3707 = vadd.f32 %v3703, %v3706
  %vm3708 = vweird.f32 %v3659
  %vm3709 = vweird.f32 %v3703
  %vm3710 = vmor %vm3708, %vm3709
  %v3711 = vsel %vm3710, %v3703, %v3707
  %v3712 = vand.u32 2147483647, %v3659
  %vm3713 = vcmp.eq.f32.partialorder %v3712, 8.507059e+37
  %v3714 = vand.u32 %v3659, 2147483648
  %v3715 = vor.u32 1.1754944e-38, %v3714
  %v3716 = vsel %vm3713, %v3715, %v3711
  %v3717 = vmul.f32 %v3637, %v3716
  %v3718 = vrcp.pop %v3666
  %v3719 = vmul.f32 %v3666, %v3718
  %v3720 = vsub.f32 1.0, %v3719
  %v3721 = vmul.f32 %v3718, %v3720
  %v3722 = vadd.f32 %v3718, %v3721
  %vm3723 = vweird.f32 %v3666
  %vm3724 = vweird.f32 %v3718
  %vm3725 = vmor %vm3723, %vm3724
  %v3726 = vsel %vm3725, %v3718, %v3722
  %v3727 = vand.u32 2147483647, %v3666
  %vm3728 = vcmp.eq.f32.partialorder %v3727, 8.507059e+37
  %v3729 = vand.u32 %v3666, 2147483648
  %v3730 = vor.u32 1.1754944e-38, %v3729
  %v3731 = vsel %vm3728, %v3730, %v3726
  %v3732 = vmul.f32 %v3639, %v3731
  %v3733 = vrcp.pop %v3673
  %v3734 = vmul.f32 %v3673, %v3733
  %v3735 = vsub.f32 1.0, %v3734
  %v3736 = vmul.f32 %v3733, %v3735
  %v3737 = vadd.f32 %v3733, %v3736
  %vm3738 = vweird.f32 %v3673
  %vm3739 = vweird.f32 %v3733
  %vm3740 = vmor %vm3738, %vm3739
  %v3741 = vsel %vm3740, %v3733, %v3737
  %v3742 = vand.u32 2147483647, %v3673
  %vm3743 = vcmp.eq.f32.partialorder %v3742, 8.507059e+37
  %v3744 = vand.u32 %v3673, 2147483648
  %v3745 = vor.u32 1.1754944e-38, %v3744
  %v3746 = vsel %vm3743, %v3745, %v3741
  %v3747 = vmul.f32 %v3641, %v3746
  %v3748 = vrcp.pop %v3680
  %v3749 = vmul.f32 %v3680, %v3748
  %v3750 = vsub.f32 1.0, %v3749
  %v3751 = vmul.f32 %v3748, %v3750
  %v3752 = vadd.f32 %v3748, %v3751
  %vm3753 = vweird.f32 %v3680
  %vm3754 = vweird.f32 %v3748
  %vm3755 = vmor %vm3753, %vm3754
  %v3756 = vsel %vm3755, %v3748, %v3752
  %v3757 = vand.u32 2147483647, %v3680
  %vm3758 = vcmp.eq.f32.partialorder %v3757, 8.507059e+37
  %v3759 = vand.u32 %v3680, 2147483648
  %v3760 = vor.u32 1.1754944e-38, %v3759
  %v3761 = vsel %vm3758, %v3760, %v3756
  %v3762 = vmul.f32 %v3643, %v3761
  %v3763 = vrcp.pop %v3687
  %v3764 = vmul.f32 %v3687, %v3763
  %v3765 = vsub.f32 1.0, %v3764
  %v3766 = vmul.f32 %v3763, %v3765
  %v3767 = vadd.f32 %v3763, %v3766
  %vm3768 = vweird.f32 %v3687
  %vm3769 = vweird.f32 %v3763
  %vm3770 = vmor %vm3768, %vm3769
  %v3771 = vsel %vm3770, %v3763, %v3767
  %v3772 = vand.u32 2147483647, %v3687
  %vm3773 = vcmp.eq.f32.partialorder %v3772, 8.507059e+37
  %v3774 = vand.u32 %v3687, 2147483648
  %v3775 = vor.u32 1.1754944e-38, %v3774
  %v3776 = vsel %vm3773, %v3775, %v3771
  %v3777 = vmul.f32 %v3645, %v3776
  %3778 = vrot.lane.b32.xlu0 %v3545, 118
  %v3779 = vpop.permute.xlu0 %3778
  %v3781 = vmul.f32 %v3702, %v3779
  %v3782 = vmul.f32 %v3717, %v3779
  %v3783 = vmul.f32 %v3732, %v3779
  %v3784 = vmul.f32 %v3747, %v3779
  %v3785 = vmul.f32 %v3762, %v3779
  %v3786 = vmul.f32 %v3777, %v3779
  %v3787 = vsel %vm151, %v3781, 0.0
  %v3788 = vrot.slane %v3787, 4
  %v3789 = vadd.f32 %v3787, %v3788
  %v3790 = vrot.slane %v3789, 2
  %v3791 = vadd.f32 %v3789, %v3790
  %v3792 = vrot.slane %v3791, 1
  %v3793 = vadd.f32 %v3791, %v3792
  %v3794 = vsel %vm151, %v3782, 0.0
  %v3795 = vrot.slane %v3794, 4
  %v3796 = vadd.f32 %v3794, %v3795
  %v3797 = vrot.slane %v3796, 2
  %v3798 = vadd.f32 %v3796, %v3797
  %v3799 = vrot.slane %v3798, 1
  %v3800 = vadd.f32 %v3798, %v3799
  %v3801 = vsel %vm151, %v3783, 0.0
  %v3802 = vrot.slane %v3801, 4
  %v3803 = vadd.f32 %v3801, %v3802
  %v3804 = vrot.slane %v3803, 2
  %v3805 = vadd.f32 %v3803, %v3804
  %v3806 = vrot.slane %v3805, 1
  %v3807 = vadd.f32 %v3805, %v3806
  %v3808 = vsel %vm151, %v3784, 0.0
  %v3809 = vrot.slane %v3808, 4
  %v3810 = vadd.f32 %v3808, %v3809
  %v3811 = vrot.slane %v3810, 2
  %v3812 = vadd.f32 %v3810, %v3811
  %v3813 = vrot.slane %v3812, 1
  %v3814 = vadd.f32 %v3812, %v3813
  %v3815 = vsel %vm151, %v3785, 0.0
  %v3816 = vrot.slane %v3815, 4
  %v3817 = vadd.f32 %v3815, %v3816
  %v3818 = vrot.slane %v3817, 2
  %v3819 = vadd.f32 %v3817, %v3818
  %v3820 = vrot.slane %v3819, 1
  %v3821 = vadd.f32 %v3819, %v3820
  %v3822 = vsel %vm151, %v3786, 0.0
  %v3823 = vrot.slane %v3822, 4
  %v3824 = vadd.f32 %v3822, %v3823
  %v3825 = vrot.slane %v3824, 2
  %v3826 = vadd.f32 %v3824, %v3825
  %v3827 = vrot.slane %v3826, 1
  %v3828 = vadd.f32 %v3826, %v3827
  %v3830 = vperm.slane %v3478, 0
  %v3838 = vsel %vm404, %v3800, %v3793
  %v3839 = vsel %vm406, %v3807, %v3838
  %v3840 = vsel %vm408, %v3814, %v3839
  %v3841 = vsel %vm410, %v3821, %v3840
  %v3842 = vsel %vm412, %v3828, %v3841
  %v3843 = vsel %vm84, %v3842, 0
  %v3846 = vsel %vm88, %v3476, 0
  %3848 = vmatpush.msra.mxu0 0.0
  %3849 = vmatpush.msra.mxu0 0.0
  %3850 = vmatpush.msra.mxu0 0.0
  %3851 = vmatpush.msra.mxu0 0.0
  %3852 = vmatpush.msra.mxu0 0.0
  %3853 = vmatpush.msra.mxu0 0.0
  %3854 = vmatpush.msra.mxu0 0.0
  %3855 = vmatpush.msra.mxu0 0.0
  %3856 = vmatpush.msra.mxu0 0.0
  %3857 = vmatpush.msra.mxu0 0.0
  %3858 = vmatpush.msra.mxu0 0.0
  %3859 = vmatpush.msra.mxu0 0.0
  %3860 = vmatpush.msra.mxu0 0.0
  %3861 = vmatpush.msra.mxu0 0.0
  %3862 = vmatpush.msra.mxu0 0.0
  %3863 = vmatpush.msra.mxu0 %v3846
  %3864 = vmatmul.f32.gmra.mxu0 %v3843
  %v3865 = vpop.f32.mrf.mxu0
  %v3866 = vadd.f32 %v3830, %v3865
  %3867 = vdwg.mxu0
  %v3868 = vadd.f32 %v3470, %v3866
  %v3871 = vperm.slane %v3497, 0
  %v3872 = vperm.slane %v3497, 1
  %v3873 = vperm.slane %v3497, 2
  %v3874 = vperm.slane %v3497, 3
  %v3875 = vperm.slane %v3497, 4
  %v3876 = vperm.slane %v3497, 5
  %v3877 = vperm.slane %v3497, 6
  %v3878 = vperm.slane %v3497, 7
  %v3879 = vperm.slane %v3498, 0
  %v3880 = vperm.slane %v3498, 1
  %v3881 = vperm.slane %v3498, 2
  %v3882 = vperm.slane %v3498, 3
  %v3883 = vperm.slane %v3498, 4
  %v3884 = vperm.slane %v3498, 5
  %v3885 = vperm.slane %v3498, 6
  %v3886 = vperm.slane %v3498, 7
  %v3904 = vsel %vm84, %v3868, 0
  %v3907 = vsel %vm88, %v3480, 0
  %v3910 = vsel %vm88, %v3481, 0
  %v3913 = vsel %vm88, %v3482, 0
  %v3916 = vsel %vm88, %v3483, 0
  %v3919 = vsel %vm88, %v3484, 0
  %v3922 = vsel %vm88, %v3485, 0
  %v3925 = vsel %vm88, %v3486, 0
  %v3928 = vsel %vm88, %v3487, 0
  %v3931 = vsel %vm88, %v3488, 0
  %v3934 = vsel %vm88, %v3489, 0
  %v3937 = vsel %vm88, %v3490, 0
  %v3940 = vsel %vm88, %v3491, 0
  %v3943 = vsel %vm88, %v3492, 0
  %v3946 = vsel %vm88, %v3493, 0
  %v3949 = vsel %vm88, %v3494, 0
  %v3952 = vsel %vm88, %v3495, 0
  %3954 = vmatpush.msra.mxu0 0.0
  %3955 = vmatpush.msra.mxu0 0.0
  %3956 = vmatpush.msra.mxu0 0.0
  %3957 = vmatpush.msra.mxu0 0.0
  %3958 = vmatpush.msra.mxu0 0.0
  %3959 = vmatpush.msra.mxu0 0.0
  %3960 = vmatpush.msra.mxu0 0.0
  %3961 = vmatpush.msra.mxu0 0.0
  %3962 = vmatpush.msra.mxu0 0.0
  %3963 = vmatpush.msra.mxu0 0.0
  %3964 = vmatpush.msra.mxu0 0.0
  %3965 = vmatpush.msra.mxu0 0.0
  %3966 = vmatpush.msra.mxu0 0.0
  %3967 = vmatpush.msra.mxu0 0.0
  %3968 = vmatpush.msra.mxu0 0.0
  %3969 = vmatpush.msra.mxu0 %v3907
  %3970 = vmatmul.f32.gmra.mxu0 %v3904
  %v3971 = vpop.f32.mrf.mxu0
  %v3972 = vadd.f32 %v3871, %v3971
  %3973 = vdwg.mxu0
  %3974 = vmatpush.msra.mxu0 0.0
  %3975 = vmatpush.msra.mxu0 0.0
  %3976 = vmatpush.msra.mxu0 0.0
  %3977 = vmatpush.msra.mxu0 0.0
  %3978 = vmatpush.msra.mxu0 0.0
  %3979 = vmatpush.msra.mxu0 0.0
  %3980 = vmatpush.msra.mxu0 0.0
  %3981 = vmatpush.msra.mxu0 0.0
  %3982 = vmatpush.msra.mxu0 0.0
  %3983 = vmatpush.msra.mxu0 0.0
  %3984 = vmatpush.msra.mxu0 0.0
  %3985 = vmatpush.msra.mxu0 0.0
  %3986 = vmatpush.msra.mxu0 0.0
  %3987 = vmatpush.msra.mxu0 0.0
  %3988 = vmatpush.msra.mxu0 0.0
  %3989 = vmatpush.msra.mxu0 %v3910
  %3990 = vmatmul.f32.gmra.mxu0 %v3904
  %v3991 = vpop.f32.mrf.mxu0
  %v3992 = vadd.f32 %v3872, %v3991
  %3993 = vdwg.mxu0
  %3994 = vmatpush.msra.mxu0 0.0
  %3995 = vmatpush.msra.mxu0 0.0
  %3996 = vmatpush.msra.mxu0 0.0
  %3997 = vmatpush.msra.mxu0 0.0
  %3998 = vmatpush.msra.mxu0 0.0
  %3999 = vmatpush.msra.mxu0 0.0
  %4000 = vmatpush.msra.mxu0 0.0
  %4001 = vmatpush.msra.mxu0 0.0
  %4002 = vmatpush.msra.mxu0 0.0
  %4003 = vmatpush.msra.mxu0 0.0
  %4004 = vmatpush.msra.mxu0 0.0
  %4005 = vmatpush.msra.mxu0 0.0
  %4006 = vmatpush.msra.mxu0 0.0
  %4007 = vmatpush.msra.mxu0 0.0
  %4008 = vmatpush.msra.mxu0 0.0
  %4009 = vmatpush.msra.mxu0 %v3913
  %4010 = vmatmul.f32.gmra.mxu0 %v3904
  %v4011 = vpop.f32.mrf.mxu0
  %v4012 = vadd.f32 %v3873, %v4011
  %4013 = vdwg.mxu0
  %4014 = vmatpush.msra.mxu0 0.0
  %4015 = vmatpush.msra.mxu0 0.0
  %4016 = vmatpush.msra.mxu0 0.0
  %4017 = vmatpush.msra.mxu0 0.0
  %4018 = vmatpush.msra.mxu0 0.0
  %4019 = vmatpush.msra.mxu0 0.0
  %4020 = vmatpush.msra.mxu0 0.0
  %4021 = vmatpush.msra.mxu0 0.0
  %4022 = vmatpush.msra.mxu0 0.0
  %4023 = vmatpush.msra.mxu0 0.0
  %4024 = vmatpush.msra.mxu0 0.0
  %4025 = vmatpush.msra.mxu0 0.0
  %4026 = vmatpush.msra.mxu0 0.0
  %4027 = vmatpush.msra.mxu0 0.0
  %4028 = vmatpush.msra.mxu0 0.0
  %4029 = vmatpush.msra.mxu0 %v3916
  %4030 = vmatmul.f32.gmra.mxu0 %v3904
  %v4031 = vpop.f32.mrf.mxu0
  %v4032 = vadd.f32 %v3874, %v4031
  %4033 = vdwg.mxu0
  %4034 = vmatpush.msra.mxu0 0.0
  %4035 = vmatpush.msra.mxu0 0.0
  %4036 = vmatpush.msra.mxu0 0.0
  %4037 = vmatpush.msra.mxu0 0.0
  %4038 = vmatpush.msra.mxu0 0.0
  %4039 = vmatpush.msra.mxu0 0.0
  %4040 = vmatpush.msra.mxu0 0.0
  %4041 = vmatpush.msra.mxu0 0.0
  %4042 = vmatpush.msra.mxu0 0.0
  %4043 = vmatpush.msra.mxu0 0.0
  %4044 = vmatpush.msra.mxu0 0.0
  %4045 = vmatpush.msra.mxu0 0.0
  %4046 = vmatpush.msra.mxu0 0.0
  %4047 = vmatpush.msra.mxu0 0.0
  %4048 = vmatpush.msra.mxu0 0.0
  %4049 = vmatpush.msra.mxu0 %v3919
  %4050 = vmatmul.f32.gmra.mxu0 %v3904
  %v4051 = vpop.f32.mrf.mxu0
  %v4052 = vadd.f32 %v3875, %v4051
  %4053 = vdwg.mxu0
  %4054 = vmatpush.msra.mxu0 0.0
  %4055 = vmatpush.msra.mxu0 0.0
  %4056 = vmatpush.msra.mxu0 0.0
  %4057 = vmatpush.msra.mxu0 0.0
  %4058 = vmatpush.msra.mxu0 0.0
  %4059 = vmatpush.msra.mxu0 0.0
  %4060 = vmatpush.msra.mxu0 0.0
  %4061 = vmatpush.msra.mxu0 0.0
  %4062 = vmatpush.msra.mxu0 0.0
  %4063 = vmatpush.msra.mxu0 0.0
  %4064 = vmatpush.msra.mxu0 0.0
  %4065 = vmatpush.msra.mxu0 0.0
  %4066 = vmatpush.msra.mxu0 0.0
  %4067 = vmatpush.msra.mxu0 0.0
  %4068 = vmatpush.msra.mxu0 0.0
  %4069 = vmatpush.msra.mxu0 %v3922
  %4070 = vmatmul.f32.gmra.mxu0 %v3904
  %v4071 = vpop.f32.mrf.mxu0
  %v4072 = vadd.f32 %v3876, %v4071
  %4073 = vdwg.mxu0
  %4074 = vmatpush.msra.mxu0 0.0
  %4075 = vmatpush.msra.mxu0 0.0
  %4076 = vmatpush.msra.mxu0 0.0
  %4077 = vmatpush.msra.mxu0 0.0
  %4078 = vmatpush.msra.mxu0 0.0
  %4079 = vmatpush.msra.mxu0 0.0
  %4080 = vmatpush.msra.mxu0 0.0
  %4081 = vmatpush.msra.mxu0 0.0
  %4082 = vmatpush.msra.mxu0 0.0
  %4083 = vmatpush.msra.mxu0 0.0
  %4084 = vmatpush.msra.mxu0 0.0
  %4085 = vmatpush.msra.mxu0 0.0
  %4086 = vmatpush.msra.mxu0 0.0
  %4087 = vmatpush.msra.mxu0 0.0
  %4088 = vmatpush.msra.mxu0 0.0
  %4089 = vmatpush.msra.mxu0 %v3925
  %4090 = vmatmul.f32.gmra.mxu0 %v3904
  %v4091 = vpop.f32.mrf.mxu0
  %v4092 = vadd.f32 %v3877, %v4091
  %4093 = vdwg.mxu0
  %4094 = vmatpush.msra.mxu0 0.0
  %4095 = vmatpush.msra.mxu0 0.0
  %4096 = vmatpush.msra.mxu0 0.0
  %4097 = vmatpush.msra.mxu0 0.0
  %4098 = vmatpush.msra.mxu0 0.0
  %4099 = vmatpush.msra.mxu0 0.0
  %4100 = vmatpush.msra.mxu0 0.0
  %4101 = vmatpush.msra.mxu0 0.0
  %4102 = vmatpush.msra.mxu0 0.0
  %4103 = vmatpush.msra.mxu0 0.0
  %4104 = vmatpush.msra.mxu0 0.0
  %4105 = vmatpush.msra.mxu0 0.0
  %4106 = vmatpush.msra.mxu0 0.0
  %4107 = vmatpush.msra.mxu0 0.0
  %4108 = vmatpush.msra.mxu0 0.0
  %4109 = vmatpush.msra.mxu0 %v3928
  %4110 = vmatmul.f32.gmra.mxu0 %v3904
  %v4111 = vpop.f32.mrf.mxu0
  %v4112 = vadd.f32 %v3878, %v4111
  %4113 = vdwg.mxu0
  %4114 = vmatpush.msra.mxu0 0.0
  %4115 = vmatpush.msra.mxu0 0.0
  %4116 = vmatpush.msra.mxu0 0.0
  %4117 = vmatpush.msra.mxu0 0.0
  %4118 = vmatpush.msra.mxu0 0.0
  %4119 = vmatpush.msra.mxu0 0.0
  %4120 = vmatpush.msra.mxu0 0.0
  %4121 = vmatpush.msra.mxu0 0.0
  %4122 = vmatpush.msra.mxu0 0.0
  %4123 = vmatpush.msra.mxu0 0.0
  %4124 = vmatpush.msra.mxu0 0.0
  %4125 = vmatpush.msra.mxu0 0.0
  %4126 = vmatpush.msra.mxu0 0.0
  %4127 = vmatpush.msra.mxu0 0.0
  %4128 = vmatpush.msra.mxu0 0.0
  %4129 = vmatpush.msra.mxu0 %v3931
  %4130 = vmatmul.f32.gmra.mxu0 %v3904
  %v4131 = vpop.f32.mrf.mxu0
  %v4132 = vadd.f32 %v3879, %v4131
  %4133 = vdwg.mxu0
  %4134 = vmatpush.msra.mxu0 0.0
  %4135 = vmatpush.msra.mxu0 0.0
  %4136 = vmatpush.msra.mxu0 0.0
  %4137 = vmatpush.msra.mxu0 0.0
  %4138 = vmatpush.msra.mxu0 0.0
  %4139 = vmatpush.msra.mxu0 0.0
  %4140 = vmatpush.msra.mxu0 0.0
  %4141 = vmatpush.msra.mxu0 0.0
  %4142 = vmatpush.msra.mxu0 0.0
  %4143 = vmatpush.msra.mxu0 0.0
  %4144 = vmatpush.msra.mxu0 0.0
  %4145 = vmatpush.msra.mxu0 0.0
  %4146 = vmatpush.msra.mxu0 0.0
  %4147 = vmatpush.msra.mxu0 0.0
  %4148 = vmatpush.msra.mxu0 0.0
  %4149 = vmatpush.msra.mxu0 %v3934
  %4150 = vmatmul.f32.gmra.mxu0 %v3904
  %v4151 = vpop.f32.mrf.mxu0
  %v4152 = vadd.f32 %v3880, %v4151
  %4153 = vdwg.mxu0
  %4154 = vmatpush.msra.mxu0 0.0
  %4155 = vmatpush.msra.mxu0 0.0
  %4156 = vmatpush.msra.mxu0 0.0
  %4157 = vmatpush.msra.mxu0 0.0
  %4158 = vmatpush.msra.mxu0 0.0
  %4159 = vmatpush.msra.mxu0 0.0
  %4160 = vmatpush.msra.mxu0 0.0
  %4161 = vmatpush.msra.mxu0 0.0
  %4162 = vmatpush.msra.mxu0 0.0
  %4163 = vmatpush.msra.mxu0 0.0
  %4164 = vmatpush.msra.mxu0 0.0
  %4165 = vmatpush.msra.mxu0 0.0
  %4166 = vmatpush.msra.mxu0 0.0
  %4167 = vmatpush.msra.mxu0 0.0
  %4168 = vmatpush.msra.mxu0 0.0
  %4169 = vmatpush.msra.mxu0 %v3937
  %4170 = vmatmul.f32.gmra.mxu0 %v3904
  %v4171 = vpop.f32.mrf.mxu0
  %v4172 = vadd.f32 %v3881, %v4171
  %4173 = vdwg.mxu0
  %4174 = vmatpush.msra.mxu0 0.0
  %4175 = vmatpush.msra.mxu0 0.0
  %4176 = vmatpush.msra.mxu0 0.0
  %4177 = vmatpush.msra.mxu0 0.0
  %4178 = vmatpush.msra.mxu0 0.0
  %4179 = vmatpush.msra.mxu0 0.0
  %4180 = vmatpush.msra.mxu0 0.0
  %4181 = vmatpush.msra.mxu0 0.0
  %4182 = vmatpush.msra.mxu0 0.0
  %4183 = vmatpush.msra.mxu0 0.0
  %4184 = vmatpush.msra.mxu0 0.0
  %4185 = vmatpush.msra.mxu0 0.0
  %4186 = vmatpush.msra.mxu0 0.0
  %4187 = vmatpush.msra.mxu0 0.0
  %4188 = vmatpush.msra.mxu0 0.0
  %4189 = vmatpush.msra.mxu0 %v3940
  %4190 = vmatmul.f32.gmra.mxu0 %v3904
  %v4191 = vpop.f32.mrf.mxu0
  %v4192 = vadd.f32 %v3882, %v4191
  %4193 = vdwg.mxu0
  %4194 = vmatpush.msra.mxu0 0.0
  %4195 = vmatpush.msra.mxu0 0.0
  %4196 = vmatpush.msra.mxu0 0.0
  %4197 = vmatpush.msra.mxu0 0.0
  %4198 = vmatpush.msra.mxu0 0.0
  %4199 = vmatpush.msra.mxu0 0.0
  %4200 = vmatpush.msra.mxu0 0.0
  %4201 = vmatpush.msra.mxu0 0.0
  %4202 = vmatpush.msra.mxu0 0.0
  %4203 = vmatpush.msra.mxu0 0.0
  %4204 = vmatpush.msra.mxu0 0.0
  %4205 = vmatpush.msra.mxu0 0.0
  %4206 = vmatpush.msra.mxu0 0.0
  %4207 = vmatpush.msra.mxu0 0.0
  %4208 = vmatpush.msra.mxu0 0.0
  %4209 = vmatpush.msra.mxu0 %v3943
  %4210 = vmatmul.f32.gmra.mxu0 %v3904
  %v4211 = vpop.f32.mrf.mxu0
  %v4212 = vadd.f32 %v3883, %v4211
  %4213 = vdwg.mxu0
  %4214 = vmatpush.msra.mxu0 0.0
  %4215 = vmatpush.msra.mxu0 0.0
  %4216 = vmatpush.msra.mxu0 0.0
  %4217 = vmatpush.msra.mxu0 0.0
  %4218 = vmatpush.msra.mxu0 0.0
  %4219 = vmatpush.msra.mxu0 0.0
  %4220 = vmatpush.msra.mxu0 0.0
  %4221 = vmatpush.msra.mxu0 0.0
  %4222 = vmatpush.msra.mxu0 0.0
  %4223 = vmatpush.msra.mxu0 0.0
  %4224 = vmatpush.msra.mxu0 0.0
  %4225 = vmatpush.msra.mxu0 0.0
  %4226 = vmatpush.msra.mxu0 0.0
  %4227 = vmatpush.msra.mxu0 0.0
  %4228 = vmatpush.msra.mxu0 0.0
  %4229 = vmatpush.msra.mxu0 %v3946
  %4230 = vmatmul.f32.gmra.mxu0 %v3904
  %v4231 = vpop.f32.mrf.mxu0
  %v4232 = vadd.f32 %v3884, %v4231
  %4233 = vdwg.mxu0
  %4234 = vmatpush.msra.mxu0 0.0
  %4235 = vmatpush.msra.mxu0 0.0
  %4236 = vmatpush.msra.mxu0 0.0
  %4237 = vmatpush.msra.mxu0 0.0
  %4238 = vmatpush.msra.mxu0 0.0
  %4239 = vmatpush.msra.mxu0 0.0
  %4240 = vmatpush.msra.mxu0 0.0
  %4241 = vmatpush.msra.mxu0 0.0
  %4242 = vmatpush.msra.mxu0 0.0
  %4243 = vmatpush.msra.mxu0 0.0
  %4244 = vmatpush.msra.mxu0 0.0
  %4245 = vmatpush.msra.mxu0 0.0
  %4246 = vmatpush.msra.mxu0 0.0
  %4247 = vmatpush.msra.mxu0 0.0
  %4248 = vmatpush.msra.mxu0 0.0
  %4249 = vmatpush.msra.mxu0 %v3949
  %4250 = vmatmul.f32.gmra.mxu0 %v3904
  %v4251 = vpop.f32.mrf.mxu0
  %v4252 = vadd.f32 %v3885, %v4251
  %4253 = vdwg.mxu0
  %4254 = vmatpush.msra.mxu0 0.0
  %4255 = vmatpush.msra.mxu0 0.0
  %4256 = vmatpush.msra.mxu0 0.0
  %4257 = vmatpush.msra.mxu0 0.0
  %4258 = vmatpush.msra.mxu0 0.0
  %4259 = vmatpush.msra.mxu0 0.0
  %4260 = vmatpush.msra.mxu0 0.0
  %4261 = vmatpush.msra.mxu0 0.0
  %4262 = vmatpush.msra.mxu0 0.0
  %4263 = vmatpush.msra.mxu0 0.0
  %4264 = vmatpush.msra.mxu0 0.0
  %4265 = vmatpush.msra.mxu0 0.0
  %4266 = vmatpush.msra.mxu0 0.0
  %4267 = vmatpush.msra.mxu0 0.0
  %4268 = vmatpush.msra.mxu0 0.0
  %4269 = vmatpush.msra.mxu0 %v3952
  %4270 = vmatmul.f32.gmra.mxu0 %v3904
  %v4271 = vpop.f32.mrf.mxu0
  %v4272 = vadd.f32 %v3886, %v4271
  %4273 = vdwg.mxu0
  %v4274 = vmax.f32 %v3972, 0.0
  %v4275 = vmax.f32 %v3992, 0.0
  %v4276 = vmax.f32 %v4012, 0.0
  %v4277 = vmax.f32 %v4032, 0.0
  %v4278 = vmax.f32 %v4052, 0.0
  %v4279 = vmax.f32 %v4072, 0.0
  %v4280 = vmax.f32 %v4092, 0.0
  %v4281 = vmax.f32 %v4112, 0.0
  %v4282 = vmax.f32 %v4132, 0.0
  %v4283 = vmax.f32 %v4152, 0.0
  %v4284 = vmax.f32 %v4172, 0.0
  %v4285 = vmax.f32 %v4192, 0.0
  %v4286 = vmax.f32 %v4212, 0.0
  %v4287 = vmax.f32 %v4232, 0.0
  %v4288 = vmax.f32 %v4252, 0.0
  %v4289 = vmax.f32 %v4272, 0.0
  %v4291 = vperm.slane %v3517, 0
  %4293 = vmatpush.xpose.msra.mxu0 0.0
  %4294 = vmatpush.xpose.msra.mxu0 0.0
  %4295 = vmatpush.xpose.msra.mxu0 0.0
  %4296 = vmatpush.xpose.msra.mxu0 0.0
  %4297 = vmatpush.xpose.msra.mxu0 0.0
  %4298 = vmatpush.xpose.msra.mxu0 0.0
  %4299 = vmatpush.xpose.msra.mxu0 0.0
  %4300 = vmatpush.xpose.msra.mxu0 0.0
  %4301 = vmatpush.xpose.msra.mxu0 0.0
  %4302 = vmatpush.xpose.msra.mxu0 0.0
  %4303 = vmatpush.xpose.msra.mxu0 0.0
  %4304 = vmatpush.xpose.msra.mxu0 0.0
  %4305 = vmatpush.xpose.msra.mxu0 0.0
  %4306 = vmatpush.xpose.msra.mxu0 0.0
  %4307 = vmatpush.xpose.msra.mxu0 0.0
  %4308 = vmatpush.xpose.msra.mxu0 %v3500
  %4309 = vmatmul.f32.gmra.mxu0 %v4274
  %v4310 = vpop.f32.mrf.mxu0
  %v4311 = vadd.f32 %v4291, %v4310
  %4312 = vdwg.mxu0
  %4313 = vmatpush.xpose.msra.mxu0 0.0
  %4314 = vmatpush.xpose.msra.mxu0 0.0
  %4315 = vmatpush.xpose.msra.mxu0 0.0
  %4316 = vmatpush.xpose.msra.mxu0 0.0
  %4317 = vmatpush.xpose.msra.mxu0 0.0
  %4318 = vmatpush.xpose.msra.mxu0 0.0
  %4319 = vmatpush.xpose.msra.mxu0 0.0
  %4320 = vmatpush.xpose.msra.mxu0 0.0
  %4321 = vmatpush.xpose.msra.mxu0 0.0
  %4322 = vmatpush.xpose.msra.mxu0 0.0
  %4323 = vmatpush.xpose.msra.mxu0 0.0
  %4324 = vmatpush.xpose.msra.mxu0 0.0
  %4325 = vmatpush.xpose.msra.mxu0 0.0
  %4326 = vmatpush.xpose.msra.mxu0 0.0
  %4327 = vmatpush.xpose.msra.mxu0 0.0
  %4328 = vmatpush.xpose.msra.mxu0 %v3501
  %4329 = vmatmul.f32.gmra.mxu0 %v4275
  %v4330 = vpop.f32.mrf.mxu0
  %v4331 = vadd.f32 %v4311, %v4330
  %4332 = vdwg.mxu0
  %4333 = vmatpush.xpose.msra.mxu0 0.0
  %4334 = vmatpush.xpose.msra.mxu0 0.0
  %4335 = vmatpush.xpose.msra.mxu0 0.0
  %4336 = vmatpush.xpose.msra.mxu0 0.0
  %4337 = vmatpush.xpose.msra.mxu0 0.0
  %4338 = vmatpush.xpose.msra.mxu0 0.0
  %4339 = vmatpush.xpose.msra.mxu0 0.0
  %4340 = vmatpush.xpose.msra.mxu0 0.0
  %4341 = vmatpush.xpose.msra.mxu0 0.0
  %4342 = vmatpush.xpose.msra.mxu0 0.0
  %4343 = vmatpush.xpose.msra.mxu0 0.0
  %4344 = vmatpush.xpose.msra.mxu0 0.0
  %4345 = vmatpush.xpose.msra.mxu0 0.0
  %4346 = vmatpush.xpose.msra.mxu0 0.0
  %4347 = vmatpush.xpose.msra.mxu0 0.0
  %4348 = vmatpush.xpose.msra.mxu0 %v3502
  %4349 = vmatmul.f32.gmra.mxu0 %v4276
  %v4350 = vpop.f32.mrf.mxu0
  %v4351 = vadd.f32 %v4331, %v4350
  %4352 = vdwg.mxu0
  %4353 = vmatpush.xpose.msra.mxu0 0.0
  %4354 = vmatpush.xpose.msra.mxu0 0.0
  %4355 = vmatpush.xpose.msra.mxu0 0.0
  %4356 = vmatpush.xpose.msra.mxu0 0.0
  %4357 = vmatpush.xpose.msra.mxu0 0.0
  %4358 = vmatpush.xpose.msra.mxu0 0.0
  %4359 = vmatpush.xpose.msra.mxu0 0.0
  %4360 = vmatpush.xpose.msra.mxu0 0.0
  %4361 = vmatpush.xpose.msra.mxu0 0.0
  %4362 = vmatpush.xpose.msra.mxu0 0.0
  %4363 = vmatpush.xpose.msra.mxu0 0.0
  %4364 = vmatpush.xpose.msra.mxu0 0.0
  %4365 = vmatpush.xpose.msra.mxu0 0.0
  %4366 = vmatpush.xpose.msra.mxu0 0.0
  %4367 = vmatpush.xpose.msra.mxu0 0.0
  %4368 = vmatpush.xpose.msra.mxu0 %v3503
  %4369 = vmatmul.f32.gmra.mxu0 %v4277
  %v4370 = vpop.f32.mrf.mxu0
  %v4371 = vadd.f32 %v4351, %v4370
  %4372 = vdwg.mxu0
  %4373 = vmatpush.xpose.msra.mxu0 0.0
  %4374 = vmatpush.xpose.msra.mxu0 0.0
  %4375 = vmatpush.xpose.msra.mxu0 0.0
  %4376 = vmatpush.xpose.msra.mxu0 0.0
  %4377 = vmatpush.xpose.msra.mxu0 0.0
  %4378 = vmatpush.xpose.msra.mxu0 0.0
  %4379 = vmatpush.xpose.msra.mxu0 0.0
  %4380 = vmatpush.xpose.msra.mxu0 0.0
  %4381 = vmatpush.xpose.msra.mxu0 0.0
  %4382 = vmatpush.xpose.msra.mxu0 0.0
  %4383 = vmatpush.xpose.msra.mxu0 0.0
  %4384 = vmatpush.xpose.msra.mxu0 0.0
  %4385 = vmatpush.xpose.msra.mxu0 0.0
  %4386 = vmatpush.xpose.msra.mxu0 0.0
  %4387 = vmatpush.xpose.msra.mxu0 0.0
  %4388 = vmatpush.xpose.msra.mxu0 %v3504
  %4389 = vmatmul.f32.gmra.mxu0 %v4278
  %v4390 = vpop.f32.mrf.mxu0
  %v4391 = vadd.f32 %v4371, %v4390
  %4392 = vdwg.mxu0
  %4393 = vmatpush.xpose.msra.mxu0 0.0
  %4394 = vmatpush.xpose.msra.mxu0 0.0
  %4395 = vmatpush.xpose.msra.mxu0 0.0
  %4396 = vmatpush.xpose.msra.mxu0 0.0
  %4397 = vmatpush.xpose.msra.mxu0 0.0
  %4398 = vmatpush.xpose.msra.mxu0 0.0
  %4399 = vmatpush.xpose.msra.mxu0 0.0
  %4400 = vmatpush.xpose.msra.mxu0 0.0
  %4401 = vmatpush.xpose.msra.mxu0 0.0
  %4402 = vmatpush.xpose.msra.mxu0 0.0
  %4403 = vmatpush.xpose.msra.mxu0 0.0
  %4404 = vmatpush.xpose.msra.mxu0 0.0
  %4405 = vmatpush.xpose.msra.mxu0 0.0
  %4406 = vmatpush.xpose.msra.mxu0 0.0
  %4407 = vmatpush.xpose.msra.mxu0 0.0
  %4408 = vmatpush.xpose.msra.mxu0 %v3505
  %4409 = vmatmul.f32.gmra.mxu0 %v4279
  %v4410 = vpop.f32.mrf.mxu0
  %v4411 = vadd.f32 %v4391, %v4410
  %4412 = vdwg.mxu0
  %4413 = vmatpush.xpose.msra.mxu0 0.0
  %4414 = vmatpush.xpose.msra.mxu0 0.0
  %4415 = vmatpush.xpose.msra.mxu0 0.0
  %4416 = vmatpush.xpose.msra.mxu0 0.0
  %4417 = vmatpush.xpose.msra.mxu0 0.0
  %4418 = vmatpush.xpose.msra.mxu0 0.0
  %4419 = vmatpush.xpose.msra.mxu0 0.0
  %4420 = vmatpush.xpose.msra.mxu0 0.0
  %4421 = vmatpush.xpose.msra.mxu0 0.0
  %4422 = vmatpush.xpose.msra.mxu0 0.0
  %4423 = vmatpush.xpose.msra.mxu0 0.0
  %4424 = vmatpush.xpose.msra.mxu0 0.0
  %4425 = vmatpush.xpose.msra.mxu0 0.0
  %4426 = vmatpush.xpose.msra.mxu0 0.0
  %4427 = vmatpush.xpose.msra.mxu0 0.0
  %4428 = vmatpush.xpose.msra.mxu0 %v3506
  %4429 = vmatmul.f32.gmra.mxu0 %v4280
  %v4430 = vpop.f32.mrf.mxu0
  %v4431 = vadd.f32 %v4411, %v4430
  %4432 = vdwg.mxu0
  %4433 = vmatpush.xpose.msra.mxu0 0.0
  %4434 = vmatpush.xpose.msra.mxu0 0.0
  %4435 = vmatpush.xpose.msra.mxu0 0.0
  %4436 = vmatpush.xpose.msra.mxu0 0.0
  %4437 = vmatpush.xpose.msra.mxu0 0.0
  %4438 = vmatpush.xpose.msra.mxu0 0.0
  %4439 = vmatpush.xpose.msra.mxu0 0.0
  %4440 = vmatpush.xpose.msra.mxu0 0.0
  %4441 = vmatpush.xpose.msra.mxu0 0.0
  %4442 = vmatpush.xpose.msra.mxu0 0.0
  %4443 = vmatpush.xpose.msra.mxu0 0.0
  %4444 = vmatpush.xpose.msra.mxu0 0.0
  %4445 = vmatpush.xpose.msra.mxu0 0.0
  %4446 = vmatpush.xpose.msra.mxu0 0.0
  %4447 = vmatpush.xpose.msra.mxu0 0.0
  %4448 = vmatpush.xpose.msra.mxu0 %v3507
  %4449 = vmatmul.f32.gmra.mxu0 %v4281
  %v4450 = vpop.f32.mrf.mxu0
  %v4451 = vadd.f32 %v4431, %v4450
  %4452 = vdwg.mxu0
  %4453 = vmatpush.xpose.msra.mxu0 0.0
  %4454 = vmatpush.xpose.msra.mxu0 0.0
  %4455 = vmatpush.xpose.msra.mxu0 0.0
  %4456 = vmatpush.xpose.msra.mxu0 0.0
  %4457 = vmatpush.xpose.msra.mxu0 0.0
  %4458 = vmatpush.xpose.msra.mxu0 0.0
  %4459 = vmatpush.xpose.msra.mxu0 0.0
  %4460 = vmatpush.xpose.msra.mxu0 0.0
  %4461 = vmatpush.xpose.msra.mxu0 0.0
  %4462 = vmatpush.xpose.msra.mxu0 0.0
  %4463 = vmatpush.xpose.msra.mxu0 0.0
  %4464 = vmatpush.xpose.msra.mxu0 0.0
  %4465 = vmatpush.xpose.msra.mxu0 0.0
  %4466 = vmatpush.xpose.msra.mxu0 0.0
  %4467 = vmatpush.xpose.msra.mxu0 0.0
  %4468 = vmatpush.xpose.msra.mxu0 %v3508
  %4469 = vmatmul.f32.gmra.mxu0 %v4282
  %v4470 = vpop.f32.mrf.mxu0
  %v4471 = vadd.f32 %v4451, %v4470
  %4472 = vdwg.mxu0
  %4473 = vmatpush.xpose.msra.mxu0 0.0
  %4474 = vmatpush.xpose.msra.mxu0 0.0
  %4475 = vmatpush.xpose.msra.mxu0 0.0
  %4476 = vmatpush.xpose.msra.mxu0 0.0
  %4477 = vmatpush.xpose.msra.mxu0 0.0
  %4478 = vmatpush.xpose.msra.mxu0 0.0
  %4479 = vmatpush.xpose.msra.mxu0 0.0
  %4480 = vmatpush.xpose.msra.mxu0 0.0
  %4481 = vmatpush.xpose.msra.mxu0 0.0
  %4482 = vmatpush.xpose.msra.mxu0 0.0
  %4483 = vmatpush.xpose.msra.mxu0 0.0
  %4484 = vmatpush.xpose.msra.mxu0 0.0
  %4485 = vmatpush.xpose.msra.mxu0 0.0
  %4486 = vmatpush.xpose.msra.mxu0 0.0
  %4487 = vmatpush.xpose.msra.mxu0 0.0
  %4488 = vmatpush.xpose.msra.mxu0 %v3509
  %4489 = vmatmul.f32.gmra.mxu0 %v4283
  %v4490 = vpop.f32.mrf.mxu0
  %v4491 = vadd.f32 %v4471, %v4490
  %4492 = vdwg.mxu0
  %4493 = vmatpush.xpose.msra.mxu0 0.0
  %4494 = vmatpush.xpose.msra.mxu0 0.0
  %4495 = vmatpush.xpose.msra.mxu0 0.0
  %4496 = vmatpush.xpose.msra.mxu0 0.0
  %4497 = vmatpush.xpose.msra.mxu0 0.0
  %4498 = vmatpush.xpose.msra.mxu0 0.0
  %4499 = vmatpush.xpose.msra.mxu0 0.0
  %4500 = vmatpush.xpose.msra.mxu0 0.0
  %4501 = vmatpush.xpose.msra.mxu0 0.0
  %4502 = vmatpush.xpose.msra.mxu0 0.0
  %4503 = vmatpush.xpose.msra.mxu0 0.0
  %4504 = vmatpush.xpose.msra.mxu0 0.0
  %4505 = vmatpush.xpose.msra.mxu0 0.0
  %4506 = vmatpush.xpose.msra.mxu0 0.0
  %4507 = vmatpush.xpose.msra.mxu0 0.0
  %4508 = vmatpush.xpose.msra.mxu0 %v3510
  %4509 = vmatmul.f32.gmra.mxu0 %v4284
  %v4510 = vpop.f32.mrf.mxu0
  %v4511 = vadd.f32 %v4491, %v4510
  %4512 = vdwg.mxu0
  %4513 = vmatpush.xpose.msra.mxu0 0.0
  %4514 = vmatpush.xpose.msra.mxu0 0.0
  %4515 = vmatpush.xpose.msra.mxu0 0.0
  %4516 = vmatpush.xpose.msra.mxu0 0.0
  %4517 = vmatpush.xpose.msra.mxu0 0.0
  %4518 = vmatpush.xpose.msra.mxu0 0.0
  %4519 = vmatpush.xpose.msra.mxu0 0.0
  %4520 = vmatpush.xpose.msra.mxu0 0.0
  %4521 = vmatpush.xpose.msra.mxu0 0.0
  %4522 = vmatpush.xpose.msra.mxu0 0.0
  %4523 = vmatpush.xpose.msra.mxu0 0.0
  %4524 = vmatpush.xpose.msra.mxu0 0.0
  %4525 = vmatpush.xpose.msra.mxu0 0.0
  %4526 = vmatpush.xpose.msra.mxu0 0.0
  %4527 = vmatpush.xpose.msra.mxu0 0.0
  %4528 = vmatpush.xpose.msra.mxu0 %v3511
  %4529 = vmatmul.f32.gmra.mxu0 %v4285
  %v4530 = vpop.f32.mrf.mxu0
  %v4531 = vadd.f32 %v4511, %v4530
  %4532 = vdwg.mxu0
  %4533 = vmatpush.xpose.msra.mxu0 0.0
  %4534 = vmatpush.xpose.msra.mxu0 0.0
  %4535 = vmatpush.xpose.msra.mxu0 0.0
  %4536 = vmatpush.xpose.msra.mxu0 0.0
  %4537 = vmatpush.xpose.msra.mxu0 0.0
  %4538 = vmatpush.xpose.msra.mxu0 0.0
  %4539 = vmatpush.xpose.msra.mxu0 0.0
  %4540 = vmatpush.xpose.msra.mxu0 0.0
  %4541 = vmatpush.xpose.msra.mxu0 0.0
  %4542 = vmatpush.xpose.msra.mxu0 0.0
  %4543 = vmatpush.xpose.msra.mxu0 0.0
  %4544 = vmatpush.xpose.msra.mxu0 0.0
  %4545 = vmatpush.xpose.msra.mxu0 0.0
  %4546 = vmatpush.xpose.msra.mxu0 0.0
  %4547 = vmatpush.xpose.msra.mxu0 0.0
  %4548 = vmatpush.xpose.msra.mxu0 %v3512
  %4549 = vmatmul.f32.gmra.mxu0 %v4286
  %v4550 = vpop.f32.mrf.mxu0
  %v4551 = vadd.f32 %v4531, %v4550
  %4552 = vdwg.mxu0
  %4553 = vmatpush.xpose.msra.mxu0 0.0
  %4554 = vmatpush.xpose.msra.mxu0 0.0
  %4555 = vmatpush.xpose.msra.mxu0 0.0
  %4556 = vmatpush.xpose.msra.mxu0 0.0
  %4557 = vmatpush.xpose.msra.mxu0 0.0
  %4558 = vmatpush.xpose.msra.mxu0 0.0
  %4559 = vmatpush.xpose.msra.mxu0 0.0
  %4560 = vmatpush.xpose.msra.mxu0 0.0
  %4561 = vmatpush.xpose.msra.mxu0 0.0
  %4562 = vmatpush.xpose.msra.mxu0 0.0
  %4563 = vmatpush.xpose.msra.mxu0 0.0
  %4564 = vmatpush.xpose.msra.mxu0 0.0
  %4565 = vmatpush.xpose.msra.mxu0 0.0
  %4566 = vmatpush.xpose.msra.mxu0 0.0
  %4567 = vmatpush.xpose.msra.mxu0 0.0
  %4568 = vmatpush.xpose.msra.mxu0 %v3513
  %4569 = vmatmul.f32.gmra.mxu0 %v4287
  %v4570 = vpop.f32.mrf.mxu0
  %v4571 = vadd.f32 %v4551, %v4570
  %4572 = vdwg.mxu0
  %4573 = vmatpush.xpose.msra.mxu0 0.0
  %4574 = vmatpush.xpose.msra.mxu0 0.0
  %4575 = vmatpush.xpose.msra.mxu0 0.0
  %4576 = vmatpush.xpose.msra.mxu0 0.0
  %4577 = vmatpush.xpose.msra.mxu0 0.0
  %4578 = vmatpush.xpose.msra.mxu0 0.0
  %4579 = vmatpush.xpose.msra.mxu0 0.0
  %4580 = vmatpush.xpose.msra.mxu0 0.0
  %4581 = vmatpush.xpose.msra.mxu0 0.0
  %4582 = vmatpush.xpose.msra.mxu0 0.0
  %4583 = vmatpush.xpose.msra.mxu0 0.0
  %4584 = vmatpush.xpose.msra.mxu0 0.0
  %4585 = vmatpush.xpose.msra.mxu0 0.0
  %4586 = vmatpush.xpose.msra.mxu0 0.0
  %4587 = vmatpush.xpose.msra.mxu0 0.0
  %4588 = vmatpush.xpose.msra.mxu0 %v3514
  %4589 = vmatmul.f32.gmra.mxu0 %v4288
  %v4590 = vpop.f32.mrf.mxu0
  %v4591 = vadd.f32 %v4571, %v4590
  %4592 = vdwg.mxu0
  %4593 = vmatpush.xpose.msra.mxu0 0.0
  %4594 = vmatpush.xpose.msra.mxu0 0.0
  %4595 = vmatpush.xpose.msra.mxu0 0.0
  %4596 = vmatpush.xpose.msra.mxu0 0.0
  %4597 = vmatpush.xpose.msra.mxu0 0.0
  %4598 = vmatpush.xpose.msra.mxu0 0.0
  %4599 = vmatpush.xpose.msra.mxu0 0.0
  %4600 = vmatpush.xpose.msra.mxu0 0.0
  %4601 = vmatpush.xpose.msra.mxu0 0.0
  %4602 = vmatpush.xpose.msra.mxu0 0.0
  %4603 = vmatpush.xpose.msra.mxu0 0.0
  %4604 = vmatpush.xpose.msra.mxu0 0.0
  %4605 = vmatpush.xpose.msra.mxu0 0.0
  %4606 = vmatpush.xpose.msra.mxu0 0.0
  %4607 = vmatpush.xpose.msra.mxu0 0.0
  %4608 = vmatpush.xpose.msra.mxu0 %v3515
  %4609 = vmatmul.f32.gmra.mxu0 %v4289
  %v4610 = vpop.f32.mrf.mxu0
  %v4611 = vadd.f32 %v4591, %v4610
  %4612 = vdwg.mxu0
  %v4613 = vadd.f32 %v3868, %v4611
  %s4614 = scalar_lea.vmem %s2, 32
  %v4615 = vld [vmem:[%s4614] sm:$0x1f]
  %s4616 = scalar_lea.vmem %s3, 4
  %v4617 = vld [vmem:[%s4616] sm:$0x1]
  %s4618 = scalar_lea.vmem %s4, 32
  %v4619 = vld [vmem:[%s4618] sm:$0x1f]
  %s4620 = scalar_lea.vmem %s5, 4
  %v4621 = vld [vmem:[%s4620] sm:$0x1]
  %s4622 = scalar_lea.vmem %s6, 512
  %v4623 = vld [vmem:[%s4622] sm:$0x1f]
  %v4624 = vld [vmem:[%s4622 + $0x8] sm:$0x1f]
  %v4625 = vld [vmem:[%s4622 + $0x10] sm:$0x1f]
  %v4626 = vld [vmem:[%s4622 + $0x18] sm:$0x1f]
  %v4627 = vld [vmem:[%s4622 + $0x20] sm:$0x1f]
  %v4628 = vld [vmem:[%s4622 + $0x28] sm:$0x1f]
  %v4629 = vld [vmem:[%s4622 + $0x30] sm:$0x1f]
  %v4630 = vld [vmem:[%s4622 + $0x38] sm:$0x1f]
  %v4631 = vld [vmem:[%s4622 + $0x40] sm:$0x1f]
  %v4632 = vld [vmem:[%s4622 + $0x48] sm:$0x1f]
  %v4633 = vld [vmem:[%s4622 + $0x50] sm:$0x1f]
  %v4634 = vld [vmem:[%s4622 + $0x58] sm:$0x1f]
  %v4635 = vld [vmem:[%s4622 + $0x60] sm:$0x1f]
  %v4636 = vld [vmem:[%s4622 + $0x68] sm:$0x1f]
  %v4637 = vld [vmem:[%s4622 + $0x70] sm:$0x1f]
  %v4638 = vld [vmem:[%s4622 + $0x78] sm:$0x1f]
  %s4639 = scalar_lea.vmem %s7, 64
  %v4640 = vld [vmem:[%s4639] sm:$0xff]
  %v4641 = vld [vmem:[%s4639 + $0x8] sm:$0xff]
  %s4642 = scalar_lea.vmem %s8, 512
  %v4643 = vld [vmem:[%s4642] sm:$0x1f]
  %v4644 = vld [vmem:[%s4642 + $0x8] sm:$0x1f]
  %v4645 = vld [vmem:[%s4642 + $0x10] sm:$0x1f]
  %v4646 = vld [vmem:[%s4642 + $0x18] sm:$0x1f]
  %v4647 = vld [vmem:[%s4642 + $0x20] sm:$0x1f]
  %v4648 = vld [vmem:[%s4642 + $0x28] sm:$0x1f]
  %v4649 = vld [vmem:[%s4642 + $0x30] sm:$0x1f]
  %v4650 = vld [vmem:[%s4642 + $0x38] sm:$0x1f]
  %v4651 = vld [vmem:[%s4642 + $0x40] sm:$0x1f]
  %v4652 = vld [vmem:[%s4642 + $0x48] sm:$0x1f]
  %v4653 = vld [vmem:[%s4642 + $0x50] sm:$0x1f]
  %v4654 = vld [vmem:[%s4642 + $0x58] sm:$0x1f]
  %v4655 = vld [vmem:[%s4642 + $0x60] sm:$0x1f]
  %v4656 = vld [vmem:[%s4642 + $0x68] sm:$0x1f]
  %v4657 = vld [vmem:[%s4642 + $0x70] sm:$0x1f]
  %v4658 = vld [vmem:[%s4642 + $0x78] sm:$0x1f]
  %s4659 = scalar_lea.vmem %s9, 4
  %v4660 = vld [vmem:[%s4659] sm:$0x1]
  %v4662 = vperm.slane %v4617, 0
  %v4665 = vsel %vm84, %v4613, 0
  %v4668 = vsel %vm88, %v4615, 0
  %4670 = vmatpush.msra.mxu0 0.0
  %4671 = vmatpush.msra.mxu0 0.0
  %4672 = vmatpush.msra.mxu0 0.0
  %4673 = vmatpush.msra.mxu0 0.0
  %4674 = vmatpush.msra.mxu0 0.0
  %4675 = vmatpush.msra.mxu0 0.0
  %4676 = vmatpush.msra.mxu0 0.0
  %4677 = vmatpush.msra.mxu0 0.0
  %4678 = vmatpush.msra.mxu0 0.0
  %4679 = vmatpush.msra.mxu0 0.0
  %4680 = vmatpush.msra.mxu0 0.0
  %4681 = vmatpush.msra.mxu0 0.0
  %4682 = vmatpush.msra.mxu0 0.0
  %4683 = vmatpush.msra.mxu0 0.0
  %4684 = vmatpush.msra.mxu0 0.0
  %4685 = vmatpush.msra.mxu0 %v4668
  %4686 = vmatmul.f32.gmra.mxu0 %v4665
  %v4687 = vpop.f32.mrf.mxu0
  %v4688 = vadd.f32 %v4662, %v4687
  %4689 = vdwg.mxu0
  %v4691 = vrot.slane %v4688, 1
  %v4692 = vrot.slane %v4688, 2
  %v4693 = vrot.slane %v4688, 3
  %v4694 = vrot.slane %v4688, 4
  %v4695 = vrot.slane %v4688, 5
  %v4696 = vperm.slane %v4688, 0
  %v4697 = vperm.slane %v4691, 0
  %v4698 = vperm.slane %v4692, 0
  %v4699 = vperm.slane %v4693, 0
  %v4700 = vperm.slane %v4694, 0
  %v4701 = vperm.slane %v4695, 0
  %4708 = vrot.lane.b32.xlu0 %v4688, 123
  %v4709 = vpop.permute.xlu0 %4708
  %v4711 = vmul.f32 %v4696, %v4709
  %v4712 = vmul.f32 %v4697, %v4709
  %v4713 = vmul.f32 %v4698, %v4709
  %v4714 = vmul.f32 %v4699, %v4709
  %v4715 = vmul.f32 %v4700, %v4709
  %v4716 = vmul.f32 %v4701, %v4709
  %v4717 = vmul.f32 %v4711, 0.4472136
  %v4718 = vmul.f32 %v4712, 0.4472136
  %v4719 = vmul.f32 %v4713, 0.4472136
  %v4720 = vmul.f32 %v4714, 0.4472136
  %v4721 = vmul.f32 %v4715, 0.4472136
  %v4722 = vmul.f32 %v4716, 0.4472136
  %v4723 = vadd.f32 %v4717, %v36
  %v4724 = vadd.f32 %v4718, %v37
  %v4725 = vadd.f32 %v4719, %v38
  %v4726 = vadd.f32 %v4720, %v39
  %v4727 = vadd.f32 %v4721, %v40
  %v4728 = vadd.f32 %v4722, %v41
  %v4729 = vsel %vm151, %v4723, -inf
  %v4730 = vrot.slane %v4729, 4
  %v4731 = vmax.f32 %v4729, %v4730
  %v4732 = vrot.slane %v4731, 2
  %v4733 = vmax.f32 %v4731, %v4732
  %v4734 = vrot.slane %v4733, 1
  %v4735 = vmax.f32 %v4733, %v4734
  %v4736 = vsel %vm151, %v4724, -inf
  %v4737 = vrot.slane %v4736, 4
  %v4738 = vmax.f32 %v4736, %v4737
  %v4739 = vrot.slane %v4738, 2
  %v4740 = vmax.f32 %v4738, %v4739
  %v4741 = vrot.slane %v4740, 1
  %v4742 = vmax.f32 %v4740, %v4741
  %v4743 = vsel %vm151, %v4725, -inf
  %v4744 = vrot.slane %v4743, 4
  %v4745 = vmax.f32 %v4743, %v4744
  %v4746 = vrot.slane %v4745, 2
  %v4747 = vmax.f32 %v4745, %v4746
  %v4748 = vrot.slane %v4747, 1
  %v4749 = vmax.f32 %v4747, %v4748
  %v4750 = vsel %vm151, %v4726, -inf
  %v4751 = vrot.slane %v4750, 4
  %v4752 = vmax.f32 %v4750, %v4751
  %v4753 = vrot.slane %v4752, 2
  %v4754 = vmax.f32 %v4752, %v4753
  %v4755 = vrot.slane %v4754, 1
  %v4756 = vmax.f32 %v4754, %v4755
  %v4757 = vsel %vm151, %v4727, -inf
  %v4758 = vrot.slane %v4757, 4
  %v4759 = vmax.f32 %v4757, %v4758
  %v4760 = vrot.slane %v4759, 2
  %v4761 = vmax.f32 %v4759, %v4760
  %v4762 = vrot.slane %v4761, 1
  %v4763 = vmax.f32 %v4761, %v4762
  %v4764 = vsel %vm151, %v4728, -inf
  %v4765 = vrot.slane %v4764, 4
  %v4766 = vmax.f32 %v4764, %v4765
  %v4767 = vrot.slane %v4766, 2
  %v4768 = vmax.f32 %v4766, %v4767
  %v4769 = vrot.slane %v4768, 1
  %v4770 = vmax.f32 %v4768, %v4769
  %v4771 = vsub.f32 %v4723, %v4735
  %v4772 = vsub.f32 %v4724, %v4742
  %v4773 = vsub.f32 %v4725, %v4749
  %v4774 = vsub.f32 %v4726, %v4756
  %v4775 = vsub.f32 %v4727, %v4763
  %v4776 = vsub.f32 %v4728, %v4770
  %v4777 = vmul.f32 %v4771, 1.442695
  %v4778 = vpow.pop %v4777
  %v4779 = vmul.f32 %v4772, 1.442695
  %v4780 = vpow.pop %v4779
  %v4781 = vmul.f32 %v4773, 1.442695
  %v4782 = vpow.pop %v4781
  %v4783 = vmul.f32 %v4774, 1.442695
  %v4784 = vpow.pop %v4783
  %v4785 = vmul.f32 %v4775, 1.442695
  %v4786 = vpow.pop %v4785
  %v4787 = vmul.f32 %v4776, 1.442695
  %v4788 = vpow.pop %v4787
  %v4789 = vsel %vm151, %v4778, 0.0
  %v4790 = vrot.slane %v4789, 4
  %v4791 = vadd.f32 %v4789, %v4790
  %v4792 = vrot.slane %v4791, 2
  %v4793 = vadd.f32 %v4791, %v4792
  %v4794 = vrot.slane %v4793, 1
  %v4795 = vadd.f32 %v4793, %v4794
  %v4796 = vsel %vm151, %v4780, 0.0
  %v4797 = vrot.slane %v4796, 4
  %v4798 = vadd.f32 %v4796, %v4797
  %v4799 = vrot.slane %v4798, 2
  %v4800 = vadd.f32 %v4798, %v4799
  %v4801 = vrot.slane %v4800, 1
  %v4802 = vadd.f32 %v4800, %v4801
  %v4803 = vsel %vm151, %v4782, 0.0
  %v4804 = vrot.slane %v4803, 4
  %v4805 = vadd.f32 %v4803, %v4804
  %v4806 = vrot.slane %v4805, 2
  %v4807 = vadd.f32 %v4805, %v4806
  %v4808 = vrot.slane %v4807, 1
  %v4809 = vadd.f32 %v4807, %v4808
  %v4810 = vsel %vm151, %v4784, 0.0
  %v4811 = vrot.slane %v4810, 4
  %v4812 = vadd.f32 %v4810, %v4811
  %v4813 = vrot.slane %v4812, 2
  %v4814 = vadd.f32 %v4812, %v4813
  %v4815 = vrot.slane %v4814, 1
  %v4816 = vadd.f32 %v4814, %v4815
  %v4817 = vsel %vm151, %v4786, 0.0
  %v4818 = vrot.slane %v4817, 4
  %v4819 = vadd.f32 %v4817, %v4818
  %v4820 = vrot.slane %v4819, 2
  %v4821 = vadd.f32 %v4819, %v4820
  %v4822 = vrot.slane %v4821, 1
  %v4823 = vadd.f32 %v4821, %v4822
  %v4824 = vsel %vm151, %v4788, 0.0
  %v4825 = vrot.slane %v4824, 4
  %v4826 = vadd.f32 %v4824, %v4825
  %v4827 = vrot.slane %v4826, 2
  %v4828 = vadd.f32 %v4826, %v4827
  %v4829 = vrot.slane %v4828, 1
  %v4830 = vadd.f32 %v4828, %v4829
  %v4831 = vrcp.pop %v4795
  %v4832 = vmul.f32 %v4795, %v4831
  %v4833 = vsub.f32 1.0, %v4832
  %v4834 = vmul.f32 %v4831, %v4833
  %v4835 = vadd.f32 %v4831, %v4834
  %vm4836 = vweird.f32 %v4795
  %vm4837 = vweird.f32 %v4831
  %vm4838 = vmor %vm4836, %vm4837
  %v4839 = vsel %vm4838, %v4831, %v4835
  %v4840 = vand.u32 2147483647, %v4795
  %vm4841 = vcmp.eq.f32.partialorder %v4840, 8.507059e+37
  %v4842 = vand.u32 %v4795, 2147483648
  %v4843 = vor.u32 1.1754944e-38, %v4842
  %v4844 = vsel %vm4841, %v4843, %v4839
  %v4845 = vmul.f32 %v4778, %v4844
  %v4846 = vrcp.pop %v4802
  %v4847 = vmul.f32 %v4802, %v4846
  %v4848 = vsub.f32 1.0, %v4847
  %v4849 = vmul.f32 %v4846, %v4848
  %v4850 = vadd.f32 %v4846, %v4849
  %vm4851 = vweird.f32 %v4802
  %vm4852 = vweird.f32 %v4846
  %vm4853 = vmor %vm4851, %vm4852
  %v4854 = vsel %vm4853, %v4846, %v4850
  %v4855 = vand.u32 2147483647, %v4802
  %vm4856 = vcmp.eq.f32.partialorder %v4855, 8.507059e+37
  %v4857 = vand.u32 %v4802, 2147483648
  %v4858 = vor.u32 1.1754944e-38, %v4857
  %v4859 = vsel %vm4856, %v4858, %v4854
  %v4860 = vmul.f32 %v4780, %v4859
  %v4861 = vrcp.pop %v4809
  %v4862 = vmul.f32 %v4809, %v4861
  %v4863 = vsub.f32 1.0, %v4862
  %v4864 = vmul.f32 %v4861, %v4863
  %v4865 = vadd.f32 %v4861, %v4864
  %vm4866 = vweird.f32 %v4809
  %vm4867 = vweird.f32 %v4861
  %vm4868 = vmor %vm4866, %vm4867
  %v4869 = vsel %vm4868, %v4861, %v4865
  %v4870 = vand.u32 2147483647, %v4809
  %vm4871 = vcmp.eq.f32.partialorder %v4870, 8.507059e+37
  %v4872 = vand.u32 %v4809, 2147483648
  %v4873 = vor.u32 1.1754944e-38, %v4872
  %v4874 = vsel %vm4871, %v4873, %v4869
  %v4875 = vmul.f32 %v4782, %v4874
  %v4876 = vrcp.pop %v4816
  %v4877 = vmul.f32 %v4816, %v4876
  %v4878 = vsub.f32 1.0, %v4877
  %v4879 = vmul.f32 %v4876, %v4878
  %v4880 = vadd.f32 %v4876, %v4879
  %vm4881 = vweird.f32 %v4816
  %vm4882 = vweird.f32 %v4876
  %vm4883 = vmor %vm4881, %vm4882
  %v4884 = vsel %vm4883, %v4876, %v4880
  %v4885 = vand.u32 2147483647, %v4816
  %vm4886 = vcmp.eq.f32.partialorder %v4885, 8.507059e+37
  %v4887 = vand.u32 %v4816, 2147483648
  %v4888 = vor.u32 1.1754944e-38, %v4887
  %v4889 = vsel %vm4886, %v4888, %v4884
  %v4890 = vmul.f32 %v4784, %v4889
  %v4891 = vrcp.pop %v4823
  %v4892 = vmul.f32 %v4823, %v4891
  %v4893 = vsub.f32 1.0, %v4892
  %v4894 = vmul.f32 %v4891, %v4893
  %v4895 = vadd.f32 %v4891, %v4894
  %vm4896 = vweird.f32 %v4823
  %vm4897 = vweird.f32 %v4891
  %vm4898 = vmor %vm4896, %vm4897
  %v4899 = vsel %vm4898, %v4891, %v4895
  %v4900 = vand.u32 2147483647, %v4823
  %vm4901 = vcmp.eq.f32.partialorder %v4900, 8.507059e+37
  %v4902 = vand.u32 %v4823, 2147483648
  %v4903 = vor.u32 1.1754944e-38, %v4902
  %v4904 = vsel %vm4901, %v4903, %v4899
  %v4905 = vmul.f32 %v4786, %v4904
  %v4906 = vrcp.pop %v4830
  %v4907 = vmul.f32 %v4830, %v4906
  %v4908 = vsub.f32 1.0, %v4907
  %v4909 = vmul.f32 %v4906, %v4908
  %v4910 = vadd.f32 %v4906, %v4909
  %vm4911 = vweird.f32 %v4830
  %vm4912 = vweird.f32 %v4906
  %vm4913 = vmor %vm4911, %vm4912
  %v4914 = vsel %vm4913, %v4906, %v4910
  %v4915 = vand.u32 2147483647, %v4830
  %vm4916 = vcmp.eq.f32.partialorder %v4915, 8.507059e+37
  %v4917 = vand.u32 %v4830, 2147483648
  %v4918 = vor.u32 1.1754944e-38, %v4917
  %v4919 = vsel %vm4916, %v4918, %v4914
  %v4920 = vmul.f32 %v4788, %v4919
  %4921 = vrot.lane.b32.xlu0 %v4688, 118
  %v4922 = vpop.permute.xlu0 %4921
  %v4924 = vmul.f32 %v4845, %v4922
  %v4925 = vmul.f32 %v4860, %v4922
  %v4926 = vmul.f32 %v4875, %v4922
  %v4927 = vmul.f32 %v4890, %v4922
  %v4928 = vmul.f32 %v4905, %v4922
  %v4929 = vmul.f32 %v4920, %v4922
  %v4930 = vsel %vm151, %v4924, 0.0
  %v4931 = vrot.slane %v4930, 4
  %v4932 = vadd.f32 %v4930, %v4931
  %v4933 = vrot.slane %v4932, 2
  %v4934 = vadd.f32 %v4932, %v4933
  %v4935 = vrot.slane %v4934, 1
  %v4936 = vadd.f32 %v4934, %v4935
  %v4937 = vsel %vm151, %v4925, 0.0
  %v4938 = vrot.slane %v4937, 4
  %v4939 = vadd.f32 %v4937, %v4938
  %v4940 = vrot.slane %v4939, 2
  %v4941 = vadd.f32 %v4939, %v4940
  %v4942 = vrot.slane %v4941, 1
  %v4943 = vadd.f32 %v4941, %v4942
  %v4944 = vsel %vm151, %v4926, 0.0
  %v4945 = vrot.slane %v4944, 4
  %v4946 = vadd.f32 %v4944, %v4945
  %v4947 = vrot.slane %v4946, 2
  %v4948 = vadd.f32 %v4946, %v4947
  %v4949 = vrot.slane %v4948, 1
  %v4950 = vadd.f32 %v4948, %v4949
  %v4951 = vsel %vm151, %v4927, 0.0
  %v4952 = vrot.slane %v4951, 4
  %v4953 = vadd.f32 %v4951, %v4952
  %v4954 = vrot.slane %v4953, 2
  %v4955 = vadd.f32 %v4953, %v4954
  %v4956 = vrot.slane %v4955, 1
  %v4957 = vadd.f32 %v4955, %v4956
  %v4958 = vsel %vm151, %v4928, 0.0
  %v4959 = vrot.slane %v4958, 4
  %v4960 = vadd.f32 %v4958, %v4959
  %v4961 = vrot.slane %v4960, 2
  %v4962 = vadd.f32 %v4960, %v4961
  %v4963 = vrot.slane %v4962, 1
  %v4964 = vadd.f32 %v4962, %v4963
  %v4965 = vsel %vm151, %v4929, 0.0
  %v4966 = vrot.slane %v4965, 4
  %v4967 = vadd.f32 %v4965, %v4966
  %v4968 = vrot.slane %v4967, 2
  %v4969 = vadd.f32 %v4967, %v4968
  %v4970 = vrot.slane %v4969, 1
  %v4971 = vadd.f32 %v4969, %v4970
  %v4973 = vperm.slane %v4621, 0
  %v4981 = vsel %vm404, %v4943, %v4936
  %v4982 = vsel %vm406, %v4950, %v4981
  %v4983 = vsel %vm408, %v4957, %v4982
  %v4984 = vsel %vm410, %v4964, %v4983
  %v4985 = vsel %vm412, %v4971, %v4984
  %v4986 = vsel %vm84, %v4985, 0
  %v4989 = vsel %vm88, %v4619, 0
  %4991 = vmatpush.msra.mxu0 0.0
  %4992 = vmatpush.msra.mxu0 0.0
  %4993 = vmatpush.msra.mxu0 0.0
  %4994 = vmatpush.msra.mxu0 0.0
  %4995 = vmatpush.msra.mxu0 0.0
  %4996 = vmatpush.msra.mxu0 0.0
  %4997 = vmatpush.msra.mxu0 0.0
  %4998 = vmatpush.msra.mxu0 0.0
  %4999 = vmatpush.msra.mxu0 0.0
  %5000 = vmatpush.msra.mxu0 0.0
  %5001 = vmatpush.msra.mxu0 0.0
  %5002 = vmatpush.msra.mxu0 0.0
  %5003 = vmatpush.msra.mxu0 0.0
  %5004 = vmatpush.msra.mxu0 0.0
  %5005 = vmatpush.msra.mxu0 0.0
  %5006 = vmatpush.msra.mxu0 %v4989
  %5007 = vmatmul.f32.gmra.mxu0 %v4986
  %v5008 = vpop.f32.mrf.mxu0
  %v5009 = vadd.f32 %v4973, %v5008
  %5010 = vdwg.mxu0
  %v5011 = vadd.f32 %v4613, %v5009
  %v5014 = vperm.slane %v4640, 0
  %v5015 = vperm.slane %v4640, 1
  %v5016 = vperm.slane %v4640, 2
  %v5017 = vperm.slane %v4640, 3
  %v5018 = vperm.slane %v4640, 4
  %v5019 = vperm.slane %v4640, 5
  %v5020 = vperm.slane %v4640, 6
  %v5021 = vperm.slane %v4640, 7
  %v5022 = vperm.slane %v4641, 0
  %v5023 = vperm.slane %v4641, 1
  %v5024 = vperm.slane %v4641, 2
  %v5025 = vperm.slane %v4641, 3
  %v5026 = vperm.slane %v4641, 4
  %v5027 = vperm.slane %v4641, 5
  %v5028 = vperm.slane %v4641, 6
  %v5029 = vperm.slane %v4641, 7
  %v5047 = vsel %vm84, %v5011, 0
  %v5050 = vsel %vm88, %v4623, 0
  %v5053 = vsel %vm88, %v4624, 0
  %v5056 = vsel %vm88, %v4625, 0
  %v5059 = vsel %vm88, %v4626, 0
  %v5062 = vsel %vm88, %v4627, 0
  %v5065 = vsel %vm88, %v4628, 0
  %v5068 = vsel %vm88, %v4629, 0
  %v5071 = vsel %vm88, %v4630, 0
  %v5074 = vsel %vm88, %v4631, 0
  %v5077 = vsel %vm88, %v4632, 0
  %v5080 = vsel %vm88, %v4633, 0
  %v5083 = vsel %vm88, %v4634, 0
  %v5086 = vsel %vm88, %v4635, 0
  %v5089 = vsel %vm88, %v4636, 0
  %v5092 = vsel %vm88, %v4637, 0
  %v5095 = vsel %vm88, %v4638, 0
  %5097 = vmatpush.msra.mxu0 0.0
  %5098 = vmatpush.msra.mxu0 0.0
  %5099 = vmatpush.msra.mxu0 0.0
  %5100 = vmatpush.msra.mxu0 0.0
  %5101 = vmatpush.msra.mxu0 0.0
  %5102 = vmatpush.msra.mxu0 0.0
  %5103 = vmatpush.msra.mxu0 0.0
  %5104 = vmatpush.msra.mxu0 0.0
  %5105 = vmatpush.msra.mxu0 0.0
  %5106 = vmatpush.msra.mxu0 0.0
  %5107 = vmatpush.msra.mxu0 0.0
  %5108 = vmatpush.msra.mxu0 0.0
  %5109 = vmatpush.msra.mxu0 0.0
  %5110 = vmatpush.msra.mxu0 0.0
  %5111 = vmatpush.msra.mxu0 0.0
  %5112 = vmatpush.msra.mxu0 %v5050
  %5113 = vmatmul.f32.gmra.mxu0 %v5047
  %v5114 = vpop.f32.mrf.mxu0
  %v5115 = vadd.f32 %v5014, %v5114
  %5116 = vdwg.mxu0
  %5117 = vmatpush.msra.mxu0 0.0
  %5118 = vmatpush.msra.mxu0 0.0
  %5119 = vmatpush.msra.mxu0 0.0
  %5120 = vmatpush.msra.mxu0 0.0
  %5121 = vmatpush.msra.mxu0 0.0
  %5122 = vmatpush.msra.mxu0 0.0
  %5123 = vmatpush.msra.mxu0 0.0
  %5124 = vmatpush.msra.mxu0 0.0
  %5125 = vmatpush.msra.mxu0 0.0
  %5126 = vmatpush.msra.mxu0 0.0
  %5127 = vmatpush.msra.mxu0 0.0
  %5128 = vmatpush.msra.mxu0 0.0
  %5129 = vmatpush.msra.mxu0 0.0
  %5130 = vmatpush.msra.mxu0 0.0
  %5131 = vmatpush.msra.mxu0 0.0
  %5132 = vmatpush.msra.mxu0 %v5053
  %5133 = vmatmul.f32.gmra.mxu0 %v5047
  %v5134 = vpop.f32.mrf.mxu0
  %v5135 = vadd.f32 %v5015, %v5134
  %5136 = vdwg.mxu0
  %5137 = vmatpush.msra.mxu0 0.0
  %5138 = vmatpush.msra.mxu0 0.0
  %5139 = vmatpush.msra.mxu0 0.0
  %5140 = vmatpush.msra.mxu0 0.0
  %5141 = vmatpush.msra.mxu0 0.0
  %5142 = vmatpush.msra.mxu0 0.0
  %5143 = vmatpush.msra.mxu0 0.0
  %5144 = vmatpush.msra.mxu0 0.0
  %5145 = vmatpush.msra.mxu0 0.0
  %5146 = vmatpush.msra.mxu0 0.0
  %5147 = vmatpush.msra.mxu0 0.0
  %5148 = vmatpush.msra.mxu0 0.0
  %5149 = vmatpush.msra.mxu0 0.0
  %5150 = vmatpush.msra.mxu0 0.0
  %5151 = vmatpush.msra.mxu0 0.0
  %5152 = vmatpush.msra.mxu0 %v5056
  %5153 = vmatmul.f32.gmra.mxu0 %v5047
  %v5154 = vpop.f32.mrf.mxu0
  %v5155 = vadd.f32 %v5016, %v5154
  %5156 = vdwg.mxu0
  %5157 = vmatpush.msra.mxu0 0.0
  %5158 = vmatpush.msra.mxu0 0.0
  %5159 = vmatpush.msra.mxu0 0.0
  %5160 = vmatpush.msra.mxu0 0.0
  %5161 = vmatpush.msra.mxu0 0.0
  %5162 = vmatpush.msra.mxu0 0.0
  %5163 = vmatpush.msra.mxu0 0.0
  %5164 = vmatpush.msra.mxu0 0.0
  %5165 = vmatpush.msra.mxu0 0.0
  %5166 = vmatpush.msra.mxu0 0.0
  %5167 = vmatpush.msra.mxu0 0.0
  %5168 = vmatpush.msra.mxu0 0.0
  %5169 = vmatpush.msra.mxu0 0.0
  %5170 = vmatpush.msra.mxu0 0.0
  %5171 = vmatpush.msra.mxu0 0.0
  %5172 = vmatpush.msra.mxu0 %v5059
  %5173 = vmatmul.f32.gmra.mxu0 %v5047
  %v5174 = vpop.f32.mrf.mxu0
  %v5175 = vadd.f32 %v5017, %v5174
  %5176 = vdwg.mxu0
  %5177 = vmatpush.msra.mxu0 0.0
  %5178 = vmatpush.msra.mxu0 0.0
  %5179 = vmatpush.msra.mxu0 0.0
  %5180 = vmatpush.msra.mxu0 0.0
  %5181 = vmatpush.msra.mxu0 0.0
  %5182 = vmatpush.msra.mxu0 0.0
  %5183 = vmatpush.msra.mxu0 0.0
  %5184 = vmatpush.msra.mxu0 0.0
  %5185 = vmatpush.msra.mxu0 0.0
  %5186 = vmatpush.msra.mxu0 0.0
  %5187 = vmatpush.msra.mxu0 0.0
  %5188 = vmatpush.msra.mxu0 0.0
  %5189 = vmatpush.msra.mxu0 0.0
  %5190 = vmatpush.msra.mxu0 0.0
  %5191 = vmatpush.msra.mxu0 0.0
  %5192 = vmatpush.msra.mxu0 %v5062
  %5193 = vmatmul.f32.gmra.mxu0 %v5047
  %v5194 = vpop.f32.mrf.mxu0
  %v5195 = vadd.f32 %v5018, %v5194
  %5196 = vdwg.mxu0
  %5197 = vmatpush.msra.mxu0 0.0
  %5198 = vmatpush.msra.mxu0 0.0
  %5199 = vmatpush.msra.mxu0 0.0
  %5200 = vmatpush.msra.mxu0 0.0
  %5201 = vmatpush.msra.mxu0 0.0
  %5202 = vmatpush.msra.mxu0 0.0
  %5203 = vmatpush.msra.mxu0 0.0
  %5204 = vmatpush.msra.mxu0 0.0
  %5205 = vmatpush.msra.mxu0 0.0
  %5206 = vmatpush.msra.mxu0 0.0
  %5207 = vmatpush.msra.mxu0 0.0
  %5208 = vmatpush.msra.mxu0 0.0
  %5209 = vmatpush.msra.mxu0 0.0
  %5210 = vmatpush.msra.mxu0 0.0
  %5211 = vmatpush.msra.mxu0 0.0
  %5212 = vmatpush.msra.mxu0 %v5065
  %5213 = vmatmul.f32.gmra.mxu0 %v5047
  %v5214 = vpop.f32.mrf.mxu0
  %v5215 = vadd.f32 %v5019, %v5214
  %5216 = vdwg.mxu0
  %5217 = vmatpush.msra.mxu0 0.0
  %5218 = vmatpush.msra.mxu0 0.0
  %5219 = vmatpush.msra.mxu0 0.0
  %5220 = vmatpush.msra.mxu0 0.0
  %5221 = vmatpush.msra.mxu0 0.0
  %5222 = vmatpush.msra.mxu0 0.0
  %5223 = vmatpush.msra.mxu0 0.0
  %5224 = vmatpush.msra.mxu0 0.0
  %5225 = vmatpush.msra.mxu0 0.0
  %5226 = vmatpush.msra.mxu0 0.0
  %5227 = vmatpush.msra.mxu0 0.0
  %5228 = vmatpush.msra.mxu0 0.0
  %5229 = vmatpush.msra.mxu0 0.0
  %5230 = vmatpush.msra.mxu0 0.0
  %5231 = vmatpush.msra.mxu0 0.0
  %5232 = vmatpush.msra.mxu0 %v5068
  %5233 = vmatmul.f32.gmra.mxu0 %v5047
  %v5234 = vpop.f32.mrf.mxu0
  %v5235 = vadd.f32 %v5020, %v5234
  %5236 = vdwg.mxu0
  %5237 = vmatpush.msra.mxu0 0.0
  %5238 = vmatpush.msra.mxu0 0.0
  %5239 = vmatpush.msra.mxu0 0.0
  %5240 = vmatpush.msra.mxu0 0.0
  %5241 = vmatpush.msra.mxu0 0.0
  %5242 = vmatpush.msra.mxu0 0.0
  %5243 = vmatpush.msra.mxu0 0.0
  %5244 = vmatpush.msra.mxu0 0.0
  %5245 = vmatpush.msra.mxu0 0.0
  %5246 = vmatpush.msra.mxu0 0.0
  %5247 = vmatpush.msra.mxu0 0.0
  %5248 = vmatpush.msra.mxu0 0.0
  %5249 = vmatpush.msra.mxu0 0.0
  %5250 = vmatpush.msra.mxu0 0.0
  %5251 = vmatpush.msra.mxu0 0.0
  %5252 = vmatpush.msra.mxu0 %v5071
  %5253 = vmatmul.f32.gmra.mxu0 %v5047
  %v5254 = vpop.f32.mrf.mxu0
  %v5255 = vadd.f32 %v5021, %v5254
  %5256 = vdwg.mxu0
  %5257 = vmatpush.msra.mxu0 0.0
  %5258 = vmatpush.msra.mxu0 0.0
  %5259 = vmatpush.msra.mxu0 0.0
  %5260 = vmatpush.msra.mxu0 0.0
  %5261 = vmatpush.msra.mxu0 0.0
  %5262 = vmatpush.msra.mxu0 0.0
  %5263 = vmatpush.msra.mxu0 0.0
  %5264 = vmatpush.msra.mxu0 0.0
  %5265 = vmatpush.msra.mxu0 0.0
  %5266 = vmatpush.msra.mxu0 0.0
  %5267 = vmatpush.msra.mxu0 0.0
  %5268 = vmatpush.msra.mxu0 0.0
  %5269 = vmatpush.msra.mxu0 0.0
  %5270 = vmatpush.msra.mxu0 0.0
  %5271 = vmatpush.msra.mxu0 0.0
  %5272 = vmatpush.msra.mxu0 %v5074
  %5273 = vmatmul.f32.gmra.mxu0 %v5047
  %v5274 = vpop.f32.mrf.mxu0
  %v5275 = vadd.f32 %v5022, %v5274
  %5276 = vdwg.mxu0
  %5277 = vmatpush.msra.mxu0 0.0
  %5278 = vmatpush.msra.mxu0 0.0
  %5279 = vmatpush.msra.mxu0 0.0
  %5280 = vmatpush.msra.mxu0 0.0
  %5281 = vmatpush.msra.mxu0 0.0
  %5282 = vmatpush.msra.mxu0 0.0
  %5283 = vmatpush.msra.mxu0 0.0
  %5284 = vmatpush.msra.mxu0 0.0
  %5285 = vmatpush.msra.mxu0 0.0
  %5286 = vmatpush.msra.mxu0 0.0
  %5287 = vmatpush.msra.mxu0 0.0
  %5288 = vmatpush.msra.mxu0 0.0
  %5289 = vmatpush.msra.mxu0 0.0
  %5290 = vmatpush.msra.mxu0 0.0
  %5291 = vmatpush.msra.mxu0 0.0
  %5292 = vmatpush.msra.mxu0 %v5077
  %5293 = vmatmul.f32.gmra.mxu0 %v5047
  %v5294 = vpop.f32.mrf.mxu0
  %v5295 = vadd.f32 %v5023, %v5294
  %5296 = vdwg.mxu0
  %5297 = vmatpush.msra.mxu0 0.0
  %5298 = vmatpush.msra.mxu0 0.0
  %5299 = vmatpush.msra.mxu0 0.0
  %5300 = vmatpush.msra.mxu0 0.0
  %5301 = vmatpush.msra.mxu0 0.0
  %5302 = vmatpush.msra.mxu0 0.0
  %5303 = vmatpush.msra.mxu0 0.0
  %5304 = vmatpush.msra.mxu0 0.0
  %5305 = vmatpush.msra.mxu0 0.0
  %5306 = vmatpush.msra.mxu0 0.0
  %5307 = vmatpush.msra.mxu0 0.0
  %5308 = vmatpush.msra.mxu0 0.0
  %5309 = vmatpush.msra.mxu0 0.0
  %5310 = vmatpush.msra.mxu0 0.0
  %5311 = vmatpush.msra.mxu0 0.0
  %5312 = vmatpush.msra.mxu0 %v5080
  %5313 = vmatmul.f32.gmra.mxu0 %v5047
  %v5314 = vpop.f32.mrf.mxu0
  %v5315 = vadd.f32 %v5024, %v5314
  %5316 = vdwg.mxu0
  %5317 = vmatpush.msra.mxu0 0.0
  %5318 = vmatpush.msra.mxu0 0.0
  %5319 = vmatpush.msra.mxu0 0.0
  %5320 = vmatpush.msra.mxu0 0.0
  %5321 = vmatpush.msra.mxu0 0.0
  %5322 = vmatpush.msra.mxu0 0.0
  %5323 = vmatpush.msra.mxu0 0.0
  %5324 = vmatpush.msra.mxu0 0.0
  %5325 = vmatpush.msra.mxu0 0.0
  %5326 = vmatpush.msra.mxu0 0.0
  %5327 = vmatpush.msra.mxu0 0.0
  %5328 = vmatpush.msra.mxu0 0.0
  %5329 = vmatpush.msra.mxu0 0.0
  %5330 = vmatpush.msra.mxu0 0.0
  %5331 = vmatpush.msra.mxu0 0.0
  %5332 = vmatpush.msra.mxu0 %v5083
  %5333 = vmatmul.f32.gmra.mxu0 %v5047
  %v5334 = vpop.f32.mrf.mxu0
  %v5335 = vadd.f32 %v5025, %v5334
  %5336 = vdwg.mxu0
  %5337 = vmatpush.msra.mxu0 0.0
  %5338 = vmatpush.msra.mxu0 0.0
  %5339 = vmatpush.msra.mxu0 0.0
  %5340 = vmatpush.msra.mxu0 0.0
  %5341 = vmatpush.msra.mxu0 0.0
  %5342 = vmatpush.msra.mxu0 0.0
  %5343 = vmatpush.msra.mxu0 0.0
  %5344 = vmatpush.msra.mxu0 0.0
  %5345 = vmatpush.msra.mxu0 0.0
  %5346 = vmatpush.msra.mxu0 0.0
  %5347 = vmatpush.msra.mxu0 0.0
  %5348 = vmatpush.msra.mxu0 0.0
  %5349 = vmatpush.msra.mxu0 0.0
  %5350 = vmatpush.msra.mxu0 0.0
  %5351 = vmatpush.msra.mxu0 0.0
  %5352 = vmatpush.msra.mxu0 %v5086
  %5353 = vmatmul.f32.gmra.mxu0 %v5047
  %v5354 = vpop.f32.mrf.mxu0
  %v5355 = vadd.f32 %v5026, %v5354
  %5356 = vdwg.mxu0
  %5357 = vmatpush.msra.mxu0 0.0
  %5358 = vmatpush.msra.mxu0 0.0
  %5359 = vmatpush.msra.mxu0 0.0
  %5360 = vmatpush.msra.mxu0 0.0
  %5361 = vmatpush.msra.mxu0 0.0
  %5362 = vmatpush.msra.mxu0 0.0
  %5363 = vmatpush.msra.mxu0 0.0
  %5364 = vmatpush.msra.mxu0 0.0
  %5365 = vmatpush.msra.mxu0 0.0
  %5366 = vmatpush.msra.mxu0 0.0
  %5367 = vmatpush.msra.mxu0 0.0
  %5368 = vmatpush.msra.mxu0 0.0
  %5369 = vmatpush.msra.mxu0 0.0
  %5370 = vmatpush.msra.mxu0 0.0
  %5371 = vmatpush.msra.mxu0 0.0
  %5372 = vmatpush.msra.mxu0 %v5089
  %5373 = vmatmul.f32.gmra.mxu0 %v5047
  %v5374 = vpop.f32.mrf.mxu0
  %v5375 = vadd.f32 %v5027, %v5374
  %5376 = vdwg.mxu0
  %5377 = vmatpush.msra.mxu0 0.0
  %5378 = vmatpush.msra.mxu0 0.0
  %5379 = vmatpush.msra.mxu0 0.0
  %5380 = vmatpush.msra.mxu0 0.0
  %5381 = vmatpush.msra.mxu0 0.0
  %5382 = vmatpush.msra.mxu0 0.0
  %5383 = vmatpush.msra.mxu0 0.0
  %5384 = vmatpush.msra.mxu0 0.0
  %5385 = vmatpush.msra.mxu0 0.0
  %5386 = vmatpush.msra.mxu0 0.0
  %5387 = vmatpush.msra.mxu0 0.0
  %5388 = vmatpush.msra.mxu0 0.0
  %5389 = vmatpush.msra.mxu0 0.0
  %5390 = vmatpush.msra.mxu0 0.0
  %5391 = vmatpush.msra.mxu0 0.0
  %5392 = vmatpush.msra.mxu0 %v5092
  %5393 = vmatmul.f32.gmra.mxu0 %v5047
  %v5394 = vpop.f32.mrf.mxu0
  %v5395 = vadd.f32 %v5028, %v5394
  %5396 = vdwg.mxu0
  %5397 = vmatpush.msra.mxu0 0.0
  %5398 = vmatpush.msra.mxu0 0.0
  %5399 = vmatpush.msra.mxu0 0.0
  %5400 = vmatpush.msra.mxu0 0.0
  %5401 = vmatpush.msra.mxu0 0.0
  %5402 = vmatpush.msra.mxu0 0.0
  %5403 = vmatpush.msra.mxu0 0.0
  %5404 = vmatpush.msra.mxu0 0.0
  %5405 = vmatpush.msra.mxu0 0.0
  %5406 = vmatpush.msra.mxu0 0.0
  %5407 = vmatpush.msra.mxu0 0.0
  %5408 = vmatpush.msra.mxu0 0.0
  %5409 = vmatpush.msra.mxu0 0.0
  %5410 = vmatpush.msra.mxu0 0.0
  %5411 = vmatpush.msra.mxu0 0.0
  %5412 = vmatpush.msra.mxu0 %v5095
  %5413 = vmatmul.f32.gmra.mxu0 %v5047
  %v5414 = vpop.f32.mrf.mxu0
  %v5415 = vadd.f32 %v5029, %v5414
  %5416 = vdwg.mxu0
  %v5417 = vmax.f32 %v5115, 0.0
  %v5418 = vmax.f32 %v5135, 0.0
  %v5419 = vmax.f32 %v5155, 0.0
  %v5420 = vmax.f32 %v5175, 0.0
  %v5421 = vmax.f32 %v5195, 0.0
  %v5422 = vmax.f32 %v5215, 0.0
  %v5423 = vmax.f32 %v5235, 0.0
  %v5424 = vmax.f32 %v5255, 0.0
  %v5425 = vmax.f32 %v5275, 0.0
  %v5426 = vmax.f32 %v5295, 0.0
  %v5427 = vmax.f32 %v5315, 0.0
  %v5428 = vmax.f32 %v5335, 0.0
  %v5429 = vmax.f32 %v5355, 0.0
  %v5430 = vmax.f32 %v5375, 0.0
  %v5431 = vmax.f32 %v5395, 0.0
  %v5432 = vmax.f32 %v5415, 0.0
  %v5434 = vperm.slane %v4660, 0
  %5436 = vmatpush.xpose.msra.mxu0 0.0
  %5437 = vmatpush.xpose.msra.mxu0 0.0
  %5438 = vmatpush.xpose.msra.mxu0 0.0
  %5439 = vmatpush.xpose.msra.mxu0 0.0
  %5440 = vmatpush.xpose.msra.mxu0 0.0
  %5441 = vmatpush.xpose.msra.mxu0 0.0
  %5442 = vmatpush.xpose.msra.mxu0 0.0
  %5443 = vmatpush.xpose.msra.mxu0 0.0
  %5444 = vmatpush.xpose.msra.mxu0 0.0
  %5445 = vmatpush.xpose.msra.mxu0 0.0
  %5446 = vmatpush.xpose.msra.mxu0 0.0
  %5447 = vmatpush.xpose.msra.mxu0 0.0
  %5448 = vmatpush.xpose.msra.mxu0 0.0
  %5449 = vmatpush.xpose.msra.mxu0 0.0
  %5450 = vmatpush.xpose.msra.mxu0 0.0
  %5451 = vmatpush.xpose.msra.mxu0 %v4643
  %5452 = vmatmul.f32.gmra.mxu0 %v5417
  %v5453 = vpop.f32.mrf.mxu0
  %v5454 = vadd.f32 %v5434, %v5453
  %5455 = vdwg.mxu0
  %5456 = vmatpush.xpose.msra.mxu0 0.0
  %5457 = vmatpush.xpose.msra.mxu0 0.0
  %5458 = vmatpush.xpose.msra.mxu0 0.0
  %5459 = vmatpush.xpose.msra.mxu0 0.0
  %5460 = vmatpush.xpose.msra.mxu0 0.0
  %5461 = vmatpush.xpose.msra.mxu0 0.0
  %5462 = vmatpush.xpose.msra.mxu0 0.0
  %5463 = vmatpush.xpose.msra.mxu0 0.0
  %5464 = vmatpush.xpose.msra.mxu0 0.0
  %5465 = vmatpush.xpose.msra.mxu0 0.0
  %5466 = vmatpush.xpose.msra.mxu0 0.0
  %5467 = vmatpush.xpose.msra.mxu0 0.0
  %5468 = vmatpush.xpose.msra.mxu0 0.0
  %5469 = vmatpush.xpose.msra.mxu0 0.0
  %5470 = vmatpush.xpose.msra.mxu0 0.0
  %5471 = vmatpush.xpose.msra.mxu0 %v4644
  %5472 = vmatmul.f32.gmra.mxu0 %v5418
  %v5473 = vpop.f32.mrf.mxu0
  %v5474 = vadd.f32 %v5454, %v5473
  %5475 = vdwg.mxu0
  %5476 = vmatpush.xpose.msra.mxu0 0.0
  %5477 = vmatpush.xpose.msra.mxu0 0.0
  %5478 = vmatpush.xpose.msra.mxu0 0.0
  %5479 = vmatpush.xpose.msra.mxu0 0.0
  %5480 = vmatpush.xpose.msra.mxu0 0.0
  %5481 = vmatpush.xpose.msra.mxu0 0.0
  %5482 = vmatpush.xpose.msra.mxu0 0.0
  %5483 = vmatpush.xpose.msra.mxu0 0.0
  %5484 = vmatpush.xpose.msra.mxu0 0.0
  %5485 = vmatpush.xpose.msra.mxu0 0.0
  %5486 = vmatpush.xpose.msra.mxu0 0.0
  %5487 = vmatpush.xpose.msra.mxu0 0.0
  %5488 = vmatpush.xpose.msra.mxu0 0.0
  %5489 = vmatpush.xpose.msra.mxu0 0.0
  %5490 = vmatpush.xpose.msra.mxu0 0.0
  %5491 = vmatpush.xpose.msra.mxu0 %v4645
  %5492 = vmatmul.f32.gmra.mxu0 %v5419
  %v5493 = vpop.f32.mrf.mxu0
  %v5494 = vadd.f32 %v5474, %v5493
  %5495 = vdwg.mxu0
  %5496 = vmatpush.xpose.msra.mxu0 0.0
  %5497 = vmatpush.xpose.msra.mxu0 0.0
  %5498 = vmatpush.xpose.msra.mxu0 0.0
  %5499 = vmatpush.xpose.msra.mxu0 0.0
  %5500 = vmatpush.xpose.msra.mxu0 0.0
  %5501 = vmatpush.xpose.msra.mxu0 0.0
  %5502 = vmatpush.xpose.msra.mxu0 0.0
  %5503 = vmatpush.xpose.msra.mxu0 0.0
  %5504 = vmatpush.xpose.msra.mxu0 0.0
  %5505 = vmatpush.xpose.msra.mxu0 0.0
  %5506 = vmatpush.xpose.msra.mxu0 0.0
  %5507 = vmatpush.xpose.msra.mxu0 0.0
  %5508 = vmatpush.xpose.msra.mxu0 0.0
  %5509 = vmatpush.xpose.msra.mxu0 0.0
  %5510 = vmatpush.xpose.msra.mxu0 0.0
  %5511 = vmatpush.xpose.msra.mxu0 %v4646
  %5512 = vmatmul.f32.gmra.mxu0 %v5420
  %v5513 = vpop.f32.mrf.mxu0
  %v5514 = vadd.f32 %v5494, %v5513
  %5515 = vdwg.mxu0
  %5516 = vmatpush.xpose.msra.mxu0 0.0
  %5517 = vmatpush.xpose.msra.mxu0 0.0
  %5518 = vmatpush.xpose.msra.mxu0 0.0
  %5519 = vmatpush.xpose.msra.mxu0 0.0
  %5520 = vmatpush.xpose.msra.mxu0 0.0
  %5521 = vmatpush.xpose.msra.mxu0 0.0
  %5522 = vmatpush.xpose.msra.mxu0 0.0
  %5523 = vmatpush.xpose.msra.mxu0 0.0
  %5524 = vmatpush.xpose.msra.mxu0 0.0
  %5525 = vmatpush.xpose.msra.mxu0 0.0
  %5526 = vmatpush.xpose.msra.mxu0 0.0
  %5527 = vmatpush.xpose.msra.mxu0 0.0
  %5528 = vmatpush.xpose.msra.mxu0 0.0
  %5529 = vmatpush.xpose.msra.mxu0 0.0
  %5530 = vmatpush.xpose.msra.mxu0 0.0
  %5531 = vmatpush.xpose.msra.mxu0 %v4647
  %5532 = vmatmul.f32.gmra.mxu0 %v5421
  %v5533 = vpop.f32.mrf.mxu0
  %v5534 = vadd.f32 %v5514, %v5533
  %5535 = vdwg.mxu0
  %5536 = vmatpush.xpose.msra.mxu0 0.0
  %5537 = vmatpush.xpose.msra.mxu0 0.0
  %5538 = vmatpush.xpose.msra.mxu0 0.0
  %5539 = vmatpush.xpose.msra.mxu0 0.0
  %5540 = vmatpush.xpose.msra.mxu0 0.0
  %5541 = vmatpush.xpose.msra.mxu0 0.0
  %5542 = vmatpush.xpose.msra.mxu0 0.0
  %5543 = vmatpush.xpose.msra.mxu0 0.0
  %5544 = vmatpush.xpose.msra.mxu0 0.0
  %5545 = vmatpush.xpose.msra.mxu0 0.0
  %5546 = vmatpush.xpose.msra.mxu0 0.0
  %5547 = vmatpush.xpose.msra.mxu0 0.0
  %5548 = vmatpush.xpose.msra.mxu0 0.0
  %5549 = vmatpush.xpose.msra.mxu0 0.0
  %5550 = vmatpush.xpose.msra.mxu0 0.0
  %5551 = vmatpush.xpose.msra.mxu0 %v4648
  %5552 = vmatmul.f32.gmra.mxu0 %v5422
  %v5553 = vpop.f32.mrf.mxu0
  %v5554 = vadd.f32 %v5534, %v5553
  %5555 = vdwg.mxu0
  %5556 = vmatpush.xpose.msra.mxu0 0.0
  %5557 = vmatpush.xpose.msra.mxu0 0.0
  %5558 = vmatpush.xpose.msra.mxu0 0.0
  %5559 = vmatpush.xpose.msra.mxu0 0.0
  %5560 = vmatpush.xpose.msra.mxu0 0.0
  %5561 = vmatpush.xpose.msra.mxu0 0.0
  %5562 = vmatpush.xpose.msra.mxu0 0.0
  %5563 = vmatpush.xpose.msra.mxu0 0.0
  %5564 = vmatpush.xpose.msra.mxu0 0.0
  %5565 = vmatpush.xpose.msra.mxu0 0.0
  %5566 = vmatpush.xpose.msra.mxu0 0.0
  %5567 = vmatpush.xpose.msra.mxu0 0.0
  %5568 = vmatpush.xpose.msra.mxu0 0.0
  %5569 = vmatpush.xpose.msra.mxu0 0.0
  %5570 = vmatpush.xpose.msra.mxu0 0.0
  %5571 = vmatpush.xpose.msra.mxu0 %v4649
  %5572 = vmatmul.f32.gmra.mxu0 %v5423
  %v5573 = vpop.f32.mrf.mxu0
  %v5574 = vadd.f32 %v5554, %v5573
  %5575 = vdwg.mxu0
  %5576 = vmatpush.xpose.msra.mxu0 0.0
  %5577 = vmatpush.xpose.msra.mxu0 0.0
  %5578 = vmatpush.xpose.msra.mxu0 0.0
  %5579 = vmatpush.xpose.msra.mxu0 0.0
  %5580 = vmatpush.xpose.msra.mxu0 0.0
  %5581 = vmatpush.xpose.msra.mxu0 0.0
  %5582 = vmatpush.xpose.msra.mxu0 0.0
  %5583 = vmatpush.xpose.msra.mxu0 0.0
  %5584 = vmatpush.xpose.msra.mxu0 0.0
  %5585 = vmatpush.xpose.msra.mxu0 0.0
  %5586 = vmatpush.xpose.msra.mxu0 0.0
  %5587 = vmatpush.xpose.msra.mxu0 0.0
  %5588 = vmatpush.xpose.msra.mxu0 0.0
  %5589 = vmatpush.xpose.msra.mxu0 0.0
  %5590 = vmatpush.xpose.msra.mxu0 0.0
  %5591 = vmatpush.xpose.msra.mxu0 %v4650
  %5592 = vmatmul.f32.gmra.mxu0 %v5424
  %v5593 = vpop.f32.mrf.mxu0
  %v5594 = vadd.f32 %v5574, %v5593
  %5595 = vdwg.mxu0
  %5596 = vmatpush.xpose.msra.mxu0 0.0
  %5597 = vmatpush.xpose.msra.mxu0 0.0
  %5598 = vmatpush.xpose.msra.mxu0 0.0
  %5599 = vmatpush.xpose.msra.mxu0 0.0
  %5600 = vmatpush.xpose.msra.mxu0 0.0
  %5601 = vmatpush.xpose.msra.mxu0 0.0
  %5602 = vmatpush.xpose.msra.mxu0 0.0
  %5603 = vmatpush.xpose.msra.mxu0 0.0
  %5604 = vmatpush.xpose.msra.mxu0 0.0
  %5605 = vmatpush.xpose.msra.mxu0 0.0
  %5606 = vmatpush.xpose.msra.mxu0 0.0
  %5607 = vmatpush.xpose.msra.mxu0 0.0
  %5608 = vmatpush.xpose.msra.mxu0 0.0
  %5609 = vmatpush.xpose.msra.mxu0 0.0
  %5610 = vmatpush.xpose.msra.mxu0 0.0
  %5611 = vmatpush.xpose.msra.mxu0 %v4651
  %5612 = vmatmul.f32.gmra.mxu0 %v5425
  %v5613 = vpop.f32.mrf.mxu0
  %v5614 = vadd.f32 %v5594, %v5613
  %5615 = vdwg.mxu0
  %5616 = vmatpush.xpose.msra.mxu0 0.0
  %5617 = vmatpush.xpose.msra.mxu0 0.0
  %5618 = vmatpush.xpose.msra.mxu0 0.0
  %5619 = vmatpush.xpose.msra.mxu0 0.0
  %5620 = vmatpush.xpose.msra.mxu0 0.0
  %5621 = vmatpush.xpose.msra.mxu0 0.0
  %5622 = vmatpush.xpose.msra.mxu0 0.0
  %5623 = vmatpush.xpose.msra.mxu0 0.0
  %5624 = vmatpush.xpose.msra.mxu0 0.0
  %5625 = vmatpush.xpose.msra.mxu0 0.0
  %5626 = vmatpush.xpose.msra.mxu0 0.0
  %5627 = vmatpush.xpose.msra.mxu0 0.0
  %5628 = vmatpush.xpose.msra.mxu0 0.0
  %5629 = vmatpush.xpose.msra.mxu0 0.0
  %5630 = vmatpush.xpose.msra.mxu0 0.0
  %5631 = vmatpush.xpose.msra.mxu0 %v4652
  %5632 = vmatmul.f32.gmra.mxu0 %v5426
  %v5633 = vpop.f32.mrf.mxu0
  %v5634 = vadd.f32 %v5614, %v5633
  %5635 = vdwg.mxu0
  %5636 = vmatpush.xpose.msra.mxu0 0.0
  %5637 = vmatpush.xpose.msra.mxu0 0.0
  %5638 = vmatpush.xpose.msra.mxu0 0.0
  %5639 = vmatpush.xpose.msra.mxu0 0.0
  %5640 = vmatpush.xpose.msra.mxu0 0.0
  %5641 = vmatpush.xpose.msra.mxu0 0.0
  %5642 = vmatpush.xpose.msra.mxu0 0.0
  %5643 = vmatpush.xpose.msra.mxu0 0.0
  %5644 = vmatpush.xpose.msra.mxu0 0.0
  %5645 = vmatpush.xpose.msra.mxu0 0.0
  %5646 = vmatpush.xpose.msra.mxu0 0.0
  %5647 = vmatpush.xpose.msra.mxu0 0.0
  %5648 = vmatpush.xpose.msra.mxu0 0.0
  %5649 = vmatpush.xpose.msra.mxu0 0.0
  %5650 = vmatpush.xpose.msra.mxu0 0.0
  %5651 = vmatpush.xpose.msra.mxu0 %v4653
  %5652 = vmatmul.f32.gmra.mxu0 %v5427
  %v5653 = vpop.f32.mrf.mxu0
  %v5654 = vadd.f32 %v5634, %v5653
  %5655 = vdwg.mxu0
  %5656 = vmatpush.xpose.msra.mxu0 0.0
  %5657 = vmatpush.xpose.msra.mxu0 0.0
  %5658 = vmatpush.xpose.msra.mxu0 0.0
  %5659 = vmatpush.xpose.msra.mxu0 0.0
  %5660 = vmatpush.xpose.msra.mxu0 0.0
  %5661 = vmatpush.xpose.msra.mxu0 0.0
  %5662 = vmatpush.xpose.msra.mxu0 0.0
  %5663 = vmatpush.xpose.msra.mxu0 0.0
  %5664 = vmatpush.xpose.msra.mxu0 0.0
  %5665 = vmatpush.xpose.msra.mxu0 0.0
  %5666 = vmatpush.xpose.msra.mxu0 0.0
  %5667 = vmatpush.xpose.msra.mxu0 0.0
  %5668 = vmatpush.xpose.msra.mxu0 0.0
  %5669 = vmatpush.xpose.msra.mxu0 0.0
  %5670 = vmatpush.xpose.msra.mxu0 0.0
  %5671 = vmatpush.xpose.msra.mxu0 %v4654
  %5672 = vmatmul.f32.gmra.mxu0 %v5428
  %v5673 = vpop.f32.mrf.mxu0
  %v5674 = vadd.f32 %v5654, %v5673
  %5675 = vdwg.mxu0
  %5676 = vmatpush.xpose.msra.mxu0 0.0
  %5677 = vmatpush.xpose.msra.mxu0 0.0
  %5678 = vmatpush.xpose.msra.mxu0 0.0
  %5679 = vmatpush.xpose.msra.mxu0 0.0
  %5680 = vmatpush.xpose.msra.mxu0 0.0
  %5681 = vmatpush.xpose.msra.mxu0 0.0
  %5682 = vmatpush.xpose.msra.mxu0 0.0
  %5683 = vmatpush.xpose.msra.mxu0 0.0
  %5684 = vmatpush.xpose.msra.mxu0 0.0
  %5685 = vmatpush.xpose.msra.mxu0 0.0
  %5686 = vmatpush.xpose.msra.mxu0 0.0
  %5687 = vmatpush.xpose.msra.mxu0 0.0
  %5688 = vmatpush.xpose.msra.mxu0 0.0
  %5689 = vmatpush.xpose.msra.mxu0 0.0
  %5690 = vmatpush.xpose.msra.mxu0 0.0
  %5691 = vmatpush.xpose.msra.mxu0 %v4655
  %5692 = vmatmul.f32.gmra.mxu0 %v5429
  %v5693 = vpop.f32.mrf.mxu0
  %v5694 = vadd.f32 %v5674, %v5693
  %5695 = vdwg.mxu0
  %5696 = vmatpush.xpose.msra.mxu0 0.0
  %5697 = vmatpush.xpose.msra.mxu0 0.0
  %5698 = vmatpush.xpose.msra.mxu0 0.0
  %5699 = vmatpush.xpose.msra.mxu0 0.0
  %5700 = vmatpush.xpose.msra.mxu0 0.0
  %5701 = vmatpush.xpose.msra.mxu0 0.0
  %5702 = vmatpush.xpose.msra.mxu0 0.0
  %5703 = vmatpush.xpose.msra.mxu0 0.0
  %5704 = vmatpush.xpose.msra.mxu0 0.0
  %5705 = vmatpush.xpose.msra.mxu0 0.0
  %5706 = vmatpush.xpose.msra.mxu0 0.0
  %5707 = vmatpush.xpose.msra.mxu0 0.0
  %5708 = vmatpush.xpose.msra.mxu0 0.0
  %5709 = vmatpush.xpose.msra.mxu0 0.0
  %5710 = vmatpush.xpose.msra.mxu0 0.0
  %5711 = vmatpush.xpose.msra.mxu0 %v4656
  %5712 = vmatmul.f32.gmra.mxu0 %v5430
  %v5713 = vpop.f32.mrf.mxu0
  %v5714 = vadd.f32 %v5694, %v5713
  %5715 = vdwg.mxu0
  %5716 = vmatpush.xpose.msra.mxu0 0.0
  %5717 = vmatpush.xpose.msra.mxu0 0.0
  %5718 = vmatpush.xpose.msra.mxu0 0.0
  %5719 = vmatpush.xpose.msra.mxu0 0.0
  %5720 = vmatpush.xpose.msra.mxu0 0.0
  %5721 = vmatpush.xpose.msra.mxu0 0.0
  %5722 = vmatpush.xpose.msra.mxu0 0.0
  %5723 = vmatpush.xpose.msra.mxu0 0.0
  %5724 = vmatpush.xpose.msra.mxu0 0.0
  %5725 = vmatpush.xpose.msra.mxu0 0.0
  %5726 = vmatpush.xpose.msra.mxu0 0.0
  %5727 = vmatpush.xpose.msra.mxu0 0.0
  %5728 = vmatpush.xpose.msra.mxu0 0.0
  %5729 = vmatpush.xpose.msra.mxu0 0.0
  %5730 = vmatpush.xpose.msra.mxu0 0.0
  %5731 = vmatpush.xpose.msra.mxu0 %v4657
  %5732 = vmatmul.f32.gmra.mxu0 %v5431
  %v5733 = vpop.f32.mrf.mxu0
  %v5734 = vadd.f32 %v5714, %v5733
  %5735 = vdwg.mxu0
  %5736 = vmatpush.xpose.msra.mxu0 0.0
  %5737 = vmatpush.xpose.msra.mxu0 0.0
  %5738 = vmatpush.xpose.msra.mxu0 0.0
  %5739 = vmatpush.xpose.msra.mxu0 0.0
  %5740 = vmatpush.xpose.msra.mxu0 0.0
  %5741 = vmatpush.xpose.msra.mxu0 0.0
  %5742 = vmatpush.xpose.msra.mxu0 0.0
  %5743 = vmatpush.xpose.msra.mxu0 0.0
  %5744 = vmatpush.xpose.msra.mxu0 0.0
  %5745 = vmatpush.xpose.msra.mxu0 0.0
  %5746 = vmatpush.xpose.msra.mxu0 0.0
  %5747 = vmatpush.xpose.msra.mxu0 0.0
  %5748 = vmatpush.xpose.msra.mxu0 0.0
  %5749 = vmatpush.xpose.msra.mxu0 0.0
  %5750 = vmatpush.xpose.msra.mxu0 0.0
  %5751 = vmatpush.xpose.msra.mxu0 %v4658
  %5752 = vmatmul.f32.gmra.mxu0 %v5432
  %v5753 = vpop.f32.mrf.mxu0
  %v5754 = vadd.f32 %v5734, %v5753
  %5755 = vdwg.mxu0
  %v5756 = vadd.f32 %v5011, %v5754
  %s5757 = scalar_lea.vmem %s2, 40
  %v5758 = vld [vmem:[%s5757] sm:$0x1f]
  %s5759 = scalar_lea.vmem %s3, 5
  %v5760 = vld [vmem:[%s5759] sm:$0x1]
  %s5761 = scalar_lea.vmem %s4, 40
  %v5762 = vld [vmem:[%s5761] sm:$0x1f]
  %s5763 = scalar_lea.vmem %s5, 5
  %v5764 = vld [vmem:[%s5763] sm:$0x1]
  %s5765 = scalar_lea.vmem %s6, 640
  %v5766 = vld [vmem:[%s5765] sm:$0x1f]
  %v5767 = vld [vmem:[%s5765 + $0x8] sm:$0x1f]
  %v5768 = vld [vmem:[%s5765 + $0x10] sm:$0x1f]
  %v5769 = vld [vmem:[%s5765 + $0x18] sm:$0x1f]
  %v5770 = vld [vmem:[%s5765 + $0x20] sm:$0x1f]
  %v5771 = vld [vmem:[%s5765 + $0x28] sm:$0x1f]
  %v5772 = vld [vmem:[%s5765 + $0x30] sm:$0x1f]
  %v5773 = vld [vmem:[%s5765 + $0x38] sm:$0x1f]
  %v5774 = vld [vmem:[%s5765 + $0x40] sm:$0x1f]
  %v5775 = vld [vmem:[%s5765 + $0x48] sm:$0x1f]
  %v5776 = vld [vmem:[%s5765 + $0x50] sm:$0x1f]
  %v5777 = vld [vmem:[%s5765 + $0x58] sm:$0x1f]
  %v5778 = vld [vmem:[%s5765 + $0x60] sm:$0x1f]
  %v5779 = vld [vmem:[%s5765 + $0x68] sm:$0x1f]
  %v5780 = vld [vmem:[%s5765 + $0x70] sm:$0x1f]
  %v5781 = vld [vmem:[%s5765 + $0x78] sm:$0x1f]
  %s5782 = scalar_lea.vmem %s7, 80
  %v5783 = vld [vmem:[%s5782] sm:$0xff]
  %v5784 = vld [vmem:[%s5782 + $0x8] sm:$0xff]
  %s5785 = scalar_lea.vmem %s8, 640
  %v5786 = vld [vmem:[%s5785] sm:$0x1f]
  %v5787 = vld [vmem:[%s5785 + $0x8] sm:$0x1f]
  %v5788 = vld [vmem:[%s5785 + $0x10] sm:$0x1f]
  %v5789 = vld [vmem:[%s5785 + $0x18] sm:$0x1f]
  %v5790 = vld [vmem:[%s5785 + $0x20] sm:$0x1f]
  %v5791 = vld [vmem:[%s5785 + $0x28] sm:$0x1f]
  %v5792 = vld [vmem:[%s5785 + $0x30] sm:$0x1f]
  %v5793 = vld [vmem:[%s5785 + $0x38] sm:$0x1f]
  %v5794 = vld [vmem:[%s5785 + $0x40] sm:$0x1f]
  %v5795 = vld [vmem:[%s5785 + $0x48] sm:$0x1f]
  %v5796 = vld [vmem:[%s5785 + $0x50] sm:$0x1f]
  %v5797 = vld [vmem:[%s5785 + $0x58] sm:$0x1f]
  %v5798 = vld [vmem:[%s5785 + $0x60] sm:$0x1f]
  %v5799 = vld [vmem:[%s5785 + $0x68] sm:$0x1f]
  %v5800 = vld [vmem:[%s5785 + $0x70] sm:$0x1f]
  %v5801 = vld [vmem:[%s5785 + $0x78] sm:$0x1f]
  %s5802 = scalar_lea.vmem %s9, 5
  %v5803 = vld [vmem:[%s5802] sm:$0x1]
  %v5805 = vperm.slane %v5760, 0
  %v5808 = vsel %vm84, %v5756, 0
  %v5811 = vsel %vm88, %v5758, 0
  %5813 = vmatpush.msra.mxu0 0.0
  %5814 = vmatpush.msra.mxu0 0.0
  %5815 = vmatpush.msra.mxu0 0.0
  %5816 = vmatpush.msra.mxu0 0.0
  %5817 = vmatpush.msra.mxu0 0.0
  %5818 = vmatpush.msra.mxu0 0.0
  %5819 = vmatpush.msra.mxu0 0.0
  %5820 = vmatpush.msra.mxu0 0.0
  %5821 = vmatpush.msra.mxu0 0.0
  %5822 = vmatpush.msra.mxu0 0.0
  %5823 = vmatpush.msra.mxu0 0.0
  %5824 = vmatpush.msra.mxu0 0.0
  %5825 = vmatpush.msra.mxu0 0.0
  %5826 = vmatpush.msra.mxu0 0.0
  %5827 = vmatpush.msra.mxu0 0.0
  %5828 = vmatpush.msra.mxu0 %v5811
  %5829 = vmatmul.f32.gmra.mxu0 %v5808
  %v5830 = vpop.f32.mrf.mxu0
  %v5831 = vadd.f32 %v5805, %v5830
  %5832 = vdwg.mxu0
  %v5834 = vrot.slane %v5831, 1
  %v5835 = vrot.slane %v5831, 2
  %v5836 = vrot.slane %v5831, 3
  %v5837 = vrot.slane %v5831, 4
  %v5838 = vrot.slane %v5831, 5
  %v5839 = vperm.slane %v5831, 0
  %v5840 = vperm.slane %v5834, 0
  %v5841 = vperm.slane %v5835, 0
  %v5842 = vperm.slane %v5836, 0
  %v5843 = vperm.slane %v5837, 0
  %v5844 = vperm.slane %v5838, 0
  %5851 = vrot.lane.b32.xlu0 %v5831, 123
  %v5852 = vpop.permute.xlu0 %5851
  %v5854 = vmul.f32 %v5839, %v5852
  %v5855 = vmul.f32 %v5840, %v5852
  %v5856 = vmul.f32 %v5841, %v5852
  %v5857 = vmul.f32 %v5842, %v5852
  %v5858 = vmul.f32 %v5843, %v5852
  %v5859 = vmul.f32 %v5844, %v5852
  %v5860 = vmul.f32 %v5854, 0.4472136
  %v5861 = vmul.f32 %v5855, 0.4472136
  %v5862 = vmul.f32 %v5856, 0.4472136
  %v5863 = vmul.f32 %v5857, 0.4472136
  %v5864 = vmul.f32 %v5858, 0.4472136
  %v5865 = vmul.f32 %v5859, 0.4472136
  %v5866 = vadd.f32 %v5860, %v36
  %v5867 = vadd.f32 %v5861, %v37
  %v5868 = vadd.f32 %v5862, %v38
  %v5869 = vadd.f32 %v5863, %v39
  %v5870 = vadd.f32 %v5864, %v40
  %v5871 = vadd.f32 %v5865, %v41
  %v5872 = vsel %vm151, %v5866, -inf
  %v5873 = vrot.slane %v5872, 4
  %v5874 = vmax.f32 %v5872, %v5873
  %v5875 = vrot.slane %v5874, 2
  %v5876 = vmax.f32 %v5874, %v5875
  %v5877 = vrot.slane %v5876, 1
  %v5878 = vmax.f32 %v5876, %v5877
  %v5879 = vsel %vm151, %v5867, -inf
  %v5880 = vrot.slane %v5879, 4
  %v5881 = vmax.f32 %v5879, %v5880
  %v5882 = vrot.slane %v5881, 2
  %v5883 = vmax.f32 %v5881, %v5882
  %v5884 = vrot.slane %v5883, 1
  %v5885 = vmax.f32 %v5883, %v5884
  %v5886 = vsel %vm151, %v5868, -inf
  %v5887 = vrot.slane %v5886, 4
  %v5888 = vmax.f32 %v5886, %v5887
  %v5889 = vrot.slane %v5888, 2
  %v5890 = vmax.f32 %v5888, %v5889
  %v5891 = vrot.slane %v5890, 1
  %v5892 = vmax.f32 %v5890, %v5891
  %v5893 = vsel %vm151, %v5869, -inf
  %v5894 = vrot.slane %v5893, 4
  %v5895 = vmax.f32 %v5893, %v5894
  %v5896 = vrot.slane %v5895, 2
  %v5897 = vmax.f32 %v5895, %v5896
  %v5898 = vrot.slane %v5897, 1
  %v5899 = vmax.f32 %v5897, %v5898
  %v5900 = vsel %vm151, %v5870, -inf
  %v5901 = vrot.slane %v5900, 4
  %v5902 = vmax.f32 %v5900, %v5901
  %v5903 = vrot.slane %v5902, 2
  %v5904 = vmax.f32 %v5902, %v5903
  %v5905 = vrot.slane %v5904, 1
  %v5906 = vmax.f32 %v5904, %v5905
  %v5907 = vsel %vm151, %v5871, -inf
  %v5908 = vrot.slane %v5907, 4
  %v5909 = vmax.f32 %v5907, %v5908
  %v5910 = vrot.slane %v5909, 2
  %v5911 = vmax.f32 %v5909, %v5910
  %v5912 = vrot.slane %v5911, 1
  %v5913 = vmax.f32 %v5911, %v5912
  %v5914 = vsub.f32 %v5866, %v5878
  %v5915 = vsub.f32 %v5867, %v5885
  %v5916 = vsub.f32 %v5868, %v5892
  %v5917 = vsub.f32 %v5869, %v5899
  %v5918 = vsub.f32 %v5870, %v5906
  %v5919 = vsub.f32 %v5871, %v5913
  %v5920 = vmul.f32 %v5914, 1.442695
  %v5921 = vpow.pop %v5920
  %v5922 = vmul.f32 %v5915, 1.442695
  %v5923 = vpow.pop %v5922
  %v5924 = vmul.f32 %v5916, 1.442695
  %v5925 = vpow.pop %v5924
  %v5926 = vmul.f32 %v5917, 1.442695
  %v5927 = vpow.pop %v5926
  %v5928 = vmul.f32 %v5918, 1.442695
  %v5929 = vpow.pop %v5928
  %v5930 = vmul.f32 %v5919, 1.442695
  %v5931 = vpow.pop %v5930
  %v5932 = vsel %vm151, %v5921, 0.0
  %v5933 = vrot.slane %v5932, 4
  %v5934 = vadd.f32 %v5932, %v5933
  %v5935 = vrot.slane %v5934, 2
  %v5936 = vadd.f32 %v5934, %v5935
  %v5937 = vrot.slane %v5936, 1
  %v5938 = vadd.f32 %v5936, %v5937
  %v5939 = vsel %vm151, %v5923, 0.0
  %v5940 = vrot.slane %v5939, 4
  %v5941 = vadd.f32 %v5939, %v5940
  %v5942 = vrot.slane %v5941, 2
  %v5943 = vadd.f32 %v5941, %v5942
  %v5944 = vrot.slane %v5943, 1
  %v5945 = vadd.f32 %v5943, %v5944
  %v5946 = vsel %vm151, %v5925, 0.0
  %v5947 = vrot.slane %v5946, 4
  %v5948 = vadd.f32 %v5946, %v5947
  %v5949 = vrot.slane %v5948, 2
  %v5950 = vadd.f32 %v5948, %v5949
  %v5951 = vrot.slane %v5950, 1
  %v5952 = vadd.f32 %v5950, %v5951
  %v5953 = vsel %vm151, %v5927, 0.0
  %v5954 = vrot.slane %v5953, 4
  %v5955 = vadd.f32 %v5953, %v5954
  %v5956 = vrot.slane %v5955, 2
  %v5957 = vadd.f32 %v5955, %v5956
  %v5958 = vrot.slane %v5957, 1
  %v5959 = vadd.f32 %v5957, %v5958
  %v5960 = vsel %vm151, %v5929, 0.0
  %v5961 = vrot.slane %v5960, 4
  %v5962 = vadd.f32 %v5960, %v5961
  %v5963 = vrot.slane %v5962, 2
  %v5964 = vadd.f32 %v5962, %v5963
  %v5965 = vrot.slane %v5964, 1
  %v5966 = vadd.f32 %v5964, %v5965
  %v5967 = vsel %vm151, %v5931, 0.0
  %v5968 = vrot.slane %v5967, 4
  %v5969 = vadd.f32 %v5967, %v5968
  %v5970 = vrot.slane %v5969, 2
  %v5971 = vadd.f32 %v5969, %v5970
  %v5972 = vrot.slane %v5971, 1
  %v5973 = vadd.f32 %v5971, %v5972
  %v5974 = vrcp.pop %v5938
  %v5975 = vmul.f32 %v5938, %v5974
  %v5976 = vsub.f32 1.0, %v5975
  %v5977 = vmul.f32 %v5974, %v5976
  %v5978 = vadd.f32 %v5974, %v5977
  %vm5979 = vweird.f32 %v5938
  %vm5980 = vweird.f32 %v5974
  %vm5981 = vmor %vm5979, %vm5980
  %v5982 = vsel %vm5981, %v5974, %v5978
  %v5983 = vand.u32 2147483647, %v5938
  %vm5984 = vcmp.eq.f32.partialorder %v5983, 8.507059e+37
  %v5985 = vand.u32 %v5938, 2147483648
  %v5986 = vor.u32 1.1754944e-38, %v5985
  %v5987 = vsel %vm5984, %v5986, %v5982
  %v5988 = vmul.f32 %v5921, %v5987
  %v5989 = vrcp.pop %v5945
  %v5990 = vmul.f32 %v5945, %v5989
  %v5991 = vsub.f32 1.0, %v5990
  %v5992 = vmul.f32 %v5989, %v5991
  %v5993 = vadd.f32 %v5989, %v5992
  %vm5994 = vweird.f32 %v5945
  %vm5995 = vweird.f32 %v5989
  %vm5996 = vmor %vm5994, %vm5995
  %v5997 = vsel %vm5996, %v5989, %v5993
  %v5998 = vand.u32 2147483647, %v5945
  %vm5999 = vcmp.eq.f32.partialorder %v5998, 8.507059e+37
  %v6000 = vand.u32 %v5945, 2147483648
  %v6001 = vor.u32 1.1754944e-38, %v6000
  %v6002 = vsel %vm5999, %v6001, %v5997
  %v6003 = vmul.f32 %v5923, %v6002
  %v6004 = vrcp.pop %v5952
  %v6005 = vmul.f32 %v5952, %v6004
  %v6006 = vsub.f32 1.0, %v6005
  %v6007 = vmul.f32 %v6004, %v6006
  %v6008 = vadd.f32 %v6004, %v6007
  %vm6009 = vweird.f32 %v5952
  %vm6010 = vweird.f32 %v6004
  %vm6011 = vmor %vm6009, %vm6010
  %v6012 = vsel %vm6011, %v6004, %v6008
  %v6013 = vand.u32 2147483647, %v5952
  %vm6014 = vcmp.eq.f32.partialorder %v6013, 8.507059e+37
  %v6015 = vand.u32 %v5952, 2147483648
  %v6016 = vor.u32 1.1754944e-38, %v6015
  %v6017 = vsel %vm6014, %v6016, %v6012
  %v6018 = vmul.f32 %v5925, %v6017
  %v6019 = vrcp.pop %v5959
  %v6020 = vmul.f32 %v5959, %v6019
  %v6021 = vsub.f32 1.0, %v6020
  %v6022 = vmul.f32 %v6019, %v6021
  %v6023 = vadd.f32 %v6019, %v6022
  %vm6024 = vweird.f32 %v5959
  %vm6025 = vweird.f32 %v6019
  %vm6026 = vmor %vm6024, %vm6025
  %v6027 = vsel %vm6026, %v6019, %v6023
  %v6028 = vand.u32 2147483647, %v5959
  %vm6029 = vcmp.eq.f32.partialorder %v6028, 8.507059e+37
  %v6030 = vand.u32 %v5959, 2147483648
  %v6031 = vor.u32 1.1754944e-38, %v6030
  %v6032 = vsel %vm6029, %v6031, %v6027
  %v6033 = vmul.f32 %v5927, %v6032
  %v6034 = vrcp.pop %v5966
  %v6035 = vmul.f32 %v5966, %v6034
  %v6036 = vsub.f32 1.0, %v6035
  %v6037 = vmul.f32 %v6034, %v6036
  %v6038 = vadd.f32 %v6034, %v6037
  %vm6039 = vweird.f32 %v5966
  %vm6040 = vweird.f32 %v6034
  %vm6041 = vmor %vm6039, %vm6040
  %v6042 = vsel %vm6041, %v6034, %v6038
  %v6043 = vand.u32 2147483647, %v5966
  %vm6044 = vcmp.eq.f32.partialorder %v6043, 8.507059e+37
  %v6045 = vand.u32 %v5966, 2147483648
  %v6046 = vor.u32 1.1754944e-38, %v6045
  %v6047 = vsel %vm6044, %v6046, %v6042
  %v6048 = vmul.f32 %v5929, %v6047
  %v6049 = vrcp.pop %v5973
  %v6050 = vmul.f32 %v5973, %v6049
  %v6051 = vsub.f32 1.0, %v6050
  %v6052 = vmul.f32 %v6049, %v6051
  %v6053 = vadd.f32 %v6049, %v6052
  %vm6054 = vweird.f32 %v5973
  %vm6055 = vweird.f32 %v6049
  %vm6056 = vmor %vm6054, %vm6055
  %v6057 = vsel %vm6056, %v6049, %v6053
  %v6058 = vand.u32 2147483647, %v5973
  %vm6059 = vcmp.eq.f32.partialorder %v6058, 8.507059e+37
  %v6060 = vand.u32 %v5973, 2147483648
  %v6061 = vor.u32 1.1754944e-38, %v6060
  %v6062 = vsel %vm6059, %v6061, %v6057
  %v6063 = vmul.f32 %v5931, %v6062
  %6064 = vrot.lane.b32.xlu0 %v5831, 118
  %v6065 = vpop.permute.xlu0 %6064
  %v6067 = vmul.f32 %v5988, %v6065
  %v6068 = vmul.f32 %v6003, %v6065
  %v6069 = vmul.f32 %v6018, %v6065
  %v6070 = vmul.f32 %v6033, %v6065
  %v6071 = vmul.f32 %v6048, %v6065
  %v6072 = vmul.f32 %v6063, %v6065
  %v6073 = vsel %vm151, %v6067, 0.0
  %v6074 = vrot.slane %v6073, 4
  %v6075 = vadd.f32 %v6073, %v6074
  %v6076 = vrot.slane %v6075, 2
  %v6077 = vadd.f32 %v6075, %v6076
  %v6078 = vrot.slane %v6077, 1
  %v6079 = vadd.f32 %v6077, %v6078
  %v6080 = vsel %vm151, %v6068, 0.0
  %v6081 = vrot.slane %v6080, 4
  %v6082 = vadd.f32 %v6080, %v6081
  %v6083 = vrot.slane %v6082, 2
  %v6084 = vadd.f32 %v6082, %v6083
  %v6085 = vrot.slane %v6084, 1
  %v6086 = vadd.f32 %v6084, %v6085
  %v6087 = vsel %vm151, %v6069, 0.0
  %v6088 = vrot.slane %v6087, 4
  %v6089 = vadd.f32 %v6087, %v6088
  %v6090 = vrot.slane %v6089, 2
  %v6091 = vadd.f32 %v6089, %v6090
  %v6092 = vrot.slane %v6091, 1
  %v6093 = vadd.f32 %v6091, %v6092
  %v6094 = vsel %vm151, %v6070, 0.0
  %v6095 = vrot.slane %v6094, 4
  %v6096 = vadd.f32 %v6094, %v6095
  %v6097 = vrot.slane %v6096, 2
  %v6098 = vadd.f32 %v6096, %v6097
  %v6099 = vrot.slane %v6098, 1
  %v6100 = vadd.f32 %v6098, %v6099
  %v6101 = vsel %vm151, %v6071, 0.0
  %v6102 = vrot.slane %v6101, 4
  %v6103 = vadd.f32 %v6101, %v6102
  %v6104 = vrot.slane %v6103, 2
  %v6105 = vadd.f32 %v6103, %v6104
  %v6106 = vrot.slane %v6105, 1
  %v6107 = vadd.f32 %v6105, %v6106
  %v6108 = vsel %vm151, %v6072, 0.0
  %v6109 = vrot.slane %v6108, 4
  %v6110 = vadd.f32 %v6108, %v6109
  %v6111 = vrot.slane %v6110, 2
  %v6112 = vadd.f32 %v6110, %v6111
  %v6113 = vrot.slane %v6112, 1
  %v6114 = vadd.f32 %v6112, %v6113
  %v6116 = vperm.slane %v5764, 0
  %v6124 = vsel %vm404, %v6086, %v6079
  %v6125 = vsel %vm406, %v6093, %v6124
  %v6126 = vsel %vm408, %v6100, %v6125
  %v6127 = vsel %vm410, %v6107, %v6126
  %v6128 = vsel %vm412, %v6114, %v6127
  %v6129 = vsel %vm84, %v6128, 0
  %v6132 = vsel %vm88, %v5762, 0
  %6134 = vmatpush.msra.mxu0 0.0
  %6135 = vmatpush.msra.mxu0 0.0
  %6136 = vmatpush.msra.mxu0 0.0
  %6137 = vmatpush.msra.mxu0 0.0
  %6138 = vmatpush.msra.mxu0 0.0
  %6139 = vmatpush.msra.mxu0 0.0
  %6140 = vmatpush.msra.mxu0 0.0
  %6141 = vmatpush.msra.mxu0 0.0
  %6142 = vmatpush.msra.mxu0 0.0
  %6143 = vmatpush.msra.mxu0 0.0
  %6144 = vmatpush.msra.mxu0 0.0
  %6145 = vmatpush.msra.mxu0 0.0
  %6146 = vmatpush.msra.mxu0 0.0
  %6147 = vmatpush.msra.mxu0 0.0
  %6148 = vmatpush.msra.mxu0 0.0
  %6149 = vmatpush.msra.mxu0 %v6132
  %6150 = vmatmul.f32.gmra.mxu0 %v6129
  %v6151 = vpop.f32.mrf.mxu0
  %v6152 = vadd.f32 %v6116, %v6151
  %6153 = vdwg.mxu0
  %v6154 = vadd.f32 %v5756, %v6152
  %v6157 = vperm.slane %v5783, 0
  %v6158 = vperm.slane %v5783, 1
  %v6159 = vperm.slane %v5783, 2
  %v6160 = vperm.slane %v5783, 3
  %v6161 = vperm.slane %v5783, 4
  %v6162 = vperm.slane %v5783, 5
  %v6163 = vperm.slane %v5783, 6
  %v6164 = vperm.slane %v5783, 7
  %v6165 = vperm.slane %v5784, 0
  %v6166 = vperm.slane %v5784, 1
  %v6167 = vperm.slane %v5784, 2
  %v6168 = vperm.slane %v5784, 3
  %v6169 = vperm.slane %v5784, 4
  %v6170 = vperm.slane %v5784, 5
  %v6171 = vperm.slane %v5784, 6
  %v6172 = vperm.slane %v5784, 7
  %v6190 = vsel %vm84, %v6154, 0
  %v6193 = vsel %vm88, %v5766, 0
  %v6196 = vsel %vm88, %v5767, 0
  %v6199 = vsel %vm88, %v5768, 0
  %v6202 = vsel %vm88, %v5769, 0
  %v6205 = vsel %vm88, %v5770, 0
  %v6208 = vsel %vm88, %v5771, 0
  %v6211 = vsel %vm88, %v5772, 0
  %v6214 = vsel %vm88, %v5773, 0
  %v6217 = vsel %vm88, %v5774, 0
  %v6220 = vsel %vm88, %v5775, 0
  %v6223 = vsel %vm88, %v5776, 0
  %v6226 = vsel %vm88, %v5777, 0
  %v6229 = vsel %vm88, %v5778, 0
  %v6232 = vsel %vm88, %v5779, 0
  %v6235 = vsel %vm88, %v5780, 0
  %v6238 = vsel %vm88, %v5781, 0
  %6240 = vmatpush.msra.mxu0 0.0
  %6241 = vmatpush.msra.mxu0 0.0
  %6242 = vmatpush.msra.mxu0 0.0
  %6243 = vmatpush.msra.mxu0 0.0
  %6244 = vmatpush.msra.mxu0 0.0
  %6245 = vmatpush.msra.mxu0 0.0
  %6246 = vmatpush.msra.mxu0 0.0
  %6247 = vmatpush.msra.mxu0 0.0
  %6248 = vmatpush.msra.mxu0 0.0
  %6249 = vmatpush.msra.mxu0 0.0
  %6250 = vmatpush.msra.mxu0 0.0
  %6251 = vmatpush.msra.mxu0 0.0
  %6252 = vmatpush.msra.mxu0 0.0
  %6253 = vmatpush.msra.mxu0 0.0
  %6254 = vmatpush.msra.mxu0 0.0
  %6255 = vmatpush.msra.mxu0 %v6193
  %6256 = vmatmul.f32.gmra.mxu0 %v6190
  %v6257 = vpop.f32.mrf.mxu0
  %v6258 = vadd.f32 %v6157, %v6257
  %6259 = vdwg.mxu0
  %6260 = vmatpush.msra.mxu0 0.0
  %6261 = vmatpush.msra.mxu0 0.0
  %6262 = vmatpush.msra.mxu0 0.0
  %6263 = vmatpush.msra.mxu0 0.0
  %6264 = vmatpush.msra.mxu0 0.0
  %6265 = vmatpush.msra.mxu0 0.0
  %6266 = vmatpush.msra.mxu0 0.0
  %6267 = vmatpush.msra.mxu0 0.0
  %6268 = vmatpush.msra.mxu0 0.0
  %6269 = vmatpush.msra.mxu0 0.0
  %6270 = vmatpush.msra.mxu0 0.0
  %6271 = vmatpush.msra.mxu0 0.0
  %6272 = vmatpush.msra.mxu0 0.0
  %6273 = vmatpush.msra.mxu0 0.0
  %6274 = vmatpush.msra.mxu0 0.0
  %6275 = vmatpush.msra.mxu0 %v6196
  %6276 = vmatmul.f32.gmra.mxu0 %v6190
  %v6277 = vpop.f32.mrf.mxu0
  %v6278 = vadd.f32 %v6158, %v6277
  %6279 = vdwg.mxu0
  %6280 = vmatpush.msra.mxu0 0.0
  %6281 = vmatpush.msra.mxu0 0.0
  %6282 = vmatpush.msra.mxu0 0.0
  %6283 = vmatpush.msra.mxu0 0.0
  %6284 = vmatpush.msra.mxu0 0.0
  %6285 = vmatpush.msra.mxu0 0.0
  %6286 = vmatpush.msra.mxu0 0.0
  %6287 = vmatpush.msra.mxu0 0.0
  %6288 = vmatpush.msra.mxu0 0.0
  %6289 = vmatpush.msra.mxu0 0.0
  %6290 = vmatpush.msra.mxu0 0.0
  %6291 = vmatpush.msra.mxu0 0.0
  %6292 = vmatpush.msra.mxu0 0.0
  %6293 = vmatpush.msra.mxu0 0.0
  %6294 = vmatpush.msra.mxu0 0.0
  %6295 = vmatpush.msra.mxu0 %v6199
  %6296 = vmatmul.f32.gmra.mxu0 %v6190
  %v6297 = vpop.f32.mrf.mxu0
  %v6298 = vadd.f32 %v6159, %v6297
  %6299 = vdwg.mxu0
  %6300 = vmatpush.msra.mxu0 0.0
  %6301 = vmatpush.msra.mxu0 0.0
  %6302 = vmatpush.msra.mxu0 0.0
  %6303 = vmatpush.msra.mxu0 0.0
  %6304 = vmatpush.msra.mxu0 0.0
  %6305 = vmatpush.msra.mxu0 0.0
  %6306 = vmatpush.msra.mxu0 0.0
  %6307 = vmatpush.msra.mxu0 0.0
  %6308 = vmatpush.msra.mxu0 0.0
  %6309 = vmatpush.msra.mxu0 0.0
  %6310 = vmatpush.msra.mxu0 0.0
  %6311 = vmatpush.msra.mxu0 0.0
  %6312 = vmatpush.msra.mxu0 0.0
  %6313 = vmatpush.msra.mxu0 0.0
  %6314 = vmatpush.msra.mxu0 0.0
  %6315 = vmatpush.msra.mxu0 %v6202
  %6316 = vmatmul.f32.gmra.mxu0 %v6190
  %v6317 = vpop.f32.mrf.mxu0
  %v6318 = vadd.f32 %v6160, %v6317
  %6319 = vdwg.mxu0
  %6320 = vmatpush.msra.mxu0 0.0
  %6321 = vmatpush.msra.mxu0 0.0
  %6322 = vmatpush.msra.mxu0 0.0
  %6323 = vmatpush.msra.mxu0 0.0
  %6324 = vmatpush.msra.mxu0 0.0
  %6325 = vmatpush.msra.mxu0 0.0
  %6326 = vmatpush.msra.mxu0 0.0
  %6327 = vmatpush.msra.mxu0 0.0
  %6328 = vmatpush.msra.mxu0 0.0
  %6329 = vmatpush.msra.mxu0 0.0
  %6330 = vmatpush.msra.mxu0 0.0
  %6331 = vmatpush.msra.mxu0 0.0
  %6332 = vmatpush.msra.mxu0 0.0
  %6333 = vmatpush.msra.mxu0 0.0
  %6334 = vmatpush.msra.mxu0 0.0
  %6335 = vmatpush.msra.mxu0 %v6205
  %6336 = vmatmul.f32.gmra.mxu0 %v6190
  %v6337 = vpop.f32.mrf.mxu0
  %v6338 = vadd.f32 %v6161, %v6337
  %6339 = vdwg.mxu0
  %6340 = vmatpush.msra.mxu0 0.0
  %6341 = vmatpush.msra.mxu0 0.0
  %6342 = vmatpush.msra.mxu0 0.0
  %6343 = vmatpush.msra.mxu0 0.0
  %6344 = vmatpush.msra.mxu0 0.0
  %6345 = vmatpush.msra.mxu0 0.0
  %6346 = vmatpush.msra.mxu0 0.0
  %6347 = vmatpush.msra.mxu0 0.0
  %6348 = vmatpush.msra.mxu0 0.0
  %6349 = vmatpush.msra.mxu0 0.0
  %6350 = vmatpush.msra.mxu0 0.0
  %6351 = vmatpush.msra.mxu0 0.0
  %6352 = vmatpush.msra.mxu0 0.0
  %6353 = vmatpush.msra.mxu0 0.0
  %6354 = vmatpush.msra.mxu0 0.0
  %6355 = vmatpush.msra.mxu0 %v6208
  %6356 = vmatmul.f32.gmra.mxu0 %v6190
  %v6357 = vpop.f32.mrf.mxu0
  %v6358 = vadd.f32 %v6162, %v6357
  %6359 = vdwg.mxu0
  %6360 = vmatpush.msra.mxu0 0.0
  %6361 = vmatpush.msra.mxu0 0.0
  %6362 = vmatpush.msra.mxu0 0.0
  %6363 = vmatpush.msra.mxu0 0.0
  %6364 = vmatpush.msra.mxu0 0.0
  %6365 = vmatpush.msra.mxu0 0.0
  %6366 = vmatpush.msra.mxu0 0.0
  %6367 = vmatpush.msra.mxu0 0.0
  %6368 = vmatpush.msra.mxu0 0.0
  %6369 = vmatpush.msra.mxu0 0.0
  %6370 = vmatpush.msra.mxu0 0.0
  %6371 = vmatpush.msra.mxu0 0.0
  %6372 = vmatpush.msra.mxu0 0.0
  %6373 = vmatpush.msra.mxu0 0.0
  %6374 = vmatpush.msra.mxu0 0.0
  %6375 = vmatpush.msra.mxu0 %v6211
  %6376 = vmatmul.f32.gmra.mxu0 %v6190
  %v6377 = vpop.f32.mrf.mxu0
  %v6378 = vadd.f32 %v6163, %v6377
  %6379 = vdwg.mxu0
  %6380 = vmatpush.msra.mxu0 0.0
  %6381 = vmatpush.msra.mxu0 0.0
  %6382 = vmatpush.msra.mxu0 0.0
  %6383 = vmatpush.msra.mxu0 0.0
  %6384 = vmatpush.msra.mxu0 0.0
  %6385 = vmatpush.msra.mxu0 0.0
  %6386 = vmatpush.msra.mxu0 0.0
  %6387 = vmatpush.msra.mxu0 0.0
  %6388 = vmatpush.msra.mxu0 0.0
  %6389 = vmatpush.msra.mxu0 0.0
  %6390 = vmatpush.msra.mxu0 0.0
  %6391 = vmatpush.msra.mxu0 0.0
  %6392 = vmatpush.msra.mxu0 0.0
  %6393 = vmatpush.msra.mxu0 0.0
  %6394 = vmatpush.msra.mxu0 0.0
  %6395 = vmatpush.msra.mxu0 %v6214
  %6396 = vmatmul.f32.gmra.mxu0 %v6190
  %v6397 = vpop.f32.mrf.mxu0
  %v6398 = vadd.f32 %v6164, %v6397
  %6399 = vdwg.mxu0
  %6400 = vmatpush.msra.mxu0 0.0
  %6401 = vmatpush.msra.mxu0 0.0
  %6402 = vmatpush.msra.mxu0 0.0
  %6403 = vmatpush.msra.mxu0 0.0
  %6404 = vmatpush.msra.mxu0 0.0
  %6405 = vmatpush.msra.mxu0 0.0
  %6406 = vmatpush.msra.mxu0 0.0
  %6407 = vmatpush.msra.mxu0 0.0
  %6408 = vmatpush.msra.mxu0 0.0
  %6409 = vmatpush.msra.mxu0 0.0
  %6410 = vmatpush.msra.mxu0 0.0
  %6411 = vmatpush.msra.mxu0 0.0
  %6412 = vmatpush.msra.mxu0 0.0
  %6413 = vmatpush.msra.mxu0 0.0
  %6414 = vmatpush.msra.mxu0 0.0
  %6415 = vmatpush.msra.mxu0 %v6217
  %6416 = vmatmul.f32.gmra.mxu0 %v6190
  %v6417 = vpop.f32.mrf.mxu0
  %v6418 = vadd.f32 %v6165, %v6417
  %6419 = vdwg.mxu0
  %6420 = vmatpush.msra.mxu0 0.0
  %6421 = vmatpush.msra.mxu0 0.0
  %6422 = vmatpush.msra.mxu0 0.0
  %6423 = vmatpush.msra.mxu0 0.0
  %6424 = vmatpush.msra.mxu0 0.0
  %6425 = vmatpush.msra.mxu0 0.0
  %6426 = vmatpush.msra.mxu0 0.0
  %6427 = vmatpush.msra.mxu0 0.0
  %6428 = vmatpush.msra.mxu0 0.0
  %6429 = vmatpush.msra.mxu0 0.0
  %6430 = vmatpush.msra.mxu0 0.0
  %6431 = vmatpush.msra.mxu0 0.0
  %6432 = vmatpush.msra.mxu0 0.0
  %6433 = vmatpush.msra.mxu0 0.0
  %6434 = vmatpush.msra.mxu0 0.0
  %6435 = vmatpush.msra.mxu0 %v6220
  %6436 = vmatmul.f32.gmra.mxu0 %v6190
  %v6437 = vpop.f32.mrf.mxu0
  %v6438 = vadd.f32 %v6166, %v6437
  %6439 = vdwg.mxu0
  %6440 = vmatpush.msra.mxu0 0.0
  %6441 = vmatpush.msra.mxu0 0.0
  %6442 = vmatpush.msra.mxu0 0.0
  %6443 = vmatpush.msra.mxu0 0.0
  %6444 = vmatpush.msra.mxu0 0.0
  %6445 = vmatpush.msra.mxu0 0.0
  %6446 = vmatpush.msra.mxu0 0.0
  %6447 = vmatpush.msra.mxu0 0.0
  %6448 = vmatpush.msra.mxu0 0.0
  %6449 = vmatpush.msra.mxu0 0.0
  %6450 = vmatpush.msra.mxu0 0.0
  %6451 = vmatpush.msra.mxu0 0.0
  %6452 = vmatpush.msra.mxu0 0.0
  %6453 = vmatpush.msra.mxu0 0.0
  %6454 = vmatpush.msra.mxu0 0.0
  %6455 = vmatpush.msra.mxu0 %v6223
  %6456 = vmatmul.f32.gmra.mxu0 %v6190
  %v6457 = vpop.f32.mrf.mxu0
  %v6458 = vadd.f32 %v6167, %v6457
  %6459 = vdwg.mxu0
  %6460 = vmatpush.msra.mxu0 0.0
  %6461 = vmatpush.msra.mxu0 0.0
  %6462 = vmatpush.msra.mxu0 0.0
  %6463 = vmatpush.msra.mxu0 0.0
  %6464 = vmatpush.msra.mxu0 0.0
  %6465 = vmatpush.msra.mxu0 0.0
  %6466 = vmatpush.msra.mxu0 0.0
  %6467 = vmatpush.msra.mxu0 0.0
  %6468 = vmatpush.msra.mxu0 0.0
  %6469 = vmatpush.msra.mxu0 0.0
  %6470 = vmatpush.msra.mxu0 0.0
  %6471 = vmatpush.msra.mxu0 0.0
  %6472 = vmatpush.msra.mxu0 0.0
  %6473 = vmatpush.msra.mxu0 0.0
  %6474 = vmatpush.msra.mxu0 0.0
  %6475 = vmatpush.msra.mxu0 %v6226
  %6476 = vmatmul.f32.gmra.mxu0 %v6190
  %v6477 = vpop.f32.mrf.mxu0
  %v6478 = vadd.f32 %v6168, %v6477
  %6479 = vdwg.mxu0
  %6480 = vmatpush.msra.mxu0 0.0
  %6481 = vmatpush.msra.mxu0 0.0
  %6482 = vmatpush.msra.mxu0 0.0
  %6483 = vmatpush.msra.mxu0 0.0
  %6484 = vmatpush.msra.mxu0 0.0
  %6485 = vmatpush.msra.mxu0 0.0
  %6486 = vmatpush.msra.mxu0 0.0
  %6487 = vmatpush.msra.mxu0 0.0
  %6488 = vmatpush.msra.mxu0 0.0
  %6489 = vmatpush.msra.mxu0 0.0
  %6490 = vmatpush.msra.mxu0 0.0
  %6491 = vmatpush.msra.mxu0 0.0
  %6492 = vmatpush.msra.mxu0 0.0
  %6493 = vmatpush.msra.mxu0 0.0
  %6494 = vmatpush.msra.mxu0 0.0
  %6495 = vmatpush.msra.mxu0 %v6229
  %6496 = vmatmul.f32.gmra.mxu0 %v6190
  %v6497 = vpop.f32.mrf.mxu0
  %v6498 = vadd.f32 %v6169, %v6497
  %6499 = vdwg.mxu0
  %6500 = vmatpush.msra.mxu0 0.0
  %6501 = vmatpush.msra.mxu0 0.0
  %6502 = vmatpush.msra.mxu0 0.0
  %6503 = vmatpush.msra.mxu0 0.0
  %6504 = vmatpush.msra.mxu0 0.0
  %6505 = vmatpush.msra.mxu0 0.0
  %6506 = vmatpush.msra.mxu0 0.0
  %6507 = vmatpush.msra.mxu0 0.0
  %6508 = vmatpush.msra.mxu0 0.0
  %6509 = vmatpush.msra.mxu0 0.0
  %6510 = vmatpush.msra.mxu0 0.0
  %6511 = vmatpush.msra.mxu0 0.0
  %6512 = vmatpush.msra.mxu0 0.0
  %6513 = vmatpush.msra.mxu0 0.0
  %6514 = vmatpush.msra.mxu0 0.0
  %6515 = vmatpush.msra.mxu0 %v6232
  %6516 = vmatmul.f32.gmra.mxu0 %v6190
  %v6517 = vpop.f32.mrf.mxu0
  %v6518 = vadd.f32 %v6170, %v6517
  %6519 = vdwg.mxu0
  %6520 = vmatpush.msra.mxu0 0.0
  %6521 = vmatpush.msra.mxu0 0.0
  %6522 = vmatpush.msra.mxu0 0.0
  %6523 = vmatpush.msra.mxu0 0.0
  %6524 = vmatpush.msra.mxu0 0.0
  %6525 = vmatpush.msra.mxu0 0.0
  %6526 = vmatpush.msra.mxu0 0.0
  %6527 = vmatpush.msra.mxu0 0.0
  %6528 = vmatpush.msra.mxu0 0.0
  %6529 = vmatpush.msra.mxu0 0.0
  %6530 = vmatpush.msra.mxu0 0.0
  %6531 = vmatpush.msra.mxu0 0.0
  %6532 = vmatpush.msra.mxu0 0.0
  %6533 = vmatpush.msra.mxu0 0.0
  %6534 = vmatpush.msra.mxu0 0.0
  %6535 = vmatpush.msra.mxu0 %v6235
  %6536 = vmatmul.f32.gmra.mxu0 %v6190
  %v6537 = vpop.f32.mrf.mxu0
  %v6538 = vadd.f32 %v6171, %v6537
  %6539 = vdwg.mxu0
  %6540 = vmatpush.msra.mxu0 0.0
  %6541 = vmatpush.msra.mxu0 0.0
  %6542 = vmatpush.msra.mxu0 0.0
  %6543 = vmatpush.msra.mxu0 0.0
  %6544 = vmatpush.msra.mxu0 0.0
  %6545 = vmatpush.msra.mxu0 0.0
  %6546 = vmatpush.msra.mxu0 0.0
  %6547 = vmatpush.msra.mxu0 0.0
  %6548 = vmatpush.msra.mxu0 0.0
  %6549 = vmatpush.msra.mxu0 0.0
  %6550 = vmatpush.msra.mxu0 0.0
  %6551 = vmatpush.msra.mxu0 0.0
  %6552 = vmatpush.msra.mxu0 0.0
  %6553 = vmatpush.msra.mxu0 0.0
  %6554 = vmatpush.msra.mxu0 0.0
  %6555 = vmatpush.msra.mxu0 %v6238
  %6556 = vmatmul.f32.gmra.mxu0 %v6190
  %v6557 = vpop.f32.mrf.mxu0
  %v6558 = vadd.f32 %v6172, %v6557
  %6559 = vdwg.mxu0
  %v6560 = vmax.f32 %v6258, 0.0
  %v6561 = vmax.f32 %v6278, 0.0
  %v6562 = vmax.f32 %v6298, 0.0
  %v6563 = vmax.f32 %v6318, 0.0
  %v6564 = vmax.f32 %v6338, 0.0
  %v6565 = vmax.f32 %v6358, 0.0
  %v6566 = vmax.f32 %v6378, 0.0
  %v6567 = vmax.f32 %v6398, 0.0
  %v6568 = vmax.f32 %v6418, 0.0
  %v6569 = vmax.f32 %v6438, 0.0
  %v6570 = vmax.f32 %v6458, 0.0
  %v6571 = vmax.f32 %v6478, 0.0
  %v6572 = vmax.f32 %v6498, 0.0
  %v6573 = vmax.f32 %v6518, 0.0
  %v6574 = vmax.f32 %v6538, 0.0
  %v6575 = vmax.f32 %v6558, 0.0
  %v6577 = vperm.slane %v5803, 0
  %6579 = vmatpush.xpose.msra.mxu0 0.0
  %6580 = vmatpush.xpose.msra.mxu0 0.0
  %6581 = vmatpush.xpose.msra.mxu0 0.0
  %6582 = vmatpush.xpose.msra.mxu0 0.0
  %6583 = vmatpush.xpose.msra.mxu0 0.0
  %6584 = vmatpush.xpose.msra.mxu0 0.0
  %6585 = vmatpush.xpose.msra.mxu0 0.0
  %6586 = vmatpush.xpose.msra.mxu0 0.0
  %6587 = vmatpush.xpose.msra.mxu0 0.0
  %6588 = vmatpush.xpose.msra.mxu0 0.0
  %6589 = vmatpush.xpose.msra.mxu0 0.0
  %6590 = vmatpush.xpose.msra.mxu0 0.0
  %6591 = vmatpush.xpose.msra.mxu0 0.0
  %6592 = vmatpush.xpose.msra.mxu0 0.0
  %6593 = vmatpush.xpose.msra.mxu0 0.0
  %6594 = vmatpush.xpose.msra.mxu0 %v5786
  %6595 = vmatmul.f32.gmra.mxu0 %v6560
  %v6596 = vpop.f32.mrf.mxu0
  %v6597 = vadd.f32 %v6577, %v6596
  %6598 = vdwg.mxu0
  %6599 = vmatpush.xpose.msra.mxu0 0.0
  %6600 = vmatpush.xpose.msra.mxu0 0.0
  %6601 = vmatpush.xpose.msra.mxu0 0.0
  %6602 = vmatpush.xpose.msra.mxu0 0.0
  %6603 = vmatpush.xpose.msra.mxu0 0.0
  %6604 = vmatpush.xpose.msra.mxu0 0.0
  %6605 = vmatpush.xpose.msra.mxu0 0.0
  %6606 = vmatpush.xpose.msra.mxu0 0.0
  %6607 = vmatpush.xpose.msra.mxu0 0.0
  %6608 = vmatpush.xpose.msra.mxu0 0.0
  %6609 = vmatpush.xpose.msra.mxu0 0.0
  %6610 = vmatpush.xpose.msra.mxu0 0.0
  %6611 = vmatpush.xpose.msra.mxu0 0.0
  %6612 = vmatpush.xpose.msra.mxu0 0.0
  %6613 = vmatpush.xpose.msra.mxu0 0.0
  %6614 = vmatpush.xpose.msra.mxu0 %v5787
  %6615 = vmatmul.f32.gmra.mxu0 %v6561
  %v6616 = vpop.f32.mrf.mxu0
  %v6617 = vadd.f32 %v6597, %v6616
  %6618 = vdwg.mxu0
  %6619 = vmatpush.xpose.msra.mxu0 0.0
  %6620 = vmatpush.xpose.msra.mxu0 0.0
  %6621 = vmatpush.xpose.msra.mxu0 0.0
  %6622 = vmatpush.xpose.msra.mxu0 0.0
  %6623 = vmatpush.xpose.msra.mxu0 0.0
  %6624 = vmatpush.xpose.msra.mxu0 0.0
  %6625 = vmatpush.xpose.msra.mxu0 0.0
  %6626 = vmatpush.xpose.msra.mxu0 0.0
  %6627 = vmatpush.xpose.msra.mxu0 0.0
  %6628 = vmatpush.xpose.msra.mxu0 0.0
  %6629 = vmatpush.xpose.msra.mxu0 0.0
  %6630 = vmatpush.xpose.msra.mxu0 0.0
  %6631 = vmatpush.xpose.msra.mxu0 0.0
  %6632 = vmatpush.xpose.msra.mxu0 0.0
  %6633 = vmatpush.xpose.msra.mxu0 0.0
  %6634 = vmatpush.xpose.msra.mxu0 %v5788
  %6635 = vmatmul.f32.gmra.mxu0 %v6562
  %v6636 = vpop.f32.mrf.mxu0
  %v6637 = vadd.f32 %v6617, %v6636
  %6638 = vdwg.mxu0
  %6639 = vmatpush.xpose.msra.mxu0 0.0
  %6640 = vmatpush.xpose.msra.mxu0 0.0
  %6641 = vmatpush.xpose.msra.mxu0 0.0
  %6642 = vmatpush.xpose.msra.mxu0 0.0
  %6643 = vmatpush.xpose.msra.mxu0 0.0
  %6644 = vmatpush.xpose.msra.mxu0 0.0
  %6645 = vmatpush.xpose.msra.mxu0 0.0
  %6646 = vmatpush.xpose.msra.mxu0 0.0
  %6647 = vmatpush.xpose.msra.mxu0 0.0
  %6648 = vmatpush.xpose.msra.mxu0 0.0
  %6649 = vmatpush.xpose.msra.mxu0 0.0
  %6650 = vmatpush.xpose.msra.mxu0 0.0
  %6651 = vmatpush.xpose.msra.mxu0 0.0
  %6652 = vmatpush.xpose.msra.mxu0 0.0
  %6653 = vmatpush.xpose.msra.mxu0 0.0
  %6654 = vmatpush.xpose.msra.mxu0 %v5789
  %6655 = vmatmul.f32.gmra.mxu0 %v6563
  %v6656 = vpop.f32.mrf.mxu0
  %v6657 = vadd.f32 %v6637, %v6656
  %6658 = vdwg.mxu0
  %6659 = vmatpush.xpose.msra.mxu0 0.0
  %6660 = vmatpush.xpose.msra.mxu0 0.0
  %6661 = vmatpush.xpose.msra.mxu0 0.0
  %6662 = vmatpush.xpose.msra.mxu0 0.0
  %6663 = vmatpush.xpose.msra.mxu0 0.0
  %6664 = vmatpush.xpose.msra.mxu0 0.0
  %6665 = vmatpush.xpose.msra.mxu0 0.0
  %6666 = vmatpush.xpose.msra.mxu0 0.0
  %6667 = vmatpush.xpose.msra.mxu0 0.0
  %6668 = vmatpush.xpose.msra.mxu0 0.0
  %6669 = vmatpush.xpose.msra.mxu0 0.0
  %6670 = vmatpush.xpose.msra.mxu0 0.0
  %6671 = vmatpush.xpose.msra.mxu0 0.0
  %6672 = vmatpush.xpose.msra.mxu0 0.0
  %6673 = vmatpush.xpose.msra.mxu0 0.0
  %6674 = vmatpush.xpose.msra.mxu0 %v5790
  %6675 = vmatmul.f32.gmra.mxu0 %v6564
  %v6676 = vpop.f32.mrf.mxu0
  %v6677 = vadd.f32 %v6657, %v6676
  %6678 = vdwg.mxu0
  %6679 = vmatpush.xpose.msra.mxu0 0.0
  %6680 = vmatpush.xpose.msra.mxu0 0.0
  %6681 = vmatpush.xpose.msra.mxu0 0.0
  %6682 = vmatpush.xpose.msra.mxu0 0.0
  %6683 = vmatpush.xpose.msra.mxu0 0.0
  %6684 = vmatpush.xpose.msra.mxu0 0.0
  %6685 = vmatpush.xpose.msra.mxu0 0.0
  %6686 = vmatpush.xpose.msra.mxu0 0.0
  %6687 = vmatpush.xpose.msra.mxu0 0.0
  %6688 = vmatpush.xpose.msra.mxu0 0.0
  %6689 = vmatpush.xpose.msra.mxu0 0.0
  %6690 = vmatpush.xpose.msra.mxu0 0.0
  %6691 = vmatpush.xpose.msra.mxu0 0.0
  %6692 = vmatpush.xpose.msra.mxu0 0.0
  %6693 = vmatpush.xpose.msra.mxu0 0.0
  %6694 = vmatpush.xpose.msra.mxu0 %v5791
  %6695 = vmatmul.f32.gmra.mxu0 %v6565
  %v6696 = vpop.f32.mrf.mxu0
  %v6697 = vadd.f32 %v6677, %v6696
  %6698 = vdwg.mxu0
  %6699 = vmatpush.xpose.msra.mxu0 0.0
  %6700 = vmatpush.xpose.msra.mxu0 0.0
  %6701 = vmatpush.xpose.msra.mxu0 0.0
  %6702 = vmatpush.xpose.msra.mxu0 0.0
  %6703 = vmatpush.xpose.msra.mxu0 0.0
  %6704 = vmatpush.xpose.msra.mxu0 0.0
  %6705 = vmatpush.xpose.msra.mxu0 0.0
  %6706 = vmatpush.xpose.msra.mxu0 0.0
  %6707 = vmatpush.xpose.msra.mxu0 0.0
  %6708 = vmatpush.xpose.msra.mxu0 0.0
  %6709 = vmatpush.xpose.msra.mxu0 0.0
  %6710 = vmatpush.xpose.msra.mxu0 0.0
  %6711 = vmatpush.xpose.msra.mxu0 0.0
  %6712 = vmatpush.xpose.msra.mxu0 0.0
  %6713 = vmatpush.xpose.msra.mxu0 0.0
  %6714 = vmatpush.xpose.msra.mxu0 %v5792
  %6715 = vmatmul.f32.gmra.mxu0 %v6566
  %v6716 = vpop.f32.mrf.mxu0
  %v6717 = vadd.f32 %v6697, %v6716
  %6718 = vdwg.mxu0
  %6719 = vmatpush.xpose.msra.mxu0 0.0
  %6720 = vmatpush.xpose.msra.mxu0 0.0
  %6721 = vmatpush.xpose.msra.mxu0 0.0
  %6722 = vmatpush.xpose.msra.mxu0 0.0
  %6723 = vmatpush.xpose.msra.mxu0 0.0
  %6724 = vmatpush.xpose.msra.mxu0 0.0
  %6725 = vmatpush.xpose.msra.mxu0 0.0
  %6726 = vmatpush.xpose.msra.mxu0 0.0
  %6727 = vmatpush.xpose.msra.mxu0 0.0
  %6728 = vmatpush.xpose.msra.mxu0 0.0
  %6729 = vmatpush.xpose.msra.mxu0 0.0
  %6730 = vmatpush.xpose.msra.mxu0 0.0
  %6731 = vmatpush.xpose.msra.mxu0 0.0
  %6732 = vmatpush.xpose.msra.mxu0 0.0
  %6733 = vmatpush.xpose.msra.mxu0 0.0
  %6734 = vmatpush.xpose.msra.mxu0 %v5793
  %6735 = vmatmul.f32.gmra.mxu0 %v6567
  %v6736 = vpop.f32.mrf.mxu0
  %v6737 = vadd.f32 %v6717, %v6736
  %6738 = vdwg.mxu0
  %6739 = vmatpush.xpose.msra.mxu0 0.0
  %6740 = vmatpush.xpose.msra.mxu0 0.0
  %6741 = vmatpush.xpose.msra.mxu0 0.0
  %6742 = vmatpush.xpose.msra.mxu0 0.0
  %6743 = vmatpush.xpose.msra.mxu0 0.0
  %6744 = vmatpush.xpose.msra.mxu0 0.0
  %6745 = vmatpush.xpose.msra.mxu0 0.0
  %6746 = vmatpush.xpose.msra.mxu0 0.0
  %6747 = vmatpush.xpose.msra.mxu0 0.0
  %6748 = vmatpush.xpose.msra.mxu0 0.0
  %6749 = vmatpush.xpose.msra.mxu0 0.0
  %6750 = vmatpush.xpose.msra.mxu0 0.0
  %6751 = vmatpush.xpose.msra.mxu0 0.0
  %6752 = vmatpush.xpose.msra.mxu0 0.0
  %6753 = vmatpush.xpose.msra.mxu0 0.0
  %6754 = vmatpush.xpose.msra.mxu0 %v5794
  %6755 = vmatmul.f32.gmra.mxu0 %v6568
  %v6756 = vpop.f32.mrf.mxu0
  %v6757 = vadd.f32 %v6737, %v6756
  %6758 = vdwg.mxu0
  %6759 = vmatpush.xpose.msra.mxu0 0.0
  %6760 = vmatpush.xpose.msra.mxu0 0.0
  %6761 = vmatpush.xpose.msra.mxu0 0.0
  %6762 = vmatpush.xpose.msra.mxu0 0.0
  %6763 = vmatpush.xpose.msra.mxu0 0.0
  %6764 = vmatpush.xpose.msra.mxu0 0.0
  %6765 = vmatpush.xpose.msra.mxu0 0.0
  %6766 = vmatpush.xpose.msra.mxu0 0.0
  %6767 = vmatpush.xpose.msra.mxu0 0.0
  %6768 = vmatpush.xpose.msra.mxu0 0.0
  %6769 = vmatpush.xpose.msra.mxu0 0.0
  %6770 = vmatpush.xpose.msra.mxu0 0.0
  %6771 = vmatpush.xpose.msra.mxu0 0.0
  %6772 = vmatpush.xpose.msra.mxu0 0.0
  %6773 = vmatpush.xpose.msra.mxu0 0.0
  %6774 = vmatpush.xpose.msra.mxu0 %v5795
  %6775 = vmatmul.f32.gmra.mxu0 %v6569
  %v6776 = vpop.f32.mrf.mxu0
  %v6777 = vadd.f32 %v6757, %v6776
  %6778 = vdwg.mxu0
  %6779 = vmatpush.xpose.msra.mxu0 0.0
  %6780 = vmatpush.xpose.msra.mxu0 0.0
  %6781 = vmatpush.xpose.msra.mxu0 0.0
  %6782 = vmatpush.xpose.msra.mxu0 0.0
  %6783 = vmatpush.xpose.msra.mxu0 0.0
  %6784 = vmatpush.xpose.msra.mxu0 0.0
  %6785 = vmatpush.xpose.msra.mxu0 0.0
  %6786 = vmatpush.xpose.msra.mxu0 0.0
  %6787 = vmatpush.xpose.msra.mxu0 0.0
  %6788 = vmatpush.xpose.msra.mxu0 0.0
  %6789 = vmatpush.xpose.msra.mxu0 0.0
  %6790 = vmatpush.xpose.msra.mxu0 0.0
  %6791 = vmatpush.xpose.msra.mxu0 0.0
  %6792 = vmatpush.xpose.msra.mxu0 0.0
  %6793 = vmatpush.xpose.msra.mxu0 0.0
  %6794 = vmatpush.xpose.msra.mxu0 %v5796
  %6795 = vmatmul.f32.gmra.mxu0 %v6570
  %v6796 = vpop.f32.mrf.mxu0
  %v6797 = vadd.f32 %v6777, %v6796
  %6798 = vdwg.mxu0
  %6799 = vmatpush.xpose.msra.mxu0 0.0
  %6800 = vmatpush.xpose.msra.mxu0 0.0
  %6801 = vmatpush.xpose.msra.mxu0 0.0
  %6802 = vmatpush.xpose.msra.mxu0 0.0
  %6803 = vmatpush.xpose.msra.mxu0 0.0
  %6804 = vmatpush.xpose.msra.mxu0 0.0
  %6805 = vmatpush.xpose.msra.mxu0 0.0
  %6806 = vmatpush.xpose.msra.mxu0 0.0
  %6807 = vmatpush.xpose.msra.mxu0 0.0
  %6808 = vmatpush.xpose.msra.mxu0 0.0
  %6809 = vmatpush.xpose.msra.mxu0 0.0
  %6810 = vmatpush.xpose.msra.mxu0 0.0
  %6811 = vmatpush.xpose.msra.mxu0 0.0
  %6812 = vmatpush.xpose.msra.mxu0 0.0
  %6813 = vmatpush.xpose.msra.mxu0 0.0
  %6814 = vmatpush.xpose.msra.mxu0 %v5797
  %6815 = vmatmul.f32.gmra.mxu0 %v6571
  %v6816 = vpop.f32.mrf.mxu0
  %v6817 = vadd.f32 %v6797, %v6816
  %6818 = vdwg.mxu0
  %6819 = vmatpush.xpose.msra.mxu0 0.0
  %6820 = vmatpush.xpose.msra.mxu0 0.0
  %6821 = vmatpush.xpose.msra.mxu0 0.0
  %6822 = vmatpush.xpose.msra.mxu0 0.0
  %6823 = vmatpush.xpose.msra.mxu0 0.0
  %6824 = vmatpush.xpose.msra.mxu0 0.0
  %6825 = vmatpush.xpose.msra.mxu0 0.0
  %6826 = vmatpush.xpose.msra.mxu0 0.0
  %6827 = vmatpush.xpose.msra.mxu0 0.0
  %6828 = vmatpush.xpose.msra.mxu0 0.0
  %6829 = vmatpush.xpose.msra.mxu0 0.0
  %6830 = vmatpush.xpose.msra.mxu0 0.0
  %6831 = vmatpush.xpose.msra.mxu0 0.0
  %6832 = vmatpush.xpose.msra.mxu0 0.0
  %6833 = vmatpush.xpose.msra.mxu0 0.0
  %6834 = vmatpush.xpose.msra.mxu0 %v5798
  %6835 = vmatmul.f32.gmra.mxu0 %v6572
  %v6836 = vpop.f32.mrf.mxu0
  %v6837 = vadd.f32 %v6817, %v6836
  %6838 = vdwg.mxu0
  %6839 = vmatpush.xpose.msra.mxu0 0.0
  %6840 = vmatpush.xpose.msra.mxu0 0.0
  %6841 = vmatpush.xpose.msra.mxu0 0.0
  %6842 = vmatpush.xpose.msra.mxu0 0.0
  %6843 = vmatpush.xpose.msra.mxu0 0.0
  %6844 = vmatpush.xpose.msra.mxu0 0.0
  %6845 = vmatpush.xpose.msra.mxu0 0.0
  %6846 = vmatpush.xpose.msra.mxu0 0.0
  %6847 = vmatpush.xpose.msra.mxu0 0.0
  %6848 = vmatpush.xpose.msra.mxu0 0.0
  %6849 = vmatpush.xpose.msra.mxu0 0.0
  %6850 = vmatpush.xpose.msra.mxu0 0.0
  %6851 = vmatpush.xpose.msra.mxu0 0.0
  %6852 = vmatpush.xpose.msra.mxu0 0.0
  %6853 = vmatpush.xpose.msra.mxu0 0.0
  %6854 = vmatpush.xpose.msra.mxu0 %v5799
  %6855 = vmatmul.f32.gmra.mxu0 %v6573
  %v6856 = vpop.f32.mrf.mxu0
  %v6857 = vadd.f32 %v6837, %v6856
  %6858 = vdwg.mxu0
  %6859 = vmatpush.xpose.msra.mxu0 0.0
  %6860 = vmatpush.xpose.msra.mxu0 0.0
  %6861 = vmatpush.xpose.msra.mxu0 0.0
  %6862 = vmatpush.xpose.msra.mxu0 0.0
  %6863 = vmatpush.xpose.msra.mxu0 0.0
  %6864 = vmatpush.xpose.msra.mxu0 0.0
  %6865 = vmatpush.xpose.msra.mxu0 0.0
  %6866 = vmatpush.xpose.msra.mxu0 0.0
  %6867 = vmatpush.xpose.msra.mxu0 0.0
  %6868 = vmatpush.xpose.msra.mxu0 0.0
  %6869 = vmatpush.xpose.msra.mxu0 0.0
  %6870 = vmatpush.xpose.msra.mxu0 0.0
  %6871 = vmatpush.xpose.msra.mxu0 0.0
  %6872 = vmatpush.xpose.msra.mxu0 0.0
  %6873 = vmatpush.xpose.msra.mxu0 0.0
  %6874 = vmatpush.xpose.msra.mxu0 %v5800
  %6875 = vmatmul.f32.gmra.mxu0 %v6574
  %v6876 = vpop.f32.mrf.mxu0
  %v6877 = vadd.f32 %v6857, %v6876
  %6878 = vdwg.mxu0
  %6879 = vmatpush.xpose.msra.mxu0 0.0
  %6880 = vmatpush.xpose.msra.mxu0 0.0
  %6881 = vmatpush.xpose.msra.mxu0 0.0
  %6882 = vmatpush.xpose.msra.mxu0 0.0
  %6883 = vmatpush.xpose.msra.mxu0 0.0
  %6884 = vmatpush.xpose.msra.mxu0 0.0
  %6885 = vmatpush.xpose.msra.mxu0 0.0
  %6886 = vmatpush.xpose.msra.mxu0 0.0
  %6887 = vmatpush.xpose.msra.mxu0 0.0
  %6888 = vmatpush.xpose.msra.mxu0 0.0
  %6889 = vmatpush.xpose.msra.mxu0 0.0
  %6890 = vmatpush.xpose.msra.mxu0 0.0
  %6891 = vmatpush.xpose.msra.mxu0 0.0
  %6892 = vmatpush.xpose.msra.mxu0 0.0
  %6893 = vmatpush.xpose.msra.mxu0 0.0
  %6894 = vmatpush.xpose.msra.mxu0 %v5801
  %6895 = vmatmul.f32.gmra.mxu0 %v6575
  %v6896 = vpop.f32.mrf.mxu0
  %v6897 = vadd.f32 %v6877, %v6896
  %6898 = vdwg.mxu0
  %v6899 = vadd.f32 %v6154, %v6897
  %6900 = vst.msk [vmem:[%s10] sm:$0x3f] %vm151, %v6899
  // Predicated region
  $region42: #{transformer_forward.1} parent=0 // pred_check
    _
  $region43: #{transformer_forward.1} parent=0 // pred_check_branch
    %6902 = sbr.rel (0) target = $region45
  $region44: #{transformer_forward.1} parent=0 // pred_region
    _
  $region45: #{transformer_forward.1} parent=0 // pred_fallthru
    _
  // Predicated region
  $region46: #{transformer_forward.1} parent=0 // pred_check
    _
  $region47: #{transformer_forward.1} parent=0 // pred_check_branch
    %6904 = sbr.rel (0) target = $region49
  $region48: #{transformer_forward.1} parent=0 // pred_region
    _
  $region49: #{transformer_forward.1} parent=0 // pred_fallthru
    _

</llo_original>
